<compile_context>
chip_gen: v5e
topology: v5e:2x2
jax: 0.10.0
libtpu: 0.0.40
codegen_flags: <defaults>
</compile_context>

<pallas_src>
import functools
import math

import jax
import jax.numpy as jnp
from jax import lax
from jax.experimental import pallas as pl
from jax.experimental.pallas import tpu as pltpu


def _round_up(x, m):
    return (x + m - 1) // m * m


def _vmem_limit_bytes():
    # 3/4 of physical VMEM: ~48 MiB on v7x (64 MiB phys), ~96 MiB on v5e/v6e (128 MiB phys).
    try:
        cap = int(pltpu.get_tpu_info().vmem_capacity_bytes)
    except Exception:
        cap = 64 * 1024 * 1024
    return int(min(cap * 3 // 4, 100 * 1024 * 1024))


_VMEM_LIMIT = _vmem_limit_bytes()
_TM_MAX = 1024 if _VMEM_LIMIT > 64 * 1024 * 1024 else 512


def _row_tiling(M, tm_max):
    """Balanced row tiles (multiple of 8); a ragged tail never doubles the work."""
    n = max(1, -(-M // tm_max))
    tm = _round_up(-(-M // n), 8)
    return tm, -(-M // tm)


# ---------------------------------------------------------------------------
# Kernels
# ---------------------------------------------------------------------------
def _stage_kernel(x_ref, w_ref, b_ref, g_ref, bt_ref, o_ref, *, kb, eps):
    """Fused ConvTranspose(k=s, stride=s) + bias + LayerNorm(channels) + GELU.

    x_ref  : [tm, Cin]            rows = spatial positions (cast to bf16 in-kernel)
    w_ref  : [kb, Cin, Cout]      kb = (k1,k2)-blocks handled this grid step
    b/g/bt : [1, Cout]            f32 ConvT bias / LN gamma / LN beta
    o_ref  : [tm, kb*Cout]
    """
    x = x_ref[...].astype(w_ref.dtype)
    cout = w_ref.shape[-1]
    bias = b_ref[...]
    gamma = g_ref[...]
    beta = bt_ref[...]
    if kb > 1:                               # hoist broadcasts out of the unrolled loop
        rows = x.shape[0]
        bias = pl.broadcast_to(bias, (rows, cout))
        gamma = pl.broadcast_to(gamma, (rows, cout))
        beta = pl.broadcast_to(beta, (rows, cout))
    half = jnp.float32(0.5)
    one = jnp.float32(1.0)
    inv_sqrt2 = jnp.float32(0.7071067811865476)
    eps_f = jnp.float32(eps)
    for j in range(kb):                      # kb == 1 on the aligned fast path
        y = jnp.dot(x, w_ref[j], preferred_element_type=jnp.float32) + bias
        mean = jnp.mean(y, axis=-1, keepdims=True)
        var = jnp.mean(y * y, axis=-1, keepdims=True) - mean * mean   # one-pass, biased (torch LN)
        y = (y - mean) * lax.rsqrt(var + eps_f)
        y = y * gamma + beta
        y = half * y * (one + lax.erf(y * inv_sqrt2))                 # nn.GELU() exact erf
        o_ref[:, j * cout:(j + 1) * cout] = y.astype(o_ref.dtype)


def _last_stage_kernel(x_ref, w_ref, b_ref, g_ref, bt_ref, wp_ref, bp_ref, o_ref, *, eps):
    """Last upsampling stage with the final 1x1 projection fused into the epilogue.

    x_ref  : [tm, Cin]
    w_ref  : [1, Cin, Cout]       one (k1,k2) block of the ConvT weight
    b/g/bt : [1, Cout]
    wp_ref : [Cout, out_dim]      1x1 conv weight (transposed), bf16
    bp_ref : [1, out_dim]         1x1 conv bias, f32
    o_ref  : [1, tm, out_dim]
    """
    x = x_ref[...].astype(w_ref.dtype)
    eps_f = jnp.float32(eps)
    y = jnp.dot(x, w_ref[0], preferred_element_type=jnp.float32) + b_ref[...]
    mean = jnp.mean(y, axis=-1, keepdims=True)
    var = jnp.mean(y * y, axis=-1, keepdims=True) - mean * mean
    y = (y - mean) * lax.rsqrt(var + eps_f)
    y = y * g_ref[...] + bt_ref[...]
    y = jnp.float32(0.5) * y * (jnp.float32(1.0) + lax.erf(y * jnp.float32(0.7071067811865476)))
    z = jnp.dot(y.astype(wp_ref.dtype), wp_ref[...], preferred_element_type=jnp.float32)
    o_ref[0] = (z + bp_ref[...]).astype(o_ref.dtype)


# ---------------------------------------------------------------------------
# Pallas wrappers
# ---------------------------------------------------------------------------
def fused_stage(x, w3, b2, g2, bt2, *, eps=1e-5, out_dtype=jnp.bfloat16):
    """x: [M, Cin] -> [M, n_blocks*Cout]  (ConvT + LN + GELU, blocked column order)."""
    M, K = x.shape
    nb, _, cout = w3.shape
    N = nb * cout
    # Fast path: one (k1,k2) block per grid step (lane-aligned). Fallback groups all
    # blocks so the output block stays (8,128)-legal for non-multiple-of-128 channels.
    kb = 1 if cout % 128 == 0 else nb
    tm, n_rows = _row_tiling(M, _TM_MAX)
    grid = (n_rows, nb // kb)
    cost = pl.CostEstimate(
        flops=2 * M * K * N,
        transcendentals=M * N,
        bytes_accessed=int(M * K * x.dtype.itemsize + n_rows * w3.size * w3.dtype.itemsize
                           + M * N * jnp.dtype(out_dtype).itemsize))
    return pl.pallas_call(
        functools.partial(_stage_kernel, kb=kb, eps=eps),
        out_shape=jax.ShapeDtypeStruct((M, N), out_dtype),
        grid=grid,
        in_specs=[
            pl.BlockSpec((tm, K), lambda i, k: (i, 0)),          # row tile resident across k
            pl.BlockSpec((kb, K, cout), lambda i, k: (k, 0, 0)),  # weight streamed per block
            pl.BlockSpec((1, cout), lambda i, k: (0, 0)),
            pl.BlockSpec((1, cout), lambda i, k: (0, 0)),
            pl.BlockSpec((1, cout), lambda i, k: (0, 0)),
        ],
        out_specs=pl.BlockSpec((tm, kb * cout), lambda i, k: (i, k)),
        compiler_params=pltpu.CompilerParams(
            dimension_semantics=("parallel", "parallel"),
            vmem_limit_bytes=_VMEM_LIMIT),
        cost_estimate=cost,
    )(x, w3, b2, g2, bt2)


def fused_last_stage(x, w3, b2, g2, bt2, wp, bp, *, eps=1e-5, out_dtype=jnp.float32):
    """x: [M, Cin] -> [n_blocks, M, out_dim]  (ConvT + LN + GELU + fused 1x1 projection)."""
    M, K = x.shape
    nb, _, cout = w3.shape
    out_dim = wp.shape[1]
    tm, n_rows = _row_tiling(M, _TM_MAX)
    grid = (n_rows, nb)
    cost = pl.CostEstimate(
        flops=2 * M * K * nb * cout + 2 * M * nb * cout * out_dim,
        transcendentals=M * nb * cout,
        bytes_accessed=int(M * K * x.dtype.itemsize + n_rows * w3.size * w3.dtype.itemsize
                           + nb * M * out_dim * 4))
    return pl.pallas_call(
        functools.partial(_last_stage_kernel, eps=eps),
        out_shape=jax.ShapeDtypeStruct((nb, M, out_dim), out_dtype),
        grid=grid,
        in_specs=[
            pl.BlockSpec((tm, K), lambda i, k: (i, 0)),
            pl.BlockSpec((1, K, cout), lambda i, k: (k, 0, 0)),
            pl.BlockSpec((1, cout), lambda i, k: (0, 0)),
            pl.BlockSpec((1, cout), lambda i, k: (0, 0)),
            pl.BlockSpec((1, cout), lambda i, k: (0, 0)),
            pl.BlockSpec((cout, out_dim), lambda i, k: (0, 0)),
            pl.BlockSpec((1, out_dim), lambda i, k: (0, 0)),
        ],
        out_specs=pl.BlockSpec((1, tm, out_dim), lambda i, k: (k, i, 0)),
        compiler_params=pltpu.CompilerParams(
            dimension_semantics=("parallel", "parallel"),
            vmem_limit_bytes=_VMEM_LIMIT),
        cost_estimate=cost,
    )(x, w3, b2, g2, bt2, wp, bp)


# ---------------------------------------------------------------------------
# Module logic (glue)
# ---------------------------------------------------------------------------
def decompose_patching(patch_size):
    """Decompose per-axis patch sizes into per-stage strides, e.g. (4,4)->[(2,2),(2,2)]."""
    per_axis = []
    for p in patch_size:
        f = []
        while p % 2 == 0 and p > 1:
            f.append(2)
            p //= 2
        if p > 1:
            f.append(p)
        if not f:
            f = [1]
        per_axis.append(f)
    n_stages = max(len(f) for f in per_axis)
    per_axis = [f + [1] * (n_stages - len(f)) for f in per_axis]
    return [tuple(f[i] for f in per_axis) for i in range(n_stages)]


def init_params(key, in_dim, out_dim, patch_size, head_init_std=None):
    strides = tuple(decompose_patching(patch_size))
    stage_params = []
    for s in strides:
        key, kw, kb = jax.random.split(key, 3)
        # ConvTranspose2d weight layout: [Cin, Cout, s1, s2]
        w = 0.05 * jax.random.normal(kw, (in_dim, in_dim, s[0], s[1]), jnp.float32)
        b = 0.05 * jax.random.normal(kb, (in_dim,), jnp.float32)
        gamma = jnp.ones((in_dim,), jnp.float32)     # LayerNorm init: ones / zeros
        beta = jnp.zeros((in_dim,), jnp.float32)
        stage_params.append((w, b, gamma, beta))
    # Final 1x1 conv: weight [Cout, Cin, 1, 1]; xavier_uniform on flatten(1), zero bias.
    key, kw = jax.random.split(key)
    if head_init_std is not None:
        proj_w = head_init_std * jax.random.truncated_normal(
            kw, -2.0, 2.0, (out_dim, in_dim, 1, 1), jnp.float32)
    else:
        limit = math.sqrt(6.0 / (in_dim + out_dim))
        proj_w = jax.random.uniform(
            kw, (out_dim, in_dim, 1, 1), jnp.float32, -limit, limit)
    proj_b = jnp.zeros((out_dim,), jnp.float32)
    return stage_params, proj_w, proj_b, strides


def pack_params(stage_params, proj_w, proj_b, strides, compute_dtype=jnp.bfloat16):
    """Pre-pack & pre-cast weights ONCE (no per-forward astype / transpose)."""
    stages = []
    for (w, b, gamma, beta), (s1, s2) in zip(stage_params, strides):
        cin, cout = w.shape[0], w.shape[1]
        # ConvTranspose weight [Cin, Cout, s1, s2] -> [n_blocks=(k1,k2), Cin, Cout]
        w3 = jnp.transpose(w, (2, 3, 0, 1)).reshape(s1 * s2, cin, cout)
        stages.append((w3.astype(compute_dtype),
                       b.reshape(1, cout).astype(jnp.float32),
                       gamma.reshape(1, cout).astype(jnp.float32),
                       beta.reshape(1, cout).astype(jnp.float32)))
    proj_wt = jnp.transpose(proj_w[:, :, 0, 0]).astype(compute_dtype)   # [Cin, Cout]
    proj_b2 = proj_b.reshape(1, -1).astype(jnp.float32)                 # [1, Cout]
    return tuple(stages), proj_wt, proj_b2


@functools.partial(jax.jit, static_argnums=(4,))
def conv_head_forward(x, stages, proj_wt, proj_b2, strides):
    """x: [B, n1, n2, D] (token grid, channels-last) ->
       [B, out_dim, n1*p1, n2*p2] (NCHW, matching the PyTorch module output)."""
    # TODO(synk): only 2-D patch grids are implemented; the module supports n-D patching.
    B, n1, n2, D = x.shape
    h = x.reshape(B * n1 * n2, D)                       # rows ordered (b, h0, w0)
    nst = len(strides)
    o = None
    for si, ((w3, b2, g2, bt2), (s1, s2)) in enumerate(zip(stages, strides)):
        nb = s1 * s2
        if si < nst - 1:
            M_cur = h.shape[0]
            y = fused_stage(h, w3, b2, g2, bt2)         # [M, nb*cout], blocked column order
            # FREE reshape: rows stay in (b, ..., k1, k2) blocked order — no transpose.
            h = y.reshape(M_cur * nb, w3.shape[-1])
        else:
            # last stage: 1x1 projection fused in-kernel -> [nb, M, out_dim]
            o = fused_last_stage(h, w3, b2, g2, bt2, proj_wt, proj_b2)
    out_dim = proj_wt.shape[1]
    # Single XLA permutation over the SMALL out_dim tensor to un-block the spatial order.
    s1L, s2L = strides[-1]
    mid = [v for st in strides[:-1] for v in st]        # (s1_1, s2_1, ..., s1_{L-1}, s2_{L-1})
    o = o.reshape([s1L, s2L, B, n1, n2] + mid + [out_dim])
    L = nst
    perm = ([2, 3 + 2 * L, 3] + [5 + 2 * i for i in range(L - 1)] + [0, 4]
            + [6 + 2 * i for i in range(L - 1)] + [1])
    o = jnp.transpose(o, perm)                          # [B, C, n1, s1_1..s1_L, n2, s2_1..s2_L]
    p1 = math.prod(s for (s, _) in strides)
    p2 = math.prod(s for (_, s) in strides)
    return o.reshape(B, out_dim, n1 * p1, n2 * p2)


# ---------------------------------------------------------------------------
# Pure-JAX reference (f32) for validation
# ---------------------------------------------------------------------------
def reference_forward(x, stage_params, proj_w, proj_b, strides, eps=1e-5):
    h = jnp.transpose(x, (0, 3, 1, 2))                  # NCHW
    inv_sqrt2 = 0.7071067811865476
    for (w, b, g, bt), (s1, s2) in zip(stage_params, strides):
        Bc, C, H, W = h.shape
        cout = w.shape[1]
        y = jnp.einsum('bihw,iokl->bohkwl', h, w, precision='highest')
        y = y.reshape(Bc, cout, H * s1, W * s2) + b[None, :, None, None]
        mean = jnp.mean(y, axis=1, keepdims=True)
        var = jnp.mean((y - mean) ** 2, axis=1, keepdims=True)
        y = (y - mean) * lax.rsqrt(var + eps)
        y = y * g[None, :, None, None] + bt[None, :, None, None]
        h = 0.5 * y * (1.0 + lax.erf(y * inv_sqrt2))
    out = jnp.einsum('bihw,oi->bohw', h, proj_w[:, :, 0, 0], precision='highest')
    return out + proj_b[None, :, None, None]


# ---------------------------------------------------------------------------
if __name__ == "__main__":
    key = jax.random.PRNGKey(0)
    B, n1, n2 = 2, 8, 8
    in_dim, out_dim = 128, 8          # lane-aligned channels -> per-block fast path
    patch_size = (4, 4)               # -> two ConvT(2,2)+LN+GELU stages, fused 1x1 proj

    key, kx, kp = jax.random.split(key, 3)
    x = jax.random.normal(kx, (B, n1, n2, in_dim), jnp.float32)

    stage_params, proj_w, proj_b, strides = init_params(kp, in_dim, out_dim, patch_size)
    stages, proj_wt, proj_b2 = pack_params(stage_params, proj_w, proj_b, strides)

    out = conv_head_forward(x, stages, proj_wt, proj_b2, strides)
    out = jax.block_until_ready(out)

    expected = (B, out_dim, n1 * patch_size[0], n2 * patch_size[1])
    assert out.shape == expected, (out.shape, expected)
    assert bool(jnp.all(jnp.isfinite(out)))

    ref = reference_forward(x, stage_params, proj_w, proj_b, strides)
    err = float(jnp.max(jnp.abs(out - ref)))
    assert err < 0.15, f"max abs err vs f32 reference: {err}"
    print("KERNEL_OK")
</pallas_src>

<mosaic_0001>
module attributes {stable_mosaic.version = 11 : i64} {
  func.func @_stage_kernel(%arg0: i32, %arg1: i32, %arg2: memref<128x128xf32, #tpu.memory_space<vmem>>, %arg3: memref<1x128x128xbf16, #tpu.memory_space<vmem>>, %arg4: memref<1x128xf32, #tpu.memory_space<vmem>>, %arg5: memref<1x128xf32, #tpu.memory_space<vmem>>, %arg6: memref<1x128xf32, #tpu.memory_space<vmem>>, %arg7: memref<128x128xbf16, #tpu.memory_space<vmem>>) attributes {dimension_semantics = [#tpu.dimension_semantics<parallel>, #tpu.dimension_semantics<parallel>], iteration_bounds = array<i64: 1, 4>, scalar_prefetch = 0 : i64, scratch_operands = 0 : i64, tpu.core_type = #tpu.core_type<tc>, window_params = [{transform_indices = @transform_0, window_bounds = array<i64: 128, 128>}, {transform_indices = @transform_1, window_bounds = array<i64: 1, 128, 128>}, {pipeline_mode = #tpu.pipeline_mode<synchronous>, transform_indices = @transform_2, window_bounds = array<i64: 1, 128>}, {pipeline_mode = #tpu.pipeline_mode<synchronous>, transform_indices = @transform_3, window_bounds = array<i64: 1, 128>}, {pipeline_mode = #tpu.pipeline_mode<synchronous>, transform_indices = @transform_4, window_bounds = array<i64: 1, 128>}, {transform_indices = @transform_5, window_bounds = array<i64: 128, 128>}]} {
    %c0 = arith.constant 0 : index
    %c0_0 = arith.constant 0 : index
    %0 = vector.load %arg2[%c0, %c0_0] : memref<128x128xf32, #tpu.memory_space<vmem>>, vector<128x128xf32>
    %1 = arith.truncf %0 : vector<128x128xf32> to vector<128x128xbf16>
    %c0_1 = arith.constant 0 : index
    %c0_2 = arith.constant 0 : index
    %2 = vector.load %arg4[%c0_1, %c0_2] : memref<1x128xf32, #tpu.memory_space<vmem>>, vector<1x128xf32>
    %c0_3 = arith.constant 0 : index
    %c0_4 = arith.constant 0 : index
    %3 = vector.load %arg5[%c0_3, %c0_4] : memref<1x128xf32, #tpu.memory_space<vmem>>, vector<1x128xf32>
    %c0_5 = arith.constant 0 : index
    %c0_6 = arith.constant 0 : index
    %4 = vector.load %arg6[%c0_5, %c0_6] : memref<1x128xf32, #tpu.memory_space<vmem>>, vector<1x128xf32>
    %c0_7 = arith.constant 0 : index
    %c0_8 = arith.constant 0 : index
    %c0_9 = arith.constant 0 : index
    %5 = vector.load %arg3[%c0_7, %c0_8, %c0_9] : memref<1x128x128xbf16, #tpu.memory_space<vmem>>, vector<1x128x128xbf16>
    %6 = vector.shape_cast %5 : vector<1x128x128xbf16> to vector<128x128xbf16>
    %cst = arith.constant dense<0.000000e+00> : vector<128x128xf32>
    %7 = tpu.matmul %1, %6, %cst {dimension_numbers = #tpu.dot_dimension_numbers<[1], [0], [0], [1], [0, 0, 1, 1], [], []>} : vector<128x128xbf16>, vector<128x128xbf16>, vector<128x128xf32> -> vector<128x128xf32>
    %8 = vector.broadcast %2 : vector<1x128xf32> to vector<128x128xf32>
    %9 = arith.addf %7, %8 : vector<128x128xf32>
    %cst_10 = arith.constant dense<0.000000e+00> : vector<128xf32>
    %10 = vector.multi_reduction <add>, %9, %cst_10 [1] : vector<128x128xf32> to vector<128xf32>
    %11 = vector.shape_cast %10 : vector<128xf32> to vector<128x1xf32>
    %cst_11 = arith.constant 1.280000e+02 : f32
    %12 = vector.broadcast %cst_11 : f32 to vector<128x1xf32>
    %13 = arith.divf %11, %12 : vector<128x1xf32>
    %14 = arith.mulf %9, %9 : vector<128x128xf32>
    %cst_12 = arith.constant dense<0.000000e+00> : vector<128xf32>
    %15 = vector.multi_reduction <add>, %14, %cst_12 [1] : vector<128x128xf32> to vector<128xf32>
    %16 = vector.shape_cast %15 : vector<128xf32> to vector<128x1xf32>
    %cst_13 = arith.constant 1.280000e+02 : f32
    %17 = vector.broadcast %cst_13 : f32 to vector<128x1xf32>
    %18 = arith.divf %16, %17 : vector<128x1xf32>
    %19 = arith.mulf %13, %13 : vector<128x1xf32>
    %20 = arith.subf %18, %19 : vector<128x1xf32>
    %21 = vector.broadcast %13 : vector<128x1xf32> to vector<128x128xf32>
    %22 = arith.subf %9, %21 : vector<128x128xf32>
    %cst_14 = arith.constant 9.99999974E-6 : f32
    %23 = vector.broadcast %cst_14 : f32 to vector<128x1xf32>
    %24 = arith.addf %20, %23 : vector<128x1xf32>
    %25 = math.rsqrt %24 : vector<128x1xf32>
    %26 = vector.broadcast %25 : vector<128x1xf32> to vector<128x128xf32>
    %27 = arith.mulf %22, %26 : vector<128x128xf32>
    %28 = vector.broadcast %3 : vector<1x128xf32> to vector<128x128xf32>
    %29 = arith.mulf %27, %28 : vector<128x128xf32>
    %30 = vector.broadcast %4 : vector<1x128xf32> to vector<128x128xf32>
    %31 = arith.addf %29, %30 : vector<128x128xf32>
    %cst_15 = arith.constant 5.000000e-01 : f32
    %32 = vector.broadcast %cst_15 : f32 to vector<128x128xf32>
    %33 = arith.mulf %32, %31 : vector<128x128xf32>
    %cst_16 = arith.constant 0.707106769 : f32
    %34 = vector.broadcast %cst_16 : f32 to vector<128x128xf32>
    %35 = arith.mulf %31, %34 : vector<128x128xf32>
    %36 = math.erf %35 : vector<128x128xf32>
    %cst_17 = arith.constant 1.000000e+00 : f32
    %37 = vector.broadcast %cst_17 : f32 to vector<128x128xf32>
    %38 = arith.addf %37, %36 : vector<128x128xf32>
    %39 = arith.mulf %33, %38 : vector<128x128xf32>
    %40 = arith.truncf %39 : vector<128x128xf32> to vector<128x128xbf16>
    %c0_18 = arith.constant 0 : index
    %c0_19 = arith.constant 0 : index
    %41 = vector.load %arg7[%c0_18, %c0_19] : memref<128x128xbf16, #tpu.memory_space<vmem>>, vector<128x128xbf16>
    tpu.vector_store %arg7[%c0_18, %c0_19], %40 {strides = array<i32>} : memref<128x128xbf16, #tpu.memory_space<vmem>>, vector<128x128xbf16>,
    return
  }
  func.func @transform_0(%arg0: i32, %arg1: i32) -> (i32, i32) {
    %c0_i32 = arith.constant 0 : i32
    %c0_i32_0 = arith.constant 0 : i32
    return %arg0, %c0_i32 : i32, i32
  }
  func.func @transform_1(%arg0: i32, %arg1: i32) -> (i32, i32, i32) {
    %c0_i32 = arith.constant 0 : i32
    %c0_i32_0 = arith.constant 0 : i32
    %c0_i32_1 = arith.constant 0 : i32
    return %arg1, %c0_i32, %c0_i32_0 : i32, i32, i32
  }
  func.func @transform_2(%arg0: i32, %arg1: i32) -> (i32, i32) {
    %c0_i32 = arith.constant 0 : i32
    %c0_i32_0 = arith.constant 0 : i32
    %c0_i32_1 = arith.constant 0 : i32
    return %c0_i32, %c0_i32_0 : i32, i32
  }
  func.func @transform_3(%arg0: i32, %arg1: i32) -> (i32, i32) {
    %c0_i32 = arith.constant 0 : i32
    %c0_i32_0 = arith.constant 0 : i32
    %c0_i32_1 = arith.constant 0 : i32
    return %c0_i32, %c0_i32_0 : i32, i32
  }
  func.func @transform_4(%arg0: i32, %arg1: i32) -> (i32, i32) {
    %c0_i32 = arith.constant 0 : i32
    %c0_i32_0 = arith.constant 0 : i32
    %c0_i32_1 = arith.constant 0 : i32
    return %c0_i32, %c0_i32_0 : i32, i32
  }
  func.func @transform_5(%arg0: i32, %arg1: i32) -> (i32, i32) {
    %c0_i32 = arith.constant 0 : i32
    return %arg0, %arg1 : i32, i32
  }
}

module attributes {stable_mosaic.version = 11 : i64} {
  func.func @_last_stage_kernel(%arg0: i32, %arg1: i32, %arg2: memref<512x128xbf16, #tpu.memory_space<vmem>>, %arg3: memref<1x128x128xbf16, #tpu.memory_space<vmem>>, %arg4: memref<1x128xf32, #tpu.memory_space<vmem>>, %arg5: memref<1x128xf32, #tpu.memory_space<vmem>>, %arg6: memref<1x128xf32, #tpu.memory_space<vmem>>, %arg7: memref<128x8xbf16, #tpu.memory_space<vmem>>, %arg8: memref<1x8xf32, #tpu.memory_space<vmem>>, %arg9: memref<1x512x8xf32, #tpu.memory_space<vmem>>) attributes {dimension_semantics = [#tpu.dimension_semantics<parallel>, #tpu.dimension_semantics<parallel>], iteration_bounds = array<i64: 1, 4>, scalar_prefetch = 0 : i64, scratch_operands = 0 : i64, tpu.core_type = #tpu.core_type<tc>, window_params = [{transform_indices = @transform_0, window_bounds = array<i64: 512, 128>}, {transform_indices = @transform_1, window_bounds = array<i64: 1, 128, 128>}, {pipeline_mode = #tpu.pipeline_mode<synchronous>, transform_indices = @transform_2, window_bounds = array<i64: 1, 128>}, {pipeline_mode = #tpu.pipeline_mode<synchronous>, transform_indices = @transform_3, window_bounds = array<i64: 1, 128>}, {pipeline_mode = #tpu.pipeline_mode<synchronous>, transform_indices = @transform_4, window_bounds = array<i64: 1, 128>}, {pipeline_mode = #tpu.pipeline_mode<synchronous>, transform_indices = @transform_5, window_bounds = array<i64: 128, 8>}, {pipeline_mode = #tpu.pipeline_mode<synchronous>, transform_indices = @transform_6, window_bounds = array<i64: 1, 8>}, {transform_indices = @transform_7, window_bounds = array<i64: 1, 512, 8>}]} {
    %c0 = arith.constant 0 : index
    %c0_0 = arith.constant 0 : index
    %0 = vector.load %arg2[%c0, %c0_0] : memref<512x128xbf16, #tpu.memory_space<vmem>>, vector<512x128xbf16>
    %c0_1 = arith.constant 0 : index
    %c0_2 = arith.constant 0 : index
    %c0_3 = arith.constant 0 : index
    %1 = vector.load %arg3[%c0_1, %c0_2, %c0_3] : memref<1x128x128xbf16, #tpu.memory_space<vmem>>, vector<1x128x128xbf16>
    %2 = vector.shape_cast %1 : vector<1x128x128xbf16> to vector<128x128xbf16>
    %cst = arith.constant dense<0.000000e+00> : vector<512x128xf32>
    %3 = tpu.matmul %0, %2, %cst {dimension_numbers = #tpu.dot_dimension_numbers<[1], [0], [0], [1], [0, 0, 1, 1], [], []>} : vector<512x128xbf16>, vector<128x128xbf16>, vector<512x128xf32> -> vector<512x128xf32>
    %c0_4 = arith.constant 0 : index
    %c0_5 = arith.constant 0 : index
    %4 = vector.load %arg4[%c0_4, %c0_5] : memref<1x128xf32, #tpu.memory_space<vmem>>, vector<1x128xf32>
    %5 = vector.broadcast %4 : vector<1x128xf32> to vector<512x128xf32>
    %6 = arith.addf %3, %5 : vector<512x128xf32>
    %cst_6 = arith.constant dense<0.000000e+00> : vector<512xf32>
    %7 = vector.multi_reduction <add>, %6, %cst_6 [1] : vector<512x128xf32> to vector<512xf32>
    %8 = vector.shape_cast %7 : vector<512xf32> to vector<512x1xf32>
    %cst_7 = arith.constant 1.280000e+02 : f32
    %9 = vector.broadcast %cst_7 : f32 to vector<512x1xf32>
    %10 = arith.divf %8, %9 : vector<512x1xf32>
    %11 = arith.mulf %6, %6 : vector<512x128xf32>
    %cst_8 = arith.constant dense<0.000000e+00> : vector<512xf32>
    %12 = vector.multi_reduction <add>, %11, %cst_8 [1] : vector<512x128xf32> to vector<512xf32>
    %13 = vector.shape_cast %12 : vector<512xf32> to vector<512x1xf32>
    %cst_9 = arith.constant 1.280000e+02 : f32
    %14 = vector.broadcast %cst_9 : f32 to vector<512x1xf32>
    %15 = arith.divf %13, %14 : vector<512x1xf32>
    %16 = arith.mulf %10, %10 : vector<512x1xf32>
    %17 = arith.subf %15, %16 : vector<512x1xf32>
    %18 = vector.broadcast %10 : vector<512x1xf32> to vector<512x128xf32>
    %19 = arith.subf %6, %18 : vector<512x128xf32>
    %cst_10 = arith.constant 9.99999974E-6 : f32
    %20 = vector.broadcast %cst_10 : f32 to vector<512x1xf32>
    %21 = arith.addf %17, %20 : vector<512x1xf32>
    %22 = math.rsqrt %21 : vector<512x1xf32>
    %23 = vector.broadcast %22 : vector<512x1xf32> to vector<512x128xf32>
    %24 = arith.mulf %19, %23 : vector<512x128xf32>
    %c0_11 = arith.constant 0 : index
    %c0_12 = arith.constant 0 : index
    %25 = vector.load %arg5[%c0_11, %c0_12] : memref<1x128xf32, #tpu.memory_space<vmem>>, vector<1x128xf32>
    %26 = vector.broadcast %25 : vector<1x128xf32> to vector<512x128xf32>
    %27 = arith.mulf %24, %26 : vector<512x128xf32>
    %c0_13 = arith.constant 0 : index
    %c0_14 = arith.constant 0 : index
    %28 = vector.load %arg6[%c0_13, %c0_14] : memref<1x128xf32, #tpu.memory_space<vmem>>, vector<1x128xf32>
    %29 = vector.broadcast %28 : vector<1x128xf32> to vector<512x128xf32>
    %30 = arith.addf %27, %29 : vector<512x128xf32>
    %cst_15 = arith.constant 5.000000e-01 : f32
    %31 = vector.broadcast %cst_15 : f32 to vector<512x128xf32>
    %32 = arith.mulf %31, %30 : vector<512x128xf32>
    %cst_16 = arith.constant 0.707106769 : f32
    %33 = vector.broadcast %cst_16 : f32 to vector<512x128xf32>
    %34 = arith.mulf %30, %33 : vector<512x128xf32>
    %35 = math.erf %34 : vector<512x128xf32>
    %cst_17 = arith.constant 1.000000e+00 : f32
    %36 = vector.broadcast %cst_17 : f32 to vector<512x128xf32>
    %37 = arith.addf %36, %35 : vector<512x128xf32>
    %38 = arith.mulf %32, %37 : vector<512x128xf32>
    %39 = arith.truncf %38 : vector<512x128xf32> to vector<512x128xbf16>
    %c0_18 = arith.constant 0 : index
    %c0_19 = arith.constant 0 : index
    %40 = vector.load %arg7[%c0_18, %c0_19] : memref<128x8xbf16, #tpu.memory_space<vmem>>, vector<128x8xbf16>
    %cst_20 = arith.constant dense<0.000000e+00> : vector<512x8xf32>
    %41 = tpu.matmul %39, %40, %cst_20 {dimension_numbers = #tpu.dot_dimension_numbers<[1], [0], [0], [1], [0, 0, 1, 1], [], []>} : vector<512x128xbf16>, vector<128x8xbf16>, vector<512x8xf32> -> vector<512x8xf32>
    %c0_21 = arith.constant 0 : index
    %c0_22 = arith.constant 0 : index
    %42 = vector.load %arg8[%c0_21, %c0_22] : memref<1x8xf32, #tpu.memory_space<vmem>>, vector<1x8xf32>
    %43 = vector.broadcast %42 : vector<1x8xf32> to vector<512x8xf32>
    %44 = arith.addf %41, %43 : vector<512x8xf32>
    %c0_23 = arith.constant 0 : index
    %c0_24 = arith.constant 0 : index
    %c0_25 = arith.constant 0 : index
    %45 = vector.load %arg9[%c0_23, %c0_24, %c0_25] : memref<1x512x8xf32, #tpu.memory_space<vmem>>, vector<1x512x8xf32>
    %46 = vector.shape_cast %45 : vector<1x512x8xf32> to vector<512x8xf32>
    %47 = vector.shape_cast %44 : vector<512x8xf32> to vector<1x512x8xf32>
    tpu.vector_store %arg9[%c0_23, %c0_24, %c0_25], %47 {strides = array<i32>} : memref<1x512x8xf32, #tpu.memory_space<vmem>>, vector<1x512x8xf32>,
    return
  }
  func.func @transform_0(%arg0: i32, %arg1: i32) -> (i32, i32) {
    %c0_i32 = arith.constant 0 : i32
    %c0_i32_0 = arith.constant 0 : i32
    return %arg0, %c0_i32 : i32, i32
  }
  func.func @transform_1(%arg0: i32, %arg1: i32) -> (i32, i32, i32) {
    %c0_i32 = arith.constant 0 : i32
    %c0_i32_0 = arith.constant 0 : i32
    %c0_i32_1 = arith.constant 0 : i32
    return %arg1, %c0_i32, %c0_i32_0 : i32, i32, i32
  }
  func.func @transform_2(%arg0: i32, %arg1: i32) -> (i32, i32) {
    %c0_i32 = arith.constant 0 : i32
    %c0_i32_0 = arith.constant 0 : i32
    %c0_i32_1 = arith.constant 0 : i32
    return %c0_i32, %c0_i32_0 : i32, i32
  }
  func.func @transform_3(%arg0: i32, %arg1: i32) -> (i32, i32) {
    %c0_i32 = arith.constant 0 : i32
    %c0_i32_0 = arith.constant 0 : i32
    %c0_i32_1 = arith.constant 0 : i32
    return %c0_i32, %c0_i32_0 : i32, i32
  }
  func.func @transform_4(%arg0: i32, %arg1: i32) -> (i32, i32) {
    %c0_i32 = arith.constant 0 : i32
    %c0_i32_0 = arith.constant 0 : i32
    %c0_i32_1 = arith.constant 0 : i32
    return %c0_i32, %c0_i32_0 : i32, i32
  }
  func.func @transform_5(%arg0: i32, %arg1: i32) -> (i32, i32) {
    %c0_i32 = arith.constant 0 : i32
    %c0_i32_0 = arith.constant 0 : i32
    %c0_i32_1 = arith.constant 0 : i32
    return %c0_i32, %c0_i32_0 : i32, i32
  }
  func.func @transform_6(%arg0: i32, %arg1: i32) -> (i32, i32) {
    %c0_i32 = arith.constant 0 : i32
    %c0_i32_0 = arith.constant 0 : i32
    %c0_i32_1 = arith.constant 0 : i32
    return %c0_i32, %c0_i32_0 : i32, i32
  }
  func.func @transform_7(%arg0: i32, %arg1: i32) -> (i32, i32, i32) {
    %c0_i32 = arith.constant 0 : i32
    %c0_i32_0 = arith.constant 0 : i32
    return %arg1, %arg0, %c0_i32 : i32, i32, i32
  }
}

</mosaic_0001>

<llo_original>
// kernel: conv_head_forward.2
$region0: #{conv_head_forward.2}
  #allocation0 [shape = 'u32[]', space=smem, size = 0x4, offset = 0x4, fixed_abs, tag = 'smem constant byte address 0x4 - core index']
  #allocation1 [shape = 'u32[72,128]{1,0:T(1,128)}', space=vmem, size = 0x9000, scoped, tag = 'internal scratch']
  %s0 = inlined_call_operand.hbm [shape: f32[128,128], index: 0, kind: input, shape index: {}]
  %s1 = inlined_call_operand.hbm [shape: bf16[4,128,128], index: 1, kind: input, shape index: {}]
  %s2 = inlined_call_operand.vmem [shape: f32[1,128], index: 2, kind: input, shape index: {}]
  %s3 = inlined_call_operand.vmem [shape: f32[1,128], index: 3, kind: input, shape index: {}]
  %s4 = inlined_call_operand.vmem [shape: f32[1,128], index: 4, kind: input, shape index: {}]
  %s5 = inlined_call_operand.vmem [shape: bf16[128,512], index: 5, kind: output, shape index: {}]
  %s6 = sld [smem:[#allocation0]]
  $region98: #{conv_head_forward.2} parent=0
    _
  %s8 = ssub.s32 1, %s6
  %s9 = scalar_select 0, %s8, %s6
  $region1: #{conv_head_forward.2} parent=0
    #allocation2 [shape = 'u8[65536]{0}', space=vmem, size = 0x10000, scoped, tag = 'input window, operand 0, single buffered']
    #allocation3 [shape = 's32[2]{0}', space=sflag, size = 0x8, scoped, tag = 'scoped memory for conv_head_forward.2']
    #allocation4 [shape = 'u8[65536]{0}', space=vmem, size = 0x10000, scoped, tag = 'input window, operand 1']
    #allocation5 [shape = 's32[2]{0}', space=sflag, size = 0x8, scoped, tag = 'scoped memory for conv_head_forward.2']
    #allocation6 [shape = 'u8[65536]{0}', space=vmem, size = 0x10000, scoped, tag = 'output window, operand 0']
    %10 = vsyncpa [#allocation3], 0
    %11 = vsyncpa [#allocation5], 0
    %s12 = scalar_lea.sflag [#allocation5], 1
    %13 = vsyncpa %s12, 0
    loop: start=0, step=1, limit=6
    $region2: #{conv_head_forward.2} parent=1 // loop_pre_header
      _
    $region3: #{conv_head_forward.2} parent=1 // loop_header
      %s15 = sphi 0, %s19
      %p16 = scmp.ge.s32.totalorder %s15, 6
      %s22 = sphi 0, %s34
      %s23 = sphi 0, %s30
      %s24 = sphi 0, %s22
      %s25 = sphi 0, %s23
      %s26 = sphi 0, %s24
      %s27 = sphi 0, %s25
      %s37 = sphi 0, %s39
      %s40 = sphi 0, %s37
      %s41 = sphi 0, %s40
      %s57 = sphi 0, %s41
      %s63 = sphi 0, %s65
      %s66 = sphi 0, %s63
      %s67 = sphi 0, %s66
      %s83 = sphi 0, %s67
      %s87 = sphi 0, %s87
      %s89 = sphi 0, %s87
      %s90 = sphi 0, %s89
      %s104 = sphi 0, %s90
      %s108 = sphi 0, %s108
      %s110 = sphi 0, %s108
      %s111 = sphi 0, %s110
      %s125 = sphi 0, %s111
      %s129 = sphi 0, %s129
      %s131 = sphi 0, %s129
      %s132 = sphi 0, %s131
      %s146 = sphi 0, %s132
      %s154 = sphi 0, %s156
      %s157 = sphi 0, %s154
      %s158 = sphi 0, %s157
      %s174 = sphi 0, %s158
    $region4: #{conv_head_forward.2} parent=1 // loop_header_branch
      %18 = sbr.rel (%p16) target = $region8
    $region5: #{conv_head_forward.2} parent=1 // loop_body
      %s20 = ssub.s32 %s15, 1
      %s21 = ssub.s32 %s15, 2
      %s28 = sadd.s32 1, %s23
      %p29 = scmp.ge.s32.totalorder %s28, 4
      %s30 = scalar_select %p29, 0, %s28
      %s31 = sadd.s32 1, %s22
      %s32 = scalar_select %p29, %s31, %s22
      %p33 = scmp.ge.s32.totalorder %s32, 1
      %s34 = scalar_select %p33, 0, %s32
      %s35 = ssub.s32 %s22, %s34
      %p36 = scmp.eq.s32.totalorder %s35, 0
      %s38 = sadd.s32 %s37, 1
      %s39 = scalar_select %p36, %s37, %s38
      %p42 = pneg %p36
      %p43 = scmp.eq.s32.totalorder %s15, 3
      %p44 = por %p42, %p43
      %p45 = scmp.ne.s32.totalorder %s37, %s40
      %p46 = scmp.eq.s32.totalorder %s15, 0
      %p47 = por %p45, %p46
      %p48 = scmp.ne.s32.totalorder %s37, %s40
      %p49 = scmp.eq.s32.totalorder %s20, 3
      %p50 = por %p48, %p49
      %p51 = scmp.ne.s32.totalorder %s40, %s41
      %p52 = scmp.eq.s32.totalorder %s20, 0
      %p53 = por %p51, %p52
      %p54 = scmp.ne.s32.totalorder %s40, %s41
      %p55 = scmp.eq.s32.totalorder %s21, 3
      %p56 = por %p54, %p55
      %p58 = scmp.ne.s32.totalorder %s41, %s57
      %p59 = scmp.eq.s32.totalorder %s21, 0
      %p60 = por %p58, %p59
      %s61 = ssub.s32 %s23, %s30
      %p62 = scmp.eq.s32.totalorder %s61, 0
      %s64 = sadd.s32 %s63, 1
      %s65 = scalar_select %p62, %s63, %s64
      %p68 = pneg %p62
      %p69 = scmp.eq.s32.totalorder %s15, 3
      %p70 = por %p68, %p69
      %p71 = scmp.ne.s32.totalorder %s63, %s66
      %p72 = scmp.eq.s32.totalorder %s15, 0
      %p73 = por %p71, %p72
      %p74 = scmp.ne.s32.totalorder %s63, %s66
      %p75 = scmp.eq.s32.totalorder %s20, 3
      %p76 = por %p74, %p75
      %p77 = scmp.ne.s32.totalorder %s66, %s67
      %p78 = scmp.eq.s32.totalorder %s20, 0
      %p79 = por %p77, %p78
      %p80 = scmp.ne.s32.totalorder %s66, %s67
      %p81 = scmp.eq.s32.totalorder %s21, 3
      %p82 = por %p80, %p81
      %p84 = scmp.ne.s32.totalorder %s67, %s83
      %p85 = scmp.eq.s32.totalorder %s21, 0
      %p86 = por %p84, %p85
      %s88 = sadd.s32 %s87, 1
      %p91 = scmp.eq.s32.totalorder %s15, 3
      %p92 = scmp.ne.s32.totalorder %s87, %s89
      %p93 = scmp.eq.s32.totalorder %s15, 0
      %p94 = por %p92, %p93
      %p95 = scmp.ne.s32.totalorder %s87, %s89
      %p96 = scmp.eq.s32.totalorder %s20, 3
      %p97 = por %p95, %p96
      %p98 = scmp.ne.s32.totalorder %s89, %s90
      %p99 = scmp.eq.s32.totalorder %s20, 0
      %p100 = por %p98, %p99
      %p101 = scmp.ne.s32.totalorder %s89, %s90
      %p102 = scmp.eq.s32.totalorder %s21, 3
      %p103 = por %p101, %p102
      %p105 = scmp.ne.s32.totalorder %s90, %s104
      %p106 = scmp.eq.s32.totalorder %s21, 0
      %p107 = por %p105, %p106
      %s109 = sadd.s32 %s108, 1
      %p112 = scmp.eq.s32.totalorder %s15, 3
      %p113 = scmp.ne.s32.totalorder %s108, %s110
      %p114 = scmp.eq.s32.totalorder %s15, 0
      %p115 = por %p113, %p114
      %p116 = scmp.ne.s32.totalorder %s108, %s110
      %p117 = scmp.eq.s32.totalorder %s20, 3
      %p118 = por %p116, %p117
      %p119 = scmp.ne.s32.totalorder %s110, %s111
      %p120 = scmp.eq.s32.totalorder %s20, 0
      %p121 = por %p119, %p120
      %p122 = scmp.ne.s32.totalorder %s110, %s111
      %p123 = scmp.eq.s32.totalorder %s21, 3
      %p124 = por %p122, %p123
      %p126 = scmp.ne.s32.totalorder %s111, %s125
      %p127 = scmp.eq.s32.totalorder %s21, 0
      %p128 = por %p126, %p127
      %s130 = sadd.s32 %s129, 1
      %p133 = scmp.eq.s32.totalorder %s15, 3
      %p134 = scmp.ne.s32.totalorder %s129, %s131
      %p135 = scmp.eq.s32.totalorder %s15, 0
      %p136 = por %p134, %p135
      %p137 = scmp.ne.s32.totalorder %s129, %s131
      %p138 = scmp.eq.s32.totalorder %s20, 3
      %p139 = por %p137, %p138
      %p140 = scmp.ne.s32.totalorder %s131, %s132
      %p141 = scmp.eq.s32.totalorder %s20, 0
      %p142 = por %p140, %p141
      %p143 = scmp.ne.s32.totalorder %s131, %s132
      %p144 = scmp.eq.s32.totalorder %s21, 3
      %p145 = por %p143, %p144
      %p147 = scmp.ne.s32.totalorder %s132, %s146
      %p148 = scmp.eq.s32.totalorder %s21, 0
      %p149 = por %p147, %p148
      %s150 = ssub.s32 %s22, %s34
      %s151 = ssub.s32 %s23, %s30
      %s152 = sor.u32 %s150, %s151
      %p153 = scmp.eq.s32.totalorder %s152, 0
      %s155 = sadd.s32 %s154, 1
      %s156 = scalar_select %p153, %s154, %s155
      %p159 = pneg %p153
      %p160 = scmp.eq.s32.totalorder %s15, 3
      %p161 = por %p159, %p160
      %p162 = scmp.ne.s32.totalorder %s154, %s157
      %p163 = scmp.eq.s32.totalorder %s15, 0
      %p164 = por %p162, %p163
      %p165 = scmp.ne.s32.totalorder %s154, %s157
      %p166 = scmp.eq.s32.totalorder %s20, 3
      %p167 = por %p165, %p166
      %p168 = scmp.ne.s32.totalorder %s157, %s158
      %p169 = scmp.eq.s32.totalorder %s20, 0
      %p170 = por %p168, %p169
      %p171 = scmp.ne.s32.totalorder %s157, %s158
      %p172 = scmp.eq.s32.totalorder %s21, 3
      %p173 = por %p171, %p172
      %p175 = scmp.ne.s32.totalorder %s158, %s174
      %p176 = scmp.eq.s32.totalorder %s21, 0
      %p177 = por %p175, %p176
      %p178 = scmp.le.s32.totalorder 1, %s15
      %p179 = scmp.lt.s32.totalorder %s15, 5
      %p180 = pnand %p178, %p179
      %p181 = pneg %p180
      // Predicated region
      $region9: #{conv_head_forward.2} parent=5 // pred_check
        _
      $region10: #{conv_head_forward.2} parent=5 // pred_check_branch
        %183 = sbr.rel (%p180) target = $region12
      $region11: #{conv_head_forward.2} parent=5 // pred_region
        %s184 = ssub.s32 %s15, 1
        // Predicated region
        $region13: #{conv_head_forward.2} parent=11 // pred_check
          %p185 = pneg %p53
        $region14: #{conv_head_forward.2} parent=11 // pred_check_branch
          %187 = sbr.rel (%p185) target = $region16
        $region15: #{conv_head_forward.2} parent=11 // pred_region
          %s188 = smul.u32 16, %s24
          %190 = vsyncadd [#allocation3], 0
          %s191 = smul.addr %s188, 8
          %s192 = scalar_lea.hbm %s0, %s191
          %s193 = sshll.u32 %s192, 4
          %s194 = int_to_ptr.hbm [resolvable:$true] %s193
          %s195 = sshll.u32 [#allocation2], 4
          %s196 = int_to_ptr.vmem [resolvable:$true] %s195
          %201 = dma.hbm_to_vmem [thread:$0]  %s194, 2048, %s196, [#allocation3], 128, 128, 8
        $region16: #{conv_head_forward.2} parent=11 // pred_fallthru
          _
        // Predicated region
        $region17: #{conv_head_forward.2} parent=11 // pred_check
          %p202 = pneg %p100
        $region18: #{conv_head_forward.2} parent=11 // pred_check_branch
          %204 = sbr.rel (%p202) target = $region20
        $region19: #{conv_head_forward.2} parent=11 // pred_region
          _
        $region20: #{conv_head_forward.2} parent=11 // pred_fallthru
          _
        // Predicated region
        $region21: #{conv_head_forward.2} parent=11 // pred_check
          %p205 = pneg %p121
        $region22: #{conv_head_forward.2} parent=11 // pred_check_branch
          %207 = sbr.rel (%p205) target = $region24
        $region23: #{conv_head_forward.2} parent=11 // pred_region
          _
        $region24: #{conv_head_forward.2} parent=11 // pred_fallthru
          _
        // Predicated region
        $region25: #{conv_head_forward.2} parent=11 // pred_check
          %p208 = pneg %p142
        $region26: #{conv_head_forward.2} parent=11 // pred_check_branch
          %210 = sbr.rel (%p208) target = $region28
        $region27: #{conv_head_forward.2} parent=11 // pred_region
          _
        $region28: #{conv_head_forward.2} parent=11 // pred_fallthru
          _
      $region12: #{conv_head_forward.2} parent=5 // pred_fallthru
        _
      %p211 = scmp.lt.s32.totalorder %s15, 4
      // Predicated region
      $region29: #{conv_head_forward.2} parent=5 // pred_check
        %p212 = pneg %p211
      $region30: #{conv_head_forward.2} parent=5 // pred_check_branch
        %214 = sbr.rel (%p212) target = $region32
      $region31: #{conv_head_forward.2} parent=5 // pred_region
        // Predicated region
        $region33: #{conv_head_forward.2} parent=31 // pred_check
          %p215 = pneg %p73
        $region34: #{conv_head_forward.2} parent=31 // pred_check_branch
          %217 = sbr.rel (%p215) target = $region36
        $region35: #{conv_head_forward.2} parent=31 // pred_region
          %s218 = sand.u32 %s63, 1
          %s219 = scalar_lea.sflag [#allocation5], %s218
          %s220 = sand.u32 %s63, 1
          %s221 = smul.addr %s220, 64
          %s222 = scalar_lea.vmem [#allocation4], %s221
          %224 = vsyncadd %s219, 0
          %s225 = smul.addr %s23, 16
          %s226 = smul.addr %s225, 4
          %s227 = scalar_lea.hbm %s1, %s226
          %s228 = sshll.u32 %s227, 4
          %s229 = int_to_ptr.hbm [resolvable:$true] %s228
          %s230 = sshll.u32 %s222, 4
          %s231 = int_to_ptr.vmem [resolvable:$true] %s230
          %236 = dma.hbm_to_vmem [thread:$0]  %s229, 1024, %s231, %s219, 64, 64, 4
        $region36: #{conv_head_forward.2} parent=31 // pred_fallthru
          _
      $region32: #{conv_head_forward.2} parent=5 // pred_fallthru
        _
      %p237 = scmp.le.s32.totalorder 1, %s15
      %p238 = scmp.lt.s32.totalorder %s15, 5
      %p239 = pnand %p237, %p238
      %p240 = pneg %p239
      // Predicated region
      $region37: #{conv_head_forward.2} parent=5 // pred_check
        _
      $region38: #{conv_head_forward.2} parent=5 // pred_check_branch
        %242 = sbr.rel (%p239) target = $region40
      $region39: #{conv_head_forward.2} parent=5 // pred_region
        %s243 = ssub.s32 %s15, 1
        // Predicated region
        $region41: #{conv_head_forward.2} parent=39 // pred_check
          %p244 = pneg %p53
        $region42: #{conv_head_forward.2} parent=39 // pred_check_branch
          %246 = sbr.rel (%p244) target = $region44
        $region43: #{conv_head_forward.2} parent=39 // pred_region
          %248 = dma.done [#allocation3], 2048
        $region44: #{conv_head_forward.2} parent=39 // pred_fallthru
          _
        %s249 = sand.u32 %s66, 1
        %s250 = scalar_lea.sflag [#allocation5], %s249
        %s251 = sand.u32 %s66, 1
        %s252 = smul.addr %s251, 64
        %s253 = scalar_lea.vmem [#allocation4], %s252
        // Predicated region
        $region45: #{conv_head_forward.2} parent=39 // pred_check
          %p254 = pneg %p79
        $region46: #{conv_head_forward.2} parent=39 // pred_check_branch
          %256 = sbr.rel (%p254) target = $region48
        $region47: #{conv_head_forward.2} parent=39 // pred_region
          %258 = dma.done %s250, 1024
        $region48: #{conv_head_forward.2} parent=39 // pred_fallthru
          _
        %p259 = pneg %p53
        %p260 = pneg %p50
        %s261 = sand.u32 %s66, 1
        %s262 = scalar_lea.sflag [#allocation5], %s261
        %s263 = sand.u32 %s66, 1
        %s264 = smul.addr %s263, 64
        %s265 = scalar_lea.vmem [#allocation4], %s264
        %p266 = pneg %p79
        %p267 = pneg %p76
        %p268 = pneg %p100
        %p269 = pneg %p97
        %p270 = pneg %p121
        %p271 = pneg %p118
        %p272 = pneg %p142
        %p273 = pneg %p139
        %p274 = pneg %p170
        %p275 = pneg %p167
        %s276 = sand.u32 %s157, 1
        %s277 = sand.u32 %s157, 1
        %s278 = smul.addr %s277, 64
        %s279 = scalar_lea.vmem [#allocation6], %s278
        %s280 = smul.u32 16, %s24
        %s281 = smul.u32 16, %s24
        %v282 = vld [vmem:[#allocation2] sm:$0xff]
        %v283 = vld [vmem:[#allocation2 + $0x8] sm:$0xff]
        %v284 = vld [vmem:[#allocation2 + $0x10] sm:$0xff]
        %v285 = vld [vmem:[#allocation2 + $0x18] sm:$0xff]
        %v286 = vld [vmem:[#allocation2 + $0x20] sm:$0xff]
        %v287 = vld [vmem:[#allocation2 + $0x28] sm:$0xff]
        %v288 = vld [vmem:[#allocation2 + $0x30] sm:$0xff]
        %v289 = vld [vmem:[#allocation2 + $0x38] sm:$0xff]
        %v290 = vld [vmem:[#allocation2 + $0x40] sm:$0xff]
        %v291 = vld [vmem:[#allocation2 + $0x48] sm:$0xff]
        %v292 = vld [vmem:[#allocation2 + $0x50] sm:$0xff]
        %v293 = vld [vmem:[#allocation2 + $0x58] sm:$0xff]
        %v294 = vld [vmem:[#allocation2 + $0x60] sm:$0xff]
        %v295 = vld [vmem:[#allocation2 + $0x68] sm:$0xff]
        %v296 = vld [vmem:[#allocation2 + $0x70] sm:$0xff]
        %v297 = vld [vmem:[#allocation2 + $0x78] sm:$0xff]
        %v298 = vpack.c.bf16 %v283, %v282
        %v299 = vpack.c.bf16 %v285, %v284
        %v300 = vpack.c.bf16 %v287, %v286
        %v301 = vpack.c.bf16 %v289, %v288
        %v302 = vpack.c.bf16 %v291, %v290
        %v303 = vpack.c.bf16 %v293, %v292
        %v304 = vpack.c.bf16 %v295, %v294
        %v305 = vpack.c.bf16 %v297, %v296
        %v306 = vld [vmem:[%s2] sm:$0x1]
        %v307 = vld [vmem:[%s3] sm:$0x1]
        %v308 = vld [vmem:[%s4] sm:$0x1]
        %v309 = vld [vmem:[%s253] sm:$0xf]
        %v310 = vld [vmem:[%s253 + $0x4] sm:$0xf]
        %v311 = vld [vmem:[%s253 + $0x8] sm:$0xf]
        %v312 = vld [vmem:[%s253 + $0xc] sm:$0xf]
        %v313 = vld [vmem:[%s253 + $0x10] sm:$0xf]
        %v314 = vld [vmem:[%s253 + $0x14] sm:$0xf]
        %v315 = vld [vmem:[%s253 + $0x18] sm:$0xf]
        %v316 = vld [vmem:[%s253 + $0x1c] sm:$0xf]
        %v317 = vld [vmem:[%s253 + $0x20] sm:$0xf]
        %v318 = vld [vmem:[%s253 + $0x24] sm:$0xf]
        %v319 = vld [vmem:[%s253 + $0x28] sm:$0xf]
        %v320 = vld [vmem:[%s253 + $0x2c] sm:$0xf]
        %v321 = vld [vmem:[%s253 + $0x30] sm:$0xf]
        %v322 = vld [vmem:[%s253 + $0x34] sm:$0xf]
        %v323 = vld [vmem:[%s253 + $0x38] sm:$0xf]
        %v324 = vld [vmem:[%s253 + $0x3c] sm:$0xf]
        %v326 = vperm.slane %v306, 0
        %v344 = vunpack.c.l.b16 %v309
        %v345 = vunpack.c.l.b16 %v310
        %v346 = vunpack.c.l.b16 %v311
        %v347 = vunpack.c.l.b16 %v312
        %v348 = vunpack.c.l.b16 %v313
        %v349 = vunpack.c.l.b16 %v314
        %v350 = vunpack.c.l.b16 %v315
        %v351 = vunpack.c.l.b16 %v316
        %v352 = vunpack.c.l.b16 %v317
        %v353 = vunpack.c.l.b16 %v318
        %v354 = vunpack.c.l.b16 %v319
        %v355 = vunpack.c.l.b16 %v320
        %v356 = vunpack.c.l.b16 %v321
        %v357 = vunpack.c.l.b16 %v322
        %v358 = vunpack.c.l.b16 %v323
        %v359 = vunpack.c.l.b16 %v324
        %v360 = vpack.c.b16 %v345, %v344
        %v361 = vpack.c.b16 %v347, %v346
        %v362 = vpack.c.b16 %v349, %v348
        %v363 = vpack.c.b16 %v351, %v350
        %v364 = vpack.c.b16 %v353, %v352
        %v365 = vpack.c.b16 %v355, %v354
        %v366 = vpack.c.b16 %v357, %v356
        %v367 = vpack.c.b16 %v359, %v358
        %376 = vmatpush.bf16.msra.mxu0 %v367
        %377 = vmatpush.bf16.msra.mxu0 %v366
        %378 = vmatpush.bf16.msra.mxu0 %v365
        %379 = vmatpush.bf16.msra.mxu0 %v364
        %380 = vmatpush.bf16.msra.mxu0 %v363
        %381 = vmatpush.bf16.msra.mxu0 %v362
        %382 = vmatpush.bf16.msra.mxu0 %v361
        %383 = vmatpush.bf16.msra.mxu0 %v360
        %384 = vmatmul.bf16.gmra.mxu0 %v298
        %v385 = vpop.f32.mrf.mxu0
        %v386 = vadd.f32 %v326, %v385
        %v387 = vpop.f32.mrf.mxu0
        %v388 = vadd.f32 %v326, %v387
        %389 = vmatmul.bf16.gmra.mxu0 %v299
        %v390 = vpop.f32.mrf.mxu0
        %v391 = vadd.f32 %v326, %v390
        %v392 = vpop.f32.mrf.mxu0
        %v393 = vadd.f32 %v326, %v392
        %394 = vmatmul.bf16.gmra.mxu0 %v300
        %v395 = vpop.f32.mrf.mxu0
        %v396 = vadd.f32 %v326, %v395
        %v397 = vpop.f32.mrf.mxu0
        %v398 = vadd.f32 %v326, %v397
        %399 = vmatmul.bf16.gmra.mxu0 %v301
        %v400 = vpop.f32.mrf.mxu0
        %v401 = vadd.f32 %v326, %v400
        %v402 = vpop.f32.mrf.mxu0
        %v403 = vadd.f32 %v326, %v402
        %404 = vmatmul.bf16.gmra.mxu0 %v302
        %v405 = vpop.f32.mrf.mxu0
        %v406 = vadd.f32 %v326, %v405
        %v407 = vpop.f32.mrf.mxu0
        %v408 = vadd.f32 %v326, %v407
        %409 = vmatmul.bf16.gmra.mxu0 %v303
        %v410 = vpop.f32.mrf.mxu0
        %v411 = vadd.f32 %v326, %v410
        %v412 = vpop.f32.mrf.mxu0
        %v413 = vadd.f32 %v326, %v412
        %414 = vmatmul.bf16.gmra.mxu0 %v304
        %v415 = vpop.f32.mrf.mxu0
        %v416 = vadd.f32 %v326, %v415
        %v417 = vpop.f32.mrf.mxu0
        %v418 = vadd.f32 %v326, %v417
        %419 = vmatmul.bf16.gmra.mxu0 %v305
        %v420 = vpop.f32.mrf.mxu0
        %v421 = vadd.f32 %v326, %v420
        %v422 = vpop.f32.mrf.mxu0
        %v423 = vadd.f32 %v326, %v422
        %424 = vdwg.mxu0
        %425 = vadd.xlane.f32.xlu0 %v386
        %v426 = vpop.xlane.xlu0 %425
        %427 = vadd.xlane.f32.xlu0 %v388
        %v428 = vpop.xlane.xlu0 %427
        %429 = vadd.xlane.f32.xlu0 %v391
        %v430 = vpop.xlane.xlu0 %429
        %431 = vadd.xlane.f32.xlu0 %v393
        %v432 = vpop.xlane.xlu0 %431
        %433 = vadd.xlane.f32.xlu0 %v396
        %v434 = vpop.xlane.xlu0 %433
        %435 = vadd.xlane.f32.xlu0 %v398
        %v436 = vpop.xlane.xlu0 %435
        %437 = vadd.xlane.f32.xlu0 %v401
        %v438 = vpop.xlane.xlu0 %437
        %439 = vadd.xlane.f32.xlu0 %v403
        %v440 = vpop.xlane.xlu0 %439
        %441 = vadd.xlane.f32.xlu0 %v406
        %v442 = vpop.xlane.xlu0 %441
        %443 = vadd.xlane.f32.xlu0 %v408
        %v444 = vpop.xlane.xlu0 %443
        %445 = vadd.xlane.f32.xlu0 %v411
        %v446 = vpop.xlane.xlu0 %445
        %447 = vadd.xlane.f32.xlu0 %v413
        %v448 = vpop.xlane.xlu0 %447
        %449 = vadd.xlane.f32.xlu0 %v416
        %v450 = vpop.xlane.xlu0 %449
        %451 = vadd.xlane.f32.xlu0 %v418
        %v452 = vpop.xlane.xlu0 %451
        %453 = vadd.xlane.f32.xlu0 %v421
        %v454 = vpop.xlane.xlu0 %453
        %455 = vadd.xlane.f32.xlu0 %v423
        %v456 = vpop.xlane.xlu0 %455
        %v457 = vrcp.pop 128.0
        %v458 = vmul.f32 128.0, %v457
        %v459 = vsub.f32 1.0, %v458
        %v460 = vmul.f32 %v457, %v459
        %v461 = vadd.f32 %v457, %v460
        %vm462 = vweird.f32 %v457
        %v463 = vsel %vm462, %v457, %v461
        %v464 = vmul.f32 %v426, %v463
        %v465 = vmul.f32 %v428, %v463
        %v466 = vmul.f32 %v430, %v463
        %v467 = vmul.f32 %v432, %v463
        %v468 = vmul.f32 %v434, %v463
        %v469 = vmul.f32 %v436, %v463
        %v470 = vmul.f32 %v438, %v463
        %v471 = vmul.f32 %v440, %v463
        %v472 = vmul.f32 %v442, %v463
        %v473 = vmul.f32 %v444, %v463
        %v474 = vmul.f32 %v446, %v463
        %v475 = vmul.f32 %v448, %v463
        %v476 = vmul.f32 %v450, %v463
        %v477 = vmul.f32 %v452, %v463
        %v478 = vmul.f32 %v454, %v463
        %v479 = vmul.f32 %v456, %v463
        %v480 = vmul.f32 %v386, %v386
        %v481 = vmul.f32 %v388, %v388
        %v482 = vmul.f32 %v391, %v391
        %v483 = vmul.f32 %v393, %v393
        %v484 = vmul.f32 %v396, %v396
        %v485 = vmul.f32 %v398, %v398
        %v486 = vmul.f32 %v401, %v401
        %v487 = vmul.f32 %v403, %v403
        %v488 = vmul.f32 %v406, %v406
        %v489 = vmul.f32 %v408, %v408
        %v490 = vmul.f32 %v411, %v411
        %v491 = vmul.f32 %v413, %v413
        %v492 = vmul.f32 %v416, %v416
        %v493 = vmul.f32 %v418, %v418
        %v494 = vmul.f32 %v421, %v421
        %v495 = vmul.f32 %v423, %v423
        %496 = vadd.xlane.f32.xlu0 %v480
        %v497 = vpop.xlane.xlu0 %496
        %498 = vadd.xlane.f32.xlu0 %v481
        %v499 = vpop.xlane.xlu0 %498
        %500 = vadd.xlane.f32.xlu0 %v482
        %v501 = vpop.xlane.xlu0 %500
        %502 = vadd.xlane.f32.xlu0 %v483
        %v503 = vpop.xlane.xlu0 %502
        %504 = vadd.xlane.f32.xlu0 %v484
        %v505 = vpop.xlane.xlu0 %504
        %506 = vadd.xlane.f32.xlu0 %v485
        %v507 = vpop.xlane.xlu0 %506
        %508 = vadd.xlane.f32.xlu0 %v486
        %v509 = vpop.xlane.xlu0 %508
        %510 = vadd.xlane.f32.xlu0 %v487
        %v511 = vpop.xlane.xlu0 %510
        %512 = vadd.xlane.f32.xlu0 %v488
        %v513 = vpop.xlane.xlu0 %512
        %514 = vadd.xlane.f32.xlu0 %v489
        %v515 = vpop.xlane.xlu0 %514
        %516 = vadd.xlane.f32.xlu0 %v490
        %v517 = vpop.xlane.xlu0 %516
        %518 = vadd.xlane.f32.xlu0 %v491
        %v519 = vpop.xlane.xlu0 %518
        %520 = vadd.xlane.f32.xlu0 %v492
        %v521 = vpop.xlane.xlu0 %520
        %522 = vadd.xlane.f32.xlu0 %v493
        %v523 = vpop.xlane.xlu0 %522
        %524 = vadd.xlane.f32.xlu0 %v494
        %v525 = vpop.xlane.xlu0 %524
        %526 = vadd.xlane.f32.xlu0 %v495
        %v527 = vpop.xlane.xlu0 %526
        %v528 = vmul.f32 %v497, %v463
        %v529 = vmul.f32 %v499, %v463
        %v530 = vmul.f32 %v501, %v463
        %v531 = vmul.f32 %v503, %v463
        %v532 = vmul.f32 %v505, %v463
        %v533 = vmul.f32 %v507, %v463
        %v534 = vmul.f32 %v509, %v463
        %v535 = vmul.f32 %v511, %v463
        %v536 = vmul.f32 %v513, %v463
        %v537 = vmul.f32 %v515, %v463
        %v538 = vmul.f32 %v517, %v463
        %v539 = vmul.f32 %v519, %v463
        %v540 = vmul.f32 %v521, %v463
        %v541 = vmul.f32 %v523, %v463
        %v542 = vmul.f32 %v525, %v463
        %v543 = vmul.f32 %v527, %v463
        %v544 = vmul.f32 %v464, %v464
        %v545 = vmul.f32 %v465, %v465
        %v546 = vmul.f32 %v466, %v466
        %v547 = vmul.f32 %v467, %v467
        %v548 = vmul.f32 %v468, %v468
        %v549 = vmul.f32 %v469, %v469
        %v550 = vmul.f32 %v470, %v470
        %v551 = vmul.f32 %v471, %v471
        %v552 = vmul.f32 %v472, %v472
        %v553 = vmul.f32 %v473, %v473
        %v554 = vmul.f32 %v474, %v474
        %v555 = vmul.f32 %v475, %v475
        %v556 = vmul.f32 %v476, %v476
        %v557 = vmul.f32 %v477, %v477
        %v558 = vmul.f32 %v478, %v478
        %v559 = vmul.f32 %v479, %v479
        %v560 = vsub.f32 %v528, %v544
        %v561 = vsub.f32 %v529, %v545
        %v562 = vsub.f32 %v530, %v546
        %v563 = vsub.f32 %v531, %v547
        %v564 = vsub.f32 %v532, %v548
        %v565 = vsub.f32 %v533, %v549
        %v566 = vsub.f32 %v534, %v550
        %v567 = vsub.f32 %v535, %v551
        %v568 = vsub.f32 %v536, %v552
        %v569 = vsub.f32 %v537, %v553
        %v570 = vsub.f32 %v538, %v554
        %v571 = vsub.f32 %v539, %v555
        %v572 = vsub.f32 %v540, %v556
        %v573 = vsub.f32 %v541, %v557
        %v574 = vsub.f32 %v542, %v558
        %v575 = vsub.f32 %v543, %v559
        %v576 = vsub.f32 %v386, %v464
        %v577 = vsub.f32 %v388, %v465
        %v578 = vsub.f32 %v391, %v466
        %v579 = vsub.f32 %v393, %v467
        %v580 = vsub.f32 %v396, %v468
        %v581 = vsub.f32 %v398, %v469
        %v582 = vsub.f32 %v401, %v470
        %v583 = vsub.f32 %v403, %v471
        %v584 = vsub.f32 %v406, %v472
        %v585 = vsub.f32 %v408, %v473
        %v586 = vsub.f32 %v411, %v474
        %v587 = vsub.f32 %v413, %v475
        %v588 = vsub.f32 %v416, %v476
        %v589 = vsub.f32 %v418, %v477
        %v590 = vsub.f32 %v421, %v478
        %v591 = vsub.f32 %v423, %v479
        %v592 = vadd.f32 %v560, 1e-05
        %v593 = vadd.f32 %v561, 1e-05
        %v594 = vadd.f32 %v562, 1e-05
        %v595 = vadd.f32 %v563, 1e-05
        %v596 = vadd.f32 %v564, 1e-05
        %v597 = vadd.f32 %v565, 1e-05
        %v598 = vadd.f32 %v566, 1e-05
        %v599 = vadd.f32 %v567, 1e-05
        %v600 = vadd.f32 %v568, 1e-05
        %v601 = vadd.f32 %v569, 1e-05
        %v602 = vadd.f32 %v570, 1e-05
        %v603 = vadd.f32 %v571, 1e-05
        %v604 = vadd.f32 %v572, 1e-05
        %v605 = vadd.f32 %v573, 1e-05
        %v606 = vadd.f32 %v574, 1e-05
        %v607 = vadd.f32 %v575, 1e-05
        %v608 = vrsqrt.pop %v592
        %v609 = vmul.f32 %v608, %v592
        %v610 = vmul.f32 %v609, %v608
        %v611 = vmul.f32 0.5, %v610
        %v612 = vsub.f32 1.5, %v611
        %v613 = vmul.f32 %v608, %v612
        %vm614 = vweird.f32 %v592
        %vm615 = vweird.f32 %v608
        %vm616 = vmor %vm614, %vm615
        %v617 = vsel %vm616, %v608, %v613
        %v618 = vrsqrt.pop %v593
        %v619 = vmul.f32 %v618, %v593
        %v620 = vmul.f32 %v619, %v618
        %v621 = vmul.f32 0.5, %v620
        %v622 = vsub.f32 1.5, %v621
        %v623 = vmul.f32 %v618, %v622
        %vm624 = vweird.f32 %v593
        %vm625 = vweird.f32 %v618
        %vm626 = vmor %vm624, %vm625
        %v627 = vsel %vm626, %v618, %v623
        %v628 = vrsqrt.pop %v594
        %v629 = vmul.f32 %v628, %v594
        %v630 = vmul.f32 %v629, %v628
        %v631 = vmul.f32 0.5, %v630
        %v632 = vsub.f32 1.5, %v631
        %v633 = vmul.f32 %v628, %v632
        %vm634 = vweird.f32 %v594
        %vm635 = vweird.f32 %v628
        %vm636 = vmor %vm634, %vm635
        %v637 = vsel %vm636, %v628, %v633
        %v638 = vrsqrt.pop %v595
        %v639 = vmul.f32 %v638, %v595
        %v640 = vmul.f32 %v639, %v638
        %v641 = vmul.f32 0.5, %v640
        %v642 = vsub.f32 1.5, %v641
        %v643 = vmul.f32 %v638, %v642
        %vm644 = vweird.f32 %v595
        %vm645 = vweird.f32 %v638
        %vm646 = vmor %vm644, %vm645
        %v647 = vsel %vm646, %v638, %v643
        %v648 = vrsqrt.pop %v596
        %v649 = vmul.f32 %v648, %v596
        %v650 = vmul.f32 %v649, %v648
        %v651 = vmul.f32 0.5, %v650
        %v652 = vsub.f32 1.5, %v651
        %v653 = vmul.f32 %v648, %v652
        %vm654 = vweird.f32 %v596
        %vm655 = vweird.f32 %v648
        %vm656 = vmor %vm654, %vm655
        %v657 = vsel %vm656, %v648, %v653
        %v658 = vrsqrt.pop %v597
        %v659 = vmul.f32 %v658, %v597
        %v660 = vmul.f32 %v659, %v658
        %v661 = vmul.f32 0.5, %v660
        %v662 = vsub.f32 1.5, %v661
        %v663 = vmul.f32 %v658, %v662
        %vm664 = vweird.f32 %v597
        %vm665 = vweird.f32 %v658
        %vm666 = vmor %vm664, %vm665
        %v667 = vsel %vm666, %v658, %v663
        %v668 = vrsqrt.pop %v598
        %v669 = vmul.f32 %v668, %v598
        %v670 = vmul.f32 %v669, %v668
        %v671 = vmul.f32 0.5, %v670
        %v672 = vsub.f32 1.5, %v671
        %v673 = vmul.f32 %v668, %v672
        %vm674 = vweird.f32 %v598
        %vm675 = vweird.f32 %v668
        %vm676 = vmor %vm674, %vm675
        %v677 = vsel %vm676, %v668, %v673
        %v678 = vrsqrt.pop %v599
        %v679 = vmul.f32 %v678, %v599
        %v680 = vmul.f32 %v679, %v678
        %v681 = vmul.f32 0.5, %v680
        %v682 = vsub.f32 1.5, %v681
        %v683 = vmul.f32 %v678, %v682
        %vm684 = vweird.f32 %v599
        %vm685 = vweird.f32 %v678
        %vm686 = vmor %vm684, %vm685
        %v687 = vsel %vm686, %v678, %v683
        %v688 = vrsqrt.pop %v600
        %v689 = vmul.f32 %v688, %v600
        %v690 = vmul.f32 %v689, %v688
        %v691 = vmul.f32 0.5, %v690
        %v692 = vsub.f32 1.5, %v691
        %v693 = vmul.f32 %v688, %v692
        %vm694 = vweird.f32 %v600
        %vm695 = vweird.f32 %v688
        %vm696 = vmor %vm694, %vm695
        %v697 = vsel %vm696, %v688, %v693
        %v698 = vrsqrt.pop %v601
        %v699 = vmul.f32 %v698, %v601
        %v700 = vmul.f32 %v699, %v698
        %v701 = vmul.f32 0.5, %v700
        %v702 = vsub.f32 1.5, %v701
        %v703 = vmul.f32 %v698, %v702
        %vm704 = vweird.f32 %v601
        %vm705 = vweird.f32 %v698
        %vm706 = vmor %vm704, %vm705
        %v707 = vsel %vm706, %v698, %v703
        %v708 = vrsqrt.pop %v602
        %v709 = vmul.f32 %v708, %v602
        %v710 = vmul.f32 %v709, %v708
        %v711 = vmul.f32 0.5, %v710
        %v712 = vsub.f32 1.5, %v711
        %v713 = vmul.f32 %v708, %v712
        %vm714 = vweird.f32 %v602
        %vm715 = vweird.f32 %v708
        %vm716 = vmor %vm714, %vm715
        %v717 = vsel %vm716, %v708, %v713
        %v718 = vrsqrt.pop %v603
        %v719 = vmul.f32 %v718, %v603
        %v720 = vmul.f32 %v719, %v718
        %v721 = vmul.f32 0.5, %v720
        %v722 = vsub.f32 1.5, %v721
        %v723 = vmul.f32 %v718, %v722
        %vm724 = vweird.f32 %v603
        %vm725 = vweird.f32 %v718
        %vm726 = vmor %vm724, %vm725
        %v727 = vsel %vm726, %v718, %v723
        %v728 = vrsqrt.pop %v604
        %v729 = vmul.f32 %v728, %v604
        %v730 = vmul.f32 %v729, %v728
        %v731 = vmul.f32 0.5, %v730
        %v732 = vsub.f32 1.5, %v731
        %v733 = vmul.f32 %v728, %v732
        %vm734 = vweird.f32 %v604
        %vm735 = vweird.f32 %v728
        %vm736 = vmor %vm734, %vm735
        %v737 = vsel %vm736, %v728, %v733
        %v738 = vrsqrt.pop %v605
        %v739 = vmul.f32 %v738, %v605
        %v740 = vmul.f32 %v739, %v738
        %v741 = vmul.f32 0.5, %v740
        %v742 = vsub.f32 1.5, %v741
        %v743 = vmul.f32 %v738, %v742
        %vm744 = vweird.f32 %v605
        %vm745 = vweird.f32 %v738
        %vm746 = vmor %vm744, %vm745
        %v747 = vsel %vm746, %v738, %v743
        %v748 = vrsqrt.pop %v606
        %v749 = vmul.f32 %v748, %v606
        %v750 = vmul.f32 %v749, %v748
        %v751 = vmul.f32 0.5, %v750
        %v752 = vsub.f32 1.5, %v751
        %v753 = vmul.f32 %v748, %v752
        %vm754 = vweird.f32 %v606
        %vm755 = vweird.f32 %v748
        %vm756 = vmor %vm754, %vm755
        %v757 = vsel %vm756, %v748, %v753
        %v758 = vrsqrt.pop %v607
        %v759 = vmul.f32 %v758, %v607
        %v760 = vmul.f32 %v759, %v758
        %v761 = vmul.f32 0.5, %v760
        %v762 = vsub.f32 1.5, %v761
        %v763 = vmul.f32 %v758, %v762
        %vm764 = vweird.f32 %v607
        %vm765 = vweird.f32 %v758
        %vm766 = vmor %vm764, %vm765
        %v767 = vsel %vm766, %v758, %v763
        %v768 = vmul.f32 %v576, %v617
        %v769 = vmul.f32 %v577, %v627
        %v770 = vmul.f32 %v578, %v637
        %v771 = vmul.f32 %v579, %v647
        %v772 = vmul.f32 %v580, %v657
        %v773 = vmul.f32 %v581, %v667
        %v774 = vmul.f32 %v582, %v677
        %v775 = vmul.f32 %v583, %v687
        %v776 = vmul.f32 %v584, %v697
        %v777 = vmul.f32 %v585, %v707
        %v778 = vmul.f32 %v586, %v717
        %v779 = vmul.f32 %v587, %v727
        %v780 = vmul.f32 %v588, %v737
        %v781 = vmul.f32 %v589, %v747
        %v782 = vmul.f32 %v590, %v757
        %v783 = vmul.f32 %v591, %v767
        %v785 = vperm.slane %v307, 0
        %v787 = vmul.f32 %v768, %v785
        %v788 = vmul.f32 %v769, %v785
        %v789 = vmul.f32 %v770, %v785
        %v790 = vmul.f32 %v771, %v785
        %v791 = vmul.f32 %v772, %v785
        %v792 = vmul.f32 %v773, %v785
        %v793 = vmul.f32 %v774, %v785
        %v794 = vmul.f32 %v775, %v785
        %v795 = vmul.f32 %v776, %v785
        %v796 = vmul.f32 %v777, %v785
        %v797 = vmul.f32 %v778, %v785
        %v798 = vmul.f32 %v779, %v785
        %v799 = vmul.f32 %v780, %v785
        %v800 = vmul.f32 %v781, %v785
        %v801 = vmul.f32 %v782, %v785
        %v802 = vmul.f32 %v783, %v785
        %v804 = vperm.slane %v308, 0
        %v806 = vadd.f32 %v787, %v804
        %v807 = vadd.f32 %v788, %v804
        %v808 = vadd.f32 %v789, %v804
        %v809 = vadd.f32 %v790, %v804
        %v810 = vadd.f32 %v791, %v804
        %v811 = vadd.f32 %v792, %v804
        %v812 = vadd.f32 %v793, %v804
        %v813 = vadd.f32 %v794, %v804
        %v814 = vadd.f32 %v795, %v804
        %v815 = vadd.f32 %v796, %v804
        %v816 = vadd.f32 %v797, %v804
        %v817 = vadd.f32 %v798, %v804
        %v818 = vadd.f32 %v799, %v804
        %v819 = vadd.f32 %v800, %v804
        %v820 = vadd.f32 %v801, %v804
        %v821 = vadd.f32 %v802, %v804
        %v822 = vmul.f32 %v806, 0.5
        %v823 = vmul.f32 %v807, 0.5
        %v824 = vmul.f32 %v808, 0.5
        %v825 = vmul.f32 %v809, 0.5
        %v826 = vmul.f32 %v810, 0.5
        %v827 = vmul.f32 %v811, 0.5
        %v828 = vmul.f32 %v812, 0.5
        %v829 = vmul.f32 %v813, 0.5
        %v830 = vmul.f32 %v814, 0.5
        %v831 = vmul.f32 %v815, 0.5
        %v832 = vmul.f32 %v816, 0.5
        %v833 = vmul.f32 %v817, 0.5
        %v834 = vmul.f32 %v818, 0.5
        %v835 = vmul.f32 %v819, 0.5
        %v836 = vmul.f32 %v820, 0.5
        %v837 = vmul.f32 %v821, 0.5
        %v838 = vmul.f32 %v806, 0.70710677
        %v839 = vmul.f32 %v807, 0.70710677
        %v840 = vmul.f32 %v808, 0.70710677
        %v841 = vmul.f32 %v809, 0.70710677
        %v842 = vmul.f32 %v810, 0.70710677
        %v843 = vmul.f32 %v811, 0.70710677
        %v844 = vmul.f32 %v812, 0.70710677
        %v845 = vmul.f32 %v813, 0.70710677
        %v846 = vmul.f32 %v814, 0.70710677
        %v847 = vmul.f32 %v815, 0.70710677
        %v848 = vmul.f32 %v816, 0.70710677
        %v849 = vmul.f32 %v817, 0.70710677
        %v850 = vmul.f32 %v818, 0.70710677
        %v851 = vmul.f32 %v819, 0.70710677
        %v852 = vmul.f32 %v820, 0.70710677
        %v853 = vmul.f32 %v821, 0.70710677
        %v854 = vmul.f32 %v838, %v838
        %v855 = vmin.f32 16.0, %v854
        %v856 = vmul.f32 %v855, 2.1237322e-06
        %v857 = vadd.f32 %v856, 0.00028619796
        %v858 = vmul.f32 %v855, %v857
        %v859 = vadd.f32 %v858, 0.0036580483
        %v860 = vmul.f32 %v855, %v859
        %v861 = vadd.f32 %v860, 0.05243302
        %v862 = vmul.f32 %v855, %v861
        %v863 = vadd.f32 %v862, 0.18741608
        %v864 = vmul.f32 %v855, %v863
        %v865 = vadd.f32 %v864, 1.1283791
        %v866 = vmul.f32 %v838, %v865
        %v867 = vmul.f32 %v855, 3.8918573e-05
        %v868 = vadd.f32 %v867, 0.001143296
        %v869 = vmul.f32 %v855, %v868
        %v870 = vadd.f32 %v869, 0.014752088
        %v871 = vmul.f32 %v855, %v870
        %v872 = vadd.f32 %v871, 0.112945676
        %v873 = vmul.f32 %v855, %v872
        %v874 = vadd.f32 %v873, 0.4994258
        %v875 = vmul.f32 %v855, %v874
        %v876 = vadd.f32 %v875, 1.0
        %v877 = vrcp.pop %v876
        %v878 = vmul.f32 %v876, %v877
        %v879 = vsub.f32 1.0, %v878
        %v880 = vmul.f32 %v877, %v879
        %v881 = vadd.f32 %v877, %v880
        %vm882 = vweird.f32 %v876
        %vm883 = vweird.f32 %v877
        %vm884 = vmor %vm882, %vm883
        %v885 = vsel %vm884, %v877, %v881
        %v886 = vand.u32 2147483647, %v876
        %vm887 = vcmp.eq.f32.partialorder %v886, 8.507059e+37
        %v888 = vand.u32 %v876, 2147483648
        %v889 = vor.u32 1.1754944e-38, %v888
        %v890 = vsel %vm887, %v889, %v885
        %v891 = vmul.f32 %v866, %v890
        %v892 = vmin.f32 %v891, 1.0
        %v893 = vmax.f32 %v892, -1.0
        %v894 = vmul.f32 %v839, %v839
        %v895 = vmin.f32 16.0, %v894
        %v896 = vmul.f32 %v895, 2.1237322e-06
        %v897 = vadd.f32 %v896, 0.00028619796
        %v898 = vmul.f32 %v895, %v897
        %v899 = vadd.f32 %v898, 0.0036580483
        %v900 = vmul.f32 %v895, %v899
        %v901 = vadd.f32 %v900, 0.05243302
        %v902 = vmul.f32 %v895, %v901
        %v903 = vadd.f32 %v902, 0.18741608
        %v904 = vmul.f32 %v895, %v903
        %v905 = vadd.f32 %v904, 1.1283791
        %v906 = vmul.f32 %v839, %v905
        %v907 = vmul.f32 %v895, 3.8918573e-05
        %v908 = vadd.f32 %v907, 0.001143296
        %v909 = vmul.f32 %v895, %v908
        %v910 = vadd.f32 %v909, 0.014752088
        %v911 = vmul.f32 %v895, %v910
        %v912 = vadd.f32 %v911, 0.112945676
        %v913 = vmul.f32 %v895, %v912
        %v914 = vadd.f32 %v913, 0.4994258
        %v915 = vmul.f32 %v895, %v914
        %v916 = vadd.f32 %v915, 1.0
        %v917 = vrcp.pop %v916
        %v918 = vmul.f32 %v916, %v917
        %v919 = vsub.f32 1.0, %v918
        %v920 = vmul.f32 %v917, %v919
        %v921 = vadd.f32 %v917, %v920
        %vm922 = vweird.f32 %v916
        %vm923 = vweird.f32 %v917
        %vm924 = vmor %vm922, %vm923
        %v925 = vsel %vm924, %v917, %v921
        %v926 = vand.u32 2147483647, %v916
        %vm927 = vcmp.eq.f32.partialorder %v926, 8.507059e+37
        %v928 = vand.u32 %v916, 2147483648
        %v929 = vor.u32 1.1754944e-38, %v928
        %v930 = vsel %vm927, %v929, %v925
        %v931 = vmul.f32 %v906, %v930
        %v932 = vmin.f32 %v931, 1.0
        %v933 = vmax.f32 %v932, -1.0
        %v934 = vmul.f32 %v840, %v840
        %v935 = vmin.f32 16.0, %v934
        %v936 = vmul.f32 %v935, 2.1237322e-06
        %v937 = vadd.f32 %v936, 0.00028619796
        %v938 = vmul.f32 %v935, %v937
        %v939 = vadd.f32 %v938, 0.0036580483
        %v940 = vmul.f32 %v935, %v939
        %v941 = vadd.f32 %v940, 0.05243302
        %v942 = vmul.f32 %v935, %v941
        %v943 = vadd.f32 %v942, 0.18741608
        %v944 = vmul.f32 %v935, %v943
        %v945 = vadd.f32 %v944, 1.1283791
        %v946 = vmul.f32 %v840, %v945
        %v947 = vmul.f32 %v935, 3.8918573e-05
        %v948 = vadd.f32 %v947, 0.001143296
        %v949 = vmul.f32 %v935, %v948
        %v950 = vadd.f32 %v949, 0.014752088
        %v951 = vmul.f32 %v935, %v950
        %v952 = vadd.f32 %v951, 0.112945676
        %v953 = vmul.f32 %v935, %v952
        %v954 = vadd.f32 %v953, 0.4994258
        %v955 = vmul.f32 %v935, %v954
        %v956 = vadd.f32 %v955, 1.0
        %v957 = vrcp.pop %v956
        %v958 = vmul.f32 %v956, %v957
        %v959 = vsub.f32 1.0, %v958
        %v960 = vmul.f32 %v957, %v959
        %v961 = vadd.f32 %v957, %v960
        %vm962 = vweird.f32 %v956
        %vm963 = vweird.f32 %v957
        %vm964 = vmor %vm962, %vm963
        %v965 = vsel %vm964, %v957, %v961
        %v966 = vand.u32 2147483647, %v956
        %vm967 = vcmp.eq.f32.partialorder %v966, 8.507059e+37
        %v968 = vand.u32 %v956, 2147483648
        %v969 = vor.u32 1.1754944e-38, %v968
        %v970 = vsel %vm967, %v969, %v965
        %v971 = vmul.f32 %v946, %v970
        %v972 = vmin.f32 %v971, 1.0
        %v973 = vmax.f32 %v972, -1.0
        %v974 = vmul.f32 %v841, %v841
        %v975 = vmin.f32 16.0, %v974
        %v976 = vmul.f32 %v975, 2.1237322e-06
        %v977 = vadd.f32 %v976, 0.00028619796
        %v978 = vmul.f32 %v975, %v977
        %v979 = vadd.f32 %v978, 0.0036580483
        %v980 = vmul.f32 %v975, %v979
        %v981 = vadd.f32 %v980, 0.05243302
        %v982 = vmul.f32 %v975, %v981
        %v983 = vadd.f32 %v982, 0.18741608
        %v984 = vmul.f32 %v975, %v983
        %v985 = vadd.f32 %v984, 1.1283791
        %v986 = vmul.f32 %v841, %v985
        %v987 = vmul.f32 %v975, 3.8918573e-05
        %v988 = vadd.f32 %v987, 0.001143296
        %v989 = vmul.f32 %v975, %v988
        %v990 = vadd.f32 %v989, 0.014752088
        %v991 = vmul.f32 %v975, %v990
        %v992 = vadd.f32 %v991, 0.112945676
        %v993 = vmul.f32 %v975, %v992
        %v994 = vadd.f32 %v993, 0.4994258
        %v995 = vmul.f32 %v975, %v994
        %v996 = vadd.f32 %v995, 1.0
        %v997 = vrcp.pop %v996
        %v998 = vmul.f32 %v996, %v997
        %v999 = vsub.f32 1.0, %v998
        %v1000 = vmul.f32 %v997, %v999
        %v1001 = vadd.f32 %v997, %v1000
        %vm1002 = vweird.f32 %v996
        %vm1003 = vweird.f32 %v997
        %vm1004 = vmor %vm1002, %vm1003
        %v1005 = vsel %vm1004, %v997, %v1001
        %v1006 = vand.u32 2147483647, %v996
        %vm1007 = vcmp.eq.f32.partialorder %v1006, 8.507059e+37
        %v1008 = vand.u32 %v996, 2147483648
        %v1009 = vor.u32 1.1754944e-38, %v1008
        %v1010 = vsel %vm1007, %v1009, %v1005
        %v1011 = vmul.f32 %v986, %v1010
        %v1012 = vmin.f32 %v1011, 1.0
        %v1013 = vmax.f32 %v1012, -1.0
        %v1014 = vmul.f32 %v842, %v842
        %v1015 = vmin.f32 16.0, %v1014
        %v1016 = vmul.f32 %v1015, 2.1237322e-06
        %v1017 = vadd.f32 %v1016, 0.00028619796
        %v1018 = vmul.f32 %v1015, %v1017
        %v1019 = vadd.f32 %v1018, 0.0036580483
        %v1020 = vmul.f32 %v1015, %v1019
        %v1021 = vadd.f32 %v1020, 0.05243302
        %v1022 = vmul.f32 %v1015, %v1021
        %v1023 = vadd.f32 %v1022, 0.18741608
        %v1024 = vmul.f32 %v1015, %v1023
        %v1025 = vadd.f32 %v1024, 1.1283791
        %v1026 = vmul.f32 %v842, %v1025
        %v1027 = vmul.f32 %v1015, 3.8918573e-05
        %v1028 = vadd.f32 %v1027, 0.001143296
        %v1029 = vmul.f32 %v1015, %v1028
        %v1030 = vadd.f32 %v1029, 0.014752088
        %v1031 = vmul.f32 %v1015, %v1030
        %v1032 = vadd.f32 %v1031, 0.112945676
        %v1033 = vmul.f32 %v1015, %v1032
        %v1034 = vadd.f32 %v1033, 0.4994258
        %v1035 = vmul.f32 %v1015, %v1034
        %v1036 = vadd.f32 %v1035, 1.0
        %v1037 = vrcp.pop %v1036
        %v1038 = vmul.f32 %v1036, %v1037
        %v1039 = vsub.f32 1.0, %v1038
        %v1040 = vmul.f32 %v1037, %v1039
        %v1041 = vadd.f32 %v1037, %v1040
        %vm1042 = vweird.f32 %v1036
        %vm1043 = vweird.f32 %v1037
        %vm1044 = vmor %vm1042, %vm1043
        %v1045 = vsel %vm1044, %v1037, %v1041
        %v1046 = vand.u32 2147483647, %v1036
        %vm1047 = vcmp.eq.f32.partialorder %v1046, 8.507059e+37
        %v1048 = vand.u32 %v1036, 2147483648
        %v1049 = vor.u32 1.1754944e-38, %v1048
        %v1050 = vsel %vm1047, %v1049, %v1045
        %v1051 = vmul.f32 %v1026, %v1050
        %v1052 = vmin.f32 %v1051, 1.0
        %v1053 = vmax.f32 %v1052, -1.0
        %v1054 = vmul.f32 %v843, %v843
        %v1055 = vmin.f32 16.0, %v1054
        %v1056 = vmul.f32 %v1055, 2.1237322e-06
        %v1057 = vadd.f32 %v1056, 0.00028619796
        %v1058 = vmul.f32 %v1055, %v1057
        %v1059 = vadd.f32 %v1058, 0.0036580483
        %v1060 = vmul.f32 %v1055, %v1059
        %v1061 = vadd.f32 %v1060, 0.05243302
        %v1062 = vmul.f32 %v1055, %v1061
        %v1063 = vadd.f32 %v1062, 0.18741608
        %v1064 = vmul.f32 %v1055, %v1063
        %v1065 = vadd.f32 %v1064, 1.1283791
        %v1066 = vmul.f32 %v843, %v1065
        %v1067 = vmul.f32 %v1055, 3.8918573e-05
        %v1068 = vadd.f32 %v1067, 0.001143296
        %v1069 = vmul.f32 %v1055, %v1068
        %v1070 = vadd.f32 %v1069, 0.014752088
        %v1071 = vmul.f32 %v1055, %v1070
        %v1072 = vadd.f32 %v1071, 0.112945676
        %v1073 = vmul.f32 %v1055, %v1072
        %v1074 = vadd.f32 %v1073, 0.4994258
        %v1075 = vmul.f32 %v1055, %v1074
        %v1076 = vadd.f32 %v1075, 1.0
        %v1077 = vrcp.pop %v1076
        %v1078 = vmul.f32 %v1076, %v1077
        %v1079 = vsub.f32 1.0, %v1078
        %v1080 = vmul.f32 %v1077, %v1079
        %v1081 = vadd.f32 %v1077, %v1080
        %vm1082 = vweird.f32 %v1076
        %vm1083 = vweird.f32 %v1077
        %vm1084 = vmor %vm1082, %vm1083
        %v1085 = vsel %vm1084, %v1077, %v1081
        %v1086 = vand.u32 2147483647, %v1076
        %vm1087 = vcmp.eq.f32.partialorder %v1086, 8.507059e+37
        %v1088 = vand.u32 %v1076, 2147483648
        %v1089 = vor.u32 1.1754944e-38, %v1088
        %v1090 = vsel %vm1087, %v1089, %v1085
        %v1091 = vmul.f32 %v1066, %v1090
        %v1092 = vmin.f32 %v1091, 1.0
        %v1093 = vmax.f32 %v1092, -1.0
        %v1094 = vmul.f32 %v844, %v844
        %v1095 = vmin.f32 16.0, %v1094
        %v1096 = vmul.f32 %v1095, 2.1237322e-06
        %v1097 = vadd.f32 %v1096, 0.00028619796
        %v1098 = vmul.f32 %v1095, %v1097
        %v1099 = vadd.f32 %v1098, 0.0036580483
        %v1100 = vmul.f32 %v1095, %v1099
        %v1101 = vadd.f32 %v1100, 0.05243302
        %v1102 = vmul.f32 %v1095, %v1101
        %v1103 = vadd.f32 %v1102, 0.18741608
        %v1104 = vmul.f32 %v1095, %v1103
        %v1105 = vadd.f32 %v1104, 1.1283791
        %v1106 = vmul.f32 %v844, %v1105
        %v1107 = vmul.f32 %v1095, 3.8918573e-05
        %v1108 = vadd.f32 %v1107, 0.001143296
        %v1109 = vmul.f32 %v1095, %v1108
        %v1110 = vadd.f32 %v1109, 0.014752088
        %v1111 = vmul.f32 %v1095, %v1110
        %v1112 = vadd.f32 %v1111, 0.112945676
        %v1113 = vmul.f32 %v1095, %v1112
        %v1114 = vadd.f32 %v1113, 0.4994258
        %v1115 = vmul.f32 %v1095, %v1114
        %v1116 = vadd.f32 %v1115, 1.0
        %v1117 = vrcp.pop %v1116
        %v1118 = vmul.f32 %v1116, %v1117
        %v1119 = vsub.f32 1.0, %v1118
        %v1120 = vmul.f32 %v1117, %v1119
        %v1121 = vadd.f32 %v1117, %v1120
        %vm1122 = vweird.f32 %v1116
        %vm1123 = vweird.f32 %v1117
        %vm1124 = vmor %vm1122, %vm1123
        %v1125 = vsel %vm1124, %v1117, %v1121
        %v1126 = vand.u32 2147483647, %v1116
        %vm1127 = vcmp.eq.f32.partialorder %v1126, 8.507059e+37
        %v1128 = vand.u32 %v1116, 2147483648
        %v1129 = vor.u32 1.1754944e-38, %v1128
        %v1130 = vsel %vm1127, %v1129, %v1125
        %v1131 = vmul.f32 %v1106, %v1130
        %v1132 = vmin.f32 %v1131, 1.0
        %v1133 = vmax.f32 %v1132, -1.0
        %v1134 = vmul.f32 %v845, %v845
        %v1135 = vmin.f32 16.0, %v1134
        %v1136 = vmul.f32 %v1135, 2.1237322e-06
        %v1137 = vadd.f32 %v1136, 0.00028619796
        %v1138 = vmul.f32 %v1135, %v1137
        %v1139 = vadd.f32 %v1138, 0.0036580483
        %v1140 = vmul.f32 %v1135, %v1139
        %v1141 = vadd.f32 %v1140, 0.05243302
        %v1142 = vmul.f32 %v1135, %v1141
        %v1143 = vadd.f32 %v1142, 0.18741608
        %v1144 = vmul.f32 %v1135, %v1143
        %v1145 = vadd.f32 %v1144, 1.1283791
        %v1146 = vmul.f32 %v845, %v1145
        %v1147 = vmul.f32 %v1135, 3.8918573e-05
        %v1148 = vadd.f32 %v1147, 0.001143296
        %v1149 = vmul.f32 %v1135, %v1148
        %v1150 = vadd.f32 %v1149, 0.014752088
        %v1151 = vmul.f32 %v1135, %v1150
        %v1152 = vadd.f32 %v1151, 0.112945676
        %v1153 = vmul.f32 %v1135, %v1152
        %v1154 = vadd.f32 %v1153, 0.4994258
        %v1155 = vmul.f32 %v1135, %v1154
        %v1156 = vadd.f32 %v1155, 1.0
        %v1157 = vrcp.pop %v1156
        %v1158 = vmul.f32 %v1156, %v1157
        %v1159 = vsub.f32 1.0, %v1158
        %v1160 = vmul.f32 %v1157, %v1159
        %v1161 = vadd.f32 %v1157, %v1160
        %vm1162 = vweird.f32 %v1156
        %vm1163 = vweird.f32 %v1157
        %vm1164 = vmor %vm1162, %vm1163
        %v1165 = vsel %vm1164, %v1157, %v1161
        %v1166 = vand.u32 2147483647, %v1156
        %vm1167 = vcmp.eq.f32.partialorder %v1166, 8.507059e+37
        %v1168 = vand.u32 %v1156, 2147483648
        %v1169 = vor.u32 1.1754944e-38, %v1168
        %v1170 = vsel %vm1167, %v1169, %v1165
        %v1171 = vmul.f32 %v1146, %v1170
        %v1172 = vmin.f32 %v1171, 1.0
        %v1173 = vmax.f32 %v1172, -1.0
        %v1174 = vmul.f32 %v846, %v846
        %v1175 = vmin.f32 16.0, %v1174
        %v1176 = vmul.f32 %v1175, 2.1237322e-06
        %v1177 = vadd.f32 %v1176, 0.00028619796
        %v1178 = vmul.f32 %v1175, %v1177
        %v1179 = vadd.f32 %v1178, 0.0036580483
        %v1180 = vmul.f32 %v1175, %v1179
        %v1181 = vadd.f32 %v1180, 0.05243302
        %v1182 = vmul.f32 %v1175, %v1181
        %v1183 = vadd.f32 %v1182, 0.18741608
        %v1184 = vmul.f32 %v1175, %v1183
        %v1185 = vadd.f32 %v1184, 1.1283791
        %v1186 = vmul.f32 %v846, %v1185
        %v1187 = vmul.f32 %v1175, 3.8918573e-05
        %v1188 = vadd.f32 %v1187, 0.001143296
        %v1189 = vmul.f32 %v1175, %v1188
        %v1190 = vadd.f32 %v1189, 0.014752088
        %v1191 = vmul.f32 %v1175, %v1190
        %v1192 = vadd.f32 %v1191, 0.112945676
        %v1193 = vmul.f32 %v1175, %v1192
        %v1194 = vadd.f32 %v1193, 0.4994258
        %v1195 = vmul.f32 %v1175, %v1194
        %v1196 = vadd.f32 %v1195, 1.0
        %v1197 = vrcp.pop %v1196
        %v1198 = vmul.f32 %v1196, %v1197
        %v1199 = vsub.f32 1.0, %v1198
        %v1200 = vmul.f32 %v1197, %v1199
        %v1201 = vadd.f32 %v1197, %v1200
        %vm1202 = vweird.f32 %v1196
        %vm1203 = vweird.f32 %v1197
        %vm1204 = vmor %vm1202, %vm1203
        %v1205 = vsel %vm1204, %v1197, %v1201
        %v1206 = vand.u32 2147483647, %v1196
        %vm1207 = vcmp.eq.f32.partialorder %v1206, 8.507059e+37
        %v1208 = vand.u32 %v1196, 2147483648
        %v1209 = vor.u32 1.1754944e-38, %v1208
        %v1210 = vsel %vm1207, %v1209, %v1205
        %v1211 = vmul.f32 %v1186, %v1210
        %v1212 = vmin.f32 %v1211, 1.0
        %v1213 = vmax.f32 %v1212, -1.0
        %v1214 = vmul.f32 %v847, %v847
        %v1215 = vmin.f32 16.0, %v1214
        %v1216 = vmul.f32 %v1215, 2.1237322e-06
        %v1217 = vadd.f32 %v1216, 0.00028619796
        %v1218 = vmul.f32 %v1215, %v1217
        %v1219 = vadd.f32 %v1218, 0.0036580483
        %v1220 = vmul.f32 %v1215, %v1219
        %v1221 = vadd.f32 %v1220, 0.05243302
        %v1222 = vmul.f32 %v1215, %v1221
        %v1223 = vadd.f32 %v1222, 0.18741608
        %v1224 = vmul.f32 %v1215, %v1223
        %v1225 = vadd.f32 %v1224, 1.1283791
        %v1226 = vmul.f32 %v847, %v1225
        %v1227 = vmul.f32 %v1215, 3.8918573e-05
        %v1228 = vadd.f32 %v1227, 0.001143296
        %v1229 = vmul.f32 %v1215, %v1228
        %v1230 = vadd.f32 %v1229, 0.014752088
        %v1231 = vmul.f32 %v1215, %v1230
        %v1232 = vadd.f32 %v1231, 0.112945676
        %v1233 = vmul.f32 %v1215, %v1232
        %v1234 = vadd.f32 %v1233, 0.4994258
        %v1235 = vmul.f32 %v1215, %v1234
        %v1236 = vadd.f32 %v1235, 1.0
        %v1237 = vrcp.pop %v1236
        %v1238 = vmul.f32 %v1236, %v1237
        %v1239 = vsub.f32 1.0, %v1238
        %v1240 = vmul.f32 %v1237, %v1239
        %v1241 = vadd.f32 %v1237, %v1240
        %vm1242 = vweird.f32 %v1236
        %vm1243 = vweird.f32 %v1237
        %vm1244 = vmor %vm1242, %vm1243
        %v1245 = vsel %vm1244, %v1237, %v1241
        %v1246 = vand.u32 2147483647, %v1236
        %vm1247 = vcmp.eq.f32.partialorder %v1246, 8.507059e+37
        %v1248 = vand.u32 %v1236, 2147483648
        %v1249 = vor.u32 1.1754944e-38, %v1248
        %v1250 = vsel %vm1247, %v1249, %v1245
        %v1251 = vmul.f32 %v1226, %v1250
        %v1252 = vmin.f32 %v1251, 1.0
        %v1253 = vmax.f32 %v1252, -1.0
        %v1254 = vmul.f32 %v848, %v848
        %v1255 = vmin.f32 16.0, %v1254
        %v1256 = vmul.f32 %v1255, 2.1237322e-06
        %v1257 = vadd.f32 %v1256, 0.00028619796
        %v1258 = vmul.f32 %v1255, %v1257
        %v1259 = vadd.f32 %v1258, 0.0036580483
        %v1260 = vmul.f32 %v1255, %v1259
        %v1261 = vadd.f32 %v1260, 0.05243302
        %v1262 = vmul.f32 %v1255, %v1261
        %v1263 = vadd.f32 %v1262, 0.18741608
        %v1264 = vmul.f32 %v1255, %v1263
        %v1265 = vadd.f32 %v1264, 1.1283791
        %v1266 = vmul.f32 %v848, %v1265
        %v1267 = vmul.f32 %v1255, 3.8918573e-05
        %v1268 = vadd.f32 %v1267, 0.001143296
        %v1269 = vmul.f32 %v1255, %v1268
        %v1270 = vadd.f32 %v1269, 0.014752088
        %v1271 = vmul.f32 %v1255, %v1270
        %v1272 = vadd.f32 %v1271, 0.112945676
        %v1273 = vmul.f32 %v1255, %v1272
        %v1274 = vadd.f32 %v1273, 0.4994258
        %v1275 = vmul.f32 %v1255, %v1274
        %v1276 = vadd.f32 %v1275, 1.0
        %v1277 = vrcp.pop %v1276
        %v1278 = vmul.f32 %v1276, %v1277
        %v1279 = vsub.f32 1.0, %v1278
        %v1280 = vmul.f32 %v1277, %v1279
        %v1281 = vadd.f32 %v1277, %v1280
        %vm1282 = vweird.f32 %v1276
        %vm1283 = vweird.f32 %v1277
        %vm1284 = vmor %vm1282, %vm1283
        %v1285 = vsel %vm1284, %v1277, %v1281
        %v1286 = vand.u32 2147483647, %v1276
        %vm1287 = vcmp.eq.f32.partialorder %v1286, 8.507059e+37
        %v1288 = vand.u32 %v1276, 2147483648
        %v1289 = vor.u32 1.1754944e-38, %v1288
        %v1290 = vsel %vm1287, %v1289, %v1285
        %v1291 = vmul.f32 %v1266, %v1290
        %v1292 = vmin.f32 %v1291, 1.0
        %v1293 = vmax.f32 %v1292, -1.0
        %v1294 = vmul.f32 %v849, %v849
        %v1295 = vmin.f32 16.0, %v1294
        %v1296 = vmul.f32 %v1295, 2.1237322e-06
        %v1297 = vadd.f32 %v1296, 0.00028619796
        %v1298 = vmul.f32 %v1295, %v1297
        %v1299 = vadd.f32 %v1298, 0.0036580483
        %v1300 = vmul.f32 %v1295, %v1299
        %v1301 = vadd.f32 %v1300, 0.05243302
        %v1302 = vmul.f32 %v1295, %v1301
        %v1303 = vadd.f32 %v1302, 0.18741608
        %v1304 = vmul.f32 %v1295, %v1303
        %v1305 = vadd.f32 %v1304, 1.1283791
        %v1306 = vmul.f32 %v849, %v1305
        %v1307 = vmul.f32 %v1295, 3.8918573e-05
        %v1308 = vadd.f32 %v1307, 0.001143296
        %v1309 = vmul.f32 %v1295, %v1308
        %v1310 = vadd.f32 %v1309, 0.014752088
        %v1311 = vmul.f32 %v1295, %v1310
        %v1312 = vadd.f32 %v1311, 0.112945676
        %v1313 = vmul.f32 %v1295, %v1312
        %v1314 = vadd.f32 %v1313, 0.4994258
        %v1315 = vmul.f32 %v1295, %v1314
        %v1316 = vadd.f32 %v1315, 1.0
        %v1317 = vrcp.pop %v1316
        %v1318 = vmul.f32 %v1316, %v1317
        %v1319 = vsub.f32 1.0, %v1318
        %v1320 = vmul.f32 %v1317, %v1319
        %v1321 = vadd.f32 %v1317, %v1320
        %vm1322 = vweird.f32 %v1316
        %vm1323 = vweird.f32 %v1317
        %vm1324 = vmor %vm1322, %vm1323
        %v1325 = vsel %vm1324, %v1317, %v1321
        %v1326 = vand.u32 2147483647, %v1316
        %vm1327 = vcmp.eq.f32.partialorder %v1326, 8.507059e+37
        %v1328 = vand.u32 %v1316, 2147483648
        %v1329 = vor.u32 1.1754944e-38, %v1328
        %v1330 = vsel %vm1327, %v1329, %v1325
        %v1331 = vmul.f32 %v1306, %v1330
        %v1332 = vmin.f32 %v1331, 1.0
        %v1333 = vmax.f32 %v1332, -1.0
        %v1334 = vmul.f32 %v850, %v850
        %v1335 = vmin.f32 16.0, %v1334
        %v1336 = vmul.f32 %v1335, 2.1237322e-06
        %v1337 = vadd.f32 %v1336, 0.00028619796
        %v1338 = vmul.f32 %v1335, %v1337
        %v1339 = vadd.f32 %v1338, 0.0036580483
        %v1340 = vmul.f32 %v1335, %v1339
        %v1341 = vadd.f32 %v1340, 0.05243302
        %v1342 = vmul.f32 %v1335, %v1341
        %v1343 = vadd.f32 %v1342, 0.18741608
        %v1344 = vmul.f32 %v1335, %v1343
        %v1345 = vadd.f32 %v1344, 1.1283791
        %v1346 = vmul.f32 %v850, %v1345
        %v1347 = vmul.f32 %v1335, 3.8918573e-05
        %v1348 = vadd.f32 %v1347, 0.001143296
        %v1349 = vmul.f32 %v1335, %v1348
        %v1350 = vadd.f32 %v1349, 0.014752088
        %v1351 = vmul.f32 %v1335, %v1350
        %v1352 = vadd.f32 %v1351, 0.112945676
        %v1353 = vmul.f32 %v1335, %v1352
        %v1354 = vadd.f32 %v1353, 0.4994258
        %v1355 = vmul.f32 %v1335, %v1354
        %v1356 = vadd.f32 %v1355, 1.0
        %v1357 = vrcp.pop %v1356
        %v1358 = vmul.f32 %v1356, %v1357
        %v1359 = vsub.f32 1.0, %v1358
        %v1360 = vmul.f32 %v1357, %v1359
        %v1361 = vadd.f32 %v1357, %v1360
        %vm1362 = vweird.f32 %v1356
        %vm1363 = vweird.f32 %v1357
        %vm1364 = vmor %vm1362, %vm1363
        %v1365 = vsel %vm1364, %v1357, %v1361
        %v1366 = vand.u32 2147483647, %v1356
        %vm1367 = vcmp.eq.f32.partialorder %v1366, 8.507059e+37
        %v1368 = vand.u32 %v1356, 2147483648
        %v1369 = vor.u32 1.1754944e-38, %v1368
        %v1370 = vsel %vm1367, %v1369, %v1365
        %v1371 = vmul.f32 %v1346, %v1370
        %v1372 = vmin.f32 %v1371, 1.0
        %v1373 = vmax.f32 %v1372, -1.0
        %v1374 = vmul.f32 %v851, %v851
        %v1375 = vmin.f32 16.0, %v1374
        %v1376 = vmul.f32 %v1375, 2.1237322e-06
        %v1377 = vadd.f32 %v1376, 0.00028619796
        %v1378 = vmul.f32 %v1375, %v1377
        %v1379 = vadd.f32 %v1378, 0.0036580483
        %v1380 = vmul.f32 %v1375, %v1379
        %v1381 = vadd.f32 %v1380, 0.05243302
        %v1382 = vmul.f32 %v1375, %v1381
        %v1383 = vadd.f32 %v1382, 0.18741608
        %v1384 = vmul.f32 %v1375, %v1383
        %v1385 = vadd.f32 %v1384, 1.1283791
        %v1386 = vmul.f32 %v851, %v1385
        %v1387 = vmul.f32 %v1375, 3.8918573e-05
        %v1388 = vadd.f32 %v1387, 0.001143296
        %v1389 = vmul.f32 %v1375, %v1388
        %v1390 = vadd.f32 %v1389, 0.014752088
        %v1391 = vmul.f32 %v1375, %v1390
        %v1392 = vadd.f32 %v1391, 0.112945676
        %v1393 = vmul.f32 %v1375, %v1392
        %v1394 = vadd.f32 %v1393, 0.4994258
        %v1395 = vmul.f32 %v1375, %v1394
        %v1396 = vadd.f32 %v1395, 1.0
        %v1397 = vrcp.pop %v1396
        %v1398 = vmul.f32 %v1396, %v1397
        %v1399 = vsub.f32 1.0, %v1398
        %v1400 = vmul.f32 %v1397, %v1399
        %v1401 = vadd.f32 %v1397, %v1400
        %vm1402 = vweird.f32 %v1396
        %vm1403 = vweird.f32 %v1397
        %vm1404 = vmor %vm1402, %vm1403
        %v1405 = vsel %vm1404, %v1397, %v1401
        %v1406 = vand.u32 2147483647, %v1396
        %vm1407 = vcmp.eq.f32.partialorder %v1406, 8.507059e+37
        %v1408 = vand.u32 %v1396, 2147483648
        %v1409 = vor.u32 1.1754944e-38, %v1408
        %v1410 = vsel %vm1407, %v1409, %v1405
        %v1411 = vmul.f32 %v1386, %v1410
        %v1412 = vmin.f32 %v1411, 1.0
        %v1413 = vmax.f32 %v1412, -1.0
        %v1414 = vmul.f32 %v852, %v852
        %v1415 = vmin.f32 16.0, %v1414
        %v1416 = vmul.f32 %v1415, 2.1237322e-06
        %v1417 = vadd.f32 %v1416, 0.00028619796
        %v1418 = vmul.f32 %v1415, %v1417
        %v1419 = vadd.f32 %v1418, 0.0036580483
        %v1420 = vmul.f32 %v1415, %v1419
        %v1421 = vadd.f32 %v1420, 0.05243302
        %v1422 = vmul.f32 %v1415, %v1421
        %v1423 = vadd.f32 %v1422, 0.18741608
        %v1424 = vmul.f32 %v1415, %v1423
        %v1425 = vadd.f32 %v1424, 1.1283791
        %v1426 = vmul.f32 %v852, %v1425
        %v1427 = vmul.f32 %v1415, 3.8918573e-05
        %v1428 = vadd.f32 %v1427, 0.001143296
        %v1429 = vmul.f32 %v1415, %v1428
        %v1430 = vadd.f32 %v1429, 0.014752088
        %v1431 = vmul.f32 %v1415, %v1430
        %v1432 = vadd.f32 %v1431, 0.112945676
        %v1433 = vmul.f32 %v1415, %v1432
        %v1434 = vadd.f32 %v1433, 0.4994258
        %v1435 = vmul.f32 %v1415, %v1434
        %v1436 = vadd.f32 %v1435, 1.0
        %v1437 = vrcp.pop %v1436
        %v1438 = vmul.f32 %v1436, %v1437
        %v1439 = vsub.f32 1.0, %v1438
        %v1440 = vmul.f32 %v1437, %v1439
        %v1441 = vadd.f32 %v1437, %v1440
        %vm1442 = vweird.f32 %v1436
        %vm1443 = vweird.f32 %v1437
        %vm1444 = vmor %vm1442, %vm1443
        %v1445 = vsel %vm1444, %v1437, %v1441
        %v1446 = vand.u32 2147483647, %v1436
        %vm1447 = vcmp.eq.f32.partialorder %v1446, 8.507059e+37
        %v1448 = vand.u32 %v1436, 2147483648
        %v1449 = vor.u32 1.1754944e-38, %v1448
        %v1450 = vsel %vm1447, %v1449, %v1445
        %v1451 = vmul.f32 %v1426, %v1450
        %v1452 = vmin.f32 %v1451, 1.0
        %v1453 = vmax.f32 %v1452, -1.0
        %v1454 = vmul.f32 %v853, %v853
        %v1455 = vmin.f32 16.0, %v1454
        %v1456 = vmul.f32 %v1455, 2.1237322e-06
        %v1457 = vadd.f32 %v1456, 0.00028619796
        %v1458 = vmul.f32 %v1455, %v1457
        %v1459 = vadd.f32 %v1458, 0.0036580483
        %v1460 = vmul.f32 %v1455, %v1459
        %v1461 = vadd.f32 %v1460, 0.05243302
        %v1462 = vmul.f32 %v1455, %v1461
        %v1463 = vadd.f32 %v1462, 0.18741608
        %v1464 = vmul.f32 %v1455, %v1463
        %v1465 = vadd.f32 %v1464, 1.1283791
        %v1466 = vmul.f32 %v853, %v1465
        %v1467 = vmul.f32 %v1455, 3.8918573e-05
        %v1468 = vadd.f32 %v1467, 0.001143296
        %v1469 = vmul.f32 %v1455, %v1468
        %v1470 = vadd.f32 %v1469, 0.014752088
        %v1471 = vmul.f32 %v1455, %v1470
        %v1472 = vadd.f32 %v1471, 0.112945676
        %v1473 = vmul.f32 %v1455, %v1472
        %v1474 = vadd.f32 %v1473, 0.4994258
        %v1475 = vmul.f32 %v1455, %v1474
        %v1476 = vadd.f32 %v1475, 1.0
        %v1477 = vrcp.pop %v1476
        %v1478 = vmul.f32 %v1476, %v1477
        %v1479 = vsub.f32 1.0, %v1478
        %v1480 = vmul.f32 %v1477, %v1479
        %v1481 = vadd.f32 %v1477, %v1480
        %vm1482 = vweird.f32 %v1476
        %vm1483 = vweird.f32 %v1477
        %vm1484 = vmor %vm1482, %vm1483
        %v1485 = vsel %vm1484, %v1477, %v1481
        %v1486 = vand.u32 2147483647, %v1476
        %vm1487 = vcmp.eq.f32.partialorder %v1486, 8.507059e+37
        %v1488 = vand.u32 %v1476, 2147483648
        %v1489 = vor.u32 1.1754944e-38, %v1488
        %v1490 = vsel %vm1487, %v1489, %v1485
        %v1491 = vmul.f32 %v1466, %v1490
        %v1492 = vmin.f32 %v1491, 1.0
        %v1493 = vmax.f32 %v1492, -1.0
        %v1494 = vadd.f32 %v893, 1.0
        %v1495 = vadd.f32 %v933, 1.0
        %v1496 = vadd.f32 %v973, 1.0
        %v1497 = vadd.f32 %v1013, 1.0
        %v1498 = vadd.f32 %v1053, 1.0
        %v1499 = vadd.f32 %v1093, 1.0
        %v1500 = vadd.f32 %v1133, 1.0
        %v1501 = vadd.f32 %v1173, 1.0
        %v1502 = vadd.f32 %v1213, 1.0
        %v1503 = vadd.f32 %v1253, 1.0
        %v1504 = vadd.f32 %v1293, 1.0
        %v1505 = vadd.f32 %v1333, 1.0
        %v1506 = vadd.f32 %v1373, 1.0
        %v1507 = vadd.f32 %v1413, 1.0
        %v1508 = vadd.f32 %v1453, 1.0
        %v1509 = vadd.f32 %v1493, 1.0
        %v1510 = vmul.f32 %v822, %v1494
        %v1511 = vmul.f32 %v823, %v1495
        %v1512 = vmul.f32 %v824, %v1496
        %v1513 = vmul.f32 %v825, %v1497
        %v1514 = vmul.f32 %v826, %v1498
        %v1515 = vmul.f32 %v827, %v1499
        %v1516 = vmul.f32 %v828, %v1500
        %v1517 = vmul.f32 %v829, %v1501
        %v1518 = vmul.f32 %v830, %v1502
        %v1519 = vmul.f32 %v831, %v1503
        %v1520 = vmul.f32 %v832, %v1504
        %v1521 = vmul.f32 %v833, %v1505
        %v1522 = vmul.f32 %v834, %v1506
        %v1523 = vmul.f32 %v835, %v1507
        %v1524 = vmul.f32 %v836, %v1508
        %v1525 = vmul.f32 %v837, %v1509
        %v1526 = vpack.c.bf16 %v1510, %v1510
        %v1527 = vpack.c.bf16 %v1511, %v1511
        %v1528 = vpack.c.bf16 %v1512, %v1512
        %v1529 = vpack.c.bf16 %v1513, %v1513
        %v1530 = vpack.c.bf16 %v1514, %v1514
        %v1531 = vpack.c.bf16 %v1515, %v1515
        %v1532 = vpack.c.bf16 %v1516, %v1516
        %v1533 = vpack.c.bf16 %v1517, %v1517
        %v1534 = vpack.c.bf16 %v1518, %v1518
        %v1535 = vpack.c.bf16 %v1519, %v1519
        %v1536 = vpack.c.bf16 %v1520, %v1520
        %v1537 = vpack.c.bf16 %v1521, %v1521
        %v1538 = vpack.c.bf16 %v1522, %v1522
        %v1539 = vpack.c.bf16 %v1523, %v1523
        %v1540 = vpack.c.bf16 %v1524, %v1524
        %v1541 = vpack.c.bf16 %v1525, %v1525
        %1542 = vst [vmem:[%s279] sm:$0xf] %v1526
        %1543 = vst [vmem:[%s279 + $0x4] sm:$0xf] %v1527
        %1544 = vst [vmem:[%s279 + $0x8] sm:$0xf] %v1528
        %1545 = vst [vmem:[%s279 + $0xc] sm:$0xf] %v1529
        %1546 = vst [vmem:[%s279 + $0x10] sm:$0xf] %v1530
        %1547 = vst [vmem:[%s279 + $0x14] sm:$0xf] %v1531
        %1548 = vst [vmem:[%s279 + $0x18] sm:$0xf] %v1532
        %1549 = vst [vmem:[%s279 + $0x1c] sm:$0xf] %v1533
        %1550 = vst [vmem:[%s279 + $0x20] sm:$0xf] %v1534
        %1551 = vst [vmem:[%s279 + $0x24] sm:$0xf] %v1535
        %1552 = vst [vmem:[%s279 + $0x28] sm:$0xf] %v1536
        %1553 = vst [vmem:[%s279 + $0x2c] sm:$0xf] %v1537
        %1554 = vst [vmem:[%s279 + $0x30] sm:$0xf] %v1538
        %1555 = vst [vmem:[%s279 + $0x34] sm:$0xf] %v1539
        %1556 = vst [vmem:[%s279 + $0x38] sm:$0xf] %v1540
        %1557 = vst [vmem:[%s279 + $0x3c] sm:$0xf] %v1541
        %s1558 = sand.u32 %s157, 1
        %s1559 = sand.u32 %s157, 1
        %s1560 = smul.addr %s1559, 64
        %s1561 = scalar_lea.vmem [#allocation6], %s1560
        // Predicated region
        $region49: #{conv_head_forward.2} parent=39 // pred_check
          %p1562 = pneg %p167
        $region50: #{conv_head_forward.2} parent=39 // pred_check_branch
          %1564 = sbr.rel (%p1562) target = $region52
        $region51: #{conv_head_forward.2} parent=39 // pred_region
          %s1565 = smul.u32 16, %s24
          %s1566 = smul.addr %s1565, 4
          %s1567 = sadd.s32 %s25, %s1566
          %s1568 = smul.addr %s1567, 4
          %s1569 = scalar_lea.vmem %s5, %s1568
          // Predicated region
          $region53: #{conv_head_forward.2} parent=51 // pred_check
            _
          $region54: #{conv_head_forward.2} parent=51 // pred_check_branch
            %1571 = sbr.rel (0) target = $region56
          $region55: #{conv_head_forward.2} parent=51 // pred_region
            // Predicated region
            $region57: #{conv_head_forward.2} parent=55 // pred_check
              _
            $region58: #{conv_head_forward.2} parent=55 // pred_check_branch
              %1573 = sbr.rel target = $region60
            $region59: #{conv_head_forward.2} parent=55 // pred_region
              // Predicated region
              $region72: #{conv_head_forward.2} parent=59 // pred_check
                _
              $region73: #{conv_head_forward.2} parent=59 // pred_check_branch
                %1619 = sbr.rel (0) target = $region75
              $region74: #{conv_head_forward.2} parent=59 // pred_region
                loop: start=0, step=1, limit=1
                $region76: #{conv_head_forward.2} parent=74 // loop_pre_header
                  _
                $region77: #{conv_head_forward.2} parent=74 // loop_header
                  %s1621 = sphi 0, %s1625
                  %p1622 = scmp.ge.s32.totalorder %s1621, 1
                  %s1626 = sphi %s1561, %s1561
                  %s1627 = sphi %s1569, %s1569
                $region78: #{conv_head_forward.2} parent=74 // loop_header_branch
                  %1624 = sbr.rel (%p1622) target = $region82
                $region79: #{conv_head_forward.2} parent=74 // loop_body
                  _
                $region80: #{conv_head_forward.2} parent=74 // loop_footer
                  %s1625 = sadd.s32 1, %s1621
                $region81: #{conv_head_forward.2} parent=74 // loop_footer_branch
                  %1620 = sbr.rel target = $region77
                $region82: #{conv_head_forward.2} parent=74 // loop_exit
                  _
                %s1629 = ssub.s32 16, 1
                loop: start=0, step=1, limit=1
                $region83: #{conv_head_forward.2} parent=74 // loop_pre_header
                  _
                $region84: #{conv_head_forward.2} parent=74 // loop_header
                  %s1631 = sphi 0, %s1635
                  %p1632 = scmp.ge.s32.totalorder %s1631, 1
                  %s1636 = sphi %s1561, %s1561
                  %s1637 = sphi %s1569, %s1569
                $region85: #{conv_head_forward.2} parent=74 // loop_header_branch
                  %1634 = sbr.rel (%p1632) target = $region89
                $region86: #{conv_head_forward.2} parent=74 // loop_body
                  %v1638 = vld [vmem:[%s1636] sm:%s1629]
                  %1639 = vst [vmem:[%s1637] sm:%s1629] %v1638
                  %v1640 = vld [vmem:[%s1636 + $0x4] sm:%s1629]
                  %1641 = vst [vmem:[%s1637 + $0x10] sm:%s1629] %v1640
                  %v1642 = vld [vmem:[%s1636 + $0x8] sm:%s1629]
                  %1643 = vst [vmem:[%s1637 + $0x20] sm:%s1629] %v1642
                  %v1644 = vld [vmem:[%s1636 + $0xc] sm:%s1629]
                  %1645 = vst [vmem:[%s1637 + $0x30] sm:%s1629] %v1644
                  %v1646 = vld [vmem:[%s1636 + $0x10] sm:%s1629]
                  %1647 = vst [vmem:[%s1637 + $0x40] sm:%s1629] %v1646
                  %v1648 = vld [vmem:[%s1636 + $0x14] sm:%s1629]
                  %1649 = vst [vmem:[%s1637 + $0x50] sm:%s1629] %v1648
                  %v1650 = vld [vmem:[%s1636 + $0x18] sm:%s1629]
                  %1651 = vst [vmem:[%s1637 + $0x60] sm:%s1629] %v1650
                  %v1652 = vld [vmem:[%s1636 + $0x1c] sm:%s1629]
                  %1653 = vst [vmem:[%s1637 + $0x70] sm:%s1629] %v1652
                  %v1654 = vld [vmem:[%s1636 + $0x20] sm:%s1629]
                  %1655 = vst [vmem:[%s1637 + $0x80] sm:%s1629] %v1654
                  %v1656 = vld [vmem:[%s1636 + $0x24] sm:%s1629]
                  %1657 = vst [vmem:[%s1637 + $0x90] sm:%s1629] %v1656
                  %v1658 = vld [vmem:[%s1636 + $0x28] sm:%s1629]
                  %1659 = vst [vmem:[%s1637 + $0xa0] sm:%s1629] %v1658
                  %v1660 = vld [vmem:[%s1636 + $0x2c] sm:%s1629]
                  %1661 = vst [vmem:[%s1637 + $0xb0] sm:%s1629] %v1660
                  %v1662 = vld [vmem:[%s1636 + $0x30] sm:%s1629]
                  %1663 = vst [vmem:[%s1637 + $0xc0] sm:%s1629] %v1662
                  %v1664 = vld [vmem:[%s1636 + $0x34] sm:%s1629]
                  %1665 = vst [vmem:[%s1637 + $0xd0] sm:%s1629] %v1664
                  %v1666 = vld [vmem:[%s1636 + $0x38] sm:%s1629]
                  %1667 = vst [vmem:[%s1637 + $0xe0] sm:%s1629] %v1666
                  %v1668 = vld [vmem:[%s1636 + $0x3c] sm:%s1629]
                  %1669 = vst [vmem:[%s1637 + $0xf0] sm:%s1629] %v1668
                $region87: #{conv_head_forward.2} parent=74 // loop_footer
                  %s1635 = sadd.s32 1, %s1631
                $region88: #{conv_head_forward.2} parent=74 // loop_footer_branch
                  %1630 = sbr.rel target = $region84
                $region89: #{conv_head_forward.2} parent=74 // loop_exit
                  _
              $region75: #{conv_head_forward.2} parent=59 // pred_fallthru
                _
            $region60: #{conv_head_forward.2} parent=55 // pred_fallthru
              _
            // Predicated region
            $region61: #{conv_head_forward.2} parent=55 // pred_check
              _
            $region62: #{conv_head_forward.2} parent=55 // pred_check_branch
              %1575 = sbr.rel (0) target = $region64
            $region63: #{conv_head_forward.2} parent=55 // pred_region
              %s1577 = ssub.s32 16, 1
              loop: start=0, step=1, limit=1
              $region65: #{conv_head_forward.2} parent=63 // loop_pre_header
                _
              $region66: #{conv_head_forward.2} parent=63 // loop_header
                %s1579 = sphi 0, %s1583
                %p1580 = scmp.ge.s32.totalorder %s1579, 1
                %s1584 = sphi %s1561, %s1561
                %s1585 = sphi %s1569, %s1569
              $region67: #{conv_head_forward.2} parent=63 // loop_header_branch
                %1582 = sbr.rel (%p1580) target = $region71
              $region68: #{conv_head_forward.2} parent=63 // loop_body
                %v1586 = vld [vmem:[%s1584] sm:%s1577]
                %1587 = vst [vmem:[%s1585] sm:%s1577] %v1586
                %v1588 = vld [vmem:[%s1584 + $0x4] sm:%s1577]
                %1589 = vst [vmem:[%s1585 + $0x10] sm:%s1577] %v1588
                %v1590 = vld [vmem:[%s1584 + $0x8] sm:%s1577]
                %1591 = vst [vmem:[%s1585 + $0x20] sm:%s1577] %v1590
                %v1592 = vld [vmem:[%s1584 + $0xc] sm:%s1577]
                %1593 = vst [vmem:[%s1585 + $0x30] sm:%s1577] %v1592
                %v1594 = vld [vmem:[%s1584 + $0x10] sm:%s1577]
                %1595 = vst [vmem:[%s1585 + $0x40] sm:%s1577] %v1594
                %v1596 = vld [vmem:[%s1584 + $0x14] sm:%s1577]
                %1597 = vst [vmem:[%s1585 + $0x50] sm:%s1577] %v1596
                %v1598 = vld [vmem:[%s1584 + $0x18] sm:%s1577]
                %1599 = vst [vmem:[%s1585 + $0x60] sm:%s1577] %v1598
                %v1600 = vld [vmem:[%s1584 + $0x1c] sm:%s1577]
                %1601 = vst [vmem:[%s1585 + $0x70] sm:%s1577] %v1600
                %v1602 = vld [vmem:[%s1584 + $0x20] sm:%s1577]
                %1603 = vst [vmem:[%s1585 + $0x80] sm:%s1577] %v1602
                %v1604 = vld [vmem:[%s1584 + $0x24] sm:%s1577]
                %1605 = vst [vmem:[%s1585 + $0x90] sm:%s1577] %v1604
                %v1606 = vld [vmem:[%s1584 + $0x28] sm:%s1577]
                %1607 = vst [vmem:[%s1585 + $0xa0] sm:%s1577] %v1606
                %v1608 = vld [vmem:[%s1584 + $0x2c] sm:%s1577]
                %1609 = vst [vmem:[%s1585 + $0xb0] sm:%s1577] %v1608
                %v1610 = vld [vmem:[%s1584 + $0x30] sm:%s1577]
                %1611 = vst [vmem:[%s1585 + $0xc0] sm:%s1577] %v1610
                %v1612 = vld [vmem:[%s1584 + $0x34] sm:%s1577]
                %1613 = vst [vmem:[%s1585 + $0xd0] sm:%s1577] %v1612
                %v1614 = vld [vmem:[%s1584 + $0x38] sm:%s1577]
                %1615 = vst [vmem:[%s1585 + $0xe0] sm:%s1577] %v1614
                %v1616 = vld [vmem:[%s1584 + $0x3c] sm:%s1577]
                %1617 = vst [vmem:[%s1585 + $0xf0] sm:%s1577] %v1616
              $region69: #{conv_head_forward.2} parent=63 // loop_footer
                %s1583 = sadd.s32 1, %s1579
              $region70: #{conv_head_forward.2} parent=63 // loop_footer_branch
                %1578 = sbr.rel target = $region66
              $region71: #{conv_head_forward.2} parent=63 // loop_exit
                _
            $region64: #{conv_head_forward.2} parent=55 // pred_fallthru
              _
          $region56: #{conv_head_forward.2} parent=51 // pred_fallthru
            _
          %1670 = vnop
        $region52: #{conv_head_forward.2} parent=39 // pred_fallthru
          _
      $region40: #{conv_head_forward.2} parent=5 // pred_fallthru
        _
      %p1671 = scmp.le.s32.totalorder 2, %s15
      // Predicated region
      $region90: #{conv_head_forward.2} parent=5 // pred_check
        %p1672 = pneg %p1671
      $region91: #{conv_head_forward.2} parent=5 // pred_check_branch
        %1674 = sbr.rel (%p1672) target = $region93
      $region92: #{conv_head_forward.2} parent=5 // pred_region
        %s1675 = ssub.s32 %s15, 2
        // Predicated region
        $region94: #{conv_head_forward.2} parent=92 // pred_check
          %p1676 = pneg %p173
        $region95: #{conv_head_forward.2} parent=92 // pred_check_branch
          %1678 = sbr.rel (%p1676) target = $region97
        $region96: #{conv_head_forward.2} parent=92 // pred_region
          %s1679 = sand.u32 %s158, 1
          %s1680 = sand.u32 %s158, 1
          %s1681 = smul.addr %s1680, 64
          %s1682 = scalar_lea.vmem [#allocation6], %s1681
        $region97: #{conv_head_forward.2} parent=92 // pred_fallthru
          _
      $region93: #{conv_head_forward.2} parent=5 // pred_fallthru
        _
    $region6: #{conv_head_forward.2} parent=1 // loop_footer
      %s19 = sadd.s32 1, %s15
    $region7: #{conv_head_forward.2} parent=1 // loop_footer_branch
      %14 = sbr.rel target = $region3
    $region8: #{conv_head_forward.2} parent=1 // loop_exit
      _
    %1683 = vsyncpa [#allocation3], 1
    %s1684 = scalar_lea.sflag [#allocation3], 1
    %1685 = vsyncpa %s1684, 1
    %1686 = vsyncpa [#allocation5], 1
    %s1687 = scalar_lea.sflag [#allocation5], 1
    %1688 = vsyncpa %s1687, 1

// kernel: conv_head_forward.3
$region0: #{conv_head_forward.3}
  #allocation0 [shape = 'u32[]', space=smem, size = 0x4, offset = 0x4, fixed_abs, tag = 'smem constant byte address 0x4 - core index']
  #allocation1 [shape = 'u32[72,128]{1,0:T(1,128)}', space=vmem, size = 0x9000, scoped, tag = 'internal scratch']
  %s0 = inlined_call_operand.vmem [shape: bf16[512,128], index: 0, kind: input, shape index: {}]
  %s1 = inlined_call_operand.vmem [shape: bf16[4,128,128], index: 1, kind: input, shape index: {}]
  %s2 = inlined_call_operand.vmem [shape: f32[1,128], index: 2, kind: input, shape index: {}]
  %s3 = inlined_call_operand.vmem [shape: f32[1,128], index: 3, kind: input, shape index: {}]
  %s4 = inlined_call_operand.vmem [shape: f32[1,128], index: 4, kind: input, shape index: {}]
  %s5 = inlined_call_operand.vmem [shape: bf16[128,8], index: 5, kind: input, shape index: {}]
  %s6 = inlined_call_operand.vmem [shape: f32[1,8], index: 6, kind: input, shape index: {}]
  %s7 = inlined_call_operand.vmem [shape: f32[4,512,8], index: 7, kind: output, shape index: {}]
  %s8 = sld [smem:[#allocation0]]
  $region61: #{conv_head_forward.3} parent=0
    _
  %s10 = ssub.s32 1, %s8
  %s11 = scalar_select 0, %s10, %s8
  loop: start=0, step=1, limit=6
  $region2: #{conv_head_forward.3} parent=0 // loop_pre_header
    _
  $region3: #{conv_head_forward.3} parent=0 // loop_header
    %s13 = sphi 0, %s17
    %p14 = scmp.ge.s32.totalorder %s13, 6
    %s20 = sphi 0, %s32
    %s21 = sphi 0, %s28
    %s22 = sphi 0, %s20
    %s23 = sphi 0, %s21
    %s24 = sphi 0, %s22
    %s25 = sphi 0, %s23
    %s35 = sphi 0, %s37
    %s38 = sphi 0, %s35
    %s39 = sphi 0, %s38
    %s55 = sphi 0, %s39
    %s61 = sphi 0, %s63
    %s64 = sphi 0, %s61
    %s65 = sphi 0, %s64
    %s81 = sphi 0, %s65
    %s85 = sphi 0, %s85
    %s87 = sphi 0, %s85
    %s88 = sphi 0, %s87
    %s102 = sphi 0, %s88
    %s106 = sphi 0, %s106
    %s108 = sphi 0, %s106
    %s109 = sphi 0, %s108
    %s123 = sphi 0, %s109
    %s127 = sphi 0, %s127
    %s129 = sphi 0, %s127
    %s130 = sphi 0, %s129
    %s144 = sphi 0, %s130
    %s148 = sphi 0, %s148
    %s150 = sphi 0, %s148
    %s151 = sphi 0, %s150
    %s165 = sphi 0, %s151
    %s169 = sphi 0, %s169
    %s171 = sphi 0, %s169
    %s172 = sphi 0, %s171
    %s186 = sphi 0, %s172
    %s194 = sphi 0, %s196
    %s197 = sphi 0, %s194
    %s198 = sphi 0, %s197
    %s214 = sphi 0, %s198
  $region4: #{conv_head_forward.3} parent=0 // loop_header_branch
    %16 = sbr.rel (%p14) target = $region8
  $region5: #{conv_head_forward.3} parent=0 // loop_body
    %s18 = ssub.s32 %s13, 1
    %s19 = ssub.s32 %s13, 2
    %s26 = sadd.s32 1, %s21
    %p27 = scmp.ge.s32.totalorder %s26, 4
    %s28 = scalar_select %p27, 0, %s26
    %s29 = sadd.s32 1, %s20
    %s30 = scalar_select %p27, %s29, %s20
    %p31 = scmp.ge.s32.totalorder %s30, 1
    %s32 = scalar_select %p31, 0, %s30
    %s33 = ssub.s32 %s20, %s32
    %p34 = scmp.eq.s32.totalorder %s33, 0
    %s36 = sadd.s32 %s35, 1
    %s37 = scalar_select %p34, %s35, %s36
    %p40 = pneg %p34
    %p41 = scmp.eq.s32.totalorder %s13, 3
    %p42 = por %p40, %p41
    %p43 = scmp.ne.s32.totalorder %s35, %s38
    %p44 = scmp.eq.s32.totalorder %s13, 0
    %p45 = por %p43, %p44
    %p46 = scmp.ne.s32.totalorder %s35, %s38
    %p47 = scmp.eq.s32.totalorder %s18, 3
    %p48 = por %p46, %p47
    %p49 = scmp.ne.s32.totalorder %s38, %s39
    %p50 = scmp.eq.s32.totalorder %s18, 0
    %p51 = por %p49, %p50
    %p52 = scmp.ne.s32.totalorder %s38, %s39
    %p53 = scmp.eq.s32.totalorder %s19, 3
    %p54 = por %p52, %p53
    %p56 = scmp.ne.s32.totalorder %s39, %s55
    %p57 = scmp.eq.s32.totalorder %s19, 0
    %p58 = por %p56, %p57
    %s59 = ssub.s32 %s21, %s28
    %p60 = scmp.eq.s32.totalorder %s59, 0
    %s62 = sadd.s32 %s61, 1
    %s63 = scalar_select %p60, %s61, %s62
    %p66 = pneg %p60
    %p67 = scmp.eq.s32.totalorder %s13, 3
    %p68 = por %p66, %p67
    %p69 = scmp.ne.s32.totalorder %s61, %s64
    %p70 = scmp.eq.s32.totalorder %s13, 0
    %p71 = por %p69, %p70
    %p72 = scmp.ne.s32.totalorder %s61, %s64
    %p73 = scmp.eq.s32.totalorder %s18, 3
    %p74 = por %p72, %p73
    %p75 = scmp.ne.s32.totalorder %s64, %s65
    %p76 = scmp.eq.s32.totalorder %s18, 0
    %p77 = por %p75, %p76
    %p78 = scmp.ne.s32.totalorder %s64, %s65
    %p79 = scmp.eq.s32.totalorder %s19, 3
    %p80 = por %p78, %p79
    %p82 = scmp.ne.s32.totalorder %s65, %s81
    %p83 = scmp.eq.s32.totalorder %s19, 0
    %p84 = por %p82, %p83
    %s86 = sadd.s32 %s85, 1
    %p89 = scmp.eq.s32.totalorder %s13, 3
    %p90 = scmp.ne.s32.totalorder %s85, %s87
    %p91 = scmp.eq.s32.totalorder %s13, 0
    %p92 = por %p90, %p91
    %p93 = scmp.ne.s32.totalorder %s85, %s87
    %p94 = scmp.eq.s32.totalorder %s18, 3
    %p95 = por %p93, %p94
    %p96 = scmp.ne.s32.totalorder %s87, %s88
    %p97 = scmp.eq.s32.totalorder %s18, 0
    %p98 = por %p96, %p97
    %p99 = scmp.ne.s32.totalorder %s87, %s88
    %p100 = scmp.eq.s32.totalorder %s19, 3
    %p101 = por %p99, %p100
    %p103 = scmp.ne.s32.totalorder %s88, %s102
    %p104 = scmp.eq.s32.totalorder %s19, 0
    %p105 = por %p103, %p104
    %s107 = sadd.s32 %s106, 1
    %p110 = scmp.eq.s32.totalorder %s13, 3
    %p111 = scmp.ne.s32.totalorder %s106, %s108
    %p112 = scmp.eq.s32.totalorder %s13, 0
    %p113 = por %p111, %p112
    %p114 = scmp.ne.s32.totalorder %s106, %s108
    %p115 = scmp.eq.s32.totalorder %s18, 3
    %p116 = por %p114, %p115
    %p117 = scmp.ne.s32.totalorder %s108, %s109
    %p118 = scmp.eq.s32.totalorder %s18, 0
    %p119 = por %p117, %p118
    %p120 = scmp.ne.s32.totalorder %s108, %s109
    %p121 = scmp.eq.s32.totalorder %s19, 3
    %p122 = por %p120, %p121
    %p124 = scmp.ne.s32.totalorder %s109, %s123
    %p125 = scmp.eq.s32.totalorder %s19, 0
    %p126 = por %p124, %p125
    %s128 = sadd.s32 %s127, 1
    %p131 = scmp.eq.s32.totalorder %s13, 3
    %p132 = scmp.ne.s32.totalorder %s127, %s129
    %p133 = scmp.eq.s32.totalorder %s13, 0
    %p134 = por %p132, %p133
    %p135 = scmp.ne.s32.totalorder %s127, %s129
    %p136 = scmp.eq.s32.totalorder %s18, 3
    %p137 = por %p135, %p136
    %p138 = scmp.ne.s32.totalorder %s129, %s130
    %p139 = scmp.eq.s32.totalorder %s18, 0
    %p140 = por %p138, %p139
    %p141 = scmp.ne.s32.totalorder %s129, %s130
    %p142 = scmp.eq.s32.totalorder %s19, 3
    %p143 = por %p141, %p142
    %p145 = scmp.ne.s32.totalorder %s130, %s144
    %p146 = scmp.eq.s32.totalorder %s19, 0
    %p147 = por %p145, %p146
    %s149 = sadd.s32 %s148, 1
    %p152 = scmp.eq.s32.totalorder %s13, 3
    %p153 = scmp.ne.s32.totalorder %s148, %s150
    %p154 = scmp.eq.s32.totalorder %s13, 0
    %p155 = por %p153, %p154
    %p156 = scmp.ne.s32.totalorder %s148, %s150
    %p157 = scmp.eq.s32.totalorder %s18, 3
    %p158 = por %p156, %p157
    %p159 = scmp.ne.s32.totalorder %s150, %s151
    %p160 = scmp.eq.s32.totalorder %s18, 0
    %p161 = por %p159, %p160
    %p162 = scmp.ne.s32.totalorder %s150, %s151
    %p163 = scmp.eq.s32.totalorder %s19, 3
    %p164 = por %p162, %p163
    %p166 = scmp.ne.s32.totalorder %s151, %s165
    %p167 = scmp.eq.s32.totalorder %s19, 0
    %p168 = por %p166, %p167
    %s170 = sadd.s32 %s169, 1
    %p173 = scmp.eq.s32.totalorder %s13, 3
    %p174 = scmp.ne.s32.totalorder %s169, %s171
    %p175 = scmp.eq.s32.totalorder %s13, 0
    %p176 = por %p174, %p175
    %p177 = scmp.ne.s32.totalorder %s169, %s171
    %p178 = scmp.eq.s32.totalorder %s18, 3
    %p179 = por %p177, %p178
    %p180 = scmp.ne.s32.totalorder %s171, %s172
    %p181 = scmp.eq.s32.totalorder %s18, 0
    %p182 = por %p180, %p181
    %p183 = scmp.ne.s32.totalorder %s171, %s172
    %p184 = scmp.eq.s32.totalorder %s19, 3
    %p185 = por %p183, %p184
    %p187 = scmp.ne.s32.totalorder %s172, %s186
    %p188 = scmp.eq.s32.totalorder %s19, 0
    %p189 = por %p187, %p188
    %s190 = ssub.s32 %s21, %s28
    %s191 = ssub.s32 %s20, %s32
    %s192 = sor.u32 %s190, %s191
    %p193 = scmp.eq.s32.totalorder %s192, 0
    %s195 = sadd.s32 %s194, 1
    %s196 = scalar_select %p193, %s194, %s195
    %p199 = pneg %p193
    %p200 = scmp.eq.s32.totalorder %s13, 3
    %p201 = por %p199, %p200
    %p202 = scmp.ne.s32.totalorder %s194, %s197
    %p203 = scmp.eq.s32.totalorder %s13, 0
    %p204 = por %p202, %p203
    %p205 = scmp.ne.s32.totalorder %s194, %s197
    %p206 = scmp.eq.s32.totalorder %s18, 3
    %p207 = por %p205, %p206
    %p208 = scmp.ne.s32.totalorder %s197, %s198
    %p209 = scmp.eq.s32.totalorder %s18, 0
    %p210 = por %p208, %p209
    %p211 = scmp.ne.s32.totalorder %s197, %s198
    %p212 = scmp.eq.s32.totalorder %s19, 3
    %p213 = por %p211, %p212
    %p215 = scmp.ne.s32.totalorder %s198, %s214
    %p216 = scmp.eq.s32.totalorder %s19, 0
    %p217 = por %p215, %p216
    %p218 = scmp.le.s32.totalorder 1, %s13
    %p219 = scmp.lt.s32.totalorder %s13, 5
    %p220 = pnand %p218, %p219
    %p221 = pneg %p220
    // Predicated region
    $region9: #{conv_head_forward.3} parent=5 // pred_check
      _
    $region10: #{conv_head_forward.3} parent=5 // pred_check_branch
      %223 = sbr.rel (%p220) target = $region12
    $region11: #{conv_head_forward.3} parent=5 // pred_region
      %s224 = ssub.s32 %s13, 1
      // Predicated region
      $region13: #{conv_head_forward.3} parent=11 // pred_check
        %p225 = pneg %p51
      $region14: #{conv_head_forward.3} parent=11 // pred_check_branch
        %227 = sbr.rel (%p225) target = $region16
      $region15: #{conv_head_forward.3} parent=11 // pred_region
        %s228 = smul.u32 64, %s22
        %p229 = scmp.lt.s32.totalorder %s228, 63
        %s230 = scalar_select %p229, %s228, 63
        %s231 = smul.addr %s230, 4
        %s232 = scalar_lea.vmem %s0, %s231
        %s233 = smul.u32 64, %s22
      $region16: #{conv_head_forward.3} parent=11 // pred_fallthru
        _
      // Predicated region
      $region17: #{conv_head_forward.3} parent=11 // pred_check
        %p234 = pneg %p98
      $region18: #{conv_head_forward.3} parent=11 // pred_check_branch
        %236 = sbr.rel (%p234) target = $region20
      $region19: #{conv_head_forward.3} parent=11 // pred_region
        _
      $region20: #{conv_head_forward.3} parent=11 // pred_fallthru
        _
      // Predicated region
      $region21: #{conv_head_forward.3} parent=11 // pred_check
        %p237 = pneg %p119
      $region22: #{conv_head_forward.3} parent=11 // pred_check_branch
        %239 = sbr.rel (%p237) target = $region24
      $region23: #{conv_head_forward.3} parent=11 // pred_region
        _
      $region24: #{conv_head_forward.3} parent=11 // pred_fallthru
        _
      // Predicated region
      $region25: #{conv_head_forward.3} parent=11 // pred_check
        %p240 = pneg %p140
      $region26: #{conv_head_forward.3} parent=11 // pred_check_branch
        %242 = sbr.rel (%p240) target = $region28
      $region27: #{conv_head_forward.3} parent=11 // pred_region
        _
      $region28: #{conv_head_forward.3} parent=11 // pred_fallthru
        _
      // Predicated region
      $region29: #{conv_head_forward.3} parent=11 // pred_check
        %p243 = pneg %p161
      $region30: #{conv_head_forward.3} parent=11 // pred_check_branch
        %245 = sbr.rel (%p243) target = $region32
      $region31: #{conv_head_forward.3} parent=11 // pred_region
        _
      $region32: #{conv_head_forward.3} parent=11 // pred_fallthru
        _
      // Predicated region
      $region33: #{conv_head_forward.3} parent=11 // pred_check
        %p246 = pneg %p182
      $region34: #{conv_head_forward.3} parent=11 // pred_check_branch
        %248 = sbr.rel (%p246) target = $region36
      $region35: #{conv_head_forward.3} parent=11 // pred_region
        _
      $region36: #{conv_head_forward.3} parent=11 // pred_fallthru
        _
    $region12: #{conv_head_forward.3} parent=5 // pred_fallthru
      _
    %p249 = scmp.lt.s32.totalorder %s13, 4
    // Predicated region
    $region37: #{conv_head_forward.3} parent=5 // pred_check
      %p250 = pneg %p249
    $region38: #{conv_head_forward.3} parent=5 // pred_check_branch
      %252 = sbr.rel (%p250) target = $region40
    $region39: #{conv_head_forward.3} parent=5 // pred_region
      // Predicated region
      $region41: #{conv_head_forward.3} parent=39 // pred_check
        %p253 = pneg %p71
      $region42: #{conv_head_forward.3} parent=39 // pred_check_branch
        %255 = sbr.rel (%p253) target = $region44
      $region43: #{conv_head_forward.3} parent=39 // pred_region
        %p256 = scmp.lt.s32.totalorder %s21, 3
        %s257 = scalar_select %p256, %s21, 3
        %s258 = smul.addr %s257, 16
        %s259 = smul.addr %s258, 4
        %s260 = scalar_lea.vmem %s1, %s259
      $region44: #{conv_head_forward.3} parent=39 // pred_fallthru
        _
    $region40: #{conv_head_forward.3} parent=5 // pred_fallthru
      _
    %p261 = scmp.le.s32.totalorder 1, %s13
    %p262 = scmp.lt.s32.totalorder %s13, 5
    %p263 = pnand %p261, %p262
    %p264 = pneg %p263
    // Predicated region
    $region45: #{conv_head_forward.3} parent=5 // pred_check
      _
    $region46: #{conv_head_forward.3} parent=5 // pred_check_branch
      %266 = sbr.rel (%p263) target = $region48
    $region47: #{conv_head_forward.3} parent=5 // pred_region
      %s267 = ssub.s32 %s13, 1
      %s268 = smul.u32 64, %s22
      %p269 = scmp.lt.s32.totalorder %s268, 63
      %s270 = scalar_select %p269, %s268, 63
      %s271 = smul.addr %s270, 4
      %s272 = scalar_lea.vmem %s0, %s271
      %p273 = pneg %p51
      %p274 = pneg %p48
      %p275 = scmp.lt.s32.totalorder %s23, 3
      %s276 = scalar_select %p275, %s23, 3
      %s277 = smul.addr %s276, 16
      %s278 = smul.addr %s277, 4
      %s279 = scalar_lea.vmem %s1, %s278
      %p280 = pneg %p77
      %p281 = pneg %p74
      %p282 = pneg %p98
      %p283 = pneg %p95
      %p284 = pneg %p119
      %p285 = pneg %p116
      %p286 = pneg %p140
      %p287 = pneg %p137
      %p288 = pneg %p161
      %p289 = pneg %p158
      %p290 = pneg %p182
      %p291 = pneg %p179
      %p292 = pneg %p210
      %p293 = pneg %p207
      %s294 = smul.u32 64, %s22
      %p295 = scmp.lt.s32.totalorder %s23, 3
      %s296 = scalar_select %p295, %s23, 3
      %p297 = scmp.lt.s32.totalorder %s294, 63
      %s298 = scalar_select %p297, %s294, 63
      %s299 = smul.addr %s296, 64
      %s300 = sadd.s32 %s298, %s299
      %s301 = smul.addr %s300, 8
      %s302 = scalar_lea.vmem %s7, %s301
      %s303 = smul.u32 64, %s22
      %p304 = scmp.lt.s32.totalorder %s303, 63
      %s305 = scalar_select %p304, %s303, 63
      %s306 = smul.addr %s305, 4
      %s307 = scalar_lea.vmem %s0, %s306
      %s308 = smul.u32 64, %s22
      %p309 = scmp.lt.s32.totalorder %s23, 3
      %s310 = scalar_select %p309, %s23, 3
      %s311 = smul.addr %s310, 16
      %s312 = smul.addr %s311, 4
      %s313 = scalar_lea.vmem %s1, %s312
      %s314 = smul.u32 64, %s22
      %p315 = scmp.lt.s32.totalorder %s23, 3
      %s316 = scalar_select %p315, %s23, 3
      %p317 = scmp.lt.s32.totalorder %s314, 63
      %s318 = scalar_select %p317, %s314, 63
      %s319 = smul.addr %s316, 64
      %s320 = sadd.s32 %s318, %s319
      %s321 = smul.addr %s320, 8
      %s322 = scalar_lea.vmem %s7, %s321
      %s323 = smul.u32 64, %s22
      %v324 = vld [vmem:[%s307] sm:$0xf]
      %v325 = vld [vmem:[%s307 + $0x4] sm:$0xf]
      %v326 = vld [vmem:[%s307 + $0x8] sm:$0xf]
      %v327 = vld [vmem:[%s307 + $0xc] sm:$0xf]
      %v328 = vld [vmem:[%s307 + $0x10] sm:$0xf]
      %v329 = vld [vmem:[%s307 + $0x14] sm:$0xf]
      %v330 = vld [vmem:[%s307 + $0x18] sm:$0xf]
      %v331 = vld [vmem:[%s307 + $0x1c] sm:$0xf]
      %v332 = vld [vmem:[%s307 + $0x20] sm:$0xf]
      %v333 = vld [vmem:[%s307 + $0x24] sm:$0xf]
      %v334 = vld [vmem:[%s307 + $0x28] sm:$0xf]
      %v335 = vld [vmem:[%s307 + $0x2c] sm:$0xf]
      %v336 = vld [vmem:[%s307 + $0x30] sm:$0xf]
      %v337 = vld [vmem:[%s307 + $0x34] sm:$0xf]
      %v338 = vld [vmem:[%s307 + $0x38] sm:$0xf]
      %v339 = vld [vmem:[%s307 + $0x3c] sm:$0xf]
      %v340 = vld [vmem:[%s307 + $0x40] sm:$0xf]
      %v341 = vld [vmem:[%s307 + $0x44] sm:$0xf]
      %v342 = vld [vmem:[%s307 + $0x48] sm:$0xf]
      %v343 = vld [vmem:[%s307 + $0x4c] sm:$0xf]
      %v344 = vld [vmem:[%s307 + $0x50] sm:$0xf]
      %v345 = vld [vmem:[%s307 + $0x54] sm:$0xf]
      %v346 = vld [vmem:[%s307 + $0x58] sm:$0xf]
      %v347 = vld [vmem:[%s307 + $0x5c] sm:$0xf]
      %v348 = vld [vmem:[%s307 + $0x60] sm:$0xf]
      %v349 = vld [vmem:[%s307 + $0x64] sm:$0xf]
      %v350 = vld [vmem:[%s307 + $0x68] sm:$0xf]
      %v351 = vld [vmem:[%s307 + $0x6c] sm:$0xf]
      %v352 = vld [vmem:[%s307 + $0x70] sm:$0xf]
      %v353 = vld [vmem:[%s307 + $0x74] sm:$0xf]
      %v354 = vld [vmem:[%s307 + $0x78] sm:$0xf]
      %v355 = vld [vmem:[%s307 + $0x7c] sm:$0xf]
      %v356 = vld [vmem:[%s307 + $0x80] sm:$0xf]
      %v357 = vld [vmem:[%s307 + $0x84] sm:$0xf]
      %v358 = vld [vmem:[%s307 + $0x88] sm:$0xf]
      %v359 = vld [vmem:[%s307 + $0x8c] sm:$0xf]
      %v360 = vld [vmem:[%s307 + $0x90] sm:$0xf]
      %v361 = vld [vmem:[%s307 + $0x94] sm:$0xf]
      %v362 = vld [vmem:[%s307 + $0x98] sm:$0xf]
      %v363 = vld [vmem:[%s307 + $0x9c] sm:$0xf]
      %v364 = vld [vmem:[%s307 + $0xa0] sm:$0xf]
      %v365 = vld [vmem:[%s307 + $0xa4] sm:$0xf]
      %v366 = vld [vmem:[%s307 + $0xa8] sm:$0xf]
      %v367 = vld [vmem:[%s307 + $0xac] sm:$0xf]
      %v368 = vld [vmem:[%s307 + $0xb0] sm:$0xf]
      %v369 = vld [vmem:[%s307 + $0xb4] sm:$0xf]
      %v370 = vld [vmem:[%s307 + $0xb8] sm:$0xf]
      %v371 = vld [vmem:[%s307 + $0xbc] sm:$0xf]
      %v372 = vld [vmem:[%s307 + $0xc0] sm:$0xf]
      %v373 = vld [vmem:[%s307 + $0xc4] sm:$0xf]
      %v374 = vld [vmem:[%s307 + $0xc8] sm:$0xf]
      %v375 = vld [vmem:[%s307 + $0xcc] sm:$0xf]
      %v376 = vld [vmem:[%s307 + $0xd0] sm:$0xf]
      %v377 = vld [vmem:[%s307 + $0xd4] sm:$0xf]
      %v378 = vld [vmem:[%s307 + $0xd8] sm:$0xf]
      %v379 = vld [vmem:[%s307 + $0xdc] sm:$0xf]
      %v380 = vld [vmem:[%s307 + $0xe0] sm:$0xf]
      %v381 = vld [vmem:[%s307 + $0xe4] sm:$0xf]
      %v382 = vld [vmem:[%s307 + $0xe8] sm:$0xf]
      %v383 = vld [vmem:[%s307 + $0xec] sm:$0xf]
      %v384 = vld [vmem:[%s307 + $0xf0] sm:$0xf]
      %v385 = vld [vmem:[%s307 + $0xf4] sm:$0xf]
      %v386 = vld [vmem:[%s307 + $0xf8] sm:$0xf]
      %v387 = vld [vmem:[%s307 + $0xfc] sm:$0xf]
      %v388 = vld [vmem:[%s313] sm:$0xf]
      %v389 = vld [vmem:[%s313 + $0x4] sm:$0xf]
      %v390 = vld [vmem:[%s313 + $0x8] sm:$0xf]
      %v391 = vld [vmem:[%s313 + $0xc] sm:$0xf]
      %v392 = vld [vmem:[%s313 + $0x10] sm:$0xf]
      %v393 = vld [vmem:[%s313 + $0x14] sm:$0xf]
      %v394 = vld [vmem:[%s313 + $0x18] sm:$0xf]
      %v395 = vld [vmem:[%s313 + $0x1c] sm:$0xf]
      %v396 = vld [vmem:[%s313 + $0x20] sm:$0xf]
      %v397 = vld [vmem:[%s313 + $0x24] sm:$0xf]
      %v398 = vld [vmem:[%s313 + $0x28] sm:$0xf]
      %v399 = vld [vmem:[%s313 + $0x2c] sm:$0xf]
      %v400 = vld [vmem:[%s313 + $0x30] sm:$0xf]
      %v401 = vld [vmem:[%s313 + $0x34] sm:$0xf]
      %v402 = vld [vmem:[%s313 + $0x38] sm:$0xf]
      %v403 = vld [vmem:[%s313 + $0x3c] sm:$0xf]
      %v404 = vld [vmem:[%s2] sm:$0x1]
      %v406 = vperm.slane %v404, 0
      %v472 = vunpack.c.l.b16 %v324
      %v473 = vunpack.c.l.b16 %v325
      %v474 = vunpack.c.l.b16 %v326
      %v475 = vunpack.c.l.b16 %v327
      %v476 = vunpack.c.l.b16 %v328
      %v477 = vunpack.c.l.b16 %v329
      %v478 = vunpack.c.l.b16 %v330
      %v479 = vunpack.c.l.b16 %v331
      %v480 = vunpack.c.l.b16 %v332
      %v481 = vunpack.c.l.b16 %v333
      %v482 = vunpack.c.l.b16 %v334
      %v483 = vunpack.c.l.b16 %v335
      %v484 = vunpack.c.l.b16 %v336
      %v485 = vunpack.c.l.b16 %v337
      %v486 = vunpack.c.l.b16 %v338
      %v487 = vunpack.c.l.b16 %v339
      %v488 = vunpack.c.l.b16 %v340
      %v489 = vunpack.c.l.b16 %v341
      %v490 = vunpack.c.l.b16 %v342
      %v491 = vunpack.c.l.b16 %v343
      %v492 = vunpack.c.l.b16 %v344
      %v493 = vunpack.c.l.b16 %v345
      %v494 = vunpack.c.l.b16 %v346
      %v495 = vunpack.c.l.b16 %v347
      %v496 = vunpack.c.l.b16 %v348
      %v497 = vunpack.c.l.b16 %v349
      %v498 = vunpack.c.l.b16 %v350
      %v499 = vunpack.c.l.b16 %v351
      %v500 = vunpack.c.l.b16 %v352
      %v501 = vunpack.c.l.b16 %v353
      %v502 = vunpack.c.l.b16 %v354
      %v503 = vunpack.c.l.b16 %v355
      %v504 = vunpack.c.l.b16 %v356
      %v505 = vunpack.c.l.b16 %v357
      %v506 = vunpack.c.l.b16 %v358
      %v507 = vunpack.c.l.b16 %v359
      %v508 = vunpack.c.l.b16 %v360
      %v509 = vunpack.c.l.b16 %v361
      %v510 = vunpack.c.l.b16 %v362
      %v511 = vunpack.c.l.b16 %v363
      %v512 = vunpack.c.l.b16 %v364
      %v513 = vunpack.c.l.b16 %v365
      %v514 = vunpack.c.l.b16 %v366
      %v515 = vunpack.c.l.b16 %v367
      %v516 = vunpack.c.l.b16 %v368
      %v517 = vunpack.c.l.b16 %v369
      %v518 = vunpack.c.l.b16 %v370
      %v519 = vunpack.c.l.b16 %v371
      %v520 = vunpack.c.l.b16 %v372
      %v521 = vunpack.c.l.b16 %v373
      %v522 = vunpack.c.l.b16 %v374
      %v523 = vunpack.c.l.b16 %v375
      %v524 = vunpack.c.l.b16 %v376
      %v525 = vunpack.c.l.b16 %v377
      %v526 = vunpack.c.l.b16 %v378
      %v527 = vunpack.c.l.b16 %v379
      %v528 = vunpack.c.l.b16 %v380
      %v529 = vunpack.c.l.b16 %v381
      %v530 = vunpack.c.l.b16 %v382
      %v531 = vunpack.c.l.b16 %v383
      %v532 = vunpack.c.l.b16 %v384
      %v533 = vunpack.c.l.b16 %v385
      %v534 = vunpack.c.l.b16 %v386
      %v535 = vunpack.c.l.b16 %v387
      %v536 = vpack.c.b16 %v473, %v472
      %v537 = vpack.c.b16 %v475, %v474
      %v538 = vpack.c.b16 %v477, %v476
      %v539 = vpack.c.b16 %v479, %v478
      %v540 = vpack.c.b16 %v481, %v480
      %v541 = vpack.c.b16 %v483, %v482
      %v542 = vpack.c.b16 %v485, %v484
      %v543 = vpack.c.b16 %v487, %v486
      %v544 = vpack.c.b16 %v489, %v488
      %v545 = vpack.c.b16 %v491, %v490
      %v546 = vpack.c.b16 %v493, %v492
      %v547 = vpack.c.b16 %v495, %v494
      %v548 = vpack.c.b16 %v497, %v496
      %v549 = vpack.c.b16 %v499, %v498
      %v550 = vpack.c.b16 %v501, %v500
      %v551 = vpack.c.b16 %v503, %v502
      %v552 = vpack.c.b16 %v505, %v504
      %v553 = vpack.c.b16 %v507, %v506
      %v554 = vpack.c.b16 %v509, %v508
      %v555 = vpack.c.b16 %v511, %v510
      %v556 = vpack.c.b16 %v513, %v512
      %v557 = vpack.c.b16 %v515, %v514
      %v558 = vpack.c.b16 %v517, %v516
      %v559 = vpack.c.b16 %v519, %v518
      %v560 = vpack.c.b16 %v521, %v520
      %v561 = vpack.c.b16 %v523, %v522
      %v562 = vpack.c.b16 %v525, %v524
      %v563 = vpack.c.b16 %v527, %v526
      %v564 = vpack.c.b16 %v529, %v528
      %v565 = vpack.c.b16 %v531, %v530
      %v566 = vpack.c.b16 %v533, %v532
      %v567 = vpack.c.b16 %v535, %v534
      %v616 = vunpack.c.l.b16 %v388
      %v617 = vunpack.c.l.b16 %v389
      %v618 = vunpack.c.l.b16 %v390
      %v619 = vunpack.c.l.b16 %v391
      %v620 = vunpack.c.l.b16 %v392
      %v621 = vunpack.c.l.b16 %v393
      %v622 = vunpack.c.l.b16 %v394
      %v623 = vunpack.c.l.b16 %v395
      %v624 = vunpack.c.l.b16 %v396
      %v625 = vunpack.c.l.b16 %v397
      %v626 = vunpack.c.l.b16 %v398
      %v627 = vunpack.c.l.b16 %v399
      %v628 = vunpack.c.l.b16 %v400
      %v629 = vunpack.c.l.b16 %v401
      %v630 = vunpack.c.l.b16 %v402
      %v631 = vunpack.c.l.b16 %v403
      %v632 = vpack.c.b16 %v617, %v616
      %v633 = vpack.c.b16 %v619, %v618
      %v634 = vpack.c.b16 %v621, %v620
      %v635 = vpack.c.b16 %v623, %v622
      %v636 = vpack.c.b16 %v625, %v624
      %v637 = vpack.c.b16 %v627, %v626
      %v638 = vpack.c.b16 %v629, %v628
      %v639 = vpack.c.b16 %v631, %v630
      %648 = vmatpush.bf16.msra.mxu0 %v639
      %649 = vmatpush.bf16.msra.mxu0 %v638
      %650 = vmatpush.bf16.msra.mxu0 %v637
      %651 = vmatpush.bf16.msra.mxu0 %v636
      %652 = vmatpush.bf16.msra.mxu0 %v635
      %653 = vmatpush.bf16.msra.mxu0 %v634
      %654 = vmatpush.bf16.msra.mxu0 %v633
      %655 = vmatpush.bf16.msra.mxu0 %v632
      %656 = vmatmul.bf16.gmra.mxu0 %v536
      %v657 = vpop.f32.mrf.mxu0
      %v658 = vadd.f32 %v406, %v657
      %v659 = vpop.f32.mrf.mxu0
      %v660 = vadd.f32 %v406, %v659
      %661 = vmatmul.bf16.gmra.mxu0 %v537
      %v662 = vpop.f32.mrf.mxu0
      %v663 = vadd.f32 %v406, %v662
      %v664 = vpop.f32.mrf.mxu0
      %v665 = vadd.f32 %v406, %v664
      %666 = vmatmul.bf16.gmra.mxu0 %v538
      %v667 = vpop.f32.mrf.mxu0
      %v668 = vadd.f32 %v406, %v667
      %v669 = vpop.f32.mrf.mxu0
      %v670 = vadd.f32 %v406, %v669
      %671 = vmatmul.bf16.gmra.mxu0 %v539
      %v672 = vpop.f32.mrf.mxu0
      %v673 = vadd.f32 %v406, %v672
      %v674 = vpop.f32.mrf.mxu0
      %v675 = vadd.f32 %v406, %v674
      %676 = vmatmul.bf16.gmra.mxu0 %v540
      %v677 = vpop.f32.mrf.mxu0
      %v678 = vadd.f32 %v406, %v677
      %v679 = vpop.f32.mrf.mxu0
      %v680 = vadd.f32 %v406, %v679
      %681 = vmatmul.bf16.gmra.mxu0 %v541
      %v682 = vpop.f32.mrf.mxu0
      %v683 = vadd.f32 %v406, %v682
      %v684 = vpop.f32.mrf.mxu0
      %v685 = vadd.f32 %v406, %v684
      %686 = vmatmul.bf16.gmra.mxu0 %v542
      %v687 = vpop.f32.mrf.mxu0
      %v688 = vadd.f32 %v406, %v687
      %v689 = vpop.f32.mrf.mxu0
      %v690 = vadd.f32 %v406, %v689
      %691 = vmatmul.bf16.gmra.mxu0 %v543
      %v692 = vpop.f32.mrf.mxu0
      %v693 = vadd.f32 %v406, %v692
      %v694 = vpop.f32.mrf.mxu0
      %v695 = vadd.f32 %v406, %v694
      %696 = vmatmul.bf16.gmra.mxu0 %v544
      %v697 = vpop.f32.mrf.mxu0
      %v698 = vadd.f32 %v406, %v697
      %v699 = vpop.f32.mrf.mxu0
      %v700 = vadd.f32 %v406, %v699
      %701 = vmatmul.bf16.gmra.mxu0 %v545
      %v702 = vpop.f32.mrf.mxu0
      %v703 = vadd.f32 %v406, %v702
      %v704 = vpop.f32.mrf.mxu0
      %v705 = vadd.f32 %v406, %v704
      %706 = vmatmul.bf16.gmra.mxu0 %v546
      %v707 = vpop.f32.mrf.mxu0
      %v708 = vadd.f32 %v406, %v707
      %v709 = vpop.f32.mrf.mxu0
      %v710 = vadd.f32 %v406, %v709
      %711 = vmatmul.bf16.gmra.mxu0 %v547
      %v712 = vpop.f32.mrf.mxu0
      %v713 = vadd.f32 %v406, %v712
      %v714 = vpop.f32.mrf.mxu0
      %v715 = vadd.f32 %v406, %v714
      %716 = vmatmul.bf16.gmra.mxu0 %v548
      %v717 = vpop.f32.mrf.mxu0
      %v718 = vadd.f32 %v406, %v717
      %v719 = vpop.f32.mrf.mxu0
      %v720 = vadd.f32 %v406, %v719
      %721 = vmatmul.bf16.gmra.mxu0 %v549
      %v722 = vpop.f32.mrf.mxu0
      %v723 = vadd.f32 %v406, %v722
      %v724 = vpop.f32.mrf.mxu0
      %v725 = vadd.f32 %v406, %v724
      %726 = vmatmul.bf16.gmra.mxu0 %v550
      %v727 = vpop.f32.mrf.mxu0
      %v728 = vadd.f32 %v406, %v727
      %v729 = vpop.f32.mrf.mxu0
      %v730 = vadd.f32 %v406, %v729
      %731 = vmatmul.bf16.gmra.mxu0 %v551
      %v732 = vpop.f32.mrf.mxu0
      %v733 = vadd.f32 %v406, %v732
      %v734 = vpop.f32.mrf.mxu0
      %v735 = vadd.f32 %v406, %v734
      %736 = vmatmul.bf16.gmra.mxu0 %v552
      %v737 = vpop.f32.mrf.mxu0
      %v738 = vadd.f32 %v406, %v737
      %v739 = vpop.f32.mrf.mxu0
      %v740 = vadd.f32 %v406, %v739
      %741 = vmatmul.bf16.gmra.mxu0 %v553
      %v742 = vpop.f32.mrf.mxu0
      %v743 = vadd.f32 %v406, %v742
      %v744 = vpop.f32.mrf.mxu0
      %v745 = vadd.f32 %v406, %v744
      %746 = vmatmul.bf16.gmra.mxu0 %v554
      %v747 = vpop.f32.mrf.mxu0
      %v748 = vadd.f32 %v406, %v747
      %v749 = vpop.f32.mrf.mxu0
      %v750 = vadd.f32 %v406, %v749
      %751 = vmatmul.bf16.gmra.mxu0 %v555
      %v752 = vpop.f32.mrf.mxu0
      %v753 = vadd.f32 %v406, %v752
      %v754 = vpop.f32.mrf.mxu0
      %v755 = vadd.f32 %v406, %v754
      %756 = vmatmul.bf16.gmra.mxu0 %v556
      %v757 = vpop.f32.mrf.mxu0
      %v758 = vadd.f32 %v406, %v757
      %v759 = vpop.f32.mrf.mxu0
      %v760 = vadd.f32 %v406, %v759
      %761 = vmatmul.bf16.gmra.mxu0 %v557
      %v762 = vpop.f32.mrf.mxu0
      %v763 = vadd.f32 %v406, %v762
      %v764 = vpop.f32.mrf.mxu0
      %v765 = vadd.f32 %v406, %v764
      %766 = vmatmul.bf16.gmra.mxu0 %v558
      %v767 = vpop.f32.mrf.mxu0
      %v768 = vadd.f32 %v406, %v767
      %v769 = vpop.f32.mrf.mxu0
      %v770 = vadd.f32 %v406, %v769
      %771 = vmatmul.bf16.gmra.mxu0 %v559
      %v772 = vpop.f32.mrf.mxu0
      %v773 = vadd.f32 %v406, %v772
      %v774 = vpop.f32.mrf.mxu0
      %v775 = vadd.f32 %v406, %v774
      %776 = vmatmul.bf16.gmra.mxu0 %v560
      %v777 = vpop.f32.mrf.mxu0
      %v778 = vadd.f32 %v406, %v777
      %v779 = vpop.f32.mrf.mxu0
      %v780 = vadd.f32 %v406, %v779
      %781 = vmatmul.bf16.gmra.mxu0 %v561
      %v782 = vpop.f32.mrf.mxu0
      %v783 = vadd.f32 %v406, %v782
      %v784 = vpop.f32.mrf.mxu0
      %v785 = vadd.f32 %v406, %v784
      %786 = vmatmul.bf16.gmra.mxu0 %v562
      %v787 = vpop.f32.mrf.mxu0
      %v788 = vadd.f32 %v406, %v787
      %v789 = vpop.f32.mrf.mxu0
      %v790 = vadd.f32 %v406, %v789
      %791 = vmatmul.bf16.gmra.mxu0 %v563
      %v792 = vpop.f32.mrf.mxu0
      %v793 = vadd.f32 %v406, %v792
      %v794 = vpop.f32.mrf.mxu0
      %v795 = vadd.f32 %v406, %v794
      %796 = vmatmul.bf16.gmra.mxu0 %v564
      %v797 = vpop.f32.mrf.mxu0
      %v798 = vadd.f32 %v406, %v797
      %v799 = vpop.f32.mrf.mxu0
      %v800 = vadd.f32 %v406, %v799
      %801 = vmatmul.bf16.gmra.mxu0 %v565
      %v802 = vpop.f32.mrf.mxu0
      %v803 = vadd.f32 %v406, %v802
      %v804 = vpop.f32.mrf.mxu0
      %v805 = vadd.f32 %v406, %v804
      %806 = vmatmul.bf16.gmra.mxu0 %v566
      %v807 = vpop.f32.mrf.mxu0
      %v808 = vadd.f32 %v406, %v807
      %v809 = vpop.f32.mrf.mxu0
      %v810 = vadd.f32 %v406, %v809
      %811 = vmatmul.bf16.gmra.mxu0 %v567
      %v812 = vpop.f32.mrf.mxu0
      %v813 = vadd.f32 %v406, %v812
      %v814 = vpop.f32.mrf.mxu0
      %v815 = vadd.f32 %v406, %v814
      %816 = vdwg.mxu0
      %817 = vadd.xlane.f32.xlu0 %v658
      %v818 = vpop.xlane.xlu0 %817
      %819 = vadd.xlane.f32.xlu0 %v660
      %v820 = vpop.xlane.xlu0 %819
      %821 = vadd.xlane.f32.xlu0 %v663
      %v822 = vpop.xlane.xlu0 %821
      %823 = vadd.xlane.f32.xlu0 %v665
      %v824 = vpop.xlane.xlu0 %823
      %825 = vadd.xlane.f32.xlu0 %v668
      %v826 = vpop.xlane.xlu0 %825
      %827 = vadd.xlane.f32.xlu0 %v670
      %v828 = vpop.xlane.xlu0 %827
      %829 = vadd.xlane.f32.xlu0 %v673
      %v830 = vpop.xlane.xlu0 %829
      %831 = vadd.xlane.f32.xlu0 %v675
      %v832 = vpop.xlane.xlu0 %831
      %833 = vadd.xlane.f32.xlu0 %v678
      %v834 = vpop.xlane.xlu0 %833
      %835 = vadd.xlane.f32.xlu0 %v680
      %v836 = vpop.xlane.xlu0 %835
      %837 = vadd.xlane.f32.xlu0 %v683
      %v838 = vpop.xlane.xlu0 %837
      %839 = vadd.xlane.f32.xlu0 %v685
      %v840 = vpop.xlane.xlu0 %839
      %841 = vadd.xlane.f32.xlu0 %v688
      %v842 = vpop.xlane.xlu0 %841
      %843 = vadd.xlane.f32.xlu0 %v690
      %v844 = vpop.xlane.xlu0 %843
      %845 = vadd.xlane.f32.xlu0 %v693
      %v846 = vpop.xlane.xlu0 %845
      %847 = vadd.xlane.f32.xlu0 %v695
      %v848 = vpop.xlane.xlu0 %847
      %849 = vadd.xlane.f32.xlu0 %v698
      %v850 = vpop.xlane.xlu0 %849
      %851 = vadd.xlane.f32.xlu0 %v700
      %v852 = vpop.xlane.xlu0 %851
      %853 = vadd.xlane.f32.xlu0 %v703
      %v854 = vpop.xlane.xlu0 %853
      %855 = vadd.xlane.f32.xlu0 %v705
      %v856 = vpop.xlane.xlu0 %855
      %857 = vadd.xlane.f32.xlu0 %v708
      %v858 = vpop.xlane.xlu0 %857
      %859 = vadd.xlane.f32.xlu0 %v710
      %v860 = vpop.xlane.xlu0 %859
      %861 = vadd.xlane.f32.xlu0 %v713
      %v862 = vpop.xlane.xlu0 %861
      %863 = vadd.xlane.f32.xlu0 %v715
      %v864 = vpop.xlane.xlu0 %863
      %865 = vadd.xlane.f32.xlu0 %v718
      %v866 = vpop.xlane.xlu0 %865
      %867 = vadd.xlane.f32.xlu0 %v720
      %v868 = vpop.xlane.xlu0 %867
      %869 = vadd.xlane.f32.xlu0 %v723
      %v870 = vpop.xlane.xlu0 %869
      %871 = vadd.xlane.f32.xlu0 %v725
      %v872 = vpop.xlane.xlu0 %871
      %873 = vadd.xlane.f32.xlu0 %v728
      %v874 = vpop.xlane.xlu0 %873
      %875 = vadd.xlane.f32.xlu0 %v730
      %v876 = vpop.xlane.xlu0 %875
      %877 = vadd.xlane.f32.xlu0 %v733
      %v878 = vpop.xlane.xlu0 %877
      %879 = vadd.xlane.f32.xlu0 %v735
      %v880 = vpop.xlane.xlu0 %879
      %881 = vadd.xlane.f32.xlu0 %v738
      %v882 = vpop.xlane.xlu0 %881
      %883 = vadd.xlane.f32.xlu0 %v740
      %v884 = vpop.xlane.xlu0 %883
      %885 = vadd.xlane.f32.xlu0 %v743
      %v886 = vpop.xlane.xlu0 %885
      %887 = vadd.xlane.f32.xlu0 %v745
      %v888 = vpop.xlane.xlu0 %887
      %889 = vadd.xlane.f32.xlu0 %v748
      %v890 = vpop.xlane.xlu0 %889
      %891 = vadd.xlane.f32.xlu0 %v750
      %v892 = vpop.xlane.xlu0 %891
      %893 = vadd.xlane.f32.xlu0 %v753
      %v894 = vpop.xlane.xlu0 %893
      %895 = vadd.xlane.f32.xlu0 %v755
      %v896 = vpop.xlane.xlu0 %895
      %897 = vadd.xlane.f32.xlu0 %v758
      %v898 = vpop.xlane.xlu0 %897
      %899 = vadd.xlane.f32.xlu0 %v760
      %v900 = vpop.xlane.xlu0 %899
      %901 = vadd.xlane.f32.xlu0 %v763
      %v902 = vpop.xlane.xlu0 %901
      %903 = vadd.xlane.f32.xlu0 %v765
      %v904 = vpop.xlane.xlu0 %903
      %905 = vadd.xlane.f32.xlu0 %v768
      %v906 = vpop.xlane.xlu0 %905
      %907 = vadd.xlane.f32.xlu0 %v770
      %v908 = vpop.xlane.xlu0 %907
      %909 = vadd.xlane.f32.xlu0 %v773
      %v910 = vpop.xlane.xlu0 %909
      %911 = vadd.xlane.f32.xlu0 %v775
      %v912 = vpop.xlane.xlu0 %911
      %913 = vadd.xlane.f32.xlu0 %v778
      %v914 = vpop.xlane.xlu0 %913
      %915 = vadd.xlane.f32.xlu0 %v780
      %v916 = vpop.xlane.xlu0 %915
      %917 = vadd.xlane.f32.xlu0 %v783
      %v918 = vpop.xlane.xlu0 %917
      %919 = vadd.xlane.f32.xlu0 %v785
      %v920 = vpop.xlane.xlu0 %919
      %921 = vadd.xlane.f32.xlu0 %v788
      %v922 = vpop.xlane.xlu0 %921
      %923 = vadd.xlane.f32.xlu0 %v790
      %v924 = vpop.xlane.xlu0 %923
      %925 = vadd.xlane.f32.xlu0 %v793
      %v926 = vpop.xlane.xlu0 %925
      %927 = vadd.xlane.f32.xlu0 %v795
      %v928 = vpop.xlane.xlu0 %927
      %929 = vadd.xlane.f32.xlu0 %v798
      %v930 = vpop.xlane.xlu0 %929
      %931 = vadd.xlane.f32.xlu0 %v800
      %v932 = vpop.xlane.xlu0 %931
      %933 = vadd.xlane.f32.xlu0 %v803
      %v934 = vpop.xlane.xlu0 %933
      %935 = vadd.xlane.f32.xlu0 %v805
      %v936 = vpop.xlane.xlu0 %935
      %937 = vadd.xlane.f32.xlu0 %v808
      %v938 = vpop.xlane.xlu0 %937
      %939 = vadd.xlane.f32.xlu0 %v810
      %v940 = vpop.xlane.xlu0 %939
      %941 = vadd.xlane.f32.xlu0 %v813
      %v942 = vpop.xlane.xlu0 %941
      %943 = vadd.xlane.f32.xlu0 %v815
      %v944 = vpop.xlane.xlu0 %943
      %v945 = vrcp.pop 128.0
      %v946 = vmul.f32 128.0, %v945
      %v947 = vsub.f32 1.0, %v946
      %v948 = vmul.f32 %v945, %v947
      %v949 = vadd.f32 %v945, %v948
      %vm950 = vweird.f32 %v945
      %v951 = vsel %vm950, %v945, %v949
      %v952 = vmul.f32 %v818, %v951
      %v953 = vmul.f32 %v820, %v951
      %v954 = vmul.f32 %v822, %v951
      %v955 = vmul.f32 %v824, %v951
      %v956 = vmul.f32 %v826, %v951
      %v957 = vmul.f32 %v828, %v951
      %v958 = vmul.f32 %v830, %v951
      %v959 = vmul.f32 %v832, %v951
      %v960 = vmul.f32 %v834, %v951
      %v961 = vmul.f32 %v836, %v951
      %v962 = vmul.f32 %v838, %v951
      %v963 = vmul.f32 %v840, %v951
      %v964 = vmul.f32 %v842, %v951
      %v965 = vmul.f32 %v844, %v951
      %v966 = vmul.f32 %v846, %v951
      %v967 = vmul.f32 %v848, %v951
      %v968 = vmul.f32 %v850, %v951
      %v969 = vmul.f32 %v852, %v951
      %v970 = vmul.f32 %v854, %v951
      %v971 = vmul.f32 %v856, %v951
      %v972 = vmul.f32 %v858, %v951
      %v973 = vmul.f32 %v860, %v951
      %v974 = vmul.f32 %v862, %v951
      %v975 = vmul.f32 %v864, %v951
      %v976 = vmul.f32 %v866, %v951
      %v977 = vmul.f32 %v868, %v951
      %v978 = vmul.f32 %v870, %v951
      %v979 = vmul.f32 %v872, %v951
      %v980 = vmul.f32 %v874, %v951
      %v981 = vmul.f32 %v876, %v951
      %v982 = vmul.f32 %v878, %v951
      %v983 = vmul.f32 %v880, %v951
      %v984 = vmul.f32 %v882, %v951
      %v985 = vmul.f32 %v884, %v951
      %v986 = vmul.f32 %v886, %v951
      %v987 = vmul.f32 %v888, %v951
      %v988 = vmul.f32 %v890, %v951
      %v989 = vmul.f32 %v892, %v951
      %v990 = vmul.f32 %v894, %v951
      %v991 = vmul.f32 %v896, %v951
      %v992 = vmul.f32 %v898, %v951
      %v993 = vmul.f32 %v900, %v951
      %v994 = vmul.f32 %v902, %v951
      %v995 = vmul.f32 %v904, %v951
      %v996 = vmul.f32 %v906, %v951
      %v997 = vmul.f32 %v908, %v951
      %v998 = vmul.f32 %v910, %v951
      %v999 = vmul.f32 %v912, %v951
      %v1000 = vmul.f32 %v914, %v951
      %v1001 = vmul.f32 %v916, %v951
      %v1002 = vmul.f32 %v918, %v951
      %v1003 = vmul.f32 %v920, %v951
      %v1004 = vmul.f32 %v922, %v951
      %v1005 = vmul.f32 %v924, %v951
      %v1006 = vmul.f32 %v926, %v951
      %v1007 = vmul.f32 %v928, %v951
      %v1008 = vmul.f32 %v930, %v951
      %v1009 = vmul.f32 %v932, %v951
      %v1010 = vmul.f32 %v934, %v951
      %v1011 = vmul.f32 %v936, %v951
      %v1012 = vmul.f32 %v938, %v951
      %v1013 = vmul.f32 %v940, %v951
      %v1014 = vmul.f32 %v942, %v951
      %v1015 = vmul.f32 %v944, %v951
      %v1016 = vmul.f32 %v658, %v658
      %v1017 = vmul.f32 %v660, %v660
      %v1018 = vmul.f32 %v663, %v663
      %v1019 = vmul.f32 %v665, %v665
      %v1020 = vmul.f32 %v668, %v668
      %v1021 = vmul.f32 %v670, %v670
      %v1022 = vmul.f32 %v673, %v673
      %v1023 = vmul.f32 %v675, %v675
      %v1024 = vmul.f32 %v678, %v678
      %v1025 = vmul.f32 %v680, %v680
      %v1026 = vmul.f32 %v683, %v683
      %v1027 = vmul.f32 %v685, %v685
      %v1028 = vmul.f32 %v688, %v688
      %v1029 = vmul.f32 %v690, %v690
      %v1030 = vmul.f32 %v693, %v693
      %v1031 = vmul.f32 %v695, %v695
      %v1032 = vmul.f32 %v698, %v698
      %v1033 = vmul.f32 %v700, %v700
      %v1034 = vmul.f32 %v703, %v703
      %v1035 = vmul.f32 %v705, %v705
      %v1036 = vmul.f32 %v708, %v708
      %v1037 = vmul.f32 %v710, %v710
      %v1038 = vmul.f32 %v713, %v713
      %v1039 = vmul.f32 %v715, %v715
      %v1040 = vmul.f32 %v718, %v718
      %v1041 = vmul.f32 %v720, %v720
      %v1042 = vmul.f32 %v723, %v723
      %v1043 = vmul.f32 %v725, %v725
      %v1044 = vmul.f32 %v728, %v728
      %v1045 = vmul.f32 %v730, %v730
      %v1046 = vmul.f32 %v733, %v733
      %v1047 = vmul.f32 %v735, %v735
      %v1048 = vmul.f32 %v738, %v738
      %v1049 = vmul.f32 %v740, %v740
      %v1050 = vmul.f32 %v743, %v743
      %v1051 = vmul.f32 %v745, %v745
      %v1052 = vmul.f32 %v748, %v748
      %v1053 = vmul.f32 %v750, %v750
      %v1054 = vmul.f32 %v753, %v753
      %v1055 = vmul.f32 %v755, %v755
      %v1056 = vmul.f32 %v758, %v758
      %v1057 = vmul.f32 %v760, %v760
      %v1058 = vmul.f32 %v763, %v763
      %v1059 = vmul.f32 %v765, %v765
      %v1060 = vmul.f32 %v768, %v768
      %v1061 = vmul.f32 %v770, %v770
      %v1062 = vmul.f32 %v773, %v773
      %v1063 = vmul.f32 %v775, %v775
      %v1064 = vmul.f32 %v778, %v778
      %v1065 = vmul.f32 %v780, %v780
      %v1066 = vmul.f32 %v783, %v783
      %v1067 = vmul.f32 %v785, %v785
      %v1068 = vmul.f32 %v788, %v788
      %v1069 = vmul.f32 %v790, %v790
      %v1070 = vmul.f32 %v793, %v793
      %v1071 = vmul.f32 %v795, %v795
      %v1072 = vmul.f32 %v798, %v798
      %v1073 = vmul.f32 %v800, %v800
      %v1074 = vmul.f32 %v803, %v803
      %v1075 = vmul.f32 %v805, %v805
      %v1076 = vmul.f32 %v808, %v808
      %v1077 = vmul.f32 %v810, %v810
      %v1078 = vmul.f32 %v813, %v813
      %v1079 = vmul.f32 %v815, %v815
      %1080 = vadd.xlane.f32.xlu0 %v1016
      %v1081 = vpop.xlane.xlu0 %1080
      %1082 = vadd.xlane.f32.xlu0 %v1017
      %v1083 = vpop.xlane.xlu0 %1082
      %1084 = vadd.xlane.f32.xlu0 %v1018
      %v1085 = vpop.xlane.xlu0 %1084
      %1086 = vadd.xlane.f32.xlu0 %v1019
      %v1087 = vpop.xlane.xlu0 %1086
      %1088 = vadd.xlane.f32.xlu0 %v1020
      %v1089 = vpop.xlane.xlu0 %1088
      %1090 = vadd.xlane.f32.xlu0 %v1021
      %v1091 = vpop.xlane.xlu0 %1090
      %1092 = vadd.xlane.f32.xlu0 %v1022
      %v1093 = vpop.xlane.xlu0 %1092
      %1094 = vadd.xlane.f32.xlu0 %v1023
      %v1095 = vpop.xlane.xlu0 %1094
      %1096 = vadd.xlane.f32.xlu0 %v1024
      %v1097 = vpop.xlane.xlu0 %1096
      %1098 = vadd.xlane.f32.xlu0 %v1025
      %v1099 = vpop.xlane.xlu0 %1098
      %1100 = vadd.xlane.f32.xlu0 %v1026
      %v1101 = vpop.xlane.xlu0 %1100
      %1102 = vadd.xlane.f32.xlu0 %v1027
      %v1103 = vpop.xlane.xlu0 %1102
      %1104 = vadd.xlane.f32.xlu0 %v1028
      %v1105 = vpop.xlane.xlu0 %1104
      %1106 = vadd.xlane.f32.xlu0 %v1029
      %v1107 = vpop.xlane.xlu0 %1106
      %1108 = vadd.xlane.f32.xlu0 %v1030
      %v1109 = vpop.xlane.xlu0 %1108
      %1110 = vadd.xlane.f32.xlu0 %v1031
      %v1111 = vpop.xlane.xlu0 %1110
      %1112 = vadd.xlane.f32.xlu0 %v1032
      %v1113 = vpop.xlane.xlu0 %1112
      %1114 = vadd.xlane.f32.xlu0 %v1033
      %v1115 = vpop.xlane.xlu0 %1114
      %1116 = vadd.xlane.f32.xlu0 %v1034
      %v1117 = vpop.xlane.xlu0 %1116
      %1118 = vadd.xlane.f32.xlu0 %v1035
      %v1119 = vpop.xlane.xlu0 %1118
      %1120 = vadd.xlane.f32.xlu0 %v1036
      %v1121 = vpop.xlane.xlu0 %1120
      %1122 = vadd.xlane.f32.xlu0 %v1037
      %v1123 = vpop.xlane.xlu0 %1122
      %1124 = vadd.xlane.f32.xlu0 %v1038
      %v1125 = vpop.xlane.xlu0 %1124
      %1126 = vadd.xlane.f32.xlu0 %v1039
      %v1127 = vpop.xlane.xlu0 %1126
      %1128 = vadd.xlane.f32.xlu0 %v1040
      %v1129 = vpop.xlane.xlu0 %1128
      %1130 = vadd.xlane.f32.xlu0 %v1041
      %v1131 = vpop.xlane.xlu0 %1130
      %1132 = vadd.xlane.f32.xlu0 %v1042
      %v1133 = vpop.xlane.xlu0 %1132
      %1134 = vadd.xlane.f32.xlu0 %v1043
      %v1135 = vpop.xlane.xlu0 %1134
      %1136 = vadd.xlane.f32.xlu0 %v1044
      %v1137 = vpop.xlane.xlu0 %1136
      %1138 = vadd.xlane.f32.xlu0 %v1045
      %v1139 = vpop.xlane.xlu0 %1138
      %1140 = vadd.xlane.f32.xlu0 %v1046
      %v1141 = vpop.xlane.xlu0 %1140
      %1142 = vadd.xlane.f32.xlu0 %v1047
      %v1143 = vpop.xlane.xlu0 %1142
      %1144 = vadd.xlane.f32.xlu0 %v1048
      %v1145 = vpop.xlane.xlu0 %1144
      %1146 = vadd.xlane.f32.xlu0 %v1049
      %v1147 = vpop.xlane.xlu0 %1146
      %1148 = vadd.xlane.f32.xlu0 %v1050
      %v1149 = vpop.xlane.xlu0 %1148
      %1150 = vadd.xlane.f32.xlu0 %v1051
      %v1151 = vpop.xlane.xlu0 %1150
      %1152 = vadd.xlane.f32.xlu0 %v1052
      %v1153 = vpop.xlane.xlu0 %1152
      %1154 = vadd.xlane.f32.xlu0 %v1053
      %v1155 = vpop.xlane.xlu0 %1154
      %1156 = vadd.xlane.f32.xlu0 %v1054
      %v1157 = vpop.xlane.xlu0 %1156
      %1158 = vadd.xlane.f32.xlu0 %v1055
      %v1159 = vpop.xlane.xlu0 %1158
      %1160 = vadd.xlane.f32.xlu0 %v1056
      %v1161 = vpop.xlane.xlu0 %1160
      %1162 = vadd.xlane.f32.xlu0 %v1057
      %v1163 = vpop.xlane.xlu0 %1162
      %1164 = vadd.xlane.f32.xlu0 %v1058
      %v1165 = vpop.xlane.xlu0 %1164
      %1166 = vadd.xlane.f32.xlu0 %v1059
      %v1167 = vpop.xlane.xlu0 %1166
      %1168 = vadd.xlane.f32.xlu0 %v1060
      %v1169 = vpop.xlane.xlu0 %1168
      %1170 = vadd.xlane.f32.xlu0 %v1061
      %v1171 = vpop.xlane.xlu0 %1170
      %1172 = vadd.xlane.f32.xlu0 %v1062
      %v1173 = vpop.xlane.xlu0 %1172
      %1174 = vadd.xlane.f32.xlu0 %v1063
      %v1175 = vpop.xlane.xlu0 %1174
      %1176 = vadd.xlane.f32.xlu0 %v1064
      %v1177 = vpop.xlane.xlu0 %1176
      %1178 = vadd.xlane.f32.xlu0 %v1065
      %v1179 = vpop.xlane.xlu0 %1178
      %1180 = vadd.xlane.f32.xlu0 %v1066
      %v1181 = vpop.xlane.xlu0 %1180
      %1182 = vadd.xlane.f32.xlu0 %v1067
      %v1183 = vpop.xlane.xlu0 %1182
      %1184 = vadd.xlane.f32.xlu0 %v1068
      %v1185 = vpop.xlane.xlu0 %1184
      %1186 = vadd.xlane.f32.xlu0 %v1069
      %v1187 = vpop.xlane.xlu0 %1186
      %1188 = vadd.xlane.f32.xlu0 %v1070
      %v1189 = vpop.xlane.xlu0 %1188
      %1190 = vadd.xlane.f32.xlu0 %v1071
      %v1191 = vpop.xlane.xlu0 %1190
      %1192 = vadd.xlane.f32.xlu0 %v1072
      %v1193 = vpop.xlane.xlu0 %1192
      %1194 = vadd.xlane.f32.xlu0 %v1073
      %v1195 = vpop.xlane.xlu0 %1194
      %1196 = vadd.xlane.f32.xlu0 %v1074
      %v1197 = vpop.xlane.xlu0 %1196
      %1198 = vadd.xlane.f32.xlu0 %v1075
      %v1199 = vpop.xlane.xlu0 %1198
      %1200 = vadd.xlane.f32.xlu0 %v1076
      %v1201 = vpop.xlane.xlu0 %1200
      %1202 = vadd.xlane.f32.xlu0 %v1077
      %v1203 = vpop.xlane.xlu0 %1202
      %1204 = vadd.xlane.f32.xlu0 %v1078
      %v1205 = vpop.xlane.xlu0 %1204
      %1206 = vadd.xlane.f32.xlu0 %v1079
      %v1207 = vpop.xlane.xlu0 %1206
      %v1208 = vmul.f32 %v1081, %v951
      %v1209 = vmul.f32 %v1083, %v951
      %v1210 = vmul.f32 %v1085, %v951
      %v1211 = vmul.f32 %v1087, %v951
      %v1212 = vmul.f32 %v1089, %v951
      %v1213 = vmul.f32 %v1091, %v951
      %v1214 = vmul.f32 %v1093, %v951
      %v1215 = vmul.f32 %v1095, %v951
      %v1216 = vmul.f32 %v1097, %v951
      %v1217 = vmul.f32 %v1099, %v951
      %v1218 = vmul.f32 %v1101, %v951
      %v1219 = vmul.f32 %v1103, %v951
      %v1220 = vmul.f32 %v1105, %v951
      %v1221 = vmul.f32 %v1107, %v951
      %v1222 = vmul.f32 %v1109, %v951
      %v1223 = vmul.f32 %v1111, %v951
      %v1224 = vmul.f32 %v1113, %v951
      %v1225 = vmul.f32 %v1115, %v951
      %v1226 = vmul.f32 %v1117, %v951
      %v1227 = vmul.f32 %v1119, %v951
      %v1228 = vmul.f32 %v1121, %v951
      %v1229 = vmul.f32 %v1123, %v951
      %v1230 = vmul.f32 %v1125, %v951
      %v1231 = vmul.f32 %v1127, %v951
      %v1232 = vmul.f32 %v1129, %v951
      %v1233 = vmul.f32 %v1131, %v951
      %v1234 = vmul.f32 %v1133, %v951
      %v1235 = vmul.f32 %v1135, %v951
      %v1236 = vmul.f32 %v1137, %v951
      %v1237 = vmul.f32 %v1139, %v951
      %v1238 = vmul.f32 %v1141, %v951
      %v1239 = vmul.f32 %v1143, %v951
      %v1240 = vmul.f32 %v1145, %v951
      %v1241 = vmul.f32 %v1147, %v951
      %v1242 = vmul.f32 %v1149, %v951
      %v1243 = vmul.f32 %v1151, %v951
      %v1244 = vmul.f32 %v1153, %v951
      %v1245 = vmul.f32 %v1155, %v951
      %v1246 = vmul.f32 %v1157, %v951
      %v1247 = vmul.f32 %v1159, %v951
      %v1248 = vmul.f32 %v1161, %v951
      %v1249 = vmul.f32 %v1163, %v951
      %v1250 = vmul.f32 %v1165, %v951
      %v1251 = vmul.f32 %v1167, %v951
      %v1252 = vmul.f32 %v1169, %v951
      %v1253 = vmul.f32 %v1171, %v951
      %v1254 = vmul.f32 %v1173, %v951
      %v1255 = vmul.f32 %v1175, %v951
      %v1256 = vmul.f32 %v1177, %v951
      %v1257 = vmul.f32 %v1179, %v951
      %v1258 = vmul.f32 %v1181, %v951
      %v1259 = vmul.f32 %v1183, %v951
      %v1260 = vmul.f32 %v1185, %v951
      %v1261 = vmul.f32 %v1187, %v951
      %v1262 = vmul.f32 %v1189, %v951
      %v1263 = vmul.f32 %v1191, %v951
      %v1264 = vmul.f32 %v1193, %v951
      %v1265 = vmul.f32 %v1195, %v951
      %v1266 = vmul.f32 %v1197, %v951
      %v1267 = vmul.f32 %v1199, %v951
      %v1268 = vmul.f32 %v1201, %v951
      %v1269 = vmul.f32 %v1203, %v951
      %v1270 = vmul.f32 %v1205, %v951
      %v1271 = vmul.f32 %v1207, %v951
      %v1272 = vmul.f32 %v952, %v952
      %v1273 = vmul.f32 %v953, %v953
      %v1274 = vmul.f32 %v954, %v954
      %v1275 = vmul.f32 %v955, %v955
      %v1276 = vmul.f32 %v956, %v956
      %v1277 = vmul.f32 %v957, %v957
      %v1278 = vmul.f32 %v958, %v958
      %v1279 = vmul.f32 %v959, %v959
      %v1280 = vmul.f32 %v960, %v960
      %v1281 = vmul.f32 %v961, %v961
      %v1282 = vmul.f32 %v962, %v962
      %v1283 = vmul.f32 %v963, %v963
      %v1284 = vmul.f32 %v964, %v964
      %v1285 = vmul.f32 %v965, %v965
      %v1286 = vmul.f32 %v966, %v966
      %v1287 = vmul.f32 %v967, %v967
      %v1288 = vmul.f32 %v968, %v968
      %v1289 = vmul.f32 %v969, %v969
      %v1290 = vmul.f32 %v970, %v970
      %v1291 = vmul.f32 %v971, %v971
      %v1292 = vmul.f32 %v972, %v972
      %v1293 = vmul.f32 %v973, %v973
      %v1294 = vmul.f32 %v974, %v974
      %v1295 = vmul.f32 %v975, %v975
      %v1296 = vmul.f32 %v976, %v976
      %v1297 = vmul.f32 %v977, %v977
      %v1298 = vmul.f32 %v978, %v978
      %v1299 = vmul.f32 %v979, %v979
      %v1300 = vmul.f32 %v980, %v980
      %v1301 = vmul.f32 %v981, %v981
      %v1302 = vmul.f32 %v982, %v982
      %v1303 = vmul.f32 %v983, %v983
      %v1304 = vmul.f32 %v984, %v984
      %v1305 = vmul.f32 %v985, %v985
      %v1306 = vmul.f32 %v986, %v986
      %v1307 = vmul.f32 %v987, %v987
      %v1308 = vmul.f32 %v988, %v988
      %v1309 = vmul.f32 %v989, %v989
      %v1310 = vmul.f32 %v990, %v990
      %v1311 = vmul.f32 %v991, %v991
      %v1312 = vmul.f32 %v992, %v992
      %v1313 = vmul.f32 %v993, %v993
      %v1314 = vmul.f32 %v994, %v994
      %v1315 = vmul.f32 %v995, %v995
      %v1316 = vmul.f32 %v996, %v996
      %v1317 = vmul.f32 %v997, %v997
      %v1318 = vmul.f32 %v998, %v998
      %v1319 = vmul.f32 %v999, %v999
      %v1320 = vmul.f32 %v1000, %v1000
      %v1321 = vmul.f32 %v1001, %v1001
      %v1322 = vmul.f32 %v1002, %v1002
      %v1323 = vmul.f32 %v1003, %v1003
      %v1324 = vmul.f32 %v1004, %v1004
      %v1325 = vmul.f32 %v1005, %v1005
      %v1326 = vmul.f32 %v1006, %v1006
      %v1327 = vmul.f32 %v1007, %v1007
      %v1328 = vmul.f32 %v1008, %v1008
      %v1329 = vmul.f32 %v1009, %v1009
      %v1330 = vmul.f32 %v1010, %v1010
      %v1331 = vmul.f32 %v1011, %v1011
      %v1332 = vmul.f32 %v1012, %v1012
      %v1333 = vmul.f32 %v1013, %v1013
      %v1334 = vmul.f32 %v1014, %v1014
      %v1335 = vmul.f32 %v1015, %v1015
      %v1336 = vsub.f32 %v1208, %v1272
      %v1337 = vsub.f32 %v1209, %v1273
      %v1338 = vsub.f32 %v1210, %v1274
      %v1339 = vsub.f32 %v1211, %v1275
      %v1340 = vsub.f32 %v1212, %v1276
      %v1341 = vsub.f32 %v1213, %v1277
      %v1342 = vsub.f32 %v1214, %v1278
      %v1343 = vsub.f32 %v1215, %v1279
      %v1344 = vsub.f32 %v1216, %v1280
      %v1345 = vsub.f32 %v1217, %v1281
      %v1346 = vsub.f32 %v1218, %v1282
      %v1347 = vsub.f32 %v1219, %v1283
      %v1348 = vsub.f32 %v1220, %v1284
      %v1349 = vsub.f32 %v1221, %v1285
      %v1350 = vsub.f32 %v1222, %v1286
      %v1351 = vsub.f32 %v1223, %v1287
      %v1352 = vsub.f32 %v1224, %v1288
      %v1353 = vsub.f32 %v1225, %v1289
      %v1354 = vsub.f32 %v1226, %v1290
      %v1355 = vsub.f32 %v1227, %v1291
      %v1356 = vsub.f32 %v1228, %v1292
      %v1357 = vsub.f32 %v1229, %v1293
      %v1358 = vsub.f32 %v1230, %v1294
      %v1359 = vsub.f32 %v1231, %v1295
      %v1360 = vsub.f32 %v1232, %v1296
      %v1361 = vsub.f32 %v1233, %v1297
      %v1362 = vsub.f32 %v1234, %v1298
      %v1363 = vsub.f32 %v1235, %v1299
      %v1364 = vsub.f32 %v1236, %v1300
      %v1365 = vsub.f32 %v1237, %v1301
      %v1366 = vsub.f32 %v1238, %v1302
      %v1367 = vsub.f32 %v1239, %v1303
      %v1368 = vsub.f32 %v1240, %v1304
      %v1369 = vsub.f32 %v1241, %v1305
      %v1370 = vsub.f32 %v1242, %v1306
      %v1371 = vsub.f32 %v1243, %v1307
      %v1372 = vsub.f32 %v1244, %v1308
      %v1373 = vsub.f32 %v1245, %v1309
      %v1374 = vsub.f32 %v1246, %v1310
      %v1375 = vsub.f32 %v1247, %v1311
      %v1376 = vsub.f32 %v1248, %v1312
      %v1377 = vsub.f32 %v1249, %v1313
      %v1378 = vsub.f32 %v1250, %v1314
      %v1379 = vsub.f32 %v1251, %v1315
      %v1380 = vsub.f32 %v1252, %v1316
      %v1381 = vsub.f32 %v1253, %v1317
      %v1382 = vsub.f32 %v1254, %v1318
      %v1383 = vsub.f32 %v1255, %v1319
      %v1384 = vsub.f32 %v1256, %v1320
      %v1385 = vsub.f32 %v1257, %v1321
      %v1386 = vsub.f32 %v1258, %v1322
      %v1387 = vsub.f32 %v1259, %v1323
      %v1388 = vsub.f32 %v1260, %v1324
      %v1389 = vsub.f32 %v1261, %v1325
      %v1390 = vsub.f32 %v1262, %v1326
      %v1391 = vsub.f32 %v1263, %v1327
      %v1392 = vsub.f32 %v1264, %v1328
      %v1393 = vsub.f32 %v1265, %v1329
      %v1394 = vsub.f32 %v1266, %v1330
      %v1395 = vsub.f32 %v1267, %v1331
      %v1396 = vsub.f32 %v1268, %v1332
      %v1397 = vsub.f32 %v1269, %v1333
      %v1398 = vsub.f32 %v1270, %v1334
      %v1399 = vsub.f32 %v1271, %v1335
      %v1400 = vsub.f32 %v658, %v952
      %v1401 = vsub.f32 %v660, %v953
      %v1402 = vsub.f32 %v663, %v954
      %v1403 = vsub.f32 %v665, %v955
      %v1404 = vsub.f32 %v668, %v956
      %v1405 = vsub.f32 %v670, %v957
      %v1406 = vsub.f32 %v673, %v958
      %v1407 = vsub.f32 %v675, %v959
      %v1408 = vsub.f32 %v678, %v960
      %v1409 = vsub.f32 %v680, %v961
      %v1410 = vsub.f32 %v683, %v962
      %v1411 = vsub.f32 %v685, %v963
      %v1412 = vsub.f32 %v688, %v964
      %v1413 = vsub.f32 %v690, %v965
      %v1414 = vsub.f32 %v693, %v966
      %v1415 = vsub.f32 %v695, %v967
      %v1416 = vsub.f32 %v698, %v968
      %v1417 = vsub.f32 %v700, %v969
      %v1418 = vsub.f32 %v703, %v970
      %v1419 = vsub.f32 %v705, %v971
      %v1420 = vsub.f32 %v708, %v972
      %v1421 = vsub.f32 %v710, %v973
      %v1422 = vsub.f32 %v713, %v974
      %v1423 = vsub.f32 %v715, %v975
      %v1424 = vsub.f32 %v718, %v976
      %v1425 = vsub.f32 %v720, %v977
      %v1426 = vsub.f32 %v723, %v978
      %v1427 = vsub.f32 %v725, %v979
      %v1428 = vsub.f32 %v728, %v980
      %v1429 = vsub.f32 %v730, %v981
      %v1430 = vsub.f32 %v733, %v982
      %v1431 = vsub.f32 %v735, %v983
      %v1432 = vsub.f32 %v738, %v984
      %v1433 = vsub.f32 %v740, %v985
      %v1434 = vsub.f32 %v743, %v986
      %v1435 = vsub.f32 %v745, %v987
      %v1436 = vsub.f32 %v748, %v988
      %v1437 = vsub.f32 %v750, %v989
      %v1438 = vsub.f32 %v753, %v990
      %v1439 = vsub.f32 %v755, %v991
      %v1440 = vsub.f32 %v758, %v992
      %v1441 = vsub.f32 %v760, %v993
      %v1442 = vsub.f32 %v763, %v994
      %v1443 = vsub.f32 %v765, %v995
      %v1444 = vsub.f32 %v768, %v996
      %v1445 = vsub.f32 %v770, %v997
      %v1446 = vsub.f32 %v773, %v998
      %v1447 = vsub.f32 %v775, %v999
      %v1448 = vsub.f32 %v778, %v1000
      %v1449 = vsub.f32 %v780, %v1001
      %v1450 = vsub.f32 %v783, %v1002
      %v1451 = vsub.f32 %v785, %v1003
      %v1452 = vsub.f32 %v788, %v1004
      %v1453 = vsub.f32 %v790, %v1005
      %v1454 = vsub.f32 %v793, %v1006
      %v1455 = vsub.f32 %v795, %v1007
      %v1456 = vsub.f32 %v798, %v1008
      %v1457 = vsub.f32 %v800, %v1009
      %v1458 = vsub.f32 %v803, %v1010
      %v1459 = vsub.f32 %v805, %v1011
      %v1460 = vsub.f32 %v808, %v1012
      %v1461 = vsub.f32 %v810, %v1013
      %v1462 = vsub.f32 %v813, %v1014
      %v1463 = vsub.f32 %v815, %v1015
      %v1464 = vadd.f32 %v1336, 1e-05
      %v1465 = vadd.f32 %v1337, 1e-05
      %v1466 = vadd.f32 %v1338, 1e-05
      %v1467 = vadd.f32 %v1339, 1e-05
      %v1468 = vadd.f32 %v1340, 1e-05
      %v1469 = vadd.f32 %v1341, 1e-05
      %v1470 = vadd.f32 %v1342, 1e-05
      %v1471 = vadd.f32 %v1343, 1e-05
      %v1472 = vadd.f32 %v1344, 1e-05
      %v1473 = vadd.f32 %v1345, 1e-05
      %v1474 = vadd.f32 %v1346, 1e-05
      %v1475 = vadd.f32 %v1347, 1e-05
      %v1476 = vadd.f32 %v1348, 1e-05
      %v1477 = vadd.f32 %v1349, 1e-05
      %v1478 = vadd.f32 %v1350, 1e-05
      %v1479 = vadd.f32 %v1351, 1e-05
      %v1480 = vadd.f32 %v1352, 1e-05
      %v1481 = vadd.f32 %v1353, 1e-05
      %v1482 = vadd.f32 %v1354, 1e-05
      %v1483 = vadd.f32 %v1355, 1e-05
      %v1484 = vadd.f32 %v1356, 1e-05
      %v1485 = vadd.f32 %v1357, 1e-05
      %v1486 = vadd.f32 %v1358, 1e-05
      %v1487 = vadd.f32 %v1359, 1e-05
      %v1488 = vadd.f32 %v1360, 1e-05
      %v1489 = vadd.f32 %v1361, 1e-05
      %v1490 = vadd.f32 %v1362, 1e-05
      %v1491 = vadd.f32 %v1363, 1e-05
      %v1492 = vadd.f32 %v1364, 1e-05
      %v1493 = vadd.f32 %v1365, 1e-05
      %v1494 = vadd.f32 %v1366, 1e-05
      %v1495 = vadd.f32 %v1367, 1e-05
      %v1496 = vadd.f32 %v1368, 1e-05
      %v1497 = vadd.f32 %v1369, 1e-05
      %v1498 = vadd.f32 %v1370, 1e-05
      %v1499 = vadd.f32 %v1371, 1e-05
      %v1500 = vadd.f32 %v1372, 1e-05
      %v1501 = vadd.f32 %v1373, 1e-05
      %v1502 = vadd.f32 %v1374, 1e-05
      %v1503 = vadd.f32 %v1375, 1e-05
      %v1504 = vadd.f32 %v1376, 1e-05
      %v1505 = vadd.f32 %v1377, 1e-05
      %v1506 = vadd.f32 %v1378, 1e-05
      %v1507 = vadd.f32 %v1379, 1e-05
      %v1508 = vadd.f32 %v1380, 1e-05
      %v1509 = vadd.f32 %v1381, 1e-05
      %v1510 = vadd.f32 %v1382, 1e-05
      %v1511 = vadd.f32 %v1383, 1e-05
      %v1512 = vadd.f32 %v1384, 1e-05
      %v1513 = vadd.f32 %v1385, 1e-05
      %v1514 = vadd.f32 %v1386, 1e-05
      %v1515 = vadd.f32 %v1387, 1e-05
      %v1516 = vadd.f32 %v1388, 1e-05
      %v1517 = vadd.f32 %v1389, 1e-05
      %v1518 = vadd.f32 %v1390, 1e-05
      %v1519 = vadd.f32 %v1391, 1e-05
      %v1520 = vadd.f32 %v1392, 1e-05
      %v1521 = vadd.f32 %v1393, 1e-05
      %v1522 = vadd.f32 %v1394, 1e-05
      %v1523 = vadd.f32 %v1395, 1e-05
      %v1524 = vadd.f32 %v1396, 1e-05
      %v1525 = vadd.f32 %v1397, 1e-05
      %v1526 = vadd.f32 %v1398, 1e-05
      %v1527 = vadd.f32 %v1399, 1e-05
      %v1528 = vrsqrt.pop %v1464
      %v1529 = vmul.f32 %v1528, %v1464
      %v1530 = vmul.f32 %v1529, %v1528
      %v1531 = vmul.f32 0.5, %v1530
      %v1532 = vsub.f32 1.5, %v1531
      %v1533 = vmul.f32 %v1528, %v1532
      %vm1534 = vweird.f32 %v1464
      %vm1535 = vweird.f32 %v1528
      %vm1536 = vmor %vm1534, %vm1535
      %v1537 = vsel %vm1536, %v1528, %v1533
      %v1538 = vrsqrt.pop %v1465
      %v1539 = vmul.f32 %v1538, %v1465
      %v1540 = vmul.f32 %v1539, %v1538
      %v1541 = vmul.f32 0.5, %v1540
      %v1542 = vsub.f32 1.5, %v1541
      %v1543 = vmul.f32 %v1538, %v1542
      %vm1544 = vweird.f32 %v1465
      %vm1545 = vweird.f32 %v1538
      %vm1546 = vmor %vm1544, %vm1545
      %v1547 = vsel %vm1546, %v1538, %v1543
      %v1548 = vrsqrt.pop %v1466
      %v1549 = vmul.f32 %v1548, %v1466
      %v1550 = vmul.f32 %v1549, %v1548
      %v1551 = vmul.f32 0.5, %v1550
      %v1552 = vsub.f32 1.5, %v1551
      %v1553 = vmul.f32 %v1548, %v1552
      %vm1554 = vweird.f32 %v1466
      %vm1555 = vweird.f32 %v1548
      %vm1556 = vmor %vm1554, %vm1555
      %v1557 = vsel %vm1556, %v1548, %v1553
      %v1558 = vrsqrt.pop %v1467
      %v1559 = vmul.f32 %v1558, %v1467
      %v1560 = vmul.f32 %v1559, %v1558
      %v1561 = vmul.f32 0.5, %v1560
      %v1562 = vsub.f32 1.5, %v1561
      %v1563 = vmul.f32 %v1558, %v1562
      %vm1564 = vweird.f32 %v1467
      %vm1565 = vweird.f32 %v1558
      %vm1566 = vmor %vm1564, %vm1565
      %v1567 = vsel %vm1566, %v1558, %v1563
      %v1568 = vrsqrt.pop %v1468
      %v1569 = vmul.f32 %v1568, %v1468
      %v1570 = vmul.f32 %v1569, %v1568
      %v1571 = vmul.f32 0.5, %v1570
      %v1572 = vsub.f32 1.5, %v1571
      %v1573 = vmul.f32 %v1568, %v1572
      %vm1574 = vweird.f32 %v1468
      %vm1575 = vweird.f32 %v1568
      %vm1576 = vmor %vm1574, %vm1575
      %v1577 = vsel %vm1576, %v1568, %v1573
      %v1578 = vrsqrt.pop %v1469
      %v1579 = vmul.f32 %v1578, %v1469
      %v1580 = vmul.f32 %v1579, %v1578
      %v1581 = vmul.f32 0.5, %v1580
      %v1582 = vsub.f32 1.5, %v1581
      %v1583 = vmul.f32 %v1578, %v1582
      %vm1584 = vweird.f32 %v1469
      %vm1585 = vweird.f32 %v1578
      %vm1586 = vmor %vm1584, %vm1585
      %v1587 = vsel %vm1586, %v1578, %v1583
      %v1588 = vrsqrt.pop %v1470
      %v1589 = vmul.f32 %v1588, %v1470
      %v1590 = vmul.f32 %v1589, %v1588
      %v1591 = vmul.f32 0.5, %v1590
      %v1592 = vsub.f32 1.5, %v1591
      %v1593 = vmul.f32 %v1588, %v1592
      %vm1594 = vweird.f32 %v1470
      %vm1595 = vweird.f32 %v1588
      %vm1596 = vmor %vm1594, %vm1595
      %v1597 = vsel %vm1596, %v1588, %v1593
      %v1598 = vrsqrt.pop %v1471
      %v1599 = vmul.f32 %v1598, %v1471
      %v1600 = vmul.f32 %v1599, %v1598
      %v1601 = vmul.f32 0.5, %v1600
      %v1602 = vsub.f32 1.5, %v1601
      %v1603 = vmul.f32 %v1598, %v1602
      %vm1604 = vweird.f32 %v1471
      %vm1605 = vweird.f32 %v1598
      %vm1606 = vmor %vm1604, %vm1605
      %v1607 = vsel %vm1606, %v1598, %v1603
      %v1608 = vrsqrt.pop %v1472
      %v1609 = vmul.f32 %v1608, %v1472
      %v1610 = vmul.f32 %v1609, %v1608
      %v1611 = vmul.f32 0.5, %v1610
      %v1612 = vsub.f32 1.5, %v1611
      %v1613 = vmul.f32 %v1608, %v1612
      %vm1614 = vweird.f32 %v1472
      %vm1615 = vweird.f32 %v1608
      %vm1616 = vmor %vm1614, %vm1615
      %v1617 = vsel %vm1616, %v1608, %v1613
      %v1618 = vrsqrt.pop %v1473
      %v1619 = vmul.f32 %v1618, %v1473
      %v1620 = vmul.f32 %v1619, %v1618
      %v1621 = vmul.f32 0.5, %v1620
      %v1622 = vsub.f32 1.5, %v1621
      %v1623 = vmul.f32 %v1618, %v1622
      %vm1624 = vweird.f32 %v1473
      %vm1625 = vweird.f32 %v1618
      %vm1626 = vmor %vm1624, %vm1625
      %v1627 = vsel %vm1626, %v1618, %v1623
      %v1628 = vrsqrt.pop %v1474
      %v1629 = vmul.f32 %v1628, %v1474
      %v1630 = vmul.f32 %v1629, %v1628
      %v1631 = vmul.f32 0.5, %v1630
      %v1632 = vsub.f32 1.5, %v1631
      %v1633 = vmul.f32 %v1628, %v1632
      %vm1634 = vweird.f32 %v1474
      %vm1635 = vweird.f32 %v1628
      %vm1636 = vmor %vm1634, %vm1635
      %v1637 = vsel %vm1636, %v1628, %v1633
      %v1638 = vrsqrt.pop %v1475
      %v1639 = vmul.f32 %v1638, %v1475
      %v1640 = vmul.f32 %v1639, %v1638
      %v1641 = vmul.f32 0.5, %v1640
      %v1642 = vsub.f32 1.5, %v1641
      %v1643 = vmul.f32 %v1638, %v1642
      %vm1644 = vweird.f32 %v1475
      %vm1645 = vweird.f32 %v1638
      %vm1646 = vmor %vm1644, %vm1645
      %v1647 = vsel %vm1646, %v1638, %v1643
      %v1648 = vrsqrt.pop %v1476
      %v1649 = vmul.f32 %v1648, %v1476
      %v1650 = vmul.f32 %v1649, %v1648
      %v1651 = vmul.f32 0.5, %v1650
      %v1652 = vsub.f32 1.5, %v1651
      %v1653 = vmul.f32 %v1648, %v1652
      %vm1654 = vweird.f32 %v1476
      %vm1655 = vweird.f32 %v1648
      %vm1656 = vmor %vm1654, %vm1655
      %v1657 = vsel %vm1656, %v1648, %v1653
      %v1658 = vrsqrt.pop %v1477
      %v1659 = vmul.f32 %v1658, %v1477
      %v1660 = vmul.f32 %v1659, %v1658
      %v1661 = vmul.f32 0.5, %v1660
      %v1662 = vsub.f32 1.5, %v1661
      %v1663 = vmul.f32 %v1658, %v1662
      %vm1664 = vweird.f32 %v1477
      %vm1665 = vweird.f32 %v1658
      %vm1666 = vmor %vm1664, %vm1665
      %v1667 = vsel %vm1666, %v1658, %v1663
      %v1668 = vrsqrt.pop %v1478
      %v1669 = vmul.f32 %v1668, %v1478
      %v1670 = vmul.f32 %v1669, %v1668
      %v1671 = vmul.f32 0.5, %v1670
      %v1672 = vsub.f32 1.5, %v1671
      %v1673 = vmul.f32 %v1668, %v1672
      %vm1674 = vweird.f32 %v1478
      %vm1675 = vweird.f32 %v1668
      %vm1676 = vmor %vm1674, %vm1675
      %v1677 = vsel %vm1676, %v1668, %v1673
      %v1678 = vrsqrt.pop %v1479
      %v1679 = vmul.f32 %v1678, %v1479
      %v1680 = vmul.f32 %v1679, %v1678
      %v1681 = vmul.f32 0.5, %v1680
      %v1682 = vsub.f32 1.5, %v1681
      %v1683 = vmul.f32 %v1678, %v1682
      %vm1684 = vweird.f32 %v1479
      %vm1685 = vweird.f32 %v1678
      %vm1686 = vmor %vm1684, %vm1685
      %v1687 = vsel %vm1686, %v1678, %v1683
      %v1688 = vrsqrt.pop %v1480
      %v1689 = vmul.f32 %v1688, %v1480
      %v1690 = vmul.f32 %v1689, %v1688
      %v1691 = vmul.f32 0.5, %v1690
      %v1692 = vsub.f32 1.5, %v1691
      %v1693 = vmul.f32 %v1688, %v1692
      %vm1694 = vweird.f32 %v1480
      %vm1695 = vweird.f32 %v1688
      %vm1696 = vmor %vm1694, %vm1695
      %v1697 = vsel %vm1696, %v1688, %v1693
      %v1698 = vrsqrt.pop %v1481
      %v1699 = vmul.f32 %v1698, %v1481
      %v1700 = vmul.f32 %v1699, %v1698
      %v1701 = vmul.f32 0.5, %v1700
      %v1702 = vsub.f32 1.5, %v1701
      %v1703 = vmul.f32 %v1698, %v1702
      %vm1704 = vweird.f32 %v1481
      %vm1705 = vweird.f32 %v1698
      %vm1706 = vmor %vm1704, %vm1705
      %v1707 = vsel %vm1706, %v1698, %v1703
      %v1708 = vrsqrt.pop %v1482
      %v1709 = vmul.f32 %v1708, %v1482
      %v1710 = vmul.f32 %v1709, %v1708
      %v1711 = vmul.f32 0.5, %v1710
      %v1712 = vsub.f32 1.5, %v1711
      %v1713 = vmul.f32 %v1708, %v1712
      %vm1714 = vweird.f32 %v1482
      %vm1715 = vweird.f32 %v1708
      %vm1716 = vmor %vm1714, %vm1715
      %v1717 = vsel %vm1716, %v1708, %v1713
      %v1718 = vrsqrt.pop %v1483
      %v1719 = vmul.f32 %v1718, %v1483
      %v1720 = vmul.f32 %v1719, %v1718
      %v1721 = vmul.f32 0.5, %v1720
      %v1722 = vsub.f32 1.5, %v1721
      %v1723 = vmul.f32 %v1718, %v1722
      %vm1724 = vweird.f32 %v1483
      %vm1725 = vweird.f32 %v1718
      %vm1726 = vmor %vm1724, %vm1725
      %v1727 = vsel %vm1726, %v1718, %v1723
      %v1728 = vrsqrt.pop %v1484
      %v1729 = vmul.f32 %v1728, %v1484
      %v1730 = vmul.f32 %v1729, %v1728
      %v1731 = vmul.f32 0.5, %v1730
      %v1732 = vsub.f32 1.5, %v1731
      %v1733 = vmul.f32 %v1728, %v1732
      %vm1734 = vweird.f32 %v1484
      %vm1735 = vweird.f32 %v1728
      %vm1736 = vmor %vm1734, %vm1735
      %v1737 = vsel %vm1736, %v1728, %v1733
      %v1738 = vrsqrt.pop %v1485
      %v1739 = vmul.f32 %v1738, %v1485
      %v1740 = vmul.f32 %v1739, %v1738
      %v1741 = vmul.f32 0.5, %v1740
      %v1742 = vsub.f32 1.5, %v1741
      %v1743 = vmul.f32 %v1738, %v1742
      %vm1744 = vweird.f32 %v1485
      %vm1745 = vweird.f32 %v1738
      %vm1746 = vmor %vm1744, %vm1745
      %v1747 = vsel %vm1746, %v1738, %v1743
      %v1748 = vrsqrt.pop %v1486
      %v1749 = vmul.f32 %v1748, %v1486
      %v1750 = vmul.f32 %v1749, %v1748
      %v1751 = vmul.f32 0.5, %v1750
      %v1752 = vsub.f32 1.5, %v1751
      %v1753 = vmul.f32 %v1748, %v1752
      %vm1754 = vweird.f32 %v1486
      %vm1755 = vweird.f32 %v1748
      %vm1756 = vmor %vm1754, %vm1755
      %v1757 = vsel %vm1756, %v1748, %v1753
      %v1758 = vrsqrt.pop %v1487
      %v1759 = vmul.f32 %v1758, %v1487
      %v1760 = vmul.f32 %v1759, %v1758
      %v1761 = vmul.f32 0.5, %v1760
      %v1762 = vsub.f32 1.5, %v1761
      %v1763 = vmul.f32 %v1758, %v1762
      %vm1764 = vweird.f32 %v1487
      %vm1765 = vweird.f32 %v1758
      %vm1766 = vmor %vm1764, %vm1765
      %v1767 = vsel %vm1766, %v1758, %v1763
      %v1768 = vrsqrt.pop %v1488
      %v1769 = vmul.f32 %v1768, %v1488
      %v1770 = vmul.f32 %v1769, %v1768
      %v1771 = vmul.f32 0.5, %v1770
      %v1772 = vsub.f32 1.5, %v1771
      %v1773 = vmul.f32 %v1768, %v1772
      %vm1774 = vweird.f32 %v1488
      %vm1775 = vweird.f32 %v1768
      %vm1776 = vmor %vm1774, %vm1775
      %v1777 = vsel %vm1776, %v1768, %v1773
      %v1778 = vrsqrt.pop %v1489
      %v1779 = vmul.f32 %v1778, %v1489
      %v1780 = vmul.f32 %v1779, %v1778
      %v1781 = vmul.f32 0.5, %v1780
      %v1782 = vsub.f32 1.5, %v1781
      %v1783 = vmul.f32 %v1778, %v1782
      %vm1784 = vweird.f32 %v1489
      %vm1785 = vweird.f32 %v1778
      %vm1786 = vmor %vm1784, %vm1785
      %v1787 = vsel %vm1786, %v1778, %v1783
      %v1788 = vrsqrt.pop %v1490
      %v1789 = vmul.f32 %v1788, %v1490
      %v1790 = vmul.f32 %v1789, %v1788
      %v1791 = vmul.f32 0.5, %v1790
      %v1792 = vsub.f32 1.5, %v1791
      %v1793 = vmul.f32 %v1788, %v1792
      %vm1794 = vweird.f32 %v1490
      %vm1795 = vweird.f32 %v1788
      %vm1796 = vmor %vm1794, %vm1795
      %v1797 = vsel %vm1796, %v1788, %v1793
      %v1798 = vrsqrt.pop %v1491
      %v1799 = vmul.f32 %v1798, %v1491
      %v1800 = vmul.f32 %v1799, %v1798
      %v1801 = vmul.f32 0.5, %v1800
      %v1802 = vsub.f32 1.5, %v1801
      %v1803 = vmul.f32 %v1798, %v1802
      %vm1804 = vweird.f32 %v1491
      %vm1805 = vweird.f32 %v1798
      %vm1806 = vmor %vm1804, %vm1805
      %v1807 = vsel %vm1806, %v1798, %v1803
      %v1808 = vrsqrt.pop %v1492
      %v1809 = vmul.f32 %v1808, %v1492
      %v1810 = vmul.f32 %v1809, %v1808
      %v1811 = vmul.f32 0.5, %v1810
      %v1812 = vsub.f32 1.5, %v1811
      %v1813 = vmul.f32 %v1808, %v1812
      %vm1814 = vweird.f32 %v1492
      %vm1815 = vweird.f32 %v1808
      %vm1816 = vmor %vm1814, %vm1815
      %v1817 = vsel %vm1816, %v1808, %v1813
      %v1818 = vrsqrt.pop %v1493
      %v1819 = vmul.f32 %v1818, %v1493
      %v1820 = vmul.f32 %v1819, %v1818
      %v1821 = vmul.f32 0.5, %v1820
      %v1822 = vsub.f32 1.5, %v1821
      %v1823 = vmul.f32 %v1818, %v1822
      %vm1824 = vweird.f32 %v1493
      %vm1825 = vweird.f32 %v1818
      %vm1826 = vmor %vm1824, %vm1825
      %v1827 = vsel %vm1826, %v1818, %v1823
      %v1828 = vrsqrt.pop %v1494
      %v1829 = vmul.f32 %v1828, %v1494
      %v1830 = vmul.f32 %v1829, %v1828
      %v1831 = vmul.f32 0.5, %v1830
      %v1832 = vsub.f32 1.5, %v1831
      %v1833 = vmul.f32 %v1828, %v1832
      %vm1834 = vweird.f32 %v1494
      %vm1835 = vweird.f32 %v1828
      %vm1836 = vmor %vm1834, %vm1835
      %v1837 = vsel %vm1836, %v1828, %v1833
      %v1838 = vrsqrt.pop %v1495
      %v1839 = vmul.f32 %v1838, %v1495
      %v1840 = vmul.f32 %v1839, %v1838
      %v1841 = vmul.f32 0.5, %v1840
      %v1842 = vsub.f32 1.5, %v1841
      %v1843 = vmul.f32 %v1838, %v1842
      %vm1844 = vweird.f32 %v1495
      %vm1845 = vweird.f32 %v1838
      %vm1846 = vmor %vm1844, %vm1845
      %v1847 = vsel %vm1846, %v1838, %v1843
      %v1848 = vrsqrt.pop %v1496
      %v1849 = vmul.f32 %v1848, %v1496
      %v1850 = vmul.f32 %v1849, %v1848
      %v1851 = vmul.f32 0.5, %v1850
      %v1852 = vsub.f32 1.5, %v1851
      %v1853 = vmul.f32 %v1848, %v1852
      %vm1854 = vweird.f32 %v1496
      %vm1855 = vweird.f32 %v1848
      %vm1856 = vmor %vm1854, %vm1855
      %v1857 = vsel %vm1856, %v1848, %v1853
      %v1858 = vrsqrt.pop %v1497
      %v1859 = vmul.f32 %v1858, %v1497
      %v1860 = vmul.f32 %v1859, %v1858
      %v1861 = vmul.f32 0.5, %v1860
      %v1862 = vsub.f32 1.5, %v1861
      %v1863 = vmul.f32 %v1858, %v1862
      %vm1864 = vweird.f32 %v1497
      %vm1865 = vweird.f32 %v1858
      %vm1866 = vmor %vm1864, %vm1865
      %v1867 = vsel %vm1866, %v1858, %v1863
      %v1868 = vrsqrt.pop %v1498
      %v1869 = vmul.f32 %v1868, %v1498
      %v1870 = vmul.f32 %v1869, %v1868
      %v1871 = vmul.f32 0.5, %v1870
      %v1872 = vsub.f32 1.5, %v1871
      %v1873 = vmul.f32 %v1868, %v1872
      %vm1874 = vweird.f32 %v1498
      %vm1875 = vweird.f32 %v1868
      %vm1876 = vmor %vm1874, %vm1875
      %v1877 = vsel %vm1876, %v1868, %v1873
      %v1878 = vrsqrt.pop %v1499
      %v1879 = vmul.f32 %v1878, %v1499
      %v1880 = vmul.f32 %v1879, %v1878
      %v1881 = vmul.f32 0.5, %v1880
      %v1882 = vsub.f32 1.5, %v1881
      %v1883 = vmul.f32 %v1878, %v1882
      %vm1884 = vweird.f32 %v1499
      %vm1885 = vweird.f32 %v1878
      %vm1886 = vmor %vm1884, %vm1885
      %v1887 = vsel %vm1886, %v1878, %v1883
      %v1888 = vrsqrt.pop %v1500
      %v1889 = vmul.f32 %v1888, %v1500
      %v1890 = vmul.f32 %v1889, %v1888
      %v1891 = vmul.f32 0.5, %v1890
      %v1892 = vsub.f32 1.5, %v1891
      %v1893 = vmul.f32 %v1888, %v1892
      %vm1894 = vweird.f32 %v1500
      %vm1895 = vweird.f32 %v1888
      %vm1896 = vmor %vm1894, %vm1895
      %v1897 = vsel %vm1896, %v1888, %v1893
      %v1898 = vrsqrt.pop %v1501
      %v1899 = vmul.f32 %v1898, %v1501
      %v1900 = vmul.f32 %v1899, %v1898
      %v1901 = vmul.f32 0.5, %v1900
      %v1902 = vsub.f32 1.5, %v1901
      %v1903 = vmul.f32 %v1898, %v1902
      %vm1904 = vweird.f32 %v1501
      %vm1905 = vweird.f32 %v1898
      %vm1906 = vmor %vm1904, %vm1905
      %v1907 = vsel %vm1906, %v1898, %v1903
      %v1908 = vrsqrt.pop %v1502
      %v1909 = vmul.f32 %v1908, %v1502
      %v1910 = vmul.f32 %v1909, %v1908
      %v1911 = vmul.f32 0.5, %v1910
      %v1912 = vsub.f32 1.5, %v1911
      %v1913 = vmul.f32 %v1908, %v1912
      %vm1914 = vweird.f32 %v1502
      %vm1915 = vweird.f32 %v1908
      %vm1916 = vmor %vm1914, %vm1915
      %v1917 = vsel %vm1916, %v1908, %v1913
      %v1918 = vrsqrt.pop %v1503
      %v1919 = vmul.f32 %v1918, %v1503
      %v1920 = vmul.f32 %v1919, %v1918
      %v1921 = vmul.f32 0.5, %v1920
      %v1922 = vsub.f32 1.5, %v1921
      %v1923 = vmul.f32 %v1918, %v1922
      %vm1924 = vweird.f32 %v1503
      %vm1925 = vweird.f32 %v1918
      %vm1926 = vmor %vm1924, %vm1925
      %v1927 = vsel %vm1926, %v1918, %v1923
      %v1928 = vrsqrt.pop %v1504
      %v1929 = vmul.f32 %v1928, %v1504
      %v1930 = vmul.f32 %v1929, %v1928
      %v1931 = vmul.f32 0.5, %v1930
      %v1932 = vsub.f32 1.5, %v1931
      %v1933 = vmul.f32 %v1928, %v1932
      %vm1934 = vweird.f32 %v1504
      %vm1935 = vweird.f32 %v1928
      %vm1936 = vmor %vm1934, %vm1935
      %v1937 = vsel %vm1936, %v1928, %v1933
      %v1938 = vrsqrt.pop %v1505
      %v1939 = vmul.f32 %v1938, %v1505
      %v1940 = vmul.f32 %v1939, %v1938
      %v1941 = vmul.f32 0.5, %v1940
      %v1942 = vsub.f32 1.5, %v1941
      %v1943 = vmul.f32 %v1938, %v1942
      %vm1944 = vweird.f32 %v1505
      %vm1945 = vweird.f32 %v1938
      %vm1946 = vmor %vm1944, %vm1945
      %v1947 = vsel %vm1946, %v1938, %v1943
      %v1948 = vrsqrt.pop %v1506
      %v1949 = vmul.f32 %v1948, %v1506
      %v1950 = vmul.f32 %v1949, %v1948
      %v1951 = vmul.f32 0.5, %v1950
      %v1952 = vsub.f32 1.5, %v1951
      %v1953 = vmul.f32 %v1948, %v1952
      %vm1954 = vweird.f32 %v1506
      %vm1955 = vweird.f32 %v1948
      %vm1956 = vmor %vm1954, %vm1955
      %v1957 = vsel %vm1956, %v1948, %v1953
      %v1958 = vrsqrt.pop %v1507
      %v1959 = vmul.f32 %v1958, %v1507
      %v1960 = vmul.f32 %v1959, %v1958
      %v1961 = vmul.f32 0.5, %v1960
      %v1962 = vsub.f32 1.5, %v1961
      %v1963 = vmul.f32 %v1958, %v1962
      %vm1964 = vweird.f32 %v1507
      %vm1965 = vweird.f32 %v1958
      %vm1966 = vmor %vm1964, %vm1965
      %v1967 = vsel %vm1966, %v1958, %v1963
      %v1968 = vrsqrt.pop %v1508
      %v1969 = vmul.f32 %v1968, %v1508
      %v1970 = vmul.f32 %v1969, %v1968
      %v1971 = vmul.f32 0.5, %v1970
      %v1972 = vsub.f32 1.5, %v1971
      %v1973 = vmul.f32 %v1968, %v1972
      %vm1974 = vweird.f32 %v1508
      %vm1975 = vweird.f32 %v1968
      %vm1976 = vmor %vm1974, %vm1975
      %v1977 = vsel %vm1976, %v1968, %v1973
      %v1978 = vrsqrt.pop %v1509
      %v1979 = vmul.f32 %v1978, %v1509
      %v1980 = vmul.f32 %v1979, %v1978
      %v1981 = vmul.f32 0.5, %v1980
      %v1982 = vsub.f32 1.5, %v1981
      %v1983 = vmul.f32 %v1978, %v1982
      %vm1984 = vweird.f32 %v1509
      %vm1985 = vweird.f32 %v1978
      %vm1986 = vmor %vm1984, %vm1985
      %v1987 = vsel %vm1986, %v1978, %v1983
      %v1988 = vrsqrt.pop %v1510
      %v1989 = vmul.f32 %v1988, %v1510
      %v1990 = vmul.f32 %v1989, %v1988
      %v1991 = vmul.f32 0.5, %v1990
      %v1992 = vsub.f32 1.5, %v1991
      %v1993 = vmul.f32 %v1988, %v1992
      %vm1994 = vweird.f32 %v1510
      %vm1995 = vweird.f32 %v1988
      %vm1996 = vmor %vm1994, %vm1995
      %v1997 = vsel %vm1996, %v1988, %v1993
      %v1998 = vrsqrt.pop %v1511
      %v1999 = vmul.f32 %v1998, %v1511
      %v2000 = vmul.f32 %v1999, %v1998
      %v2001 = vmul.f32 0.5, %v2000
      %v2002 = vsub.f32 1.5, %v2001
      %v2003 = vmul.f32 %v1998, %v2002
      %vm2004 = vweird.f32 %v1511
      %vm2005 = vweird.f32 %v1998
      %vm2006 = vmor %vm2004, %vm2005
      %v2007 = vsel %vm2006, %v1998, %v2003
      %v2008 = vrsqrt.pop %v1512
      %v2009 = vmul.f32 %v2008, %v1512
      %v2010 = vmul.f32 %v2009, %v2008
      %v2011 = vmul.f32 0.5, %v2010
      %v2012 = vsub.f32 1.5, %v2011
      %v2013 = vmul.f32 %v2008, %v2012
      %vm2014 = vweird.f32 %v1512
      %vm2015 = vweird.f32 %v2008
      %vm2016 = vmor %vm2014, %vm2015
      %v2017 = vsel %vm2016, %v2008, %v2013
      %v2018 = vrsqrt.pop %v1513
      %v2019 = vmul.f32 %v2018, %v1513
      %v2020 = vmul.f32 %v2019, %v2018
      %v2021 = vmul.f32 0.5, %v2020
      %v2022 = vsub.f32 1.5, %v2021
      %v2023 = vmul.f32 %v2018, %v2022
      %vm2024 = vweird.f32 %v1513
      %vm2025 = vweird.f32 %v2018
      %vm2026 = vmor %vm2024, %vm2025
      %v2027 = vsel %vm2026, %v2018, %v2023
      %v2028 = vrsqrt.pop %v1514
      %v2029 = vmul.f32 %v2028, %v1514
      %v2030 = vmul.f32 %v2029, %v2028
      %v2031 = vmul.f32 0.5, %v2030
      %v2032 = vsub.f32 1.5, %v2031
      %v2033 = vmul.f32 %v2028, %v2032
      %vm2034 = vweird.f32 %v1514
      %vm2035 = vweird.f32 %v2028
      %vm2036 = vmor %vm2034, %vm2035
      %v2037 = vsel %vm2036, %v2028, %v2033
      %v2038 = vrsqrt.pop %v1515
      %v2039 = vmul.f32 %v2038, %v1515
      %v2040 = vmul.f32 %v2039, %v2038
      %v2041 = vmul.f32 0.5, %v2040
      %v2042 = vsub.f32 1.5, %v2041
      %v2043 = vmul.f32 %v2038, %v2042
      %vm2044 = vweird.f32 %v1515
      %vm2045 = vweird.f32 %v2038
      %vm2046 = vmor %vm2044, %vm2045
      %v2047 = vsel %vm2046, %v2038, %v2043
      %v2048 = vrsqrt.pop %v1516
      %v2049 = vmul.f32 %v2048, %v1516
      %v2050 = vmul.f32 %v2049, %v2048
      %v2051 = vmul.f32 0.5, %v2050
      %v2052 = vsub.f32 1.5, %v2051
      %v2053 = vmul.f32 %v2048, %v2052
      %vm2054 = vweird.f32 %v1516
      %vm2055 = vweird.f32 %v2048
      %vm2056 = vmor %vm2054, %vm2055
      %v2057 = vsel %vm2056, %v2048, %v2053
      %v2058 = vrsqrt.pop %v1517
      %v2059 = vmul.f32 %v2058, %v1517
      %v2060 = vmul.f32 %v2059, %v2058
      %v2061 = vmul.f32 0.5, %v2060
      %v2062 = vsub.f32 1.5, %v2061
      %v2063 = vmul.f32 %v2058, %v2062
      %vm2064 = vweird.f32 %v1517
      %vm2065 = vweird.f32 %v2058
      %vm2066 = vmor %vm2064, %vm2065
      %v2067 = vsel %vm2066, %v2058, %v2063
      %v2068 = vrsqrt.pop %v1518
      %v2069 = vmul.f32 %v2068, %v1518
      %v2070 = vmul.f32 %v2069, %v2068
      %v2071 = vmul.f32 0.5, %v2070
      %v2072 = vsub.f32 1.5, %v2071
      %v2073 = vmul.f32 %v2068, %v2072
      %vm2074 = vweird.f32 %v1518
      %vm2075 = vweird.f32 %v2068
      %vm2076 = vmor %vm2074, %vm2075
      %v2077 = vsel %vm2076, %v2068, %v2073
      %v2078 = vrsqrt.pop %v1519
      %v2079 = vmul.f32 %v2078, %v1519
      %v2080 = vmul.f32 %v2079, %v2078
      %v2081 = vmul.f32 0.5, %v2080
      %v2082 = vsub.f32 1.5, %v2081
      %v2083 = vmul.f32 %v2078, %v2082
      %vm2084 = vweird.f32 %v1519
      %vm2085 = vweird.f32 %v2078
      %vm2086 = vmor %vm2084, %vm2085
      %v2087 = vsel %vm2086, %v2078, %v2083
      %v2088 = vrsqrt.pop %v1520
      %v2089 = vmul.f32 %v2088, %v1520
      %v2090 = vmul.f32 %v2089, %v2088
      %v2091 = vmul.f32 0.5, %v2090
      %v2092 = vsub.f32 1.5, %v2091
      %v2093 = vmul.f32 %v2088, %v2092
      %vm2094 = vweird.f32 %v1520
      %vm2095 = vweird.f32 %v2088
      %vm2096 = vmor %vm2094, %vm2095
      %v2097 = vsel %vm2096, %v2088, %v2093
      %v2098 = vrsqrt.pop %v1521
      %v2099 = vmul.f32 %v2098, %v1521
      %v2100 = vmul.f32 %v2099, %v2098
      %v2101 = vmul.f32 0.5, %v2100
      %v2102 = vsub.f32 1.5, %v2101
      %v2103 = vmul.f32 %v2098, %v2102
      %vm2104 = vweird.f32 %v1521
      %vm2105 = vweird.f32 %v2098
      %vm2106 = vmor %vm2104, %vm2105
      %v2107 = vsel %vm2106, %v2098, %v2103
      %v2108 = vrsqrt.pop %v1522
      %v2109 = vmul.f32 %v2108, %v1522
      %v2110 = vmul.f32 %v2109, %v2108
      %v2111 = vmul.f32 0.5, %v2110
      %v2112 = vsub.f32 1.5, %v2111
      %v2113 = vmul.f32 %v2108, %v2112
      %vm2114 = vweird.f32 %v1522
      %vm2115 = vweird.f32 %v2108
      %vm2116 = vmor %vm2114, %vm2115
      %v2117 = vsel %vm2116, %v2108, %v2113
      %v2118 = vrsqrt.pop %v1523
      %v2119 = vmul.f32 %v2118, %v1523
      %v2120 = vmul.f32 %v2119, %v2118
      %v2121 = vmul.f32 0.5, %v2120
      %v2122 = vsub.f32 1.5, %v2121
      %v2123 = vmul.f32 %v2118, %v2122
      %vm2124 = vweird.f32 %v1523
      %vm2125 = vweird.f32 %v2118
      %vm2126 = vmor %vm2124, %vm2125
      %v2127 = vsel %vm2126, %v2118, %v2123
      %v2128 = vrsqrt.pop %v1524
      %v2129 = vmul.f32 %v2128, %v1524
      %v2130 = vmul.f32 %v2129, %v2128
      %v2131 = vmul.f32 0.5, %v2130
      %v2132 = vsub.f32 1.5, %v2131
      %v2133 = vmul.f32 %v2128, %v2132
      %vm2134 = vweird.f32 %v1524
      %vm2135 = vweird.f32 %v2128
      %vm2136 = vmor %vm2134, %vm2135
      %v2137 = vsel %vm2136, %v2128, %v2133
      %v2138 = vrsqrt.pop %v1525
      %v2139 = vmul.f32 %v2138, %v1525
      %v2140 = vmul.f32 %v2139, %v2138
      %v2141 = vmul.f32 0.5, %v2140
      %v2142 = vsub.f32 1.5, %v2141
      %v2143 = vmul.f32 %v2138, %v2142
      %vm2144 = vweird.f32 %v1525
      %vm2145 = vweird.f32 %v2138
      %vm2146 = vmor %vm2144, %vm2145
      %v2147 = vsel %vm2146, %v2138, %v2143
      %v2148 = vrsqrt.pop %v1526
      %v2149 = vmul.f32 %v2148, %v1526
      %v2150 = vmul.f32 %v2149, %v2148
      %v2151 = vmul.f32 0.5, %v2150
      %v2152 = vsub.f32 1.5, %v2151
      %v2153 = vmul.f32 %v2148, %v2152
      %vm2154 = vweird.f32 %v1526
      %vm2155 = vweird.f32 %v2148
      %vm2156 = vmor %vm2154, %vm2155
      %v2157 = vsel %vm2156, %v2148, %v2153
      %v2158 = vrsqrt.pop %v1527
      %v2159 = vmul.f32 %v2158, %v1527
      %v2160 = vmul.f32 %v2159, %v2158
      %v2161 = vmul.f32 0.5, %v2160
      %v2162 = vsub.f32 1.5, %v2161
      %v2163 = vmul.f32 %v2158, %v2162
      %vm2164 = vweird.f32 %v1527
      %vm2165 = vweird.f32 %v2158
      %vm2166 = vmor %vm2164, %vm2165
      %v2167 = vsel %vm2166, %v2158, %v2163
      %v2168 = vmul.f32 %v1400, %v1537
      %v2169 = vmul.f32 %v1401, %v1547
      %v2170 = vmul.f32 %v1402, %v1557
      %v2171 = vmul.f32 %v1403, %v1567
      %v2172 = vmul.f32 %v1404, %v1577
      %v2173 = vmul.f32 %v1405, %v1587
      %v2174 = vmul.f32 %v1406, %v1597
      %v2175 = vmul.f32 %v1407, %v1607
      %v2176 = vmul.f32 %v1408, %v1617
      %v2177 = vmul.f32 %v1409, %v1627
      %v2178 = vmul.f32 %v1410, %v1637
      %v2179 = vmul.f32 %v1411, %v1647
      %v2180 = vmul.f32 %v1412, %v1657
      %v2181 = vmul.f32 %v1413, %v1667
      %v2182 = vmul.f32 %v1414, %v1677
      %v2183 = vmul.f32 %v1415, %v1687
      %v2184 = vmul.f32 %v1416, %v1697
      %v2185 = vmul.f32 %v1417, %v1707
      %v2186 = vmul.f32 %v1418, %v1717
      %v2187 = vmul.f32 %v1419, %v1727
      %v2188 = vmul.f32 %v1420, %v1737
      %v2189 = vmul.f32 %v1421, %v1747
      %v2190 = vmul.f32 %v1422, %v1757
      %v2191 = vmul.f32 %v1423, %v1767
      %v2192 = vmul.f32 %v1424, %v1777
      %v2193 = vmul.f32 %v1425, %v1787
      %v2194 = vmul.f32 %v1426, %v1797
      %v2195 = vmul.f32 %v1427, %v1807
      %v2196 = vmul.f32 %v1428, %v1817
      %v2197 = vmul.f32 %v1429, %v1827
      %v2198 = vmul.f32 %v1430, %v1837
      %v2199 = vmul.f32 %v1431, %v1847
      %v2200 = vmul.f32 %v1432, %v1857
      %v2201 = vmul.f32 %v1433, %v1867
      %v2202 = vmul.f32 %v1434, %v1877
      %v2203 = vmul.f32 %v1435, %v1887
      %v2204 = vmul.f32 %v1436, %v1897
      %v2205 = vmul.f32 %v1437, %v1907
      %v2206 = vmul.f32 %v1438, %v1917
      %v2207 = vmul.f32 %v1439, %v1927
      %v2208 = vmul.f32 %v1440, %v1937
      %v2209 = vmul.f32 %v1441, %v1947
      %v2210 = vmul.f32 %v1442, %v1957
      %v2211 = vmul.f32 %v1443, %v1967
      %v2212 = vmul.f32 %v1444, %v1977
      %v2213 = vmul.f32 %v1445, %v1987
      %v2214 = vmul.f32 %v1446, %v1997
      %v2215 = vmul.f32 %v1447, %v2007
      %v2216 = vmul.f32 %v1448, %v2017
      %v2217 = vmul.f32 %v1449, %v2027
      %v2218 = vmul.f32 %v1450, %v2037
      %v2219 = vmul.f32 %v1451, %v2047
      %v2220 = vmul.f32 %v1452, %v2057
      %v2221 = vmul.f32 %v1453, %v2067
      %v2222 = vmul.f32 %v1454, %v2077
      %v2223 = vmul.f32 %v1455, %v2087
      %v2224 = vmul.f32 %v1456, %v2097
      %v2225 = vmul.f32 %v1457, %v2107
      %v2226 = vmul.f32 %v1458, %v2117
      %v2227 = vmul.f32 %v1459, %v2127
      %v2228 = vmul.f32 %v1460, %v2137
      %v2229 = vmul.f32 %v1461, %v2147
      %v2230 = vmul.f32 %v1462, %v2157
      %v2231 = vmul.f32 %v1463, %v2167
      %v2232 = vld [vmem:[%s3] sm:$0x1]
      %v2234 = vperm.slane %v2232, 0
      %v2236 = vmul.f32 %v2168, %v2234
      %v2237 = vmul.f32 %v2169, %v2234
      %v2238 = vmul.f32 %v2170, %v2234
      %v2239 = vmul.f32 %v2171, %v2234
      %v2240 = vmul.f32 %v2172, %v2234
      %v2241 = vmul.f32 %v2173, %v2234
      %v2242 = vmul.f32 %v2174, %v2234
      %v2243 = vmul.f32 %v2175, %v2234
      %v2244 = vmul.f32 %v2176, %v2234
      %v2245 = vmul.f32 %v2177, %v2234
      %v2246 = vmul.f32 %v2178, %v2234
      %v2247 = vmul.f32 %v2179, %v2234
      %v2248 = vmul.f32 %v2180, %v2234
      %v2249 = vmul.f32 %v2181, %v2234
      %v2250 = vmul.f32 %v2182, %v2234
      %v2251 = vmul.f32 %v2183, %v2234
      %v2252 = vmul.f32 %v2184, %v2234
      %v2253 = vmul.f32 %v2185, %v2234
      %v2254 = vmul.f32 %v2186, %v2234
      %v2255 = vmul.f32 %v2187, %v2234
      %v2256 = vmul.f32 %v2188, %v2234
      %v2257 = vmul.f32 %v2189, %v2234
      %v2258 = vmul.f32 %v2190, %v2234
      %v2259 = vmul.f32 %v2191, %v2234
      %v2260 = vmul.f32 %v2192, %v2234
      %v2261 = vmul.f32 %v2193, %v2234
      %v2262 = vmul.f32 %v2194, %v2234
      %v2263 = vmul.f32 %v2195, %v2234
      %v2264 = vmul.f32 %v2196, %v2234
      %v2265 = vmul.f32 %v2197, %v2234
      %v2266 = vmul.f32 %v2198, %v2234
      %v2267 = vmul.f32 %v2199, %v2234
      %v2268 = vmul.f32 %v2200, %v2234
      %v2269 = vmul.f32 %v2201, %v2234
      %v2270 = vmul.f32 %v2202, %v2234
      %v2271 = vmul.f32 %v2203, %v2234
      %v2272 = vmul.f32 %v2204, %v2234
      %v2273 = vmul.f32 %v2205, %v2234
      %v2274 = vmul.f32 %v2206, %v2234
      %v2275 = vmul.f32 %v2207, %v2234
      %v2276 = vmul.f32 %v2208, %v2234
      %v2277 = vmul.f32 %v2209, %v2234
      %v2278 = vmul.f32 %v2210, %v2234
      %v2279 = vmul.f32 %v2211, %v2234
      %v2280 = vmul.f32 %v2212, %v2234
      %v2281 = vmul.f32 %v2213, %v2234
      %v2282 = vmul.f32 %v2214, %v2234
      %v2283 = vmul.f32 %v2215, %v2234
      %v2284 = vmul.f32 %v2216, %v2234
      %v2285 = vmul.f32 %v2217, %v2234
      %v2286 = vmul.f32 %v2218, %v2234
      %v2287 = vmul.f32 %v2219, %v2234
      %v2288 = vmul.f32 %v2220, %v2234
      %v2289 = vmul.f32 %v2221, %v2234
      %v2290 = vmul.f32 %v2222, %v2234
      %v2291 = vmul.f32 %v2223, %v2234
      %v2292 = vmul.f32 %v2224, %v2234
      %v2293 = vmul.f32 %v2225, %v2234
      %v2294 = vmul.f32 %v2226, %v2234
      %v2295 = vmul.f32 %v2227, %v2234
      %v2296 = vmul.f32 %v2228, %v2234
      %v2297 = vmul.f32 %v2229, %v2234
      %v2298 = vmul.f32 %v2230, %v2234
      %v2299 = vmul.f32 %v2231, %v2234
      %v2300 = vld [vmem:[%s4] sm:$0x1]
      %v2302 = vperm.slane %v2300, 0
      %v2304 = vadd.f32 %v2236, %v2302
      %v2305 = vadd.f32 %v2237, %v2302
      %v2306 = vadd.f32 %v2238, %v2302
      %v2307 = vadd.f32 %v2239, %v2302
      %v2308 = vadd.f32 %v2240, %v2302
      %v2309 = vadd.f32 %v2241, %v2302
      %v2310 = vadd.f32 %v2242, %v2302
      %v2311 = vadd.f32 %v2243, %v2302
      %v2312 = vadd.f32 %v2244, %v2302
      %v2313 = vadd.f32 %v2245, %v2302
      %v2314 = vadd.f32 %v2246, %v2302
      %v2315 = vadd.f32 %v2247, %v2302
      %v2316 = vadd.f32 %v2248, %v2302
      %v2317 = vadd.f32 %v2249, %v2302
      %v2318 = vadd.f32 %v2250, %v2302
      %v2319 = vadd.f32 %v2251, %v2302
      %v2320 = vadd.f32 %v2252, %v2302
      %v2321 = vadd.f32 %v2253, %v2302
      %v2322 = vadd.f32 %v2254, %v2302
      %v2323 = vadd.f32 %v2255, %v2302
      %v2324 = vadd.f32 %v2256, %v2302
      %v2325 = vadd.f32 %v2257, %v2302
      %v2326 = vadd.f32 %v2258, %v2302
      %v2327 = vadd.f32 %v2259, %v2302
      %v2328 = vadd.f32 %v2260, %v2302
      %v2329 = vadd.f32 %v2261, %v2302
      %v2330 = vadd.f32 %v2262, %v2302
      %v2331 = vadd.f32 %v2263, %v2302
      %v2332 = vadd.f32 %v2264, %v2302
      %v2333 = vadd.f32 %v2265, %v2302
      %v2334 = vadd.f32 %v2266, %v2302
      %v2335 = vadd.f32 %v2267, %v2302
      %v2336 = vadd.f32 %v2268, %v2302
      %v2337 = vadd.f32 %v2269, %v2302
      %v2338 = vadd.f32 %v2270, %v2302
      %v2339 = vadd.f32 %v2271, %v2302
      %v2340 = vadd.f32 %v2272, %v2302
      %v2341 = vadd.f32 %v2273, %v2302
      %v2342 = vadd.f32 %v2274, %v2302
      %v2343 = vadd.f32 %v2275, %v2302
      %v2344 = vadd.f32 %v2276, %v2302
      %v2345 = vadd.f32 %v2277, %v2302
      %v2346 = vadd.f32 %v2278, %v2302
      %v2347 = vadd.f32 %v2279, %v2302
      %v2348 = vadd.f32 %v2280, %v2302
      %v2349 = vadd.f32 %v2281, %v2302
      %v2350 = vadd.f32 %v2282, %v2302
      %v2351 = vadd.f32 %v2283, %v2302
      %v2352 = vadd.f32 %v2284, %v2302
      %v2353 = vadd.f32 %v2285, %v2302
      %v2354 = vadd.f32 %v2286, %v2302
      %v2355 = vadd.f32 %v2287, %v2302
      %v2356 = vadd.f32 %v2288, %v2302
      %v2357 = vadd.f32 %v2289, %v2302
      %v2358 = vadd.f32 %v2290, %v2302
      %v2359 = vadd.f32 %v2291, %v2302
      %v2360 = vadd.f32 %v2292, %v2302
      %v2361 = vadd.f32 %v2293, %v2302
      %v2362 = vadd.f32 %v2294, %v2302
      %v2363 = vadd.f32 %v2295, %v2302
      %v2364 = vadd.f32 %v2296, %v2302
      %v2365 = vadd.f32 %v2297, %v2302
      %v2366 = vadd.f32 %v2298, %v2302
      %v2367 = vadd.f32 %v2299, %v2302
      %v2368 = vmul.f32 %v2304, 0.5
      %v2369 = vmul.f32 %v2305, 0.5
      %v2370 = vmul.f32 %v2306, 0.5
      %v2371 = vmul.f32 %v2307, 0.5
      %v2372 = vmul.f32 %v2308, 0.5
      %v2373 = vmul.f32 %v2309, 0.5
      %v2374 = vmul.f32 %v2310, 0.5
      %v2375 = vmul.f32 %v2311, 0.5
      %v2376 = vmul.f32 %v2312, 0.5
      %v2377 = vmul.f32 %v2313, 0.5
      %v2378 = vmul.f32 %v2314, 0.5
      %v2379 = vmul.f32 %v2315, 0.5
      %v2380 = vmul.f32 %v2316, 0.5
      %v2381 = vmul.f32 %v2317, 0.5
      %v2382 = vmul.f32 %v2318, 0.5
      %v2383 = vmul.f32 %v2319, 0.5
      %v2384 = vmul.f32 %v2320, 0.5
      %v2385 = vmul.f32 %v2321, 0.5
      %v2386 = vmul.f32 %v2322, 0.5
      %v2387 = vmul.f32 %v2323, 0.5
      %v2388 = vmul.f32 %v2324, 0.5
      %v2389 = vmul.f32 %v2325, 0.5
      %v2390 = vmul.f32 %v2326, 0.5
      %v2391 = vmul.f32 %v2327, 0.5
      %v2392 = vmul.f32 %v2328, 0.5
      %v2393 = vmul.f32 %v2329, 0.5
      %v2394 = vmul.f32 %v2330, 0.5
      %v2395 = vmul.f32 %v2331, 0.5
      %v2396 = vmul.f32 %v2332, 0.5
      %v2397 = vmul.f32 %v2333, 0.5
      %v2398 = vmul.f32 %v2334, 0.5
      %v2399 = vmul.f32 %v2335, 0.5
      %v2400 = vmul.f32 %v2336, 0.5
      %v2401 = vmul.f32 %v2337, 0.5
      %v2402 = vmul.f32 %v2338, 0.5
      %v2403 = vmul.f32 %v2339, 0.5
      %v2404 = vmul.f32 %v2340, 0.5
      %v2405 = vmul.f32 %v2341, 0.5
      %v2406 = vmul.f32 %v2342, 0.5
      %v2407 = vmul.f32 %v2343, 0.5
      %v2408 = vmul.f32 %v2344, 0.5
      %v2409 = vmul.f32 %v2345, 0.5
      %v2410 = vmul.f32 %v2346, 0.5
      %v2411 = vmul.f32 %v2347, 0.5
      %v2412 = vmul.f32 %v2348, 0.5
      %v2413 = vmul.f32 %v2349, 0.5
      %v2414 = vmul.f32 %v2350, 0.5
      %v2415 = vmul.f32 %v2351, 0.5
      %v2416 = vmul.f32 %v2352, 0.5
      %v2417 = vmul.f32 %v2353, 0.5
      %v2418 = vmul.f32 %v2354, 0.5
      %v2419 = vmul.f32 %v2355, 0.5
      %v2420 = vmul.f32 %v2356, 0.5
      %v2421 = vmul.f32 %v2357, 0.5
      %v2422 = vmul.f32 %v2358, 0.5
      %v2423 = vmul.f32 %v2359, 0.5
      %v2424 = vmul.f32 %v2360, 0.5
      %v2425 = vmul.f32 %v2361, 0.5
      %v2426 = vmul.f32 %v2362, 0.5
      %v2427 = vmul.f32 %v2363, 0.5
      %v2428 = vmul.f32 %v2364, 0.5
      %v2429 = vmul.f32 %v2365, 0.5
      %v2430 = vmul.f32 %v2366, 0.5
      %v2431 = vmul.f32 %v2367, 0.5
      %v2432 = vmul.f32 %v2304, 0.70710677
      %v2433 = vmul.f32 %v2305, 0.70710677
      %v2434 = vmul.f32 %v2306, 0.70710677
      %v2435 = vmul.f32 %v2307, 0.70710677
      %v2436 = vmul.f32 %v2308, 0.70710677
      %v2437 = vmul.f32 %v2309, 0.70710677
      %v2438 = vmul.f32 %v2310, 0.70710677
      %v2439 = vmul.f32 %v2311, 0.70710677
      %v2440 = vmul.f32 %v2312, 0.70710677
      %v2441 = vmul.f32 %v2313, 0.70710677
      %v2442 = vmul.f32 %v2314, 0.70710677
      %v2443 = vmul.f32 %v2315, 0.70710677
      %v2444 = vmul.f32 %v2316, 0.70710677
      %v2445 = vmul.f32 %v2317, 0.70710677
      %v2446 = vmul.f32 %v2318, 0.70710677
      %v2447 = vmul.f32 %v2319, 0.70710677
      %v2448 = vmul.f32 %v2320, 0.70710677
      %v2449 = vmul.f32 %v2321, 0.70710677
      %v2450 = vmul.f32 %v2322, 0.70710677
      %v2451 = vmul.f32 %v2323, 0.70710677
      %v2452 = vmul.f32 %v2324, 0.70710677
      %v2453 = vmul.f32 %v2325, 0.70710677
      %v2454 = vmul.f32 %v2326, 0.70710677
      %v2455 = vmul.f32 %v2327, 0.70710677
      %v2456 = vmul.f32 %v2328, 0.70710677
      %v2457 = vmul.f32 %v2329, 0.70710677
      %v2458 = vmul.f32 %v2330, 0.70710677
      %v2459 = vmul.f32 %v2331, 0.70710677
      %v2460 = vmul.f32 %v2332, 0.70710677
      %v2461 = vmul.f32 %v2333, 0.70710677
      %v2462 = vmul.f32 %v2334, 0.70710677
      %v2463 = vmul.f32 %v2335, 0.70710677
      %v2464 = vmul.f32 %v2336, 0.70710677
      %v2465 = vmul.f32 %v2337, 0.70710677
      %v2466 = vmul.f32 %v2338, 0.70710677
      %v2467 = vmul.f32 %v2339, 0.70710677
      %v2468 = vmul.f32 %v2340, 0.70710677
      %v2469 = vmul.f32 %v2341, 0.70710677
      %v2470 = vmul.f32 %v2342, 0.70710677
      %v2471 = vmul.f32 %v2343, 0.70710677
      %v2472 = vmul.f32 %v2344, 0.70710677
      %v2473 = vmul.f32 %v2345, 0.70710677
      %v2474 = vmul.f32 %v2346, 0.70710677
      %v2475 = vmul.f32 %v2347, 0.70710677
      %v2476 = vmul.f32 %v2348, 0.70710677
      %v2477 = vmul.f32 %v2349, 0.70710677
      %v2478 = vmul.f32 %v2350, 0.70710677
      %v2479 = vmul.f32 %v2351, 0.70710677
      %v2480 = vmul.f32 %v2352, 0.70710677
      %v2481 = vmul.f32 %v2353, 0.70710677
      %v2482 = vmul.f32 %v2354, 0.70710677
      %v2483 = vmul.f32 %v2355, 0.70710677
      %v2484 = vmul.f32 %v2356, 0.70710677
      %v2485 = vmul.f32 %v2357, 0.70710677
      %v2486 = vmul.f32 %v2358, 0.70710677
      %v2487 = vmul.f32 %v2359, 0.70710677
      %v2488 = vmul.f32 %v2360, 0.70710677
      %v2489 = vmul.f32 %v2361, 0.70710677
      %v2490 = vmul.f32 %v2362, 0.70710677
      %v2491 = vmul.f32 %v2363, 0.70710677
      %v2492 = vmul.f32 %v2364, 0.70710677
      %v2493 = vmul.f32 %v2365, 0.70710677
      %v2494 = vmul.f32 %v2366, 0.70710677
      %v2495 = vmul.f32 %v2367, 0.70710677
      %v2496 = vmul.f32 %v2432, %v2432
      %v2497 = vmin.f32 16.0, %v2496
      %v2498 = vmul.f32 %v2497, 2.1237322e-06
      %v2499 = vadd.f32 %v2498, 0.00028619796
      %v2500 = vmul.f32 %v2497, %v2499
      %v2501 = vadd.f32 %v2500, 0.0036580483
      %v2502 = vmul.f32 %v2497, %v2501
      %v2503 = vadd.f32 %v2502, 0.05243302
      %v2504 = vmul.f32 %v2497, %v2503
      %v2505 = vadd.f32 %v2504, 0.18741608
      %v2506 = vmul.f32 %v2497, %v2505
      %v2507 = vadd.f32 %v2506, 1.1283791
      %v2508 = vmul.f32 %v2432, %v2507
      %v2509 = vmul.f32 %v2497, 3.8918573e-05
      %v2510 = vadd.f32 %v2509, 0.001143296
      %v2511 = vmul.f32 %v2497, %v2510
      %v2512 = vadd.f32 %v2511, 0.014752088
      %v2513 = vmul.f32 %v2497, %v2512
      %v2514 = vadd.f32 %v2513, 0.112945676
      %v2515 = vmul.f32 %v2497, %v2514
      %v2516 = vadd.f32 %v2515, 0.4994258
      %v2517 = vmul.f32 %v2497, %v2516
      %v2518 = vadd.f32 %v2517, 1.0
      %v2519 = vrcp.pop %v2518
      %v2520 = vmul.f32 %v2518, %v2519
      %v2521 = vsub.f32 1.0, %v2520
      %v2522 = vmul.f32 %v2519, %v2521
      %v2523 = vadd.f32 %v2519, %v2522
      %vm2524 = vweird.f32 %v2518
      %vm2525 = vweird.f32 %v2519
      %vm2526 = vmor %vm2524, %vm2525
      %v2527 = vsel %vm2526, %v2519, %v2523
      %v2528 = vand.u32 2147483647, %v2518
      %vm2529 = vcmp.eq.f32.partialorder %v2528, 8.507059e+37
      %v2530 = vand.u32 %v2518, 2147483648
      %v2531 = vor.u32 1.1754944e-38, %v2530
      %v2532 = vsel %vm2529, %v2531, %v2527
      %v2533 = vmul.f32 %v2508, %v2532
      %v2534 = vmin.f32 %v2533, 1.0
      %v2535 = vmax.f32 %v2534, -1.0
      %v2536 = vmul.f32 %v2433, %v2433
      %v2537 = vmin.f32 16.0, %v2536
      %v2538 = vmul.f32 %v2537, 2.1237322e-06
      %v2539 = vadd.f32 %v2538, 0.00028619796
      %v2540 = vmul.f32 %v2537, %v2539
      %v2541 = vadd.f32 %v2540, 0.0036580483
      %v2542 = vmul.f32 %v2537, %v2541
      %v2543 = vadd.f32 %v2542, 0.05243302
      %v2544 = vmul.f32 %v2537, %v2543
      %v2545 = vadd.f32 %v2544, 0.18741608
      %v2546 = vmul.f32 %v2537, %v2545
      %v2547 = vadd.f32 %v2546, 1.1283791
      %v2548 = vmul.f32 %v2433, %v2547
      %v2549 = vmul.f32 %v2537, 3.8918573e-05
      %v2550 = vadd.f32 %v2549, 0.001143296
      %v2551 = vmul.f32 %v2537, %v2550
      %v2552 = vadd.f32 %v2551, 0.014752088
      %v2553 = vmul.f32 %v2537, %v2552
      %v2554 = vadd.f32 %v2553, 0.112945676
      %v2555 = vmul.f32 %v2537, %v2554
      %v2556 = vadd.f32 %v2555, 0.4994258
      %v2557 = vmul.f32 %v2537, %v2556
      %v2558 = vadd.f32 %v2557, 1.0
      %v2559 = vrcp.pop %v2558
      %v2560 = vmul.f32 %v2558, %v2559
      %v2561 = vsub.f32 1.0, %v2560
      %v2562 = vmul.f32 %v2559, %v2561
      %v2563 = vadd.f32 %v2559, %v2562
      %vm2564 = vweird.f32 %v2558
      %vm2565 = vweird.f32 %v2559
      %vm2566 = vmor %vm2564, %vm2565
      %v2567 = vsel %vm2566, %v2559, %v2563
      %v2568 = vand.u32 2147483647, %v2558
      %vm2569 = vcmp.eq.f32.partialorder %v2568, 8.507059e+37
      %v2570 = vand.u32 %v2558, 2147483648
      %v2571 = vor.u32 1.1754944e-38, %v2570
      %v2572 = vsel %vm2569, %v2571, %v2567
      %v2573 = vmul.f32 %v2548, %v2572
      %v2574 = vmin.f32 %v2573, 1.0
      %v2575 = vmax.f32 %v2574, -1.0
      %v2576 = vmul.f32 %v2434, %v2434
      %v2577 = vmin.f32 16.0, %v2576
      %v2578 = vmul.f32 %v2577, 2.1237322e-06
      %v2579 = vadd.f32 %v2578, 0.00028619796
      %v2580 = vmul.f32 %v2577, %v2579
      %v2581 = vadd.f32 %v2580, 0.0036580483
      %v2582 = vmul.f32 %v2577, %v2581
      %v2583 = vadd.f32 %v2582, 0.05243302
      %v2584 = vmul.f32 %v2577, %v2583
      %v2585 = vadd.f32 %v2584, 0.18741608
      %v2586 = vmul.f32 %v2577, %v2585
      %v2587 = vadd.f32 %v2586, 1.1283791
      %v2588 = vmul.f32 %v2434, %v2587
      %v2589 = vmul.f32 %v2577, 3.8918573e-05
      %v2590 = vadd.f32 %v2589, 0.001143296
      %v2591 = vmul.f32 %v2577, %v2590
      %v2592 = vadd.f32 %v2591, 0.014752088
      %v2593 = vmul.f32 %v2577, %v2592
      %v2594 = vadd.f32 %v2593, 0.112945676
      %v2595 = vmul.f32 %v2577, %v2594
      %v2596 = vadd.f32 %v2595, 0.4994258
      %v2597 = vmul.f32 %v2577, %v2596
      %v2598 = vadd.f32 %v2597, 1.0
      %v2599 = vrcp.pop %v2598
      %v2600 = vmul.f32 %v2598, %v2599
      %v2601 = vsub.f32 1.0, %v2600
      %v2602 = vmul.f32 %v2599, %v2601
      %v2603 = vadd.f32 %v2599, %v2602
      %vm2604 = vweird.f32 %v2598
      %vm2605 = vweird.f32 %v2599
      %vm2606 = vmor %vm2604, %vm2605
      %v2607 = vsel %vm2606, %v2599, %v2603
      %v2608 = vand.u32 2147483647, %v2598
      %vm2609 = vcmp.eq.f32.partialorder %v2608, 8.507059e+37
      %v2610 = vand.u32 %v2598, 2147483648
      %v2611 = vor.u32 1.1754944e-38, %v2610
      %v2612 = vsel %vm2609, %v2611, %v2607
      %v2613 = vmul.f32 %v2588, %v2612
      %v2614 = vmin.f32 %v2613, 1.0
      %v2615 = vmax.f32 %v2614, -1.0
      %v2616 = vmul.f32 %v2435, %v2435
      %v2617 = vmin.f32 16.0, %v2616
      %v2618 = vmul.f32 %v2617, 2.1237322e-06
      %v2619 = vadd.f32 %v2618, 0.00028619796
      %v2620 = vmul.f32 %v2617, %v2619
      %v2621 = vadd.f32 %v2620, 0.0036580483
      %v2622 = vmul.f32 %v2617, %v2621
      %v2623 = vadd.f32 %v2622, 0.05243302
      %v2624 = vmul.f32 %v2617, %v2623
      %v2625 = vadd.f32 %v2624, 0.18741608
      %v2626 = vmul.f32 %v2617, %v2625
      %v2627 = vadd.f32 %v2626, 1.1283791
      %v2628 = vmul.f32 %v2435, %v2627
      %v2629 = vmul.f32 %v2617, 3.8918573e-05
      %v2630 = vadd.f32 %v2629, 0.001143296
      %v2631 = vmul.f32 %v2617, %v2630
      %v2632 = vadd.f32 %v2631, 0.014752088
      %v2633 = vmul.f32 %v2617, %v2632
      %v2634 = vadd.f32 %v2633, 0.112945676
      %v2635 = vmul.f32 %v2617, %v2634
      %v2636 = vadd.f32 %v2635, 0.4994258
      %v2637 = vmul.f32 %v2617, %v2636
      %v2638 = vadd.f32 %v2637, 1.0
      %v2639 = vrcp.pop %v2638
      %v2640 = vmul.f32 %v2638, %v2639
      %v2641 = vsub.f32 1.0, %v2640
      %v2642 = vmul.f32 %v2639, %v2641
      %v2643 = vadd.f32 %v2639, %v2642
      %vm2644 = vweird.f32 %v2638
      %vm2645 = vweird.f32 %v2639
      %vm2646 = vmor %vm2644, %vm2645
      %v2647 = vsel %vm2646, %v2639, %v2643
      %v2648 = vand.u32 2147483647, %v2638
      %vm2649 = vcmp.eq.f32.partialorder %v2648, 8.507059e+37
      %v2650 = vand.u32 %v2638, 2147483648
      %v2651 = vor.u32 1.1754944e-38, %v2650
      %v2652 = vsel %vm2649, %v2651, %v2647
      %v2653 = vmul.f32 %v2628, %v2652
      %v2654 = vmin.f32 %v2653, 1.0
      %v2655 = vmax.f32 %v2654, -1.0
      %v2656 = vmul.f32 %v2436, %v2436
      %v2657 = vmin.f32 16.0, %v2656
      %v2658 = vmul.f32 %v2657, 2.1237322e-06
      %v2659 = vadd.f32 %v2658, 0.00028619796
      %v2660 = vmul.f32 %v2657, %v2659
      %v2661 = vadd.f32 %v2660, 0.0036580483
      %v2662 = vmul.f32 %v2657, %v2661
      %v2663 = vadd.f32 %v2662, 0.05243302
      %v2664 = vmul.f32 %v2657, %v2663
      %v2665 = vadd.f32 %v2664, 0.18741608
      %v2666 = vmul.f32 %v2657, %v2665
      %v2667 = vadd.f32 %v2666, 1.1283791
      %v2668 = vmul.f32 %v2436, %v2667
      %v2669 = vmul.f32 %v2657, 3.8918573e-05
      %v2670 = vadd.f32 %v2669, 0.001143296
      %v2671 = vmul.f32 %v2657, %v2670
      %v2672 = vadd.f32 %v2671, 0.014752088
      %v2673 = vmul.f32 %v2657, %v2672
      %v2674 = vadd.f32 %v2673, 0.112945676
      %v2675 = vmul.f32 %v2657, %v2674
      %v2676 = vadd.f32 %v2675, 0.4994258
      %v2677 = vmul.f32 %v2657, %v2676
      %v2678 = vadd.f32 %v2677, 1.0
      %v2679 = vrcp.pop %v2678
      %v2680 = vmul.f32 %v2678, %v2679
      %v2681 = vsub.f32 1.0, %v2680
      %v2682 = vmul.f32 %v2679, %v2681
      %v2683 = vadd.f32 %v2679, %v2682
      %vm2684 = vweird.f32 %v2678
      %vm2685 = vweird.f32 %v2679
      %vm2686 = vmor %vm2684, %vm2685
      %v2687 = vsel %vm2686, %v2679, %v2683
      %v2688 = vand.u32 2147483647, %v2678
      %vm2689 = vcmp.eq.f32.partialorder %v2688, 8.507059e+37
      %v2690 = vand.u32 %v2678, 2147483648
      %v2691 = vor.u32 1.1754944e-38, %v2690
      %v2692 = vsel %vm2689, %v2691, %v2687
      %v2693 = vmul.f32 %v2668, %v2692
      %v2694 = vmin.f32 %v2693, 1.0
      %v2695 = vmax.f32 %v2694, -1.0
      %v2696 = vmul.f32 %v2437, %v2437
      %v2697 = vmin.f32 16.0, %v2696
      %v2698 = vmul.f32 %v2697, 2.1237322e-06
      %v2699 = vadd.f32 %v2698, 0.00028619796
      %v2700 = vmul.f32 %v2697, %v2699
      %v2701 = vadd.f32 %v2700, 0.0036580483
      %v2702 = vmul.f32 %v2697, %v2701
      %v2703 = vadd.f32 %v2702, 0.05243302
      %v2704 = vmul.f32 %v2697, %v2703
      %v2705 = vadd.f32 %v2704, 0.18741608
      %v2706 = vmul.f32 %v2697, %v2705
      %v2707 = vadd.f32 %v2706, 1.1283791
      %v2708 = vmul.f32 %v2437, %v2707
      %v2709 = vmul.f32 %v2697, 3.8918573e-05
      %v2710 = vadd.f32 %v2709, 0.001143296
      %v2711 = vmul.f32 %v2697, %v2710
      %v2712 = vadd.f32 %v2711, 0.014752088
      %v2713 = vmul.f32 %v2697, %v2712
      %v2714 = vadd.f32 %v2713, 0.112945676
      %v2715 = vmul.f32 %v2697, %v2714
      %v2716 = vadd.f32 %v2715, 0.4994258
      %v2717 = vmul.f32 %v2697, %v2716
      %v2718 = vadd.f32 %v2717, 1.0
      %v2719 = vrcp.pop %v2718
      %v2720 = vmul.f32 %v2718, %v2719
      %v2721 = vsub.f32 1.0, %v2720
      %v2722 = vmul.f32 %v2719, %v2721
      %v2723 = vadd.f32 %v2719, %v2722
      %vm2724 = vweird.f32 %v2718
      %vm2725 = vweird.f32 %v2719
      %vm2726 = vmor %vm2724, %vm2725
      %v2727 = vsel %vm2726, %v2719, %v2723
      %v2728 = vand.u32 2147483647, %v2718
      %vm2729 = vcmp.eq.f32.partialorder %v2728, 8.507059e+37
      %v2730 = vand.u32 %v2718, 2147483648
      %v2731 = vor.u32 1.1754944e-38, %v2730
      %v2732 = vsel %vm2729, %v2731, %v2727
      %v2733 = vmul.f32 %v2708, %v2732
      %v2734 = vmin.f32 %v2733, 1.0
      %v2735 = vmax.f32 %v2734, -1.0
      %v2736 = vmul.f32 %v2438, %v2438
      %v2737 = vmin.f32 16.0, %v2736
      %v2738 = vmul.f32 %v2737, 2.1237322e-06
      %v2739 = vadd.f32 %v2738, 0.00028619796
      %v2740 = vmul.f32 %v2737, %v2739
      %v2741 = vadd.f32 %v2740, 0.0036580483
      %v2742 = vmul.f32 %v2737, %v2741
      %v2743 = vadd.f32 %v2742, 0.05243302
      %v2744 = vmul.f32 %v2737, %v2743
      %v2745 = vadd.f32 %v2744, 0.18741608
      %v2746 = vmul.f32 %v2737, %v2745
      %v2747 = vadd.f32 %v2746, 1.1283791
      %v2748 = vmul.f32 %v2438, %v2747
      %v2749 = vmul.f32 %v2737, 3.8918573e-05
      %v2750 = vadd.f32 %v2749, 0.001143296
      %v2751 = vmul.f32 %v2737, %v2750
      %v2752 = vadd.f32 %v2751, 0.014752088
      %v2753 = vmul.f32 %v2737, %v2752
      %v2754 = vadd.f32 %v2753, 0.112945676
      %v2755 = vmul.f32 %v2737, %v2754
      %v2756 = vadd.f32 %v2755, 0.4994258
      %v2757 = vmul.f32 %v2737, %v2756
      %v2758 = vadd.f32 %v2757, 1.0
      %v2759 = vrcp.pop %v2758
      %v2760 = vmul.f32 %v2758, %v2759
      %v2761 = vsub.f32 1.0, %v2760
      %v2762 = vmul.f32 %v2759, %v2761
      %v2763 = vadd.f32 %v2759, %v2762
      %vm2764 = vweird.f32 %v2758
      %vm2765 = vweird.f32 %v2759
      %vm2766 = vmor %vm2764, %vm2765
      %v2767 = vsel %vm2766, %v2759, %v2763
      %v2768 = vand.u32 2147483647, %v2758
      %vm2769 = vcmp.eq.f32.partialorder %v2768, 8.507059e+37
      %v2770 = vand.u32 %v2758, 2147483648
      %v2771 = vor.u32 1.1754944e-38, %v2770
      %v2772 = vsel %vm2769, %v2771, %v2767
      %v2773 = vmul.f32 %v2748, %v2772
      %v2774 = vmin.f32 %v2773, 1.0
      %v2775 = vmax.f32 %v2774, -1.0
      %v2776 = vmul.f32 %v2439, %v2439
      %v2777 = vmin.f32 16.0, %v2776
      %v2778 = vmul.f32 %v2777, 2.1237322e-06
      %v2779 = vadd.f32 %v2778, 0.00028619796
      %v2780 = vmul.f32 %v2777, %v2779
      %v2781 = vadd.f32 %v2780, 0.0036580483
      %v2782 = vmul.f32 %v2777, %v2781
      %v2783 = vadd.f32 %v2782, 0.05243302
      %v2784 = vmul.f32 %v2777, %v2783
      %v2785 = vadd.f32 %v2784, 0.18741608
      %v2786 = vmul.f32 %v2777, %v2785
      %v2787 = vadd.f32 %v2786, 1.1283791
      %v2788 = vmul.f32 %v2439, %v2787
      %v2789 = vmul.f32 %v2777, 3.8918573e-05
      %v2790 = vadd.f32 %v2789, 0.001143296
      %v2791 = vmul.f32 %v2777, %v2790
      %v2792 = vadd.f32 %v2791, 0.014752088
      %v2793 = vmul.f32 %v2777, %v2792
      %v2794 = vadd.f32 %v2793, 0.112945676
      %v2795 = vmul.f32 %v2777, %v2794
      %v2796 = vadd.f32 %v2795, 0.4994258
      %v2797 = vmul.f32 %v2777, %v2796
      %v2798 = vadd.f32 %v2797, 1.0
      %v2799 = vrcp.pop %v2798
      %v2800 = vmul.f32 %v2798, %v2799
      %v2801 = vsub.f32 1.0, %v2800
      %v2802 = vmul.f32 %v2799, %v2801
      %v2803 = vadd.f32 %v2799, %v2802
      %vm2804 = vweird.f32 %v2798
      %vm2805 = vweird.f32 %v2799
      %vm2806 = vmor %vm2804, %vm2805
      %v2807 = vsel %vm2806, %v2799, %v2803
      %v2808 = vand.u32 2147483647, %v2798
      %vm2809 = vcmp.eq.f32.partialorder %v2808, 8.507059e+37
      %v2810 = vand.u32 %v2798, 2147483648
      %v2811 = vor.u32 1.1754944e-38, %v2810
      %v2812 = vsel %vm2809, %v2811, %v2807
      %v2813 = vmul.f32 %v2788, %v2812
      %v2814 = vmin.f32 %v2813, 1.0
      %v2815 = vmax.f32 %v2814, -1.0
      %v2816 = vmul.f32 %v2440, %v2440
      %v2817 = vmin.f32 16.0, %v2816
      %v2818 = vmul.f32 %v2817, 2.1237322e-06
      %v2819 = vadd.f32 %v2818, 0.00028619796
      %v2820 = vmul.f32 %v2817, %v2819
      %v2821 = vadd.f32 %v2820, 0.0036580483
      %v2822 = vmul.f32 %v2817, %v2821
      %v2823 = vadd.f32 %v2822, 0.05243302
      %v2824 = vmul.f32 %v2817, %v2823
      %v2825 = vadd.f32 %v2824, 0.18741608
      %v2826 = vmul.f32 %v2817, %v2825
      %v2827 = vadd.f32 %v2826, 1.1283791
      %v2828 = vmul.f32 %v2440, %v2827
      %v2829 = vmul.f32 %v2817, 3.8918573e-05
      %v2830 = vadd.f32 %v2829, 0.001143296
      %v2831 = vmul.f32 %v2817, %v2830
      %v2832 = vadd.f32 %v2831, 0.014752088
      %v2833 = vmul.f32 %v2817, %v2832
      %v2834 = vadd.f32 %v2833, 0.112945676
      %v2835 = vmul.f32 %v2817, %v2834
      %v2836 = vadd.f32 %v2835, 0.4994258
      %v2837 = vmul.f32 %v2817, %v2836
      %v2838 = vadd.f32 %v2837, 1.0
      %v2839 = vrcp.pop %v2838
      %v2840 = vmul.f32 %v2838, %v2839
      %v2841 = vsub.f32 1.0, %v2840
      %v2842 = vmul.f32 %v2839, %v2841
      %v2843 = vadd.f32 %v2839, %v2842
      %vm2844 = vweird.f32 %v2838
      %vm2845 = vweird.f32 %v2839
      %vm2846 = vmor %vm2844, %vm2845
      %v2847 = vsel %vm2846, %v2839, %v2843
      %v2848 = vand.u32 2147483647, %v2838
      %vm2849 = vcmp.eq.f32.partialorder %v2848, 8.507059e+37
      %v2850 = vand.u32 %v2838, 2147483648
      %v2851 = vor.u32 1.1754944e-38, %v2850
      %v2852 = vsel %vm2849, %v2851, %v2847
      %v2853 = vmul.f32 %v2828, %v2852
      %v2854 = vmin.f32 %v2853, 1.0
      %v2855 = vmax.f32 %v2854, -1.0
      %v2856 = vmul.f32 %v2441, %v2441
      %v2857 = vmin.f32 16.0, %v2856
      %v2858 = vmul.f32 %v2857, 2.1237322e-06
      %v2859 = vadd.f32 %v2858, 0.00028619796
      %v2860 = vmul.f32 %v2857, %v2859
      %v2861 = vadd.f32 %v2860, 0.0036580483
      %v2862 = vmul.f32 %v2857, %v2861
      %v2863 = vadd.f32 %v2862, 0.05243302
      %v2864 = vmul.f32 %v2857, %v2863
      %v2865 = vadd.f32 %v2864, 0.18741608
      %v2866 = vmul.f32 %v2857, %v2865
      %v2867 = vadd.f32 %v2866, 1.1283791
      %v2868 = vmul.f32 %v2441, %v2867
      %v2869 = vmul.f32 %v2857, 3.8918573e-05
      %v2870 = vadd.f32 %v2869, 0.001143296
      %v2871 = vmul.f32 %v2857, %v2870
      %v2872 = vadd.f32 %v2871, 0.014752088
      %v2873 = vmul.f32 %v2857, %v2872
      %v2874 = vadd.f32 %v2873, 0.112945676
      %v2875 = vmul.f32 %v2857, %v2874
      %v2876 = vadd.f32 %v2875, 0.4994258
      %v2877 = vmul.f32 %v2857, %v2876
      %v2878 = vadd.f32 %v2877, 1.0
      %v2879 = vrcp.pop %v2878
      %v2880 = vmul.f32 %v2878, %v2879
      %v2881 = vsub.f32 1.0, %v2880
      %v2882 = vmul.f32 %v2879, %v2881
      %v2883 = vadd.f32 %v2879, %v2882
      %vm2884 = vweird.f32 %v2878
      %vm2885 = vweird.f32 %v2879
      %vm2886 = vmor %vm2884, %vm2885
      %v2887 = vsel %vm2886, %v2879, %v2883
      %v2888 = vand.u32 2147483647, %v2878
      %vm2889 = vcmp.eq.f32.partialorder %v2888, 8.507059e+37
      %v2890 = vand.u32 %v2878, 2147483648
      %v2891 = vor.u32 1.1754944e-38, %v2890
      %v2892 = vsel %vm2889, %v2891, %v2887
      %v2893 = vmul.f32 %v2868, %v2892
      %v2894 = vmin.f32 %v2893, 1.0
      %v2895 = vmax.f32 %v2894, -1.0
      %v2896 = vmul.f32 %v2442, %v2442
      %v2897 = vmin.f32 16.0, %v2896
      %v2898 = vmul.f32 %v2897, 2.1237322e-06
      %v2899 = vadd.f32 %v2898, 0.00028619796
      %v2900 = vmul.f32 %v2897, %v2899
      %v2901 = vadd.f32 %v2900, 0.0036580483
      %v2902 = vmul.f32 %v2897, %v2901
      %v2903 = vadd.f32 %v2902, 0.05243302
      %v2904 = vmul.f32 %v2897, %v2903
      %v2905 = vadd.f32 %v2904, 0.18741608
      %v2906 = vmul.f32 %v2897, %v2905
      %v2907 = vadd.f32 %v2906, 1.1283791
      %v2908 = vmul.f32 %v2442, %v2907
      %v2909 = vmul.f32 %v2897, 3.8918573e-05
      %v2910 = vadd.f32 %v2909, 0.001143296
      %v2911 = vmul.f32 %v2897, %v2910
      %v2912 = vadd.f32 %v2911, 0.014752088
      %v2913 = vmul.f32 %v2897, %v2912
      %v2914 = vadd.f32 %v2913, 0.112945676
      %v2915 = vmul.f32 %v2897, %v2914
      %v2916 = vadd.f32 %v2915, 0.4994258
      %v2917 = vmul.f32 %v2897, %v2916
      %v2918 = vadd.f32 %v2917, 1.0
      %v2919 = vrcp.pop %v2918
      %v2920 = vmul.f32 %v2918, %v2919
      %v2921 = vsub.f32 1.0, %v2920
      %v2922 = vmul.f32 %v2919, %v2921
      %v2923 = vadd.f32 %v2919, %v2922
      %vm2924 = vweird.f32 %v2918
      %vm2925 = vweird.f32 %v2919
      %vm2926 = vmor %vm2924, %vm2925
      %v2927 = vsel %vm2926, %v2919, %v2923
      %v2928 = vand.u32 2147483647, %v2918
      %vm2929 = vcmp.eq.f32.partialorder %v2928, 8.507059e+37
      %v2930 = vand.u32 %v2918, 2147483648
      %v2931 = vor.u32 1.1754944e-38, %v2930
      %v2932 = vsel %vm2929, %v2931, %v2927
      %v2933 = vmul.f32 %v2908, %v2932
      %v2934 = vmin.f32 %v2933, 1.0
      %v2935 = vmax.f32 %v2934, -1.0
      %v2936 = vmul.f32 %v2443, %v2443
      %v2937 = vmin.f32 16.0, %v2936
      %v2938 = vmul.f32 %v2937, 2.1237322e-06
      %v2939 = vadd.f32 %v2938, 0.00028619796
      %v2940 = vmul.f32 %v2937, %v2939
      %v2941 = vadd.f32 %v2940, 0.0036580483
      %v2942 = vmul.f32 %v2937, %v2941
      %v2943 = vadd.f32 %v2942, 0.05243302
      %v2944 = vmul.f32 %v2937, %v2943
      %v2945 = vadd.f32 %v2944, 0.18741608
      %v2946 = vmul.f32 %v2937, %v2945
      %v2947 = vadd.f32 %v2946, 1.1283791
      %v2948 = vmul.f32 %v2443, %v2947
      %v2949 = vmul.f32 %v2937, 3.8918573e-05
      %v2950 = vadd.f32 %v2949, 0.001143296
      %v2951 = vmul.f32 %v2937, %v2950
      %v2952 = vadd.f32 %v2951, 0.014752088
      %v2953 = vmul.f32 %v2937, %v2952
      %v2954 = vadd.f32 %v2953, 0.112945676
      %v2955 = vmul.f32 %v2937, %v2954
      %v2956 = vadd.f32 %v2955, 0.4994258
      %v2957 = vmul.f32 %v2937, %v2956
      %v2958 = vadd.f32 %v2957, 1.0
      %v2959 = vrcp.pop %v2958
      %v2960 = vmul.f32 %v2958, %v2959
      %v2961 = vsub.f32 1.0, %v2960
      %v2962 = vmul.f32 %v2959, %v2961
      %v2963 = vadd.f32 %v2959, %v2962
      %vm2964 = vweird.f32 %v2958
      %vm2965 = vweird.f32 %v2959
      %vm2966 = vmor %vm2964, %vm2965
      %v2967 = vsel %vm2966, %v2959, %v2963
      %v2968 = vand.u32 2147483647, %v2958
      %vm2969 = vcmp.eq.f32.partialorder %v2968, 8.507059e+37
      %v2970 = vand.u32 %v2958, 2147483648
      %v2971 = vor.u32 1.1754944e-38, %v2970
      %v2972 = vsel %vm2969, %v2971, %v2967
      %v2973 = vmul.f32 %v2948, %v2972
      %v2974 = vmin.f32 %v2973, 1.0
      %v2975 = vmax.f32 %v2974, -1.0
      %v2976 = vmul.f32 %v2444, %v2444
      %v2977 = vmin.f32 16.0, %v2976
      %v2978 = vmul.f32 %v2977, 2.1237322e-06
      %v2979 = vadd.f32 %v2978, 0.00028619796
      %v2980 = vmul.f32 %v2977, %v2979
      %v2981 = vadd.f32 %v2980, 0.0036580483
      %v2982 = vmul.f32 %v2977, %v2981
      %v2983 = vadd.f32 %v2982, 0.05243302
      %v2984 = vmul.f32 %v2977, %v2983
      %v2985 = vadd.f32 %v2984, 0.18741608
      %v2986 = vmul.f32 %v2977, %v2985
      %v2987 = vadd.f32 %v2986, 1.1283791
      %v2988 = vmul.f32 %v2444, %v2987
      %v2989 = vmul.f32 %v2977, 3.8918573e-05
      %v2990 = vadd.f32 %v2989, 0.001143296
      %v2991 = vmul.f32 %v2977, %v2990
      %v2992 = vadd.f32 %v2991, 0.014752088
      %v2993 = vmul.f32 %v2977, %v2992
      %v2994 = vadd.f32 %v2993, 0.112945676
      %v2995 = vmul.f32 %v2977, %v2994
      %v2996 = vadd.f32 %v2995, 0.4994258
      %v2997 = vmul.f32 %v2977, %v2996
      %v2998 = vadd.f32 %v2997, 1.0
      %v2999 = vrcp.pop %v2998
      %v3000 = vmul.f32 %v2998, %v2999
      %v3001 = vsub.f32 1.0, %v3000
      %v3002 = vmul.f32 %v2999, %v3001
      %v3003 = vadd.f32 %v2999, %v3002
      %vm3004 = vweird.f32 %v2998
      %vm3005 = vweird.f32 %v2999
      %vm3006 = vmor %vm3004, %vm3005
      %v3007 = vsel %vm3006, %v2999, %v3003
      %v3008 = vand.u32 2147483647, %v2998
      %vm3009 = vcmp.eq.f32.partialorder %v3008, 8.507059e+37
      %v3010 = vand.u32 %v2998, 2147483648
      %v3011 = vor.u32 1.1754944e-38, %v3010
      %v3012 = vsel %vm3009, %v3011, %v3007
      %v3013 = vmul.f32 %v2988, %v3012
      %v3014 = vmin.f32 %v3013, 1.0
      %v3015 = vmax.f32 %v3014, -1.0
      %v3016 = vmul.f32 %v2445, %v2445
      %v3017 = vmin.f32 16.0, %v3016
      %v3018 = vmul.f32 %v3017, 2.1237322e-06
      %v3019 = vadd.f32 %v3018, 0.00028619796
      %v3020 = vmul.f32 %v3017, %v3019
      %v3021 = vadd.f32 %v3020, 0.0036580483
      %v3022 = vmul.f32 %v3017, %v3021
      %v3023 = vadd.f32 %v3022, 0.05243302
      %v3024 = vmul.f32 %v3017, %v3023
      %v3025 = vadd.f32 %v3024, 0.18741608
      %v3026 = vmul.f32 %v3017, %v3025
      %v3027 = vadd.f32 %v3026, 1.1283791
      %v3028 = vmul.f32 %v2445, %v3027
      %v3029 = vmul.f32 %v3017, 3.8918573e-05
      %v3030 = vadd.f32 %v3029, 0.001143296
      %v3031 = vmul.f32 %v3017, %v3030
      %v3032 = vadd.f32 %v3031, 0.014752088
      %v3033 = vmul.f32 %v3017, %v3032
      %v3034 = vadd.f32 %v3033, 0.112945676
      %v3035 = vmul.f32 %v3017, %v3034
      %v3036 = vadd.f32 %v3035, 0.4994258
      %v3037 = vmul.f32 %v3017, %v3036
      %v3038 = vadd.f32 %v3037, 1.0
      %v3039 = vrcp.pop %v3038
      %v3040 = vmul.f32 %v3038, %v3039
      %v3041 = vsub.f32 1.0, %v3040
      %v3042 = vmul.f32 %v3039, %v3041
      %v3043 = vadd.f32 %v3039, %v3042
      %vm3044 = vweird.f32 %v3038
      %vm3045 = vweird.f32 %v3039
      %vm3046 = vmor %vm3044, %vm3045
      %v3047 = vsel %vm3046, %v3039, %v3043
      %v3048 = vand.u32 2147483647, %v3038
      %vm3049 = vcmp.eq.f32.partialorder %v3048, 8.507059e+37
      %v3050 = vand.u32 %v3038, 2147483648
      %v3051 = vor.u32 1.1754944e-38, %v3050
      %v3052 = vsel %vm3049, %v3051, %v3047
      %v3053 = vmul.f32 %v3028, %v3052
      %v3054 = vmin.f32 %v3053, 1.0
      %v3055 = vmax.f32 %v3054, -1.0
      %v3056 = vmul.f32 %v2446, %v2446
      %v3057 = vmin.f32 16.0, %v3056
      %v3058 = vmul.f32 %v3057, 2.1237322e-06
      %v3059 = vadd.f32 %v3058, 0.00028619796
      %v3060 = vmul.f32 %v3057, %v3059
      %v3061 = vadd.f32 %v3060, 0.0036580483
      %v3062 = vmul.f32 %v3057, %v3061
      %v3063 = vadd.f32 %v3062, 0.05243302
      %v3064 = vmul.f32 %v3057, %v3063
      %v3065 = vadd.f32 %v3064, 0.18741608
      %v3066 = vmul.f32 %v3057, %v3065
      %v3067 = vadd.f32 %v3066, 1.1283791
      %v3068 = vmul.f32 %v2446, %v3067
      %v3069 = vmul.f32 %v3057, 3.8918573e-05
      %v3070 = vadd.f32 %v3069, 0.001143296
      %v3071 = vmul.f32 %v3057, %v3070
      %v3072 = vadd.f32 %v3071, 0.014752088
      %v3073 = vmul.f32 %v3057, %v3072
      %v3074 = vadd.f32 %v3073, 0.112945676
      %v3075 = vmul.f32 %v3057, %v3074
      %v3076 = vadd.f32 %v3075, 0.4994258
      %v3077 = vmul.f32 %v3057, %v3076
      %v3078 = vadd.f32 %v3077, 1.0
      %v3079 = vrcp.pop %v3078
      %v3080 = vmul.f32 %v3078, %v3079
      %v3081 = vsub.f32 1.0, %v3080
      %v3082 = vmul.f32 %v3079, %v3081
      %v3083 = vadd.f32 %v3079, %v3082
      %vm3084 = vweird.f32 %v3078
      %vm3085 = vweird.f32 %v3079
      %vm3086 = vmor %vm3084, %vm3085
      %v3087 = vsel %vm3086, %v3079, %v3083
      %v3088 = vand.u32 2147483647, %v3078
      %vm3089 = vcmp.eq.f32.partialorder %v3088, 8.507059e+37
      %v3090 = vand.u32 %v3078, 2147483648
      %v3091 = vor.u32 1.1754944e-38, %v3090
      %v3092 = vsel %vm3089, %v3091, %v3087
      %v3093 = vmul.f32 %v3068, %v3092
      %v3094 = vmin.f32 %v3093, 1.0
      %v3095 = vmax.f32 %v3094, -1.0
      %v3096 = vmul.f32 %v2447, %v2447
      %v3097 = vmin.f32 16.0, %v3096
      %v3098 = vmul.f32 %v3097, 2.1237322e-06
      %v3099 = vadd.f32 %v3098, 0.00028619796
      %v3100 = vmul.f32 %v3097, %v3099
      %v3101 = vadd.f32 %v3100, 0.0036580483
      %v3102 = vmul.f32 %v3097, %v3101
      %v3103 = vadd.f32 %v3102, 0.05243302
      %v3104 = vmul.f32 %v3097, %v3103
      %v3105 = vadd.f32 %v3104, 0.18741608
      %v3106 = vmul.f32 %v3097, %v3105
      %v3107 = vadd.f32 %v3106, 1.1283791
      %v3108 = vmul.f32 %v2447, %v3107
      %v3109 = vmul.f32 %v3097, 3.8918573e-05
      %v3110 = vadd.f32 %v3109, 0.001143296
      %v3111 = vmul.f32 %v3097, %v3110
      %v3112 = vadd.f32 %v3111, 0.014752088
      %v3113 = vmul.f32 %v3097, %v3112
      %v3114 = vadd.f32 %v3113, 0.112945676
      %v3115 = vmul.f32 %v3097, %v3114
      %v3116 = vadd.f32 %v3115, 0.4994258
      %v3117 = vmul.f32 %v3097, %v3116
      %v3118 = vadd.f32 %v3117, 1.0
      %v3119 = vrcp.pop %v3118
      %v3120 = vmul.f32 %v3118, %v3119
      %v3121 = vsub.f32 1.0, %v3120
      %v3122 = vmul.f32 %v3119, %v3121
      %v3123 = vadd.f32 %v3119, %v3122
      %vm3124 = vweird.f32 %v3118
      %vm3125 = vweird.f32 %v3119
      %vm3126 = vmor %vm3124, %vm3125
      %v3127 = vsel %vm3126, %v3119, %v3123
      %v3128 = vand.u32 2147483647, %v3118
      %vm3129 = vcmp.eq.f32.partialorder %v3128, 8.507059e+37
      %v3130 = vand.u32 %v3118, 2147483648
      %v3131 = vor.u32 1.1754944e-38, %v3130
      %v3132 = vsel %vm3129, %v3131, %v3127
      %v3133 = vmul.f32 %v3108, %v3132
      %v3134 = vmin.f32 %v3133, 1.0
      %v3135 = vmax.f32 %v3134, -1.0
      %v3136 = vmul.f32 %v2448, %v2448
      %v3137 = vmin.f32 16.0, %v3136
      %v3138 = vmul.f32 %v3137, 2.1237322e-06
      %v3139 = vadd.f32 %v3138, 0.00028619796
      %v3140 = vmul.f32 %v3137, %v3139
      %v3141 = vadd.f32 %v3140, 0.0036580483
      %v3142 = vmul.f32 %v3137, %v3141
      %v3143 = vadd.f32 %v3142, 0.05243302
      %v3144 = vmul.f32 %v3137, %v3143
      %v3145 = vadd.f32 %v3144, 0.18741608
      %v3146 = vmul.f32 %v3137, %v3145
      %v3147 = vadd.f32 %v3146, 1.1283791
      %v3148 = vmul.f32 %v2448, %v3147
      %v3149 = vmul.f32 %v3137, 3.8918573e-05
      %v3150 = vadd.f32 %v3149, 0.001143296
      %v3151 = vmul.f32 %v3137, %v3150
      %v3152 = vadd.f32 %v3151, 0.014752088
      %v3153 = vmul.f32 %v3137, %v3152
      %v3154 = vadd.f32 %v3153, 0.112945676
      %v3155 = vmul.f32 %v3137, %v3154
      %v3156 = vadd.f32 %v3155, 0.4994258
      %v3157 = vmul.f32 %v3137, %v3156
      %v3158 = vadd.f32 %v3157, 1.0
      %v3159 = vrcp.pop %v3158
      %v3160 = vmul.f32 %v3158, %v3159
      %v3161 = vsub.f32 1.0, %v3160
      %v3162 = vmul.f32 %v3159, %v3161
      %v3163 = vadd.f32 %v3159, %v3162
      %vm3164 = vweird.f32 %v3158
      %vm3165 = vweird.f32 %v3159
      %vm3166 = vmor %vm3164, %vm3165
      %v3167 = vsel %vm3166, %v3159, %v3163
      %v3168 = vand.u32 2147483647, %v3158
      %vm3169 = vcmp.eq.f32.partialorder %v3168, 8.507059e+37
      %v3170 = vand.u32 %v3158, 2147483648
      %v3171 = vor.u32 1.1754944e-38, %v3170
      %v3172 = vsel %vm3169, %v3171, %v3167
      %v3173 = vmul.f32 %v3148, %v3172
      %v3174 = vmin.f32 %v3173, 1.0
      %v3175 = vmax.f32 %v3174, -1.0
      %v3176 = vmul.f32 %v2449, %v2449
      %v3177 = vmin.f32 16.0, %v3176
      %v3178 = vmul.f32 %v3177, 2.1237322e-06
      %v3179 = vadd.f32 %v3178, 0.00028619796
      %v3180 = vmul.f32 %v3177, %v3179
      %v3181 = vadd.f32 %v3180, 0.0036580483
      %v3182 = vmul.f32 %v3177, %v3181
      %v3183 = vadd.f32 %v3182, 0.05243302
      %v3184 = vmul.f32 %v3177, %v3183
      %v3185 = vadd.f32 %v3184, 0.18741608
      %v3186 = vmul.f32 %v3177, %v3185
      %v3187 = vadd.f32 %v3186, 1.1283791
      %v3188 = vmul.f32 %v2449, %v3187
      %v3189 = vmul.f32 %v3177, 3.8918573e-05
      %v3190 = vadd.f32 %v3189, 0.001143296
      %v3191 = vmul.f32 %v3177, %v3190
      %v3192 = vadd.f32 %v3191, 0.014752088
      %v3193 = vmul.f32 %v3177, %v3192
      %v3194 = vadd.f32 %v3193, 0.112945676
      %v3195 = vmul.f32 %v3177, %v3194
      %v3196 = vadd.f32 %v3195, 0.4994258
      %v3197 = vmul.f32 %v3177, %v3196
      %v3198 = vadd.f32 %v3197, 1.0
      %v3199 = vrcp.pop %v3198
      %v3200 = vmul.f32 %v3198, %v3199
      %v3201 = vsub.f32 1.0, %v3200
      %v3202 = vmul.f32 %v3199, %v3201
      %v3203 = vadd.f32 %v3199, %v3202
      %vm3204 = vweird.f32 %v3198
      %vm3205 = vweird.f32 %v3199
      %vm3206 = vmor %vm3204, %vm3205
      %v3207 = vsel %vm3206, %v3199, %v3203
      %v3208 = vand.u32 2147483647, %v3198
      %vm3209 = vcmp.eq.f32.partialorder %v3208, 8.507059e+37
      %v3210 = vand.u32 %v3198, 2147483648
      %v3211 = vor.u32 1.1754944e-38, %v3210
      %v3212 = vsel %vm3209, %v3211, %v3207
      %v3213 = vmul.f32 %v3188, %v3212
      %v3214 = vmin.f32 %v3213, 1.0
      %v3215 = vmax.f32 %v3214, -1.0
      %v3216 = vmul.f32 %v2450, %v2450
      %v3217 = vmin.f32 16.0, %v3216
      %v3218 = vmul.f32 %v3217, 2.1237322e-06
      %v3219 = vadd.f32 %v3218, 0.00028619796
      %v3220 = vmul.f32 %v3217, %v3219
      %v3221 = vadd.f32 %v3220, 0.0036580483
      %v3222 = vmul.f32 %v3217, %v3221
      %v3223 = vadd.f32 %v3222, 0.05243302
      %v3224 = vmul.f32 %v3217, %v3223
      %v3225 = vadd.f32 %v3224, 0.18741608
      %v3226 = vmul.f32 %v3217, %v3225
      %v3227 = vadd.f32 %v3226, 1.1283791
      %v3228 = vmul.f32 %v2450, %v3227
      %v3229 = vmul.f32 %v3217, 3.8918573e-05
      %v3230 = vadd.f32 %v3229, 0.001143296
      %v3231 = vmul.f32 %v3217, %v3230
      %v3232 = vadd.f32 %v3231, 0.014752088
      %v3233 = vmul.f32 %v3217, %v3232
      %v3234 = vadd.f32 %v3233, 0.112945676
      %v3235 = vmul.f32 %v3217, %v3234
      %v3236 = vadd.f32 %v3235, 0.4994258
      %v3237 = vmul.f32 %v3217, %v3236
      %v3238 = vadd.f32 %v3237, 1.0
      %v3239 = vrcp.pop %v3238
      %v3240 = vmul.f32 %v3238, %v3239
      %v3241 = vsub.f32 1.0, %v3240
      %v3242 = vmul.f32 %v3239, %v3241
      %v3243 = vadd.f32 %v3239, %v3242
      %vm3244 = vweird.f32 %v3238
      %vm3245 = vweird.f32 %v3239
      %vm3246 = vmor %vm3244, %vm3245
      %v3247 = vsel %vm3246, %v3239, %v3243
      %v3248 = vand.u32 2147483647, %v3238
      %vm3249 = vcmp.eq.f32.partialorder %v3248, 8.507059e+37
      %v3250 = vand.u32 %v3238, 2147483648
      %v3251 = vor.u32 1.1754944e-38, %v3250
      %v3252 = vsel %vm3249, %v3251, %v3247
      %v3253 = vmul.f32 %v3228, %v3252
      %v3254 = vmin.f32 %v3253, 1.0
      %v3255 = vmax.f32 %v3254, -1.0
      %v3256 = vmul.f32 %v2451, %v2451
      %v3257 = vmin.f32 16.0, %v3256
      %v3258 = vmul.f32 %v3257, 2.1237322e-06
      %v3259 = vadd.f32 %v3258, 0.00028619796
      %v3260 = vmul.f32 %v3257, %v3259
      %v3261 = vadd.f32 %v3260, 0.0036580483
      %v3262 = vmul.f32 %v3257, %v3261
      %v3263 = vadd.f32 %v3262, 0.05243302
      %v3264 = vmul.f32 %v3257, %v3263
      %v3265 = vadd.f32 %v3264, 0.18741608
      %v3266 = vmul.f32 %v3257, %v3265
      %v3267 = vadd.f32 %v3266, 1.1283791
      %v3268 = vmul.f32 %v2451, %v3267
      %v3269 = vmul.f32 %v3257, 3.8918573e-05
      %v3270 = vadd.f32 %v3269, 0.001143296
      %v3271 = vmul.f32 %v3257, %v3270
      %v3272 = vadd.f32 %v3271, 0.014752088
      %v3273 = vmul.f32 %v3257, %v3272
      %v3274 = vadd.f32 %v3273, 0.112945676
      %v3275 = vmul.f32 %v3257, %v3274
      %v3276 = vadd.f32 %v3275, 0.4994258
      %v3277 = vmul.f32 %v3257, %v3276
      %v3278 = vadd.f32 %v3277, 1.0
      %v3279 = vrcp.pop %v3278
      %v3280 = vmul.f32 %v3278, %v3279
      %v3281 = vsub.f32 1.0, %v3280
      %v3282 = vmul.f32 %v3279, %v3281
      %v3283 = vadd.f32 %v3279, %v3282
      %vm3284 = vweird.f32 %v3278
      %vm3285 = vweird.f32 %v3279
      %vm3286 = vmor %vm3284, %vm3285
      %v3287 = vsel %vm3286, %v3279, %v3283
      %v3288 = vand.u32 2147483647, %v3278
      %vm3289 = vcmp.eq.f32.partialorder %v3288, 8.507059e+37
      %v3290 = vand.u32 %v3278, 2147483648
      %v3291 = vor.u32 1.1754944e-38, %v3290
      %v3292 = vsel %vm3289, %v3291, %v3287
      %v3293 = vmul.f32 %v3268, %v3292
      %v3294 = vmin.f32 %v3293, 1.0
      %v3295 = vmax.f32 %v3294, -1.0
      %v3296 = vmul.f32 %v2452, %v2452
      %v3297 = vmin.f32 16.0, %v3296
      %v3298 = vmul.f32 %v3297, 2.1237322e-06
      %v3299 = vadd.f32 %v3298, 0.00028619796
      %v3300 = vmul.f32 %v3297, %v3299
      %v3301 = vadd.f32 %v3300, 0.0036580483
      %v3302 = vmul.f32 %v3297, %v3301
      %v3303 = vadd.f32 %v3302, 0.05243302
      %v3304 = vmul.f32 %v3297, %v3303
      %v3305 = vadd.f32 %v3304, 0.18741608
      %v3306 = vmul.f32 %v3297, %v3305
      %v3307 = vadd.f32 %v3306, 1.1283791
      %v3308 = vmul.f32 %v2452, %v3307
      %v3309 = vmul.f32 %v3297, 3.8918573e-05
      %v3310 = vadd.f32 %v3309, 0.001143296
      %v3311 = vmul.f32 %v3297, %v3310
      %v3312 = vadd.f32 %v3311, 0.014752088
      %v3313 = vmul.f32 %v3297, %v3312
      %v3314 = vadd.f32 %v3313, 0.112945676
      %v3315 = vmul.f32 %v3297, %v3314
      %v3316 = vadd.f32 %v3315, 0.4994258
      %v3317 = vmul.f32 %v3297, %v3316
      %v3318 = vadd.f32 %v3317, 1.0
      %v3319 = vrcp.pop %v3318
      %v3320 = vmul.f32 %v3318, %v3319
      %v3321 = vsub.f32 1.0, %v3320
      %v3322 = vmul.f32 %v3319, %v3321
      %v3323 = vadd.f32 %v3319, %v3322
      %vm3324 = vweird.f32 %v3318
      %vm3325 = vweird.f32 %v3319
      %vm3326 = vmor %vm3324, %vm3325
      %v3327 = vsel %vm3326, %v3319, %v3323
      %v3328 = vand.u32 2147483647, %v3318
      %vm3329 = vcmp.eq.f32.partialorder %v3328, 8.507059e+37
      %v3330 = vand.u32 %v3318, 2147483648
      %v3331 = vor.u32 1.1754944e-38, %v3330
      %v3332 = vsel %vm3329, %v3331, %v3327
      %v3333 = vmul.f32 %v3308, %v3332
      %v3334 = vmin.f32 %v3333, 1.0
      %v3335 = vmax.f32 %v3334, -1.0
      %v3336 = vmul.f32 %v2453, %v2453
      %v3337 = vmin.f32 16.0, %v3336
      %v3338 = vmul.f32 %v3337, 2.1237322e-06
      %v3339 = vadd.f32 %v3338, 0.00028619796
      %v3340 = vmul.f32 %v3337, %v3339
      %v3341 = vadd.f32 %v3340, 0.0036580483
      %v3342 = vmul.f32 %v3337, %v3341
      %v3343 = vadd.f32 %v3342, 0.05243302
      %v3344 = vmul.f32 %v3337, %v3343
      %v3345 = vadd.f32 %v3344, 0.18741608
      %v3346 = vmul.f32 %v3337, %v3345
      %v3347 = vadd.f32 %v3346, 1.1283791
      %v3348 = vmul.f32 %v2453, %v3347
      %v3349 = vmul.f32 %v3337, 3.8918573e-05
      %v3350 = vadd.f32 %v3349, 0.001143296
      %v3351 = vmul.f32 %v3337, %v3350
      %v3352 = vadd.f32 %v3351, 0.014752088
      %v3353 = vmul.f32 %v3337, %v3352
      %v3354 = vadd.f32 %v3353, 0.112945676
      %v3355 = vmul.f32 %v3337, %v3354
      %v3356 = vadd.f32 %v3355, 0.4994258
      %v3357 = vmul.f32 %v3337, %v3356
      %v3358 = vadd.f32 %v3357, 1.0
      %v3359 = vrcp.pop %v3358
      %v3360 = vmul.f32 %v3358, %v3359
      %v3361 = vsub.f32 1.0, %v3360
      %v3362 = vmul.f32 %v3359, %v3361
      %v3363 = vadd.f32 %v3359, %v3362
      %vm3364 = vweird.f32 %v3358
      %vm3365 = vweird.f32 %v3359
      %vm3366 = vmor %vm3364, %vm3365
      %v3367 = vsel %vm3366, %v3359, %v3363
      %v3368 = vand.u32 2147483647, %v3358
      %vm3369 = vcmp.eq.f32.partialorder %v3368, 8.507059e+37
      %v3370 = vand.u32 %v3358, 2147483648
      %v3371 = vor.u32 1.1754944e-38, %v3370
      %v3372 = vsel %vm3369, %v3371, %v3367
      %v3373 = vmul.f32 %v3348, %v3372
      %v3374 = vmin.f32 %v3373, 1.0
      %v3375 = vmax.f32 %v3374, -1.0
      %v3376 = vmul.f32 %v2454, %v2454
      %v3377 = vmin.f32 16.0, %v3376
      %v3378 = vmul.f32 %v3377, 2.1237322e-06
      %v3379 = vadd.f32 %v3378, 0.00028619796
      %v3380 = vmul.f32 %v3377, %v3379
      %v3381 = vadd.f32 %v3380, 0.0036580483
      %v3382 = vmul.f32 %v3377, %v3381
      %v3383 = vadd.f32 %v3382, 0.05243302
      %v3384 = vmul.f32 %v3377, %v3383
      %v3385 = vadd.f32 %v3384, 0.18741608
      %v3386 = vmul.f32 %v3377, %v3385
      %v3387 = vadd.f32 %v3386, 1.1283791
      %v3388 = vmul.f32 %v2454, %v3387
      %v3389 = vmul.f32 %v3377, 3.8918573e-05
      %v3390 = vadd.f32 %v3389, 0.001143296
      %v3391 = vmul.f32 %v3377, %v3390
      %v3392 = vadd.f32 %v3391, 0.014752088
      %v3393 = vmul.f32 %v3377, %v3392
      %v3394 = vadd.f32 %v3393, 0.112945676
      %v3395 = vmul.f32 %v3377, %v3394
      %v3396 = vadd.f32 %v3395, 0.4994258
      %v3397 = vmul.f32 %v3377, %v3396
      %v3398 = vadd.f32 %v3397, 1.0
      %v3399 = vrcp.pop %v3398
      %v3400 = vmul.f32 %v3398, %v3399
      %v3401 = vsub.f32 1.0, %v3400
      %v3402 = vmul.f32 %v3399, %v3401
      %v3403 = vadd.f32 %v3399, %v3402
      %vm3404 = vweird.f32 %v3398
      %vm3405 = vweird.f32 %v3399
      %vm3406 = vmor %vm3404, %vm3405
      %v3407 = vsel %vm3406, %v3399, %v3403
      %v3408 = vand.u32 2147483647, %v3398
      %vm3409 = vcmp.eq.f32.partialorder %v3408, 8.507059e+37
      %v3410 = vand.u32 %v3398, 2147483648
      %v3411 = vor.u32 1.1754944e-38, %v3410
      %v3412 = vsel %vm3409, %v3411, %v3407
      %v3413 = vmul.f32 %v3388, %v3412
      %v3414 = vmin.f32 %v3413, 1.0
      %v3415 = vmax.f32 %v3414, -1.0
      %v3416 = vmul.f32 %v2455, %v2455
      %v3417 = vmin.f32 16.0, %v3416
      %v3418 = vmul.f32 %v3417, 2.1237322e-06
      %v3419 = vadd.f32 %v3418, 0.00028619796
      %v3420 = vmul.f32 %v3417, %v3419
      %v3421 = vadd.f32 %v3420, 0.0036580483
      %v3422 = vmul.f32 %v3417, %v3421
      %v3423 = vadd.f32 %v3422, 0.05243302
      %v3424 = vmul.f32 %v3417, %v3423
      %v3425 = vadd.f32 %v3424, 0.18741608
      %v3426 = vmul.f32 %v3417, %v3425
      %v3427 = vadd.f32 %v3426, 1.1283791
      %v3428 = vmul.f32 %v2455, %v3427
      %v3429 = vmul.f32 %v3417, 3.8918573e-05
      %v3430 = vadd.f32 %v3429, 0.001143296
      %v3431 = vmul.f32 %v3417, %v3430
      %v3432 = vadd.f32 %v3431, 0.014752088
      %v3433 = vmul.f32 %v3417, %v3432
      %v3434 = vadd.f32 %v3433, 0.112945676
      %v3435 = vmul.f32 %v3417, %v3434
      %v3436 = vadd.f32 %v3435, 0.4994258
      %v3437 = vmul.f32 %v3417, %v3436
      %v3438 = vadd.f32 %v3437, 1.0
      %v3439 = vrcp.pop %v3438
      %v3440 = vmul.f32 %v3438, %v3439
      %v3441 = vsub.f32 1.0, %v3440
      %v3442 = vmul.f32 %v3439, %v3441
      %v3443 = vadd.f32 %v3439, %v3442
      %vm3444 = vweird.f32 %v3438
      %vm3445 = vweird.f32 %v3439
      %vm3446 = vmor %vm3444, %vm3445
      %v3447 = vsel %vm3446, %v3439, %v3443
      %v3448 = vand.u32 2147483647, %v3438
      %vm3449 = vcmp.eq.f32.partialorder %v3448, 8.507059e+37
      %v3450 = vand.u32 %v3438, 2147483648
      %v3451 = vor.u32 1.1754944e-38, %v3450
      %v3452 = vsel %vm3449, %v3451, %v3447
      %v3453 = vmul.f32 %v3428, %v3452
      %v3454 = vmin.f32 %v3453, 1.0
      %v3455 = vmax.f32 %v3454, -1.0
      %v3456 = vmul.f32 %v2456, %v2456
      %v3457 = vmin.f32 16.0, %v3456
      %v3458 = vmul.f32 %v3457, 2.1237322e-06
      %v3459 = vadd.f32 %v3458, 0.00028619796
      %v3460 = vmul.f32 %v3457, %v3459
      %v3461 = vadd.f32 %v3460, 0.0036580483
      %v3462 = vmul.f32 %v3457, %v3461
      %v3463 = vadd.f32 %v3462, 0.05243302
      %v3464 = vmul.f32 %v3457, %v3463
      %v3465 = vadd.f32 %v3464, 0.18741608
      %v3466 = vmul.f32 %v3457, %v3465
      %v3467 = vadd.f32 %v3466, 1.1283791
      %v3468 = vmul.f32 %v2456, %v3467
      %v3469 = vmul.f32 %v3457, 3.8918573e-05
      %v3470 = vadd.f32 %v3469, 0.001143296
      %v3471 = vmul.f32 %v3457, %v3470
      %v3472 = vadd.f32 %v3471, 0.014752088
      %v3473 = vmul.f32 %v3457, %v3472
      %v3474 = vadd.f32 %v3473, 0.112945676
      %v3475 = vmul.f32 %v3457, %v3474
      %v3476 = vadd.f32 %v3475, 0.4994258
      %v3477 = vmul.f32 %v3457, %v3476
      %v3478 = vadd.f32 %v3477, 1.0
      %v3479 = vrcp.pop %v3478
      %v3480 = vmul.f32 %v3478, %v3479
      %v3481 = vsub.f32 1.0, %v3480
      %v3482 = vmul.f32 %v3479, %v3481
      %v3483 = vadd.f32 %v3479, %v3482
      %vm3484 = vweird.f32 %v3478
      %vm3485 = vweird.f32 %v3479
      %vm3486 = vmor %vm3484, %vm3485
      %v3487 = vsel %vm3486, %v3479, %v3483
      %v3488 = vand.u32 2147483647, %v3478
      %vm3489 = vcmp.eq.f32.partialorder %v3488, 8.507059e+37
      %v3490 = vand.u32 %v3478, 2147483648
      %v3491 = vor.u32 1.1754944e-38, %v3490
      %v3492 = vsel %vm3489, %v3491, %v3487
      %v3493 = vmul.f32 %v3468, %v3492
      %v3494 = vmin.f32 %v3493, 1.0
      %v3495 = vmax.f32 %v3494, -1.0
      %v3496 = vmul.f32 %v2457, %v2457
      %v3497 = vmin.f32 16.0, %v3496
      %v3498 = vmul.f32 %v3497, 2.1237322e-06
      %v3499 = vadd.f32 %v3498, 0.00028619796
      %v3500 = vmul.f32 %v3497, %v3499
      %v3501 = vadd.f32 %v3500, 0.0036580483
      %v3502 = vmul.f32 %v3497, %v3501
      %v3503 = vadd.f32 %v3502, 0.05243302
      %v3504 = vmul.f32 %v3497, %v3503
      %v3505 = vadd.f32 %v3504, 0.18741608
      %v3506 = vmul.f32 %v3497, %v3505
      %v3507 = vadd.f32 %v3506, 1.1283791
      %v3508 = vmul.f32 %v2457, %v3507
      %v3509 = vmul.f32 %v3497, 3.8918573e-05
      %v3510 = vadd.f32 %v3509, 0.001143296
      %v3511 = vmul.f32 %v3497, %v3510
      %v3512 = vadd.f32 %v3511, 0.014752088
      %v3513 = vmul.f32 %v3497, %v3512
      %v3514 = vadd.f32 %v3513, 0.112945676
      %v3515 = vmul.f32 %v3497, %v3514
      %v3516 = vadd.f32 %v3515, 0.4994258
      %v3517 = vmul.f32 %v3497, %v3516
      %v3518 = vadd.f32 %v3517, 1.0
      %v3519 = vrcp.pop %v3518
      %v3520 = vmul.f32 %v3518, %v3519
      %v3521 = vsub.f32 1.0, %v3520
      %v3522 = vmul.f32 %v3519, %v3521
      %v3523 = vadd.f32 %v3519, %v3522
      %vm3524 = vweird.f32 %v3518
      %vm3525 = vweird.f32 %v3519
      %vm3526 = vmor %vm3524, %vm3525
      %v3527 = vsel %vm3526, %v3519, %v3523
      %v3528 = vand.u32 2147483647, %v3518
      %vm3529 = vcmp.eq.f32.partialorder %v3528, 8.507059e+37
      %v3530 = vand.u32 %v3518, 2147483648
      %v3531 = vor.u32 1.1754944e-38, %v3530
      %v3532 = vsel %vm3529, %v3531, %v3527
      %v3533 = vmul.f32 %v3508, %v3532
      %v3534 = vmin.f32 %v3533, 1.0
      %v3535 = vmax.f32 %v3534, -1.0
      %v3536 = vmul.f32 %v2458, %v2458
      %v3537 = vmin.f32 16.0, %v3536
      %v3538 = vmul.f32 %v3537, 2.1237322e-06
      %v3539 = vadd.f32 %v3538, 0.00028619796
      %v3540 = vmul.f32 %v3537, %v3539
      %v3541 = vadd.f32 %v3540, 0.0036580483
      %v3542 = vmul.f32 %v3537, %v3541
      %v3543 = vadd.f32 %v3542, 0.05243302
      %v3544 = vmul.f32 %v3537, %v3543
      %v3545 = vadd.f32 %v3544, 0.18741608
      %v3546 = vmul.f32 %v3537, %v3545
      %v3547 = vadd.f32 %v3546, 1.1283791
      %v3548 = vmul.f32 %v2458, %v3547
      %v3549 = vmul.f32 %v3537, 3.8918573e-05
      %v3550 = vadd.f32 %v3549, 0.001143296
      %v3551 = vmul.f32 %v3537, %v3550
      %v3552 = vadd.f32 %v3551, 0.014752088
      %v3553 = vmul.f32 %v3537, %v3552
      %v3554 = vadd.f32 %v3553, 0.112945676
      %v3555 = vmul.f32 %v3537, %v3554
      %v3556 = vadd.f32 %v3555, 0.4994258
      %v3557 = vmul.f32 %v3537, %v3556
      %v3558 = vadd.f32 %v3557, 1.0
      %v3559 = vrcp.pop %v3558
      %v3560 = vmul.f32 %v3558, %v3559
      %v3561 = vsub.f32 1.0, %v3560
      %v3562 = vmul.f32 %v3559, %v3561
      %v3563 = vadd.f32 %v3559, %v3562
      %vm3564 = vweird.f32 %v3558
      %vm3565 = vweird.f32 %v3559
      %vm3566 = vmor %vm3564, %vm3565
      %v3567 = vsel %vm3566, %v3559, %v3563
      %v3568 = vand.u32 2147483647, %v3558
      %vm3569 = vcmp.eq.f32.partialorder %v3568, 8.507059e+37
      %v3570 = vand.u32 %v3558, 2147483648
      %v3571 = vor.u32 1.1754944e-38, %v3570
      %v3572 = vsel %vm3569, %v3571, %v3567
      %v3573 = vmul.f32 %v3548, %v3572
      %v3574 = vmin.f32 %v3573, 1.0
      %v3575 = vmax.f32 %v3574, -1.0
      %v3576 = vmul.f32 %v2459, %v2459
      %v3577 = vmin.f32 16.0, %v3576
      %v3578 = vmul.f32 %v3577, 2.1237322e-06
      %v3579 = vadd.f32 %v3578, 0.00028619796
      %v3580 = vmul.f32 %v3577, %v3579
      %v3581 = vadd.f32 %v3580, 0.0036580483
      %v3582 = vmul.f32 %v3577, %v3581
      %v3583 = vadd.f32 %v3582, 0.05243302
      %v3584 = vmul.f32 %v3577, %v3583
      %v3585 = vadd.f32 %v3584, 0.18741608
      %v3586 = vmul.f32 %v3577, %v3585
      %v3587 = vadd.f32 %v3586, 1.1283791
      %v3588 = vmul.f32 %v2459, %v3587
      %v3589 = vmul.f32 %v3577, 3.8918573e-05
      %v3590 = vadd.f32 %v3589, 0.001143296
      %v3591 = vmul.f32 %v3577, %v3590
      %v3592 = vadd.f32 %v3591, 0.014752088
      %v3593 = vmul.f32 %v3577, %v3592
      %v3594 = vadd.f32 %v3593, 0.112945676
      %v3595 = vmul.f32 %v3577, %v3594
      %v3596 = vadd.f32 %v3595, 0.4994258
      %v3597 = vmul.f32 %v3577, %v3596
      %v3598 = vadd.f32 %v3597, 1.0
      %v3599 = vrcp.pop %v3598
      %v3600 = vmul.f32 %v3598, %v3599
      %v3601 = vsub.f32 1.0, %v3600
      %v3602 = vmul.f32 %v3599, %v3601
      %v3603 = vadd.f32 %v3599, %v3602
      %vm3604 = vweird.f32 %v3598
      %vm3605 = vweird.f32 %v3599
      %vm3606 = vmor %vm3604, %vm3605
      %v3607 = vsel %vm3606, %v3599, %v3603
      %v3608 = vand.u32 2147483647, %v3598
      %vm3609 = vcmp.eq.f32.partialorder %v3608, 8.507059e+37
      %v3610 = vand.u32 %v3598, 2147483648
      %v3611 = vor.u32 1.1754944e-38, %v3610
      %v3612 = vsel %vm3609, %v3611, %v3607
      %v3613 = vmul.f32 %v3588, %v3612
      %v3614 = vmin.f32 %v3613, 1.0
      %v3615 = vmax.f32 %v3614, -1.0
      %v3616 = vmul.f32 %v2460, %v2460
      %v3617 = vmin.f32 16.0, %v3616
      %v3618 = vmul.f32 %v3617, 2.1237322e-06
      %v3619 = vadd.f32 %v3618, 0.00028619796
      %v3620 = vmul.f32 %v3617, %v3619
      %v3621 = vadd.f32 %v3620, 0.0036580483
      %v3622 = vmul.f32 %v3617, %v3621
      %v3623 = vadd.f32 %v3622, 0.05243302
      %v3624 = vmul.f32 %v3617, %v3623
      %v3625 = vadd.f32 %v3624, 0.18741608
      %v3626 = vmul.f32 %v3617, %v3625
      %v3627 = vadd.f32 %v3626, 1.1283791
      %v3628 = vmul.f32 %v2460, %v3627
      %v3629 = vmul.f32 %v3617, 3.8918573e-05
      %v3630 = vadd.f32 %v3629, 0.001143296
      %v3631 = vmul.f32 %v3617, %v3630
      %v3632 = vadd.f32 %v3631, 0.014752088
      %v3633 = vmul.f32 %v3617, %v3632
      %v3634 = vadd.f32 %v3633, 0.112945676
      %v3635 = vmul.f32 %v3617, %v3634
      %v3636 = vadd.f32 %v3635, 0.4994258
      %v3637 = vmul.f32 %v3617, %v3636
      %v3638 = vadd.f32 %v3637, 1.0
      %v3639 = vrcp.pop %v3638
      %v3640 = vmul.f32 %v3638, %v3639
      %v3641 = vsub.f32 1.0, %v3640
      %v3642 = vmul.f32 %v3639, %v3641
      %v3643 = vadd.f32 %v3639, %v3642
      %vm3644 = vweird.f32 %v3638
      %vm3645 = vweird.f32 %v3639
      %vm3646 = vmor %vm3644, %vm3645
      %v3647 = vsel %vm3646, %v3639, %v3643
      %v3648 = vand.u32 2147483647, %v3638
      %vm3649 = vcmp.eq.f32.partialorder %v3648, 8.507059e+37
      %v3650 = vand.u32 %v3638, 2147483648
      %v3651 = vor.u32 1.1754944e-38, %v3650
      %v3652 = vsel %vm3649, %v3651, %v3647
      %v3653 = vmul.f32 %v3628, %v3652
      %v3654 = vmin.f32 %v3653, 1.0
      %v3655 = vmax.f32 %v3654, -1.0
      %v3656 = vmul.f32 %v2461, %v2461
      %v3657 = vmin.f32 16.0, %v3656
      %v3658 = vmul.f32 %v3657, 2.1237322e-06
      %v3659 = vadd.f32 %v3658, 0.00028619796
      %v3660 = vmul.f32 %v3657, %v3659
      %v3661 = vadd.f32 %v3660, 0.0036580483
      %v3662 = vmul.f32 %v3657, %v3661
      %v3663 = vadd.f32 %v3662, 0.05243302
      %v3664 = vmul.f32 %v3657, %v3663
      %v3665 = vadd.f32 %v3664, 0.18741608
      %v3666 = vmul.f32 %v3657, %v3665
      %v3667 = vadd.f32 %v3666, 1.1283791
      %v3668 = vmul.f32 %v2461, %v3667
      %v3669 = vmul.f32 %v3657, 3.8918573e-05
      %v3670 = vadd.f32 %v3669, 0.001143296
      %v3671 = vmul.f32 %v3657, %v3670
      %v3672 = vadd.f32 %v3671, 0.014752088
      %v3673 = vmul.f32 %v3657, %v3672
      %v3674 = vadd.f32 %v3673, 0.112945676
      %v3675 = vmul.f32 %v3657, %v3674
      %v3676 = vadd.f32 %v3675, 0.4994258
      %v3677 = vmul.f32 %v3657, %v3676
      %v3678 = vadd.f32 %v3677, 1.0
      %v3679 = vrcp.pop %v3678
      %v3680 = vmul.f32 %v3678, %v3679
      %v3681 = vsub.f32 1.0, %v3680
      %v3682 = vmul.f32 %v3679, %v3681
      %v3683 = vadd.f32 %v3679, %v3682
      %vm3684 = vweird.f32 %v3678
      %vm3685 = vweird.f32 %v3679
      %vm3686 = vmor %vm3684, %vm3685
      %v3687 = vsel %vm3686, %v3679, %v3683
      %v3688 = vand.u32 2147483647, %v3678
      %vm3689 = vcmp.eq.f32.partialorder %v3688, 8.507059e+37
      %v3690 = vand.u32 %v3678, 2147483648
      %v3691 = vor.u32 1.1754944e-38, %v3690
      %v3692 = vsel %vm3689, %v3691, %v3687
      %v3693 = vmul.f32 %v3668, %v3692
      %v3694 = vmin.f32 %v3693, 1.0
      %v3695 = vmax.f32 %v3694, -1.0
      %v3696 = vmul.f32 %v2462, %v2462
      %v3697 = vmin.f32 16.0, %v3696
      %v3698 = vmul.f32 %v3697, 2.1237322e-06
      %v3699 = vadd.f32 %v3698, 0.00028619796
      %v3700 = vmul.f32 %v3697, %v3699
      %v3701 = vadd.f32 %v3700, 0.0036580483
      %v3702 = vmul.f32 %v3697, %v3701
      %v3703 = vadd.f32 %v3702, 0.05243302
      %v3704 = vmul.f32 %v3697, %v3703
      %v3705 = vadd.f32 %v3704, 0.18741608
      %v3706 = vmul.f32 %v3697, %v3705
      %v3707 = vadd.f32 %v3706, 1.1283791
      %v3708 = vmul.f32 %v2462, %v3707
      %v3709 = vmul.f32 %v3697, 3.8918573e-05
      %v3710 = vadd.f32 %v3709, 0.001143296
      %v3711 = vmul.f32 %v3697, %v3710
      %v3712 = vadd.f32 %v3711, 0.014752088
      %v3713 = vmul.f32 %v3697, %v3712
      %v3714 = vadd.f32 %v3713, 0.112945676
      %v3715 = vmul.f32 %v3697, %v3714
      %v3716 = vadd.f32 %v3715, 0.4994258
      %v3717 = vmul.f32 %v3697, %v3716
      %v3718 = vadd.f32 %v3717, 1.0
      %v3719 = vrcp.pop %v3718
      %v3720 = vmul.f32 %v3718, %v3719
      %v3721 = vsub.f32 1.0, %v3720
      %v3722 = vmul.f32 %v3719, %v3721
      %v3723 = vadd.f32 %v3719, %v3722
      %vm3724 = vweird.f32 %v3718
      %vm3725 = vweird.f32 %v3719
      %vm3726 = vmor %vm3724, %vm3725
      %v3727 = vsel %vm3726, %v3719, %v3723
      %v3728 = vand.u32 2147483647, %v3718
      %vm3729 = vcmp.eq.f32.partialorder %v3728, 8.507059e+37
      %v3730 = vand.u32 %v3718, 2147483648
      %v3731 = vor.u32 1.1754944e-38, %v3730
      %v3732 = vsel %vm3729, %v3731, %v3727
      %v3733 = vmul.f32 %v3708, %v3732
      %v3734 = vmin.f32 %v3733, 1.0
      %v3735 = vmax.f32 %v3734, -1.0
      %v3736 = vmul.f32 %v2463, %v2463
      %v3737 = vmin.f32 16.0, %v3736
      %v3738 = vmul.f32 %v3737, 2.1237322e-06
      %v3739 = vadd.f32 %v3738, 0.00028619796
      %v3740 = vmul.f32 %v3737, %v3739
      %v3741 = vadd.f32 %v3740, 0.0036580483
      %v3742 = vmul.f32 %v3737, %v3741
      %v3743 = vadd.f32 %v3742, 0.05243302
      %v3744 = vmul.f32 %v3737, %v3743
      %v3745 = vadd.f32 %v3744, 0.18741608
      %v3746 = vmul.f32 %v3737, %v3745
      %v3747 = vadd.f32 %v3746, 1.1283791
      %v3748 = vmul.f32 %v2463, %v3747
      %v3749 = vmul.f32 %v3737, 3.8918573e-05
      %v3750 = vadd.f32 %v3749, 0.001143296
      %v3751 = vmul.f32 %v3737, %v3750
      %v3752 = vadd.f32 %v3751, 0.014752088
      %v3753 = vmul.f32 %v3737, %v3752
      %v3754 = vadd.f32 %v3753, 0.112945676
      %v3755 = vmul.f32 %v3737, %v3754
      %v3756 = vadd.f32 %v3755, 0.4994258
      %v3757 = vmul.f32 %v3737, %v3756
      %v3758 = vadd.f32 %v3757, 1.0
      %v3759 = vrcp.pop %v3758
      %v3760 = vmul.f32 %v3758, %v3759
      %v3761 = vsub.f32 1.0, %v3760
      %v3762 = vmul.f32 %v3759, %v3761
      %v3763 = vadd.f32 %v3759, %v3762
      %vm3764 = vweird.f32 %v3758
      %vm3765 = vweird.f32 %v3759
      %vm3766 = vmor %vm3764, %vm3765
      %v3767 = vsel %vm3766, %v3759, %v3763
      %v3768 = vand.u32 2147483647, %v3758
      %vm3769 = vcmp.eq.f32.partialorder %v3768, 8.507059e+37
      %v3770 = vand.u32 %v3758, 2147483648
      %v3771 = vor.u32 1.1754944e-38, %v3770
      %v3772 = vsel %vm3769, %v3771, %v3767
      %v3773 = vmul.f32 %v3748, %v3772
      %v3774 = vmin.f32 %v3773, 1.0
      %v3775 = vmax.f32 %v3774, -1.0
      %v3776 = vmul.f32 %v2464, %v2464
      %v3777 = vmin.f32 16.0, %v3776
      %v3778 = vmul.f32 %v3777, 2.1237322e-06
      %v3779 = vadd.f32 %v3778, 0.00028619796
      %v3780 = vmul.f32 %v3777, %v3779
      %v3781 = vadd.f32 %v3780, 0.0036580483
      %v3782 = vmul.f32 %v3777, %v3781
      %v3783 = vadd.f32 %v3782, 0.05243302
      %v3784 = vmul.f32 %v3777, %v3783
      %v3785 = vadd.f32 %v3784, 0.18741608
      %v3786 = vmul.f32 %v3777, %v3785
      %v3787 = vadd.f32 %v3786, 1.1283791
      %v3788 = vmul.f32 %v2464, %v3787
      %v3789 = vmul.f32 %v3777, 3.8918573e-05
      %v3790 = vadd.f32 %v3789, 0.001143296
      %v3791 = vmul.f32 %v3777, %v3790
      %v3792 = vadd.f32 %v3791, 0.014752088
      %v3793 = vmul.f32 %v3777, %v3792
      %v3794 = vadd.f32 %v3793, 0.112945676
      %v3795 = vmul.f32 %v3777, %v3794
      %v3796 = vadd.f32 %v3795, 0.4994258
      %v3797 = vmul.f32 %v3777, %v3796
      %v3798 = vadd.f32 %v3797, 1.0
      %v3799 = vrcp.pop %v3798
      %v3800 = vmul.f32 %v3798, %v3799
      %v3801 = vsub.f32 1.0, %v3800
      %v3802 = vmul.f32 %v3799, %v3801
      %v3803 = vadd.f32 %v3799, %v3802
      %vm3804 = vweird.f32 %v3798
      %vm3805 = vweird.f32 %v3799
      %vm3806 = vmor %vm3804, %vm3805
      %v3807 = vsel %vm3806, %v3799, %v3803
      %v3808 = vand.u32 2147483647, %v3798
      %vm3809 = vcmp.eq.f32.partialorder %v3808, 8.507059e+37
      %v3810 = vand.u32 %v3798, 2147483648
      %v3811 = vor.u32 1.1754944e-38, %v3810
      %v3812 = vsel %vm3809, %v3811, %v3807
      %v3813 = vmul.f32 %v3788, %v3812
      %v3814 = vmin.f32 %v3813, 1.0
      %v3815 = vmax.f32 %v3814, -1.0
      %v3816 = vmul.f32 %v2465, %v2465
      %v3817 = vmin.f32 16.0, %v3816
      %v3818 = vmul.f32 %v3817, 2.1237322e-06
      %v3819 = vadd.f32 %v3818, 0.00028619796
      %v3820 = vmul.f32 %v3817, %v3819
      %v3821 = vadd.f32 %v3820, 0.0036580483
      %v3822 = vmul.f32 %v3817, %v3821
      %v3823 = vadd.f32 %v3822, 0.05243302
      %v3824 = vmul.f32 %v3817, %v3823
      %v3825 = vadd.f32 %v3824, 0.18741608
      %v3826 = vmul.f32 %v3817, %v3825
      %v3827 = vadd.f32 %v3826, 1.1283791
      %v3828 = vmul.f32 %v2465, %v3827
      %v3829 = vmul.f32 %v3817, 3.8918573e-05
      %v3830 = vadd.f32 %v3829, 0.001143296
      %v3831 = vmul.f32 %v3817, %v3830
      %v3832 = vadd.f32 %v3831, 0.014752088
      %v3833 = vmul.f32 %v3817, %v3832
      %v3834 = vadd.f32 %v3833, 0.112945676
      %v3835 = vmul.f32 %v3817, %v3834
      %v3836 = vadd.f32 %v3835, 0.4994258
      %v3837 = vmul.f32 %v3817, %v3836
      %v3838 = vadd.f32 %v3837, 1.0
      %v3839 = vrcp.pop %v3838
      %v3840 = vmul.f32 %v3838, %v3839
      %v3841 = vsub.f32 1.0, %v3840
      %v3842 = vmul.f32 %v3839, %v3841
      %v3843 = vadd.f32 %v3839, %v3842
      %vm3844 = vweird.f32 %v3838
      %vm3845 = vweird.f32 %v3839
      %vm3846 = vmor %vm3844, %vm3845
      %v3847 = vsel %vm3846, %v3839, %v3843
      %v3848 = vand.u32 2147483647, %v3838
      %vm3849 = vcmp.eq.f32.partialorder %v3848, 8.507059e+37
      %v3850 = vand.u32 %v3838, 2147483648
      %v3851 = vor.u32 1.1754944e-38, %v3850
      %v3852 = vsel %vm3849, %v3851, %v3847
      %v3853 = vmul.f32 %v3828, %v3852
      %v3854 = vmin.f32 %v3853, 1.0
      %v3855 = vmax.f32 %v3854, -1.0
      %v3856 = vmul.f32 %v2466, %v2466
      %v3857 = vmin.f32 16.0, %v3856
      %v3858 = vmul.f32 %v3857, 2.1237322e-06
      %v3859 = vadd.f32 %v3858, 0.00028619796
      %v3860 = vmul.f32 %v3857, %v3859
      %v3861 = vadd.f32 %v3860, 0.0036580483
      %v3862 = vmul.f32 %v3857, %v3861
      %v3863 = vadd.f32 %v3862, 0.05243302
      %v3864 = vmul.f32 %v3857, %v3863
      %v3865 = vadd.f32 %v3864, 0.18741608
      %v3866 = vmul.f32 %v3857, %v3865
      %v3867 = vadd.f32 %v3866, 1.1283791
      %v3868 = vmul.f32 %v2466, %v3867
      %v3869 = vmul.f32 %v3857, 3.8918573e-05
      %v3870 = vadd.f32 %v3869, 0.001143296
      %v3871 = vmul.f32 %v3857, %v3870
      %v3872 = vadd.f32 %v3871, 0.014752088
      %v3873 = vmul.f32 %v3857, %v3872
      %v3874 = vadd.f32 %v3873, 0.112945676
      %v3875 = vmul.f32 %v3857, %v3874
      %v3876 = vadd.f32 %v3875, 0.4994258
      %v3877 = vmul.f32 %v3857, %v3876
      %v3878 = vadd.f32 %v3877, 1.0
      %v3879 = vrcp.pop %v3878
      %v3880 = vmul.f32 %v3878, %v3879
      %v3881 = vsub.f32 1.0, %v3880
      %v3882 = vmul.f32 %v3879, %v3881
      %v3883 = vadd.f32 %v3879, %v3882
      %vm3884 = vweird.f32 %v3878
      %vm3885 = vweird.f32 %v3879
      %vm3886 = vmor %vm3884, %vm3885
      %v3887 = vsel %vm3886, %v3879, %v3883
      %v3888 = vand.u32 2147483647, %v3878
      %vm3889 = vcmp.eq.f32.partialorder %v3888, 8.507059e+37
      %v3890 = vand.u32 %v3878, 2147483648
      %v3891 = vor.u32 1.1754944e-38, %v3890
      %v3892 = vsel %vm3889, %v3891, %v3887
      %v3893 = vmul.f32 %v3868, %v3892
      %v3894 = vmin.f32 %v3893, 1.0
      %v3895 = vmax.f32 %v3894, -1.0
      %v3896 = vmul.f32 %v2467, %v2467
      %v3897 = vmin.f32 16.0, %v3896
      %v3898 = vmul.f32 %v3897, 2.1237322e-06
      %v3899 = vadd.f32 %v3898, 0.00028619796
      %v3900 = vmul.f32 %v3897, %v3899
      %v3901 = vadd.f32 %v3900, 0.0036580483
      %v3902 = vmul.f32 %v3897, %v3901
      %v3903 = vadd.f32 %v3902, 0.05243302
      %v3904 = vmul.f32 %v3897, %v3903
      %v3905 = vadd.f32 %v3904, 0.18741608
      %v3906 = vmul.f32 %v3897, %v3905
      %v3907 = vadd.f32 %v3906, 1.1283791
      %v3908 = vmul.f32 %v2467, %v3907
      %v3909 = vmul.f32 %v3897, 3.8918573e-05
      %v3910 = vadd.f32 %v3909, 0.001143296
      %v3911 = vmul.f32 %v3897, %v3910
      %v3912 = vadd.f32 %v3911, 0.014752088
      %v3913 = vmul.f32 %v3897, %v3912
      %v3914 = vadd.f32 %v3913, 0.112945676
      %v3915 = vmul.f32 %v3897, %v3914
      %v3916 = vadd.f32 %v3915, 0.4994258
      %v3917 = vmul.f32 %v3897, %v3916
      %v3918 = vadd.f32 %v3917, 1.0
      %v3919 = vrcp.pop %v3918
      %v3920 = vmul.f32 %v3918, %v3919
      %v3921 = vsub.f32 1.0, %v3920
      %v3922 = vmul.f32 %v3919, %v3921
      %v3923 = vadd.f32 %v3919, %v3922
      %vm3924 = vweird.f32 %v3918
      %vm3925 = vweird.f32 %v3919
      %vm3926 = vmor %vm3924, %vm3925
      %v3927 = vsel %vm3926, %v3919, %v3923
      %v3928 = vand.u32 2147483647, %v3918
      %vm3929 = vcmp.eq.f32.partialorder %v3928, 8.507059e+37
      %v3930 = vand.u32 %v3918, 2147483648
      %v3931 = vor.u32 1.1754944e-38, %v3930
      %v3932 = vsel %vm3929, %v3931, %v3927
      %v3933 = vmul.f32 %v3908, %v3932
      %v3934 = vmin.f32 %v3933, 1.0
      %v3935 = vmax.f32 %v3934, -1.0
      %v3936 = vmul.f32 %v2468, %v2468
      %v3937 = vmin.f32 16.0, %v3936
      %v3938 = vmul.f32 %v3937, 2.1237322e-06
      %v3939 = vadd.f32 %v3938, 0.00028619796
      %v3940 = vmul.f32 %v3937, %v3939
      %v3941 = vadd.f32 %v3940, 0.0036580483
      %v3942 = vmul.f32 %v3937, %v3941
      %v3943 = vadd.f32 %v3942, 0.05243302
      %v3944 = vmul.f32 %v3937, %v3943
      %v3945 = vadd.f32 %v3944, 0.18741608
      %v3946 = vmul.f32 %v3937, %v3945
      %v3947 = vadd.f32 %v3946, 1.1283791
      %v3948 = vmul.f32 %v2468, %v3947
      %v3949 = vmul.f32 %v3937, 3.8918573e-05
      %v3950 = vadd.f32 %v3949, 0.001143296
      %v3951 = vmul.f32 %v3937, %v3950
      %v3952 = vadd.f32 %v3951, 0.014752088
      %v3953 = vmul.f32 %v3937, %v3952
      %v3954 = vadd.f32 %v3953, 0.112945676
      %v3955 = vmul.f32 %v3937, %v3954
      %v3956 = vadd.f32 %v3955, 0.4994258
      %v3957 = vmul.f32 %v3937, %v3956
      %v3958 = vadd.f32 %v3957, 1.0
      %v3959 = vrcp.pop %v3958
      %v3960 = vmul.f32 %v3958, %v3959
      %v3961 = vsub.f32 1.0, %v3960
      %v3962 = vmul.f32 %v3959, %v3961
      %v3963 = vadd.f32 %v3959, %v3962
      %vm3964 = vweird.f32 %v3958
      %vm3965 = vweird.f32 %v3959
      %vm3966 = vmor %vm3964, %vm3965
      %v3967 = vsel %vm3966, %v3959, %v3963
      %v3968 = vand.u32 2147483647, %v3958
      %vm3969 = vcmp.eq.f32.partialorder %v3968, 8.507059e+37
      %v3970 = vand.u32 %v3958, 2147483648
      %v3971 = vor.u32 1.1754944e-38, %v3970
      %v3972 = vsel %vm3969, %v3971, %v3967
      %v3973 = vmul.f32 %v3948, %v3972
      %v3974 = vmin.f32 %v3973, 1.0
      %v3975 = vmax.f32 %v3974, -1.0
      %v3976 = vmul.f32 %v2469, %v2469
      %v3977 = vmin.f32 16.0, %v3976
      %v3978 = vmul.f32 %v3977, 2.1237322e-06
      %v3979 = vadd.f32 %v3978, 0.00028619796
      %v3980 = vmul.f32 %v3977, %v3979
      %v3981 = vadd.f32 %v3980, 0.0036580483
      %v3982 = vmul.f32 %v3977, %v3981
      %v3983 = vadd.f32 %v3982, 0.05243302
      %v3984 = vmul.f32 %v3977, %v3983
      %v3985 = vadd.f32 %v3984, 0.18741608
      %v3986 = vmul.f32 %v3977, %v3985
      %v3987 = vadd.f32 %v3986, 1.1283791
      %v3988 = vmul.f32 %v2469, %v3987
      %v3989 = vmul.f32 %v3977, 3.8918573e-05
      %v3990 = vadd.f32 %v3989, 0.001143296
      %v3991 = vmul.f32 %v3977, %v3990
      %v3992 = vadd.f32 %v3991, 0.014752088
      %v3993 = vmul.f32 %v3977, %v3992
      %v3994 = vadd.f32 %v3993, 0.112945676
      %v3995 = vmul.f32 %v3977, %v3994
      %v3996 = vadd.f32 %v3995, 0.4994258
      %v3997 = vmul.f32 %v3977, %v3996
      %v3998 = vadd.f32 %v3997, 1.0
      %v3999 = vrcp.pop %v3998
      %v4000 = vmul.f32 %v3998, %v3999
      %v4001 = vsub.f32 1.0, %v4000
      %v4002 = vmul.f32 %v3999, %v4001
      %v4003 = vadd.f32 %v3999, %v4002
      %vm4004 = vweird.f32 %v3998
      %vm4005 = vweird.f32 %v3999
      %vm4006 = vmor %vm4004, %vm4005
      %v4007 = vsel %vm4006, %v3999, %v4003
      %v4008 = vand.u32 2147483647, %v3998
      %vm4009 = vcmp.eq.f32.partialorder %v4008, 8.507059e+37
      %v4010 = vand.u32 %v3998, 2147483648
      %v4011 = vor.u32 1.1754944e-38, %v4010
      %v4012 = vsel %vm4009, %v4011, %v4007
      %v4013 = vmul.f32 %v3988, %v4012
      %v4014 = vmin.f32 %v4013, 1.0
      %v4015 = vmax.f32 %v4014, -1.0
      %v4016 = vmul.f32 %v2470, %v2470
      %v4017 = vmin.f32 16.0, %v4016
      %v4018 = vmul.f32 %v4017, 2.1237322e-06
      %v4019 = vadd.f32 %v4018, 0.00028619796
      %v4020 = vmul.f32 %v4017, %v4019
      %v4021 = vadd.f32 %v4020, 0.0036580483
      %v4022 = vmul.f32 %v4017, %v4021
      %v4023 = vadd.f32 %v4022, 0.05243302
      %v4024 = vmul.f32 %v4017, %v4023
      %v4025 = vadd.f32 %v4024, 0.18741608
      %v4026 = vmul.f32 %v4017, %v4025
      %v4027 = vadd.f32 %v4026, 1.1283791
      %v4028 = vmul.f32 %v2470, %v4027
      %v4029 = vmul.f32 %v4017, 3.8918573e-05
      %v4030 = vadd.f32 %v4029, 0.001143296
      %v4031 = vmul.f32 %v4017, %v4030
      %v4032 = vadd.f32 %v4031, 0.014752088
      %v4033 = vmul.f32 %v4017, %v4032
      %v4034 = vadd.f32 %v4033, 0.112945676
      %v4035 = vmul.f32 %v4017, %v4034
      %v4036 = vadd.f32 %v4035, 0.4994258
      %v4037 = vmul.f32 %v4017, %v4036
      %v4038 = vadd.f32 %v4037, 1.0
      %v4039 = vrcp.pop %v4038
      %v4040 = vmul.f32 %v4038, %v4039
      %v4041 = vsub.f32 1.0, %v4040
      %v4042 = vmul.f32 %v4039, %v4041
      %v4043 = vadd.f32 %v4039, %v4042
      %vm4044 = vweird.f32 %v4038
      %vm4045 = vweird.f32 %v4039
      %vm4046 = vmor %vm4044, %vm4045
      %v4047 = vsel %vm4046, %v4039, %v4043
      %v4048 = vand.u32 2147483647, %v4038
      %vm4049 = vcmp.eq.f32.partialorder %v4048, 8.507059e+37
      %v4050 = vand.u32 %v4038, 2147483648
      %v4051 = vor.u32 1.1754944e-38, %v4050
      %v4052 = vsel %vm4049, %v4051, %v4047
      %v4053 = vmul.f32 %v4028, %v4052
      %v4054 = vmin.f32 %v4053, 1.0
      %v4055 = vmax.f32 %v4054, -1.0
      %v4056 = vmul.f32 %v2471, %v2471
      %v4057 = vmin.f32 16.0, %v4056
      %v4058 = vmul.f32 %v4057, 2.1237322e-06
      %v4059 = vadd.f32 %v4058, 0.00028619796
      %v4060 = vmul.f32 %v4057, %v4059
      %v4061 = vadd.f32 %v4060, 0.0036580483
      %v4062 = vmul.f32 %v4057, %v4061
      %v4063 = vadd.f32 %v4062, 0.05243302
      %v4064 = vmul.f32 %v4057, %v4063
      %v4065 = vadd.f32 %v4064, 0.18741608
      %v4066 = vmul.f32 %v4057, %v4065
      %v4067 = vadd.f32 %v4066, 1.1283791
      %v4068 = vmul.f32 %v2471, %v4067
      %v4069 = vmul.f32 %v4057, 3.8918573e-05
      %v4070 = vadd.f32 %v4069, 0.001143296
      %v4071 = vmul.f32 %v4057, %v4070
      %v4072 = vadd.f32 %v4071, 0.014752088
      %v4073 = vmul.f32 %v4057, %v4072
      %v4074 = vadd.f32 %v4073, 0.112945676
      %v4075 = vmul.f32 %v4057, %v4074
      %v4076 = vadd.f32 %v4075, 0.4994258
      %v4077 = vmul.f32 %v4057, %v4076
      %v4078 = vadd.f32 %v4077, 1.0
      %v4079 = vrcp.pop %v4078
      %v4080 = vmul.f32 %v4078, %v4079
      %v4081 = vsub.f32 1.0, %v4080
      %v4082 = vmul.f32 %v4079, %v4081
      %v4083 = vadd.f32 %v4079, %v4082
      %vm4084 = vweird.f32 %v4078
      %vm4085 = vweird.f32 %v4079
      %vm4086 = vmor %vm4084, %vm4085
      %v4087 = vsel %vm4086, %v4079, %v4083
      %v4088 = vand.u32 2147483647, %v4078
      %vm4089 = vcmp.eq.f32.partialorder %v4088, 8.507059e+37
      %v4090 = vand.u32 %v4078, 2147483648
      %v4091 = vor.u32 1.1754944e-38, %v4090
      %v4092 = vsel %vm4089, %v4091, %v4087
      %v4093 = vmul.f32 %v4068, %v4092
      %v4094 = vmin.f32 %v4093, 1.0
      %v4095 = vmax.f32 %v4094, -1.0
      %v4096 = vmul.f32 %v2472, %v2472
      %v4097 = vmin.f32 16.0, %v4096
      %v4098 = vmul.f32 %v4097, 2.1237322e-06
      %v4099 = vadd.f32 %v4098, 0.00028619796
      %v4100 = vmul.f32 %v4097, %v4099
      %v4101 = vadd.f32 %v4100, 0.0036580483
      %v4102 = vmul.f32 %v4097, %v4101
      %v4103 = vadd.f32 %v4102, 0.05243302
      %v4104 = vmul.f32 %v4097, %v4103
      %v4105 = vadd.f32 %v4104, 0.18741608
      %v4106 = vmul.f32 %v4097, %v4105
      %v4107 = vadd.f32 %v4106, 1.1283791
      %v4108 = vmul.f32 %v2472, %v4107
      %v4109 = vmul.f32 %v4097, 3.8918573e-05
      %v4110 = vadd.f32 %v4109, 0.001143296
      %v4111 = vmul.f32 %v4097, %v4110
      %v4112 = vadd.f32 %v4111, 0.014752088
      %v4113 = vmul.f32 %v4097, %v4112
      %v4114 = vadd.f32 %v4113, 0.112945676
      %v4115 = vmul.f32 %v4097, %v4114
      %v4116 = vadd.f32 %v4115, 0.4994258
      %v4117 = vmul.f32 %v4097, %v4116
      %v4118 = vadd.f32 %v4117, 1.0
      %v4119 = vrcp.pop %v4118
      %v4120 = vmul.f32 %v4118, %v4119
      %v4121 = vsub.f32 1.0, %v4120
      %v4122 = vmul.f32 %v4119, %v4121
      %v4123 = vadd.f32 %v4119, %v4122
      %vm4124 = vweird.f32 %v4118
      %vm4125 = vweird.f32 %v4119
      %vm4126 = vmor %vm4124, %vm4125
      %v4127 = vsel %vm4126, %v4119, %v4123
      %v4128 = vand.u32 2147483647, %v4118
      %vm4129 = vcmp.eq.f32.partialorder %v4128, 8.507059e+37
      %v4130 = vand.u32 %v4118, 2147483648
      %v4131 = vor.u32 1.1754944e-38, %v4130
      %v4132 = vsel %vm4129, %v4131, %v4127
      %v4133 = vmul.f32 %v4108, %v4132
      %v4134 = vmin.f32 %v4133, 1.0
      %v4135 = vmax.f32 %v4134, -1.0
      %v4136 = vmul.f32 %v2473, %v2473
      %v4137 = vmin.f32 16.0, %v4136
      %v4138 = vmul.f32 %v4137, 2.1237322e-06
      %v4139 = vadd.f32 %v4138, 0.00028619796
      %v4140 = vmul.f32 %v4137, %v4139
      %v4141 = vadd.f32 %v4140, 0.0036580483
      %v4142 = vmul.f32 %v4137, %v4141
      %v4143 = vadd.f32 %v4142, 0.05243302
      %v4144 = vmul.f32 %v4137, %v4143
      %v4145 = vadd.f32 %v4144, 0.18741608
      %v4146 = vmul.f32 %v4137, %v4145
      %v4147 = vadd.f32 %v4146, 1.1283791
      %v4148 = vmul.f32 %v2473, %v4147
      %v4149 = vmul.f32 %v4137, 3.8918573e-05
      %v4150 = vadd.f32 %v4149, 0.001143296
      %v4151 = vmul.f32 %v4137, %v4150
      %v4152 = vadd.f32 %v4151, 0.014752088
      %v4153 = vmul.f32 %v4137, %v4152
      %v4154 = vadd.f32 %v4153, 0.112945676
      %v4155 = vmul.f32 %v4137, %v4154
      %v4156 = vadd.f32 %v4155, 0.4994258
      %v4157 = vmul.f32 %v4137, %v4156
      %v4158 = vadd.f32 %v4157, 1.0
      %v4159 = vrcp.pop %v4158
      %v4160 = vmul.f32 %v4158, %v4159
      %v4161 = vsub.f32 1.0, %v4160
      %v4162 = vmul.f32 %v4159, %v4161
      %v4163 = vadd.f32 %v4159, %v4162
      %vm4164 = vweird.f32 %v4158
      %vm4165 = vweird.f32 %v4159
      %vm4166 = vmor %vm4164, %vm4165
      %v4167 = vsel %vm4166, %v4159, %v4163
      %v4168 = vand.u32 2147483647, %v4158
      %vm4169 = vcmp.eq.f32.partialorder %v4168, 8.507059e+37
      %v4170 = vand.u32 %v4158, 2147483648
      %v4171 = vor.u32 1.1754944e-38, %v4170
      %v4172 = vsel %vm4169, %v4171, %v4167
      %v4173 = vmul.f32 %v4148, %v4172
      %v4174 = vmin.f32 %v4173, 1.0
      %v4175 = vmax.f32 %v4174, -1.0
      %v4176 = vmul.f32 %v2474, %v2474
      %v4177 = vmin.f32 16.0, %v4176
      %v4178 = vmul.f32 %v4177, 2.1237322e-06
      %v4179 = vadd.f32 %v4178, 0.00028619796
      %v4180 = vmul.f32 %v4177, %v4179
      %v4181 = vadd.f32 %v4180, 0.0036580483
      %v4182 = vmul.f32 %v4177, %v4181
      %v4183 = vadd.f32 %v4182, 0.05243302
      %v4184 = vmul.f32 %v4177, %v4183
      %v4185 = vadd.f32 %v4184, 0.18741608
      %v4186 = vmul.f32 %v4177, %v4185
      %v4187 = vadd.f32 %v4186, 1.1283791
      %v4188 = vmul.f32 %v2474, %v4187
      %v4189 = vmul.f32 %v4177, 3.8918573e-05
      %v4190 = vadd.f32 %v4189, 0.001143296
      %v4191 = vmul.f32 %v4177, %v4190
      %v4192 = vadd.f32 %v4191, 0.014752088
      %v4193 = vmul.f32 %v4177, %v4192
      %v4194 = vadd.f32 %v4193, 0.112945676
      %v4195 = vmul.f32 %v4177, %v4194
      %v4196 = vadd.f32 %v4195, 0.4994258
      %v4197 = vmul.f32 %v4177, %v4196
      %v4198 = vadd.f32 %v4197, 1.0
      %v4199 = vrcp.pop %v4198
      %v4200 = vmul.f32 %v4198, %v4199
      %v4201 = vsub.f32 1.0, %v4200
      %v4202 = vmul.f32 %v4199, %v4201
      %v4203 = vadd.f32 %v4199, %v4202
      %vm4204 = vweird.f32 %v4198
      %vm4205 = vweird.f32 %v4199
      %vm4206 = vmor %vm4204, %vm4205
      %v4207 = vsel %vm4206, %v4199, %v4203
      %v4208 = vand.u32 2147483647, %v4198
      %vm4209 = vcmp.eq.f32.partialorder %v4208, 8.507059e+37
      %v4210 = vand.u32 %v4198, 2147483648
      %v4211 = vor.u32 1.1754944e-38, %v4210
      %v4212 = vsel %vm4209, %v4211, %v4207
      %v4213 = vmul.f32 %v4188, %v4212
      %v4214 = vmin.f32 %v4213, 1.0
      %v4215 = vmax.f32 %v4214, -1.0
      %v4216 = vmul.f32 %v2475, %v2475
      %v4217 = vmin.f32 16.0, %v4216
      %v4218 = vmul.f32 %v4217, 2.1237322e-06
      %v4219 = vadd.f32 %v4218, 0.00028619796
      %v4220 = vmul.f32 %v4217, %v4219
      %v4221 = vadd.f32 %v4220, 0.0036580483
      %v4222 = vmul.f32 %v4217, %v4221
      %v4223 = vadd.f32 %v4222, 0.05243302
      %v4224 = vmul.f32 %v4217, %v4223
      %v4225 = vadd.f32 %v4224, 0.18741608
      %v4226 = vmul.f32 %v4217, %v4225
      %v4227 = vadd.f32 %v4226, 1.1283791
      %v4228 = vmul.f32 %v2475, %v4227
      %v4229 = vmul.f32 %v4217, 3.8918573e-05
      %v4230 = vadd.f32 %v4229, 0.001143296
      %v4231 = vmul.f32 %v4217, %v4230
      %v4232 = vadd.f32 %v4231, 0.014752088
      %v4233 = vmul.f32 %v4217, %v4232
      %v4234 = vadd.f32 %v4233, 0.112945676
      %v4235 = vmul.f32 %v4217, %v4234
      %v4236 = vadd.f32 %v4235, 0.4994258
      %v4237 = vmul.f32 %v4217, %v4236
      %v4238 = vadd.f32 %v4237, 1.0
      %v4239 = vrcp.pop %v4238
      %v4240 = vmul.f32 %v4238, %v4239
      %v4241 = vsub.f32 1.0, %v4240
      %v4242 = vmul.f32 %v4239, %v4241
      %v4243 = vadd.f32 %v4239, %v4242
      %vm4244 = vweird.f32 %v4238
      %vm4245 = vweird.f32 %v4239
      %vm4246 = vmor %vm4244, %vm4245
      %v4247 = vsel %vm4246, %v4239, %v4243
      %v4248 = vand.u32 2147483647, %v4238
      %vm4249 = vcmp.eq.f32.partialorder %v4248, 8.507059e+37
      %v4250 = vand.u32 %v4238, 2147483648
      %v4251 = vor.u32 1.1754944e-38, %v4250
      %v4252 = vsel %vm4249, %v4251, %v4247
      %v4253 = vmul.f32 %v4228, %v4252
      %v4254 = vmin.f32 %v4253, 1.0
      %v4255 = vmax.f32 %v4254, -1.0
      %v4256 = vmul.f32 %v2476, %v2476
      %v4257 = vmin.f32 16.0, %v4256
      %v4258 = vmul.f32 %v4257, 2.1237322e-06
      %v4259 = vadd.f32 %v4258, 0.00028619796
      %v4260 = vmul.f32 %v4257, %v4259
      %v4261 = vadd.f32 %v4260, 0.0036580483
      %v4262 = vmul.f32 %v4257, %v4261
      %v4263 = vadd.f32 %v4262, 0.05243302
      %v4264 = vmul.f32 %v4257, %v4263
      %v4265 = vadd.f32 %v4264, 0.18741608
      %v4266 = vmul.f32 %v4257, %v4265
      %v4267 = vadd.f32 %v4266, 1.1283791
      %v4268 = vmul.f32 %v2476, %v4267
      %v4269 = vmul.f32 %v4257, 3.8918573e-05
      %v4270 = vadd.f32 %v4269, 0.001143296
      %v4271 = vmul.f32 %v4257, %v4270
      %v4272 = vadd.f32 %v4271, 0.014752088
      %v4273 = vmul.f32 %v4257, %v4272
      %v4274 = vadd.f32 %v4273, 0.112945676
      %v4275 = vmul.f32 %v4257, %v4274
      %v4276 = vadd.f32 %v4275, 0.4994258
      %v4277 = vmul.f32 %v4257, %v4276
      %v4278 = vadd.f32 %v4277, 1.0
      %v4279 = vrcp.pop %v4278
      %v4280 = vmul.f32 %v4278, %v4279
      %v4281 = vsub.f32 1.0, %v4280
      %v4282 = vmul.f32 %v4279, %v4281
      %v4283 = vadd.f32 %v4279, %v4282
      %vm4284 = vweird.f32 %v4278
      %vm4285 = vweird.f32 %v4279
      %vm4286 = vmor %vm4284, %vm4285
      %v4287 = vsel %vm4286, %v4279, %v4283
      %v4288 = vand.u32 2147483647, %v4278
      %vm4289 = vcmp.eq.f32.partialorder %v4288, 8.507059e+37
      %v4290 = vand.u32 %v4278, 2147483648
      %v4291 = vor.u32 1.1754944e-38, %v4290
      %v4292 = vsel %vm4289, %v4291, %v4287
      %v4293 = vmul.f32 %v4268, %v4292
      %v4294 = vmin.f32 %v4293, 1.0
      %v4295 = vmax.f32 %v4294, -1.0
      %v4296 = vmul.f32 %v2477, %v2477
      %v4297 = vmin.f32 16.0, %v4296
      %v4298 = vmul.f32 %v4297, 2.1237322e-06
      %v4299 = vadd.f32 %v4298, 0.00028619796
      %v4300 = vmul.f32 %v4297, %v4299
      %v4301 = vadd.f32 %v4300, 0.0036580483
      %v4302 = vmul.f32 %v4297, %v4301
      %v4303 = vadd.f32 %v4302, 0.05243302
      %v4304 = vmul.f32 %v4297, %v4303
      %v4305 = vadd.f32 %v4304, 0.18741608
      %v4306 = vmul.f32 %v4297, %v4305
      %v4307 = vadd.f32 %v4306, 1.1283791
      %v4308 = vmul.f32 %v2477, %v4307
      %v4309 = vmul.f32 %v4297, 3.8918573e-05
      %v4310 = vadd.f32 %v4309, 0.001143296
      %v4311 = vmul.f32 %v4297, %v4310
      %v4312 = vadd.f32 %v4311, 0.014752088
      %v4313 = vmul.f32 %v4297, %v4312
      %v4314 = vadd.f32 %v4313, 0.112945676
      %v4315 = vmul.f32 %v4297, %v4314
      %v4316 = vadd.f32 %v4315, 0.4994258
      %v4317 = vmul.f32 %v4297, %v4316
      %v4318 = vadd.f32 %v4317, 1.0
      %v4319 = vrcp.pop %v4318
      %v4320 = vmul.f32 %v4318, %v4319
      %v4321 = vsub.f32 1.0, %v4320
      %v4322 = vmul.f32 %v4319, %v4321
      %v4323 = vadd.f32 %v4319, %v4322
      %vm4324 = vweird.f32 %v4318
      %vm4325 = vweird.f32 %v4319
      %vm4326 = vmor %vm4324, %vm4325
      %v4327 = vsel %vm4326, %v4319, %v4323
      %v4328 = vand.u32 2147483647, %v4318
      %vm4329 = vcmp.eq.f32.partialorder %v4328, 8.507059e+37
      %v4330 = vand.u32 %v4318, 2147483648
      %v4331 = vor.u32 1.1754944e-38, %v4330
      %v4332 = vsel %vm4329, %v4331, %v4327
      %v4333 = vmul.f32 %v4308, %v4332
      %v4334 = vmin.f32 %v4333, 1.0
      %v4335 = vmax.f32 %v4334, -1.0
      %v4336 = vmul.f32 %v2478, %v2478
      %v4337 = vmin.f32 16.0, %v4336
      %v4338 = vmul.f32 %v4337, 2.1237322e-06
      %v4339 = vadd.f32 %v4338, 0.00028619796
      %v4340 = vmul.f32 %v4337, %v4339
      %v4341 = vadd.f32 %v4340, 0.0036580483
      %v4342 = vmul.f32 %v4337, %v4341
      %v4343 = vadd.f32 %v4342, 0.05243302
      %v4344 = vmul.f32 %v4337, %v4343
      %v4345 = vadd.f32 %v4344, 0.18741608
      %v4346 = vmul.f32 %v4337, %v4345
      %v4347 = vadd.f32 %v4346, 1.1283791
      %v4348 = vmul.f32 %v2478, %v4347
      %v4349 = vmul.f32 %v4337, 3.8918573e-05
      %v4350 = vadd.f32 %v4349, 0.001143296
      %v4351 = vmul.f32 %v4337, %v4350
      %v4352 = vadd.f32 %v4351, 0.014752088
      %v4353 = vmul.f32 %v4337, %v4352
      %v4354 = vadd.f32 %v4353, 0.112945676
      %v4355 = vmul.f32 %v4337, %v4354
      %v4356 = vadd.f32 %v4355, 0.4994258
      %v4357 = vmul.f32 %v4337, %v4356
      %v4358 = vadd.f32 %v4357, 1.0
      %v4359 = vrcp.pop %v4358
      %v4360 = vmul.f32 %v4358, %v4359
      %v4361 = vsub.f32 1.0, %v4360
      %v4362 = vmul.f32 %v4359, %v4361
      %v4363 = vadd.f32 %v4359, %v4362
      %vm4364 = vweird.f32 %v4358
      %vm4365 = vweird.f32 %v4359
      %vm4366 = vmor %vm4364, %vm4365
      %v4367 = vsel %vm4366, %v4359, %v4363
      %v4368 = vand.u32 2147483647, %v4358
      %vm4369 = vcmp.eq.f32.partialorder %v4368, 8.507059e+37
      %v4370 = vand.u32 %v4358, 2147483648
      %v4371 = vor.u32 1.1754944e-38, %v4370
      %v4372 = vsel %vm4369, %v4371, %v4367
      %v4373 = vmul.f32 %v4348, %v4372
      %v4374 = vmin.f32 %v4373, 1.0
      %v4375 = vmax.f32 %v4374, -1.0
      %v4376 = vmul.f32 %v2479, %v2479
      %v4377 = vmin.f32 16.0, %v4376
      %v4378 = vmul.f32 %v4377, 2.1237322e-06
      %v4379 = vadd.f32 %v4378, 0.00028619796
      %v4380 = vmul.f32 %v4377, %v4379
      %v4381 = vadd.f32 %v4380, 0.0036580483
      %v4382 = vmul.f32 %v4377, %v4381
      %v4383 = vadd.f32 %v4382, 0.05243302
      %v4384 = vmul.f32 %v4377, %v4383
      %v4385 = vadd.f32 %v4384, 0.18741608
      %v4386 = vmul.f32 %v4377, %v4385
      %v4387 = vadd.f32 %v4386, 1.1283791
      %v4388 = vmul.f32 %v2479, %v4387
      %v4389 = vmul.f32 %v4377, 3.8918573e-05
      %v4390 = vadd.f32 %v4389, 0.001143296
      %v4391 = vmul.f32 %v4377, %v4390
      %v4392 = vadd.f32 %v4391, 0.014752088
      %v4393 = vmul.f32 %v4377, %v4392
      %v4394 = vadd.f32 %v4393, 0.112945676
      %v4395 = vmul.f32 %v4377, %v4394
      %v4396 = vadd.f32 %v4395, 0.4994258
      %v4397 = vmul.f32 %v4377, %v4396
      %v4398 = vadd.f32 %v4397, 1.0
      %v4399 = vrcp.pop %v4398
      %v4400 = vmul.f32 %v4398, %v4399
      %v4401 = vsub.f32 1.0, %v4400
      %v4402 = vmul.f32 %v4399, %v4401
      %v4403 = vadd.f32 %v4399, %v4402
      %vm4404 = vweird.f32 %v4398
      %vm4405 = vweird.f32 %v4399
      %vm4406 = vmor %vm4404, %vm4405
      %v4407 = vsel %vm4406, %v4399, %v4403
      %v4408 = vand.u32 2147483647, %v4398
      %vm4409 = vcmp.eq.f32.partialorder %v4408, 8.507059e+37
      %v4410 = vand.u32 %v4398, 2147483648
      %v4411 = vor.u32 1.1754944e-38, %v4410
      %v4412 = vsel %vm4409, %v4411, %v4407
      %v4413 = vmul.f32 %v4388, %v4412
      %v4414 = vmin.f32 %v4413, 1.0
      %v4415 = vmax.f32 %v4414, -1.0
      %v4416 = vmul.f32 %v2480, %v2480
      %v4417 = vmin.f32 16.0, %v4416
      %v4418 = vmul.f32 %v4417, 2.1237322e-06
      %v4419 = vadd.f32 %v4418, 0.00028619796
      %v4420 = vmul.f32 %v4417, %v4419
      %v4421 = vadd.f32 %v4420, 0.0036580483
      %v4422 = vmul.f32 %v4417, %v4421
      %v4423 = vadd.f32 %v4422, 0.05243302
      %v4424 = vmul.f32 %v4417, %v4423
      %v4425 = vadd.f32 %v4424, 0.18741608
      %v4426 = vmul.f32 %v4417, %v4425
      %v4427 = vadd.f32 %v4426, 1.1283791
      %v4428 = vmul.f32 %v2480, %v4427
      %v4429 = vmul.f32 %v4417, 3.8918573e-05
      %v4430 = vadd.f32 %v4429, 0.001143296
      %v4431 = vmul.f32 %v4417, %v4430
      %v4432 = vadd.f32 %v4431, 0.014752088
      %v4433 = vmul.f32 %v4417, %v4432
      %v4434 = vadd.f32 %v4433, 0.112945676
      %v4435 = vmul.f32 %v4417, %v4434
      %v4436 = vadd.f32 %v4435, 0.4994258
      %v4437 = vmul.f32 %v4417, %v4436
      %v4438 = vadd.f32 %v4437, 1.0
      %v4439 = vrcp.pop %v4438
      %v4440 = vmul.f32 %v4438, %v4439
      %v4441 = vsub.f32 1.0, %v4440
      %v4442 = vmul.f32 %v4439, %v4441
      %v4443 = vadd.f32 %v4439, %v4442
      %vm4444 = vweird.f32 %v4438
      %vm4445 = vweird.f32 %v4439
      %vm4446 = vmor %vm4444, %vm4445
      %v4447 = vsel %vm4446, %v4439, %v4443
      %v4448 = vand.u32 2147483647, %v4438
      %vm4449 = vcmp.eq.f32.partialorder %v4448, 8.507059e+37
      %v4450 = vand.u32 %v4438, 2147483648
      %v4451 = vor.u32 1.1754944e-38, %v4450
      %v4452 = vsel %vm4449, %v4451, %v4447
      %v4453 = vmul.f32 %v4428, %v4452
      %v4454 = vmin.f32 %v4453, 1.0
      %v4455 = vmax.f32 %v4454, -1.0
      %v4456 = vmul.f32 %v2481, %v2481
      %v4457 = vmin.f32 16.0, %v4456
      %v4458 = vmul.f32 %v4457, 2.1237322e-06
      %v4459 = vadd.f32 %v4458, 0.00028619796
      %v4460 = vmul.f32 %v4457, %v4459
      %v4461 = vadd.f32 %v4460, 0.0036580483
      %v4462 = vmul.f32 %v4457, %v4461
      %v4463 = vadd.f32 %v4462, 0.05243302
      %v4464 = vmul.f32 %v4457, %v4463
      %v4465 = vadd.f32 %v4464, 0.18741608
      %v4466 = vmul.f32 %v4457, %v4465
      %v4467 = vadd.f32 %v4466, 1.1283791
      %v4468 = vmul.f32 %v2481, %v4467
      %v4469 = vmul.f32 %v4457, 3.8918573e-05
      %v4470 = vadd.f32 %v4469, 0.001143296
      %v4471 = vmul.f32 %v4457, %v4470
      %v4472 = vadd.f32 %v4471, 0.014752088
      %v4473 = vmul.f32 %v4457, %v4472
      %v4474 = vadd.f32 %v4473, 0.112945676
      %v4475 = vmul.f32 %v4457, %v4474
      %v4476 = vadd.f32 %v4475, 0.4994258
      %v4477 = vmul.f32 %v4457, %v4476
      %v4478 = vadd.f32 %v4477, 1.0
      %v4479 = vrcp.pop %v4478
      %v4480 = vmul.f32 %v4478, %v4479
      %v4481 = vsub.f32 1.0, %v4480
      %v4482 = vmul.f32 %v4479, %v4481
      %v4483 = vadd.f32 %v4479, %v4482
      %vm4484 = vweird.f32 %v4478
      %vm4485 = vweird.f32 %v4479
      %vm4486 = vmor %vm4484, %vm4485
      %v4487 = vsel %vm4486, %v4479, %v4483
      %v4488 = vand.u32 2147483647, %v4478
      %vm4489 = vcmp.eq.f32.partialorder %v4488, 8.507059e+37
      %v4490 = vand.u32 %v4478, 2147483648
      %v4491 = vor.u32 1.1754944e-38, %v4490
      %v4492 = vsel %vm4489, %v4491, %v4487
      %v4493 = vmul.f32 %v4468, %v4492
      %v4494 = vmin.f32 %v4493, 1.0
      %v4495 = vmax.f32 %v4494, -1.0
      %v4496 = vmul.f32 %v2482, %v2482
      %v4497 = vmin.f32 16.0, %v4496
      %v4498 = vmul.f32 %v4497, 2.1237322e-06
      %v4499 = vadd.f32 %v4498, 0.00028619796
      %v4500 = vmul.f32 %v4497, %v4499
      %v4501 = vadd.f32 %v4500, 0.0036580483
      %v4502 = vmul.f32 %v4497, %v4501
      %v4503 = vadd.f32 %v4502, 0.05243302
      %v4504 = vmul.f32 %v4497, %v4503
      %v4505 = vadd.f32 %v4504, 0.18741608
      %v4506 = vmul.f32 %v4497, %v4505
      %v4507 = vadd.f32 %v4506, 1.1283791
      %v4508 = vmul.f32 %v2482, %v4507
      %v4509 = vmul.f32 %v4497, 3.8918573e-05
      %v4510 = vadd.f32 %v4509, 0.001143296
      %v4511 = vmul.f32 %v4497, %v4510
      %v4512 = vadd.f32 %v4511, 0.014752088
      %v4513 = vmul.f32 %v4497, %v4512
      %v4514 = vadd.f32 %v4513, 0.112945676
      %v4515 = vmul.f32 %v4497, %v4514
      %v4516 = vadd.f32 %v4515, 0.4994258
      %v4517 = vmul.f32 %v4497, %v4516
      %v4518 = vadd.f32 %v4517, 1.0
      %v4519 = vrcp.pop %v4518
      %v4520 = vmul.f32 %v4518, %v4519
      %v4521 = vsub.f32 1.0, %v4520
      %v4522 = vmul.f32 %v4519, %v4521
      %v4523 = vadd.f32 %v4519, %v4522
      %vm4524 = vweird.f32 %v4518
      %vm4525 = vweird.f32 %v4519
      %vm4526 = vmor %vm4524, %vm4525
      %v4527 = vsel %vm4526, %v4519, %v4523
      %v4528 = vand.u32 2147483647, %v4518
      %vm4529 = vcmp.eq.f32.partialorder %v4528, 8.507059e+37
      %v4530 = vand.u32 %v4518, 2147483648
      %v4531 = vor.u32 1.1754944e-38, %v4530
      %v4532 = vsel %vm4529, %v4531, %v4527
      %v4533 = vmul.f32 %v4508, %v4532
      %v4534 = vmin.f32 %v4533, 1.0
      %v4535 = vmax.f32 %v4534, -1.0
      %v4536 = vmul.f32 %v2483, %v2483
      %v4537 = vmin.f32 16.0, %v4536
      %v4538 = vmul.f32 %v4537, 2.1237322e-06
      %v4539 = vadd.f32 %v4538, 0.00028619796
      %v4540 = vmul.f32 %v4537, %v4539
      %v4541 = vadd.f32 %v4540, 0.0036580483
      %v4542 = vmul.f32 %v4537, %v4541
      %v4543 = vadd.f32 %v4542, 0.05243302
      %v4544 = vmul.f32 %v4537, %v4543
      %v4545 = vadd.f32 %v4544, 0.18741608
      %v4546 = vmul.f32 %v4537, %v4545
      %v4547 = vadd.f32 %v4546, 1.1283791
      %v4548 = vmul.f32 %v2483, %v4547
      %v4549 = vmul.f32 %v4537, 3.8918573e-05
      %v4550 = vadd.f32 %v4549, 0.001143296
      %v4551 = vmul.f32 %v4537, %v4550
      %v4552 = vadd.f32 %v4551, 0.014752088
      %v4553 = vmul.f32 %v4537, %v4552
      %v4554 = vadd.f32 %v4553, 0.112945676
      %v4555 = vmul.f32 %v4537, %v4554
      %v4556 = vadd.f32 %v4555, 0.4994258
      %v4557 = vmul.f32 %v4537, %v4556
      %v4558 = vadd.f32 %v4557, 1.0
      %v4559 = vrcp.pop %v4558
      %v4560 = vmul.f32 %v4558, %v4559
      %v4561 = vsub.f32 1.0, %v4560
      %v4562 = vmul.f32 %v4559, %v4561
      %v4563 = vadd.f32 %v4559, %v4562
      %vm4564 = vweird.f32 %v4558
      %vm4565 = vweird.f32 %v4559
      %vm4566 = vmor %vm4564, %vm4565
      %v4567 = vsel %vm4566, %v4559, %v4563
      %v4568 = vand.u32 2147483647, %v4558
      %vm4569 = vcmp.eq.f32.partialorder %v4568, 8.507059e+37
      %v4570 = vand.u32 %v4558, 2147483648
      %v4571 = vor.u32 1.1754944e-38, %v4570
      %v4572 = vsel %vm4569, %v4571, %v4567
      %v4573 = vmul.f32 %v4548, %v4572
      %v4574 = vmin.f32 %v4573, 1.0
      %v4575 = vmax.f32 %v4574, -1.0
      %v4576 = vmul.f32 %v2484, %v2484
      %v4577 = vmin.f32 16.0, %v4576
      %v4578 = vmul.f32 %v4577, 2.1237322e-06
      %v4579 = vadd.f32 %v4578, 0.00028619796
      %v4580 = vmul.f32 %v4577, %v4579
      %v4581 = vadd.f32 %v4580, 0.0036580483
      %v4582 = vmul.f32 %v4577, %v4581
      %v4583 = vadd.f32 %v4582, 0.05243302
      %v4584 = vmul.f32 %v4577, %v4583
      %v4585 = vadd.f32 %v4584, 0.18741608
      %v4586 = vmul.f32 %v4577, %v4585
      %v4587 = vadd.f32 %v4586, 1.1283791
      %v4588 = vmul.f32 %v2484, %v4587
      %v4589 = vmul.f32 %v4577, 3.8918573e-05
      %v4590 = vadd.f32 %v4589, 0.001143296
      %v4591 = vmul.f32 %v4577, %v4590
      %v4592 = vadd.f32 %v4591, 0.014752088
      %v4593 = vmul.f32 %v4577, %v4592
      %v4594 = vadd.f32 %v4593, 0.112945676
      %v4595 = vmul.f32 %v4577, %v4594
      %v4596 = vadd.f32 %v4595, 0.4994258
      %v4597 = vmul.f32 %v4577, %v4596
      %v4598 = vadd.f32 %v4597, 1.0
      %v4599 = vrcp.pop %v4598
      %v4600 = vmul.f32 %v4598, %v4599
      %v4601 = vsub.f32 1.0, %v4600
      %v4602 = vmul.f32 %v4599, %v4601
      %v4603 = vadd.f32 %v4599, %v4602
      %vm4604 = vweird.f32 %v4598
      %vm4605 = vweird.f32 %v4599
      %vm4606 = vmor %vm4604, %vm4605
      %v4607 = vsel %vm4606, %v4599, %v4603
      %v4608 = vand.u32 2147483647, %v4598
      %vm4609 = vcmp.eq.f32.partialorder %v4608, 8.507059e+37
      %v4610 = vand.u32 %v4598, 2147483648
      %v4611 = vor.u32 1.1754944e-38, %v4610
      %v4612 = vsel %vm4609, %v4611, %v4607
      %v4613 = vmul.f32 %v4588, %v4612
      %v4614 = vmin.f32 %v4613, 1.0
      %v4615 = vmax.f32 %v4614, -1.0
      %v4616 = vmul.f32 %v2485, %v2485
      %v4617 = vmin.f32 16.0, %v4616
      %v4618 = vmul.f32 %v4617, 2.1237322e-06
      %v4619 = vadd.f32 %v4618, 0.00028619796
      %v4620 = vmul.f32 %v4617, %v4619
      %v4621 = vadd.f32 %v4620, 0.0036580483
      %v4622 = vmul.f32 %v4617, %v4621
      %v4623 = vadd.f32 %v4622, 0.05243302
      %v4624 = vmul.f32 %v4617, %v4623
      %v4625 = vadd.f32 %v4624, 0.18741608
      %v4626 = vmul.f32 %v4617, %v4625
      %v4627 = vadd.f32 %v4626, 1.1283791
      %v4628 = vmul.f32 %v2485, %v4627
      %v4629 = vmul.f32 %v4617, 3.8918573e-05
      %v4630 = vadd.f32 %v4629, 0.001143296
      %v4631 = vmul.f32 %v4617, %v4630
      %v4632 = vadd.f32 %v4631, 0.014752088
      %v4633 = vmul.f32 %v4617, %v4632
      %v4634 = vadd.f32 %v4633, 0.112945676
      %v4635 = vmul.f32 %v4617, %v4634
      %v4636 = vadd.f32 %v4635, 0.4994258
      %v4637 = vmul.f32 %v4617, %v4636
      %v4638 = vadd.f32 %v4637, 1.0
      %v4639 = vrcp.pop %v4638
      %v4640 = vmul.f32 %v4638, %v4639
      %v4641 = vsub.f32 1.0, %v4640
      %v4642 = vmul.f32 %v4639, %v4641
      %v4643 = vadd.f32 %v4639, %v4642
      %vm4644 = vweird.f32 %v4638
      %vm4645 = vweird.f32 %v4639
      %vm4646 = vmor %vm4644, %vm4645
      %v4647 = vsel %vm4646, %v4639, %v4643
      %v4648 = vand.u32 2147483647, %v4638
      %vm4649 = vcmp.eq.f32.partialorder %v4648, 8.507059e+37
      %v4650 = vand.u32 %v4638, 2147483648
      %v4651 = vor.u32 1.1754944e-38, %v4650
      %v4652 = vsel %vm4649, %v4651, %v4647
      %v4653 = vmul.f32 %v4628, %v4652
      %v4654 = vmin.f32 %v4653, 1.0
      %v4655 = vmax.f32 %v4654, -1.0
      %v4656 = vmul.f32 %v2486, %v2486
      %v4657 = vmin.f32 16.0, %v4656
      %v4658 = vmul.f32 %v4657, 2.1237322e-06
      %v4659 = vadd.f32 %v4658, 0.00028619796
      %v4660 = vmul.f32 %v4657, %v4659
      %v4661 = vadd.f32 %v4660, 0.0036580483
      %v4662 = vmul.f32 %v4657, %v4661
      %v4663 = vadd.f32 %v4662, 0.05243302
      %v4664 = vmul.f32 %v4657, %v4663
      %v4665 = vadd.f32 %v4664, 0.18741608
      %v4666 = vmul.f32 %v4657, %v4665
      %v4667 = vadd.f32 %v4666, 1.1283791
      %v4668 = vmul.f32 %v2486, %v4667
      %v4669 = vmul.f32 %v4657, 3.8918573e-05
      %v4670 = vadd.f32 %v4669, 0.001143296
      %v4671 = vmul.f32 %v4657, %v4670
      %v4672 = vadd.f32 %v4671, 0.014752088
      %v4673 = vmul.f32 %v4657, %v4672
      %v4674 = vadd.f32 %v4673, 0.112945676
      %v4675 = vmul.f32 %v4657, %v4674
      %v4676 = vadd.f32 %v4675, 0.4994258
      %v4677 = vmul.f32 %v4657, %v4676
      %v4678 = vadd.f32 %v4677, 1.0
      %v4679 = vrcp.pop %v4678
      %v4680 = vmul.f32 %v4678, %v4679
      %v4681 = vsub.f32 1.0, %v4680
      %v4682 = vmul.f32 %v4679, %v4681
      %v4683 = vadd.f32 %v4679, %v4682
      %vm4684 = vweird.f32 %v4678
      %vm4685 = vweird.f32 %v4679
      %vm4686 = vmor %vm4684, %vm4685
      %v4687 = vsel %vm4686, %v4679, %v4683
      %v4688 = vand.u32 2147483647, %v4678
      %vm4689 = vcmp.eq.f32.partialorder %v4688, 8.507059e+37
      %v4690 = vand.u32 %v4678, 2147483648
      %v4691 = vor.u32 1.1754944e-38, %v4690
      %v4692 = vsel %vm4689, %v4691, %v4687
      %v4693 = vmul.f32 %v4668, %v4692
      %v4694 = vmin.f32 %v4693, 1.0
      %v4695 = vmax.f32 %v4694, -1.0
      %v4696 = vmul.f32 %v2487, %v2487
      %v4697 = vmin.f32 16.0, %v4696
      %v4698 = vmul.f32 %v4697, 2.1237322e-06
      %v4699 = vadd.f32 %v4698, 0.00028619796
      %v4700 = vmul.f32 %v4697, %v4699
      %v4701 = vadd.f32 %v4700, 0.0036580483
      %v4702 = vmul.f32 %v4697, %v4701
      %v4703 = vadd.f32 %v4702, 0.05243302
      %v4704 = vmul.f32 %v4697, %v4703
      %v4705 = vadd.f32 %v4704, 0.18741608
      %v4706 = vmul.f32 %v4697, %v4705
      %v4707 = vadd.f32 %v4706, 1.1283791
      %v4708 = vmul.f32 %v2487, %v4707
      %v4709 = vmul.f32 %v4697, 3.8918573e-05
      %v4710 = vadd.f32 %v4709, 0.001143296
      %v4711 = vmul.f32 %v4697, %v4710
      %v4712 = vadd.f32 %v4711, 0.014752088
      %v4713 = vmul.f32 %v4697, %v4712
      %v4714 = vadd.f32 %v4713, 0.112945676
      %v4715 = vmul.f32 %v4697, %v4714
      %v4716 = vadd.f32 %v4715, 0.4994258
      %v4717 = vmul.f32 %v4697, %v4716
      %v4718 = vadd.f32 %v4717, 1.0
      %v4719 = vrcp.pop %v4718
      %v4720 = vmul.f32 %v4718, %v4719
      %v4721 = vsub.f32 1.0, %v4720
      %v4722 = vmul.f32 %v4719, %v4721
      %v4723 = vadd.f32 %v4719, %v4722
      %vm4724 = vweird.f32 %v4718
      %vm4725 = vweird.f32 %v4719
      %vm4726 = vmor %vm4724, %vm4725
      %v4727 = vsel %vm4726, %v4719, %v4723
      %v4728 = vand.u32 2147483647, %v4718
      %vm4729 = vcmp.eq.f32.partialorder %v4728, 8.507059e+37
      %v4730 = vand.u32 %v4718, 2147483648
      %v4731 = vor.u32 1.1754944e-38, %v4730
      %v4732 = vsel %vm4729, %v4731, %v4727
      %v4733 = vmul.f32 %v4708, %v4732
      %v4734 = vmin.f32 %v4733, 1.0
      %v4735 = vmax.f32 %v4734, -1.0
      %v4736 = vmul.f32 %v2488, %v2488
      %v4737 = vmin.f32 16.0, %v4736
      %v4738 = vmul.f32 %v4737, 2.1237322e-06
      %v4739 = vadd.f32 %v4738, 0.00028619796
      %v4740 = vmul.f32 %v4737, %v4739
      %v4741 = vadd.f32 %v4740, 0.0036580483
      %v4742 = vmul.f32 %v4737, %v4741
      %v4743 = vadd.f32 %v4742, 0.05243302
      %v4744 = vmul.f32 %v4737, %v4743
      %v4745 = vadd.f32 %v4744, 0.18741608
      %v4746 = vmul.f32 %v4737, %v4745
      %v4747 = vadd.f32 %v4746, 1.1283791
      %v4748 = vmul.f32 %v2488, %v4747
      %v4749 = vmul.f32 %v4737, 3.8918573e-05
      %v4750 = vadd.f32 %v4749, 0.001143296
      %v4751 = vmul.f32 %v4737, %v4750
      %v4752 = vadd.f32 %v4751, 0.014752088
      %v4753 = vmul.f32 %v4737, %v4752
      %v4754 = vadd.f32 %v4753, 0.112945676
      %v4755 = vmul.f32 %v4737, %v4754
      %v4756 = vadd.f32 %v4755, 0.4994258
      %v4757 = vmul.f32 %v4737, %v4756
      %v4758 = vadd.f32 %v4757, 1.0
      %v4759 = vrcp.pop %v4758
      %v4760 = vmul.f32 %v4758, %v4759
      %v4761 = vsub.f32 1.0, %v4760
      %v4762 = vmul.f32 %v4759, %v4761
      %v4763 = vadd.f32 %v4759, %v4762
      %vm4764 = vweird.f32 %v4758
      %vm4765 = vweird.f32 %v4759
      %vm4766 = vmor %vm4764, %vm4765
      %v4767 = vsel %vm4766, %v4759, %v4763
      %v4768 = vand.u32 2147483647, %v4758
      %vm4769 = vcmp.eq.f32.partialorder %v4768, 8.507059e+37
      %v4770 = vand.u32 %v4758, 2147483648
      %v4771 = vor.u32 1.1754944e-38, %v4770
      %v4772 = vsel %vm4769, %v4771, %v4767
      %v4773 = vmul.f32 %v4748, %v4772
      %v4774 = vmin.f32 %v4773, 1.0
      %v4775 = vmax.f32 %v4774, -1.0
      %v4776 = vmul.f32 %v2489, %v2489
      %v4777 = vmin.f32 16.0, %v4776
      %v4778 = vmul.f32 %v4777, 2.1237322e-06
      %v4779 = vadd.f32 %v4778, 0.00028619796
      %v4780 = vmul.f32 %v4777, %v4779
      %v4781 = vadd.f32 %v4780, 0.0036580483
      %v4782 = vmul.f32 %v4777, %v4781
      %v4783 = vadd.f32 %v4782, 0.05243302
      %v4784 = vmul.f32 %v4777, %v4783
      %v4785 = vadd.f32 %v4784, 0.18741608
      %v4786 = vmul.f32 %v4777, %v4785
      %v4787 = vadd.f32 %v4786, 1.1283791
      %v4788 = vmul.f32 %v2489, %v4787
      %v4789 = vmul.f32 %v4777, 3.8918573e-05
      %v4790 = vadd.f32 %v4789, 0.001143296
      %v4791 = vmul.f32 %v4777, %v4790
      %v4792 = vadd.f32 %v4791, 0.014752088
      %v4793 = vmul.f32 %v4777, %v4792
      %v4794 = vadd.f32 %v4793, 0.112945676
      %v4795 = vmul.f32 %v4777, %v4794
      %v4796 = vadd.f32 %v4795, 0.4994258
      %v4797 = vmul.f32 %v4777, %v4796
      %v4798 = vadd.f32 %v4797, 1.0
      %v4799 = vrcp.pop %v4798
      %v4800 = vmul.f32 %v4798, %v4799
      %v4801 = vsub.f32 1.0, %v4800
      %v4802 = vmul.f32 %v4799, %v4801
      %v4803 = vadd.f32 %v4799, %v4802
      %vm4804 = vweird.f32 %v4798
      %vm4805 = vweird.f32 %v4799
      %vm4806 = vmor %vm4804, %vm4805
      %v4807 = vsel %vm4806, %v4799, %v4803
      %v4808 = vand.u32 2147483647, %v4798
      %vm4809 = vcmp.eq.f32.partialorder %v4808, 8.507059e+37
      %v4810 = vand.u32 %v4798, 2147483648
      %v4811 = vor.u32 1.1754944e-38, %v4810
      %v4812 = vsel %vm4809, %v4811, %v4807
      %v4813 = vmul.f32 %v4788, %v4812
      %v4814 = vmin.f32 %v4813, 1.0
      %v4815 = vmax.f32 %v4814, -1.0
      %v4816 = vmul.f32 %v2490, %v2490
      %v4817 = vmin.f32 16.0, %v4816
      %v4818 = vmul.f32 %v4817, 2.1237322e-06
      %v4819 = vadd.f32 %v4818, 0.00028619796
      %v4820 = vmul.f32 %v4817, %v4819
      %v4821 = vadd.f32 %v4820, 0.0036580483
      %v4822 = vmul.f32 %v4817, %v4821
      %v4823 = vadd.f32 %v4822, 0.05243302
      %v4824 = vmul.f32 %v4817, %v4823
      %v4825 = vadd.f32 %v4824, 0.18741608
      %v4826 = vmul.f32 %v4817, %v4825
      %v4827 = vadd.f32 %v4826, 1.1283791
      %v4828 = vmul.f32 %v2490, %v4827
      %v4829 = vmul.f32 %v4817, 3.8918573e-05
      %v4830 = vadd.f32 %v4829, 0.001143296
      %v4831 = vmul.f32 %v4817, %v4830
      %v4832 = vadd.f32 %v4831, 0.014752088
      %v4833 = vmul.f32 %v4817, %v4832
      %v4834 = vadd.f32 %v4833, 0.112945676
      %v4835 = vmul.f32 %v4817, %v4834
      %v4836 = vadd.f32 %v4835, 0.4994258
      %v4837 = vmul.f32 %v4817, %v4836
      %v4838 = vadd.f32 %v4837, 1.0
      %v4839 = vrcp.pop %v4838
      %v4840 = vmul.f32 %v4838, %v4839
      %v4841 = vsub.f32 1.0, %v4840
      %v4842 = vmul.f32 %v4839, %v4841
      %v4843 = vadd.f32 %v4839, %v4842
      %vm4844 = vweird.f32 %v4838
      %vm4845 = vweird.f32 %v4839
      %vm4846 = vmor %vm4844, %vm4845
      %v4847 = vsel %vm4846, %v4839, %v4843
      %v4848 = vand.u32 2147483647, %v4838
      %vm4849 = vcmp.eq.f32.partialorder %v4848, 8.507059e+37
      %v4850 = vand.u32 %v4838, 2147483648
      %v4851 = vor.u32 1.1754944e-38, %v4850
      %v4852 = vsel %vm4849, %v4851, %v4847
      %v4853 = vmul.f32 %v4828, %v4852
      %v4854 = vmin.f32 %v4853, 1.0
      %v4855 = vmax.f32 %v4854, -1.0
      %v4856 = vmul.f32 %v2491, %v2491
      %v4857 = vmin.f32 16.0, %v4856
      %v4858 = vmul.f32 %v4857, 2.1237322e-06
      %v4859 = vadd.f32 %v4858, 0.00028619796
      %v4860 = vmul.f32 %v4857, %v4859
      %v4861 = vadd.f32 %v4860, 0.0036580483
      %v4862 = vmul.f32 %v4857, %v4861
      %v4863 = vadd.f32 %v4862, 0.05243302
      %v4864 = vmul.f32 %v4857, %v4863
      %v4865 = vadd.f32 %v4864, 0.18741608
      %v4866 = vmul.f32 %v4857, %v4865
      %v4867 = vadd.f32 %v4866, 1.1283791
      %v4868 = vmul.f32 %v2491, %v4867
      %v4869 = vmul.f32 %v4857, 3.8918573e-05
      %v4870 = vadd.f32 %v4869, 0.001143296
      %v4871 = vmul.f32 %v4857, %v4870
      %v4872 = vadd.f32 %v4871, 0.014752088
      %v4873 = vmul.f32 %v4857, %v4872
      %v4874 = vadd.f32 %v4873, 0.112945676
      %v4875 = vmul.f32 %v4857, %v4874
      %v4876 = vadd.f32 %v4875, 0.4994258
      %v4877 = vmul.f32 %v4857, %v4876
      %v4878 = vadd.f32 %v4877, 1.0
      %v4879 = vrcp.pop %v4878
      %v4880 = vmul.f32 %v4878, %v4879
      %v4881 = vsub.f32 1.0, %v4880
      %v4882 = vmul.f32 %v4879, %v4881
      %v4883 = vadd.f32 %v4879, %v4882
      %vm4884 = vweird.f32 %v4878
      %vm4885 = vweird.f32 %v4879
      %vm4886 = vmor %vm4884, %vm4885
      %v4887 = vsel %vm4886, %v4879, %v4883
      %v4888 = vand.u32 2147483647, %v4878
      %vm4889 = vcmp.eq.f32.partialorder %v4888, 8.507059e+37
      %v4890 = vand.u32 %v4878, 2147483648
      %v4891 = vor.u32 1.1754944e-38, %v4890
      %v4892 = vsel %vm4889, %v4891, %v4887
      %v4893 = vmul.f32 %v4868, %v4892
      %v4894 = vmin.f32 %v4893, 1.0
      %v4895 = vmax.f32 %v4894, -1.0
      %v4896 = vmul.f32 %v2492, %v2492
      %v4897 = vmin.f32 16.0, %v4896
      %v4898 = vmul.f32 %v4897, 2.1237322e-06
      %v4899 = vadd.f32 %v4898, 0.00028619796
      %v4900 = vmul.f32 %v4897, %v4899
      %v4901 = vadd.f32 %v4900, 0.0036580483
      %v4902 = vmul.f32 %v4897, %v4901
      %v4903 = vadd.f32 %v4902, 0.05243302
      %v4904 = vmul.f32 %v4897, %v4903
      %v4905 = vadd.f32 %v4904, 0.18741608
      %v4906 = vmul.f32 %v4897, %v4905
      %v4907 = vadd.f32 %v4906, 1.1283791
      %v4908 = vmul.f32 %v2492, %v4907
      %v4909 = vmul.f32 %v4897, 3.8918573e-05
      %v4910 = vadd.f32 %v4909, 0.001143296
      %v4911 = vmul.f32 %v4897, %v4910
      %v4912 = vadd.f32 %v4911, 0.014752088
      %v4913 = vmul.f32 %v4897, %v4912
      %v4914 = vadd.f32 %v4913, 0.112945676
      %v4915 = vmul.f32 %v4897, %v4914
      %v4916 = vadd.f32 %v4915, 0.4994258
      %v4917 = vmul.f32 %v4897, %v4916
      %v4918 = vadd.f32 %v4917, 1.0
      %v4919 = vrcp.pop %v4918
      %v4920 = vmul.f32 %v4918, %v4919
      %v4921 = vsub.f32 1.0, %v4920
      %v4922 = vmul.f32 %v4919, %v4921
      %v4923 = vadd.f32 %v4919, %v4922
      %vm4924 = vweird.f32 %v4918
      %vm4925 = vweird.f32 %v4919
      %vm4926 = vmor %vm4924, %vm4925
      %v4927 = vsel %vm4926, %v4919, %v4923
      %v4928 = vand.u32 2147483647, %v4918
      %vm4929 = vcmp.eq.f32.partialorder %v4928, 8.507059e+37
      %v4930 = vand.u32 %v4918, 2147483648
      %v4931 = vor.u32 1.1754944e-38, %v4930
      %v4932 = vsel %vm4929, %v4931, %v4927
      %v4933 = vmul.f32 %v4908, %v4932
      %v4934 = vmin.f32 %v4933, 1.0
      %v4935 = vmax.f32 %v4934, -1.0
      %v4936 = vmul.f32 %v2493, %v2493
      %v4937 = vmin.f32 16.0, %v4936
      %v4938 = vmul.f32 %v4937, 2.1237322e-06
      %v4939 = vadd.f32 %v4938, 0.00028619796
      %v4940 = vmul.f32 %v4937, %v4939
      %v4941 = vadd.f32 %v4940, 0.0036580483
      %v4942 = vmul.f32 %v4937, %v4941
      %v4943 = vadd.f32 %v4942, 0.05243302
      %v4944 = vmul.f32 %v4937, %v4943
      %v4945 = vadd.f32 %v4944, 0.18741608
      %v4946 = vmul.f32 %v4937, %v4945
      %v4947 = vadd.f32 %v4946, 1.1283791
      %v4948 = vmul.f32 %v2493, %v4947
      %v4949 = vmul.f32 %v4937, 3.8918573e-05
      %v4950 = vadd.f32 %v4949, 0.001143296
      %v4951 = vmul.f32 %v4937, %v4950
      %v4952 = vadd.f32 %v4951, 0.014752088
      %v4953 = vmul.f32 %v4937, %v4952
      %v4954 = vadd.f32 %v4953, 0.112945676
      %v4955 = vmul.f32 %v4937, %v4954
      %v4956 = vadd.f32 %v4955, 0.4994258
      %v4957 = vmul.f32 %v4937, %v4956
      %v4958 = vadd.f32 %v4957, 1.0
      %v4959 = vrcp.pop %v4958
      %v4960 = vmul.f32 %v4958, %v4959
      %v4961 = vsub.f32 1.0, %v4960
      %v4962 = vmul.f32 %v4959, %v4961
      %v4963 = vadd.f32 %v4959, %v4962
      %vm4964 = vweird.f32 %v4958
      %vm4965 = vweird.f32 %v4959
      %vm4966 = vmor %vm4964, %vm4965
      %v4967 = vsel %vm4966, %v4959, %v4963
      %v4968 = vand.u32 2147483647, %v4958
      %vm4969 = vcmp.eq.f32.partialorder %v4968, 8.507059e+37
      %v4970 = vand.u32 %v4958, 2147483648
      %v4971 = vor.u32 1.1754944e-38, %v4970
      %v4972 = vsel %vm4969, %v4971, %v4967
      %v4973 = vmul.f32 %v4948, %v4972
      %v4974 = vmin.f32 %v4973, 1.0
      %v4975 = vmax.f32 %v4974, -1.0
      %v4976 = vmul.f32 %v2494, %v2494
      %v4977 = vmin.f32 16.0, %v4976
      %v4978 = vmul.f32 %v4977, 2.1237322e-06
      %v4979 = vadd.f32 %v4978, 0.00028619796
      %v4980 = vmul.f32 %v4977, %v4979
      %v4981 = vadd.f32 %v4980, 0.0036580483
      %v4982 = vmul.f32 %v4977, %v4981
      %v4983 = vadd.f32 %v4982, 0.05243302
      %v4984 = vmul.f32 %v4977, %v4983
      %v4985 = vadd.f32 %v4984, 0.18741608
      %v4986 = vmul.f32 %v4977, %v4985
      %v4987 = vadd.f32 %v4986, 1.1283791
      %v4988 = vmul.f32 %v2494, %v4987
      %v4989 = vmul.f32 %v4977, 3.8918573e-05
      %v4990 = vadd.f32 %v4989, 0.001143296
      %v4991 = vmul.f32 %v4977, %v4990
      %v4992 = vadd.f32 %v4991, 0.014752088
      %v4993 = vmul.f32 %v4977, %v4992
      %v4994 = vadd.f32 %v4993, 0.112945676
      %v4995 = vmul.f32 %v4977, %v4994
      %v4996 = vadd.f32 %v4995, 0.4994258
      %v4997 = vmul.f32 %v4977, %v4996
      %v4998 = vadd.f32 %v4997, 1.0
      %v4999 = vrcp.pop %v4998
      %v5000 = vmul.f32 %v4998, %v4999
      %v5001 = vsub.f32 1.0, %v5000
      %v5002 = vmul.f32 %v4999, %v5001
      %v5003 = vadd.f32 %v4999, %v5002
      %vm5004 = vweird.f32 %v4998
      %vm5005 = vweird.f32 %v4999
      %vm5006 = vmor %vm5004, %vm5005
      %v5007 = vsel %vm5006, %v4999, %v5003
      %v5008 = vand.u32 2147483647, %v4998
      %vm5009 = vcmp.eq.f32.partialorder %v5008, 8.507059e+37
      %v5010 = vand.u32 %v4998, 2147483648
      %v5011 = vor.u32 1.1754944e-38, %v5010
      %v5012 = vsel %vm5009, %v5011, %v5007
      %v5013 = vmul.f32 %v4988, %v5012
      %v5014 = vmin.f32 %v5013, 1.0
      %v5015 = vmax.f32 %v5014, -1.0
      %v5016 = vmul.f32 %v2495, %v2495
      %v5017 = vmin.f32 16.0, %v5016
      %v5018 = vmul.f32 %v5017, 2.1237322e-06
      %v5019 = vadd.f32 %v5018, 0.00028619796
      %v5020 = vmul.f32 %v5017, %v5019
      %v5021 = vadd.f32 %v5020, 0.0036580483
      %v5022 = vmul.f32 %v5017, %v5021
      %v5023 = vadd.f32 %v5022, 0.05243302
      %v5024 = vmul.f32 %v5017, %v5023
      %v5025 = vadd.f32 %v5024, 0.18741608
      %v5026 = vmul.f32 %v5017, %v5025
      %v5027 = vadd.f32 %v5026, 1.1283791
      %v5028 = vmul.f32 %v2495, %v5027
      %v5029 = vmul.f32 %v5017, 3.8918573e-05
      %v5030 = vadd.f32 %v5029, 0.001143296
      %v5031 = vmul.f32 %v5017, %v5030
      %v5032 = vadd.f32 %v5031, 0.014752088
      %v5033 = vmul.f32 %v5017, %v5032
      %v5034 = vadd.f32 %v5033, 0.112945676
      %v5035 = vmul.f32 %v5017, %v5034
      %v5036 = vadd.f32 %v5035, 0.4994258
      %v5037 = vmul.f32 %v5017, %v5036
      %v5038 = vadd.f32 %v5037, 1.0
      %v5039 = vrcp.pop %v5038
      %v5040 = vmul.f32 %v5038, %v5039
      %v5041 = vsub.f32 1.0, %v5040
      %v5042 = vmul.f32 %v5039, %v5041
      %v5043 = vadd.f32 %v5039, %v5042
      %vm5044 = vweird.f32 %v5038
      %vm5045 = vweird.f32 %v5039
      %vm5046 = vmor %vm5044, %vm5045
      %v5047 = vsel %vm5046, %v5039, %v5043
      %v5048 = vand.u32 2147483647, %v5038
      %vm5049 = vcmp.eq.f32.partialorder %v5048, 8.507059e+37
      %v5050 = vand.u32 %v5038, 2147483648
      %v5051 = vor.u32 1.1754944e-38, %v5050
      %v5052 = vsel %vm5049, %v5051, %v5047
      %v5053 = vmul.f32 %v5028, %v5052
      %v5054 = vmin.f32 %v5053, 1.0
      %v5055 = vmax.f32 %v5054, -1.0
      %v5056 = vadd.f32 %v2535, 1.0
      %v5057 = vadd.f32 %v2575, 1.0
      %v5058 = vadd.f32 %v2615, 1.0
      %v5059 = vadd.f32 %v2655, 1.0
      %v5060 = vadd.f32 %v2695, 1.0
      %v5061 = vadd.f32 %v2735, 1.0
      %v5062 = vadd.f32 %v2775, 1.0
      %v5063 = vadd.f32 %v2815, 1.0
      %v5064 = vadd.f32 %v2855, 1.0
      %v5065 = vadd.f32 %v2895, 1.0
      %v5066 = vadd.f32 %v2935, 1.0
      %v5067 = vadd.f32 %v2975, 1.0
      %v5068 = vadd.f32 %v3015, 1.0
      %v5069 = vadd.f32 %v3055, 1.0
      %v5070 = vadd.f32 %v3095, 1.0
      %v5071 = vadd.f32 %v3135, 1.0
      %v5072 = vadd.f32 %v3175, 1.0
      %v5073 = vadd.f32 %v3215, 1.0
      %v5074 = vadd.f32 %v3255, 1.0
      %v5075 = vadd.f32 %v3295, 1.0
      %v5076 = vadd.f32 %v3335, 1.0
      %v5077 = vadd.f32 %v3375, 1.0
      %v5078 = vadd.f32 %v3415, 1.0
      %v5079 = vadd.f32 %v3455, 1.0
      %v5080 = vadd.f32 %v3495, 1.0
      %v5081 = vadd.f32 %v3535, 1.0
      %v5082 = vadd.f32 %v3575, 1.0
      %v5083 = vadd.f32 %v3615, 1.0
      %v5084 = vadd.f32 %v3655, 1.0
      %v5085 = vadd.f32 %v3695, 1.0
      %v5086 = vadd.f32 %v3735, 1.0
      %v5087 = vadd.f32 %v3775, 1.0
      %v5088 = vadd.f32 %v3815, 1.0
      %v5089 = vadd.f32 %v3855, 1.0
      %v5090 = vadd.f32 %v3895, 1.0
      %v5091 = vadd.f32 %v3935, 1.0
      %v5092 = vadd.f32 %v3975, 1.0
      %v5093 = vadd.f32 %v4015, 1.0
      %v5094 = vadd.f32 %v4055, 1.0
      %v5095 = vadd.f32 %v4095, 1.0
      %v5096 = vadd.f32 %v4135, 1.0
      %v5097 = vadd.f32 %v4175, 1.0
      %v5098 = vadd.f32 %v4215, 1.0
      %v5099 = vadd.f32 %v4255, 1.0
      %v5100 = vadd.f32 %v4295, 1.0
      %v5101 = vadd.f32 %v4335, 1.0
      %v5102 = vadd.f32 %v4375, 1.0
      %v5103 = vadd.f32 %v4415, 1.0
      %v5104 = vadd.f32 %v4455, 1.0
      %v5105 = vadd.f32 %v4495, 1.0
      %v5106 = vadd.f32 %v4535, 1.0
      %v5107 = vadd.f32 %v4575, 1.0
      %v5108 = vadd.f32 %v4615, 1.0
      %v5109 = vadd.f32 %v4655, 1.0
      %v5110 = vadd.f32 %v4695, 1.0
      %v5111 = vadd.f32 %v4735, 1.0
      %v5112 = vadd.f32 %v4775, 1.0
      %v5113 = vadd.f32 %v4815, 1.0
      %v5114 = vadd.f32 %v4855, 1.0
      %v5115 = vadd.f32 %v4895, 1.0
      %v5116 = vadd.f32 %v4935, 1.0
      %v5117 = vadd.f32 %v4975, 1.0
      %v5118 = vadd.f32 %v5015, 1.0
      %v5119 = vadd.f32 %v5055, 1.0
      %v5120 = vmul.f32 %v2368, %v5056
      %v5121 = vmul.f32 %v2369, %v5057
      %v5122 = vmul.f32 %v2370, %v5058
      %v5123 = vmul.f32 %v2371, %v5059
      %v5124 = vmul.f32 %v2372, %v5060
      %v5125 = vmul.f32 %v2373, %v5061
      %v5126 = vmul.f32 %v2374, %v5062
      %v5127 = vmul.f32 %v2375, %v5063
      %v5128 = vmul.f32 %v2376, %v5064
      %v5129 = vmul.f32 %v2377, %v5065
      %v5130 = vmul.f32 %v2378, %v5066
      %v5131 = vmul.f32 %v2379, %v5067
      %v5132 = vmul.f32 %v2380, %v5068
      %v5133 = vmul.f32 %v2381, %v5069
      %v5134 = vmul.f32 %v2382, %v5070
      %v5135 = vmul.f32 %v2383, %v5071
      %v5136 = vmul.f32 %v2384, %v5072
      %v5137 = vmul.f32 %v2385, %v5073
      %v5138 = vmul.f32 %v2386, %v5074
      %v5139 = vmul.f32 %v2387, %v5075
      %v5140 = vmul.f32 %v2388, %v5076
      %v5141 = vmul.f32 %v2389, %v5077
      %v5142 = vmul.f32 %v2390, %v5078
      %v5143 = vmul.f32 %v2391, %v5079
      %v5144 = vmul.f32 %v2392, %v5080
      %v5145 = vmul.f32 %v2393, %v5081
      %v5146 = vmul.f32 %v2394, %v5082
      %v5147 = vmul.f32 %v2395, %v5083
      %v5148 = vmul.f32 %v2396, %v5084
      %v5149 = vmul.f32 %v2397, %v5085
      %v5150 = vmul.f32 %v2398, %v5086
      %v5151 = vmul.f32 %v2399, %v5087
      %v5152 = vmul.f32 %v2400, %v5088
      %v5153 = vmul.f32 %v2401, %v5089
      %v5154 = vmul.f32 %v2402, %v5090
      %v5155 = vmul.f32 %v2403, %v5091
      %v5156 = vmul.f32 %v2404, %v5092
      %v5157 = vmul.f32 %v2405, %v5093
      %v5158 = vmul.f32 %v2406, %v5094
      %v5159 = vmul.f32 %v2407, %v5095
      %v5160 = vmul.f32 %v2408, %v5096
      %v5161 = vmul.f32 %v2409, %v5097
      %v5162 = vmul.f32 %v2410, %v5098
      %v5163 = vmul.f32 %v2411, %v5099
      %v5164 = vmul.f32 %v2412, %v5100
      %v5165 = vmul.f32 %v2413, %v5101
      %v5166 = vmul.f32 %v2414, %v5102
      %v5167 = vmul.f32 %v2415, %v5103
      %v5168 = vmul.f32 %v2416, %v5104
      %v5169 = vmul.f32 %v2417, %v5105
      %v5170 = vmul.f32 %v2418, %v5106
      %v5171 = vmul.f32 %v2419, %v5107
      %v5172 = vmul.f32 %v2420, %v5108
      %v5173 = vmul.f32 %v2421, %v5109
      %v5174 = vmul.f32 %v2422, %v5110
      %v5175 = vmul.f32 %v2423, %v5111
      %v5176 = vmul.f32 %v2424, %v5112
      %v5177 = vmul.f32 %v2425, %v5113
      %v5178 = vmul.f32 %v2426, %v5114
      %v5179 = vmul.f32 %v2427, %v5115
      %v5180 = vmul.f32 %v2428, %v5116
      %v5181 = vmul.f32 %v2429, %v5117
      %v5182 = vmul.f32 %v2430, %v5118
      %v5183 = vmul.f32 %v2431, %v5119
      %v5184 = vpack.c.bf16 %v5121, %v5120
      %v5185 = vpack.c.bf16 %v5123, %v5122
      %v5186 = vpack.c.bf16 %v5125, %v5124
      %v5187 = vpack.c.bf16 %v5127, %v5126
      %v5188 = vpack.c.bf16 %v5129, %v5128
      %v5189 = vpack.c.bf16 %v5131, %v5130
      %v5190 = vpack.c.bf16 %v5133, %v5132
      %v5191 = vpack.c.bf16 %v5135, %v5134
      %v5192 = vpack.c.bf16 %v5137, %v5136
      %v5193 = vpack.c.bf16 %v5139, %v5138
      %v5194 = vpack.c.bf16 %v5141, %v5140
      %v5195 = vpack.c.bf16 %v5143, %v5142
      %v5196 = vpack.c.bf16 %v5145, %v5144
      %v5197 = vpack.c.bf16 %v5147, %v5146
      %v5198 = vpack.c.bf16 %v5149, %v5148
      %v5199 = vpack.c.bf16 %v5151, %v5150
      %v5200 = vpack.c.bf16 %v5153, %v5152
      %v5201 = vpack.c.bf16 %v5155, %v5154
      %v5202 = vpack.c.bf16 %v5157, %v5156
      %v5203 = vpack.c.bf16 %v5159, %v5158
      %v5204 = vpack.c.bf16 %v5161, %v5160
      %v5205 = vpack.c.bf16 %v5163, %v5162
      %v5206 = vpack.c.bf16 %v5165, %v5164
      %v5207 = vpack.c.bf16 %v5167, %v5166
      %v5208 = vpack.c.bf16 %v5169, %v5168
      %v5209 = vpack.c.bf16 %v5171, %v5170
      %v5210 = vpack.c.bf16 %v5173, %v5172
      %v5211 = vpack.c.bf16 %v5175, %v5174
      %v5212 = vpack.c.bf16 %v5177, %v5176
      %v5213 = vpack.c.bf16 %v5179, %v5178
      %v5214 = vpack.c.bf16 %v5181, %v5180
      %v5215 = vpack.c.bf16 %v5183, %v5182
      %v5216 = vld [vmem:[%s5] sm:$0xf]
      %v5217 = vld [vmem:[%s5 + $0x4] sm:$0xf]
      %v5218 = vld [vmem:[%s5 + $0x8] sm:$0xf]
      %v5219 = vld [vmem:[%s5 + $0xc] sm:$0xf]
      %v5220 = vld [vmem:[%s5 + $0x10] sm:$0xf]
      %v5221 = vld [vmem:[%s5 + $0x14] sm:$0xf]
      %v5222 = vld [vmem:[%s5 + $0x18] sm:$0xf]
      %v5223 = vld [vmem:[%s5 + $0x1c] sm:$0xf]
      %v5224 = vld [vmem:[%s5 + $0x20] sm:$0xf]
      %v5225 = vld [vmem:[%s5 + $0x24] sm:$0xf]
      %v5226 = vld [vmem:[%s5 + $0x28] sm:$0xf]
      %v5227 = vld [vmem:[%s5 + $0x2c] sm:$0xf]
      %v5228 = vld [vmem:[%s5 + $0x30] sm:$0xf]
      %v5229 = vld [vmem:[%s5 + $0x34] sm:$0xf]
      %v5230 = vld [vmem:[%s5 + $0x38] sm:$0xf]
      %v5231 = vld [vmem:[%s5 + $0x3c] sm:$0xf]
      %v5232 = vld [vmem:[%s6] sm:$0x1]
      %v5234 = vperm.slane %v5232, 0
      %v5252 = vunpack.c.l.b16 %v5216
      %v5253 = vunpack.c.l.b16 %v5217
      %v5254 = vunpack.c.l.b16 %v5218
      %v5255 = vunpack.c.l.b16 %v5219
      %v5256 = vunpack.c.l.b16 %v5220
      %v5257 = vunpack.c.l.b16 %v5221
      %v5258 = vunpack.c.l.b16 %v5222
      %v5259 = vunpack.c.l.b16 %v5223
      %v5260 = vunpack.c.l.b16 %v5224
      %v5261 = vunpack.c.l.b16 %v5225
      %v5262 = vunpack.c.l.b16 %v5226
      %v5263 = vunpack.c.l.b16 %v5227
      %v5264 = vunpack.c.l.b16 %v5228
      %v5265 = vunpack.c.l.b16 %v5229
      %v5266 = vunpack.c.l.b16 %v5230
      %v5267 = vunpack.c.l.b16 %v5231
      %v5268 = vpack.c.b16 %v5253, %v5252
      %v5269 = vpack.c.b16 %v5255, %v5254
      %v5270 = vpack.c.b16 %v5257, %v5256
      %v5271 = vpack.c.b16 %v5259, %v5258
      %v5272 = vpack.c.b16 %v5261, %v5260
      %v5273 = vpack.c.b16 %v5263, %v5262
      %v5274 = vpack.c.b16 %v5265, %v5264
      %v5275 = vpack.c.b16 %v5267, %v5266
      %5284 = vmatpush.bf16.msra.mxu0 %v5275
      %5285 = vmatpush.bf16.msra.mxu0 %v5274
      %5286 = vmatpush.bf16.msra.mxu0 %v5273
      %5287 = vmatpush.bf16.msra.mxu0 %v5272
      %5288 = vmatpush.bf16.msra.mxu0 %v5271
      %5289 = vmatpush.bf16.msra.mxu0 %v5270
      %5290 = vmatpush.bf16.msra.mxu0 %v5269
      %5291 = vmatpush.bf16.msra.mxu0 %v5268
      %5292 = vmatmul.bf16.gmra.mxu0 %v5184
      %v5293 = vpop.f32.mrf.mxu0
      %v5294 = vadd.f32 %v5234, %v5293
      %v5295 = vpop.f32.mrf.mxu0
      %v5296 = vadd.f32 %v5234, %v5295
      %5297 = vmatmul.bf16.gmra.mxu0 %v5185
      %v5298 = vpop.f32.mrf.mxu0
      %v5299 = vadd.f32 %v5234, %v5298
      %v5300 = vpop.f32.mrf.mxu0
      %v5301 = vadd.f32 %v5234, %v5300
      %5302 = vmatmul.bf16.gmra.mxu0 %v5186
      %v5303 = vpop.f32.mrf.mxu0
      %v5304 = vadd.f32 %v5234, %v5303
      %v5305 = vpop.f32.mrf.mxu0
      %v5306 = vadd.f32 %v5234, %v5305
      %5307 = vmatmul.bf16.gmra.mxu0 %v5187
      %v5308 = vpop.f32.mrf.mxu0
      %v5309 = vadd.f32 %v5234, %v5308
      %v5310 = vpop.f32.mrf.mxu0
      %v5311 = vadd.f32 %v5234, %v5310
      %5312 = vmatmul.bf16.gmra.mxu0 %v5188
      %v5313 = vpop.f32.mrf.mxu0
      %v5314 = vadd.f32 %v5234, %v5313
      %v5315 = vpop.f32.mrf.mxu0
      %v5316 = vadd.f32 %v5234, %v5315
      %5317 = vmatmul.bf16.gmra.mxu0 %v5189
      %v5318 = vpop.f32.mrf.mxu0
      %v5319 = vadd.f32 %v5234, %v5318
      %v5320 = vpop.f32.mrf.mxu0
      %v5321 = vadd.f32 %v5234, %v5320
      %5322 = vmatmul.bf16.gmra.mxu0 %v5190
      %v5323 = vpop.f32.mrf.mxu0
      %v5324 = vadd.f32 %v5234, %v5323
      %v5325 = vpop.f32.mrf.mxu0
      %v5326 = vadd.f32 %v5234, %v5325
      %5327 = vmatmul.bf16.gmra.mxu0 %v5191
      %v5328 = vpop.f32.mrf.mxu0
      %v5329 = vadd.f32 %v5234, %v5328
      %v5330 = vpop.f32.mrf.mxu0
      %v5331 = vadd.f32 %v5234, %v5330
      %5332 = vmatmul.bf16.gmra.mxu0 %v5192
      %v5333 = vpop.f32.mrf.mxu0
      %v5334 = vadd.f32 %v5234, %v5333
      %v5335 = vpop.f32.mrf.mxu0
      %v5336 = vadd.f32 %v5234, %v5335
      %5337 = vmatmul.bf16.gmra.mxu0 %v5193
      %v5338 = vpop.f32.mrf.mxu0
      %v5339 = vadd.f32 %v5234, %v5338
      %v5340 = vpop.f32.mrf.mxu0
      %v5341 = vadd.f32 %v5234, %v5340
      %5342 = vmatmul.bf16.gmra.mxu0 %v5194
      %v5343 = vpop.f32.mrf.mxu0
      %v5344 = vadd.f32 %v5234, %v5343
      %v5345 = vpop.f32.mrf.mxu0
      %v5346 = vadd.f32 %v5234, %v5345
      %5347 = vmatmul.bf16.gmra.mxu0 %v5195
      %v5348 = vpop.f32.mrf.mxu0
      %v5349 = vadd.f32 %v5234, %v5348
      %v5350 = vpop.f32.mrf.mxu0
      %v5351 = vadd.f32 %v5234, %v5350
      %5352 = vmatmul.bf16.gmra.mxu0 %v5196
      %v5353 = vpop.f32.mrf.mxu0
      %v5354 = vadd.f32 %v5234, %v5353
      %v5355 = vpop.f32.mrf.mxu0
      %v5356 = vadd.f32 %v5234, %v5355
      %5357 = vmatmul.bf16.gmra.mxu0 %v5197
      %v5358 = vpop.f32.mrf.mxu0
      %v5359 = vadd.f32 %v5234, %v5358
      %v5360 = vpop.f32.mrf.mxu0
      %v5361 = vadd.f32 %v5234, %v5360
      %5362 = vmatmul.bf16.gmra.mxu0 %v5198
      %v5363 = vpop.f32.mrf.mxu0
      %v5364 = vadd.f32 %v5234, %v5363
      %v5365 = vpop.f32.mrf.mxu0
      %v5366 = vadd.f32 %v5234, %v5365
      %5367 = vmatmul.bf16.gmra.mxu0 %v5199
      %v5368 = vpop.f32.mrf.mxu0
      %v5369 = vadd.f32 %v5234, %v5368
      %v5370 = vpop.f32.mrf.mxu0
      %v5371 = vadd.f32 %v5234, %v5370
      %5372 = vmatmul.bf16.gmra.mxu0 %v5200
      %v5373 = vpop.f32.mrf.mxu0
      %v5374 = vadd.f32 %v5234, %v5373
      %v5375 = vpop.f32.mrf.mxu0
      %v5376 = vadd.f32 %v5234, %v5375
      %5377 = vmatmul.bf16.gmra.mxu0 %v5201
      %v5378 = vpop.f32.mrf.mxu0
      %v5379 = vadd.f32 %v5234, %v5378
      %v5380 = vpop.f32.mrf.mxu0
      %v5381 = vadd.f32 %v5234, %v5380
      %5382 = vmatmul.bf16.gmra.mxu0 %v5202
      %v5383 = vpop.f32.mrf.mxu0
      %v5384 = vadd.f32 %v5234, %v5383
      %v5385 = vpop.f32.mrf.mxu0
      %v5386 = vadd.f32 %v5234, %v5385
      %5387 = vmatmul.bf16.gmra.mxu0 %v5203
      %v5388 = vpop.f32.mrf.mxu0
      %v5389 = vadd.f32 %v5234, %v5388
      %v5390 = vpop.f32.mrf.mxu0
      %v5391 = vadd.f32 %v5234, %v5390
      %5392 = vmatmul.bf16.gmra.mxu0 %v5204
      %v5393 = vpop.f32.mrf.mxu0
      %v5394 = vadd.f32 %v5234, %v5393
      %v5395 = vpop.f32.mrf.mxu0
      %v5396 = vadd.f32 %v5234, %v5395
      %5397 = vmatmul.bf16.gmra.mxu0 %v5205
      %v5398 = vpop.f32.mrf.mxu0
      %v5399 = vadd.f32 %v5234, %v5398
      %v5400 = vpop.f32.mrf.mxu0
      %v5401 = vadd.f32 %v5234, %v5400
      %5402 = vmatmul.bf16.gmra.mxu0 %v5206
      %v5403 = vpop.f32.mrf.mxu0
      %v5404 = vadd.f32 %v5234, %v5403
      %v5405 = vpop.f32.mrf.mxu0
      %v5406 = vadd.f32 %v5234, %v5405
      %5407 = vmatmul.bf16.gmra.mxu0 %v5207
      %v5408 = vpop.f32.mrf.mxu0
      %v5409 = vadd.f32 %v5234, %v5408
      %v5410 = vpop.f32.mrf.mxu0
      %v5411 = vadd.f32 %v5234, %v5410
      %5412 = vmatmul.bf16.gmra.mxu0 %v5208
      %v5413 = vpop.f32.mrf.mxu0
      %v5414 = vadd.f32 %v5234, %v5413
      %v5415 = vpop.f32.mrf.mxu0
      %v5416 = vadd.f32 %v5234, %v5415
      %5417 = vmatmul.bf16.gmra.mxu0 %v5209
      %v5418 = vpop.f32.mrf.mxu0
      %v5419 = vadd.f32 %v5234, %v5418
      %v5420 = vpop.f32.mrf.mxu0
      %v5421 = vadd.f32 %v5234, %v5420
      %5422 = vmatmul.bf16.gmra.mxu0 %v5210
      %v5423 = vpop.f32.mrf.mxu0
      %v5424 = vadd.f32 %v5234, %v5423
      %v5425 = vpop.f32.mrf.mxu0
      %v5426 = vadd.f32 %v5234, %v5425
      %5427 = vmatmul.bf16.gmra.mxu0 %v5211
      %v5428 = vpop.f32.mrf.mxu0
      %v5429 = vadd.f32 %v5234, %v5428
      %v5430 = vpop.f32.mrf.mxu0
      %v5431 = vadd.f32 %v5234, %v5430
      %5432 = vmatmul.bf16.gmra.mxu0 %v5212
      %v5433 = vpop.f32.mrf.mxu0
      %v5434 = vadd.f32 %v5234, %v5433
      %v5435 = vpop.f32.mrf.mxu0
      %v5436 = vadd.f32 %v5234, %v5435
      %5437 = vmatmul.bf16.gmra.mxu0 %v5213
      %v5438 = vpop.f32.mrf.mxu0
      %v5439 = vadd.f32 %v5234, %v5438
      %v5440 = vpop.f32.mrf.mxu0
      %v5441 = vadd.f32 %v5234, %v5440
      %5442 = vmatmul.bf16.gmra.mxu0 %v5214
      %v5443 = vpop.f32.mrf.mxu0
      %v5444 = vadd.f32 %v5234, %v5443
      %v5445 = vpop.f32.mrf.mxu0
      %v5446 = vadd.f32 %v5234, %v5445
      %5447 = vmatmul.bf16.gmra.mxu0 %v5215
      %v5448 = vpop.f32.mrf.mxu0
      %v5449 = vadd.f32 %v5234, %v5448
      %v5450 = vpop.f32.mrf.mxu0
      %v5451 = vadd.f32 %v5234, %v5450
      %5452 = vdwg.mxu0
      %vm5453 = vcmask 64512
      %5454 = vst.msk [vmem:[%s322] sm:$0xff] %vm5453, %v5294
      %5455 = vst.msk [vmem:[%s322 + $0x8] sm:$0xff] %vm5453, %v5296
      %5456 = vst.msk [vmem:[%s322 + $0x10] sm:$0xff] %vm5453, %v5299
      %5457 = vst.msk [vmem:[%s322 + $0x18] sm:$0xff] %vm5453, %v5301
      %5458 = vst.msk [vmem:[%s322 + $0x20] sm:$0xff] %vm5453, %v5304
      %5459 = vst.msk [vmem:[%s322 + $0x28] sm:$0xff] %vm5453, %v5306
      %5460 = vst.msk [vmem:[%s322 + $0x30] sm:$0xff] %vm5453, %v5309
      %5461 = vst.msk [vmem:[%s322 + $0x38] sm:$0xff] %vm5453, %v5311
      %5462 = vst.msk [vmem:[%s322 + $0x40] sm:$0xff] %vm5453, %v5314
      %5463 = vst.msk [vmem:[%s322 + $0x48] sm:$0xff] %vm5453, %v5316
      %5464 = vst.msk [vmem:[%s322 + $0x50] sm:$0xff] %vm5453, %v5319
      %5465 = vst.msk [vmem:[%s322 + $0x58] sm:$0xff] %vm5453, %v5321
      %5466 = vst.msk [vmem:[%s322 + $0x60] sm:$0xff] %vm5453, %v5324
      %5467 = vst.msk [vmem:[%s322 + $0x68] sm:$0xff] %vm5453, %v5326
      %5468 = vst.msk [vmem:[%s322 + $0x70] sm:$0xff] %vm5453, %v5329
      %5469 = vst.msk [vmem:[%s322 + $0x78] sm:$0xff] %vm5453, %v5331
      %5470 = vst.msk [vmem:[%s322 + $0x80] sm:$0xff] %vm5453, %v5334
      %5471 = vst.msk [vmem:[%s322 + $0x88] sm:$0xff] %vm5453, %v5336
      %5472 = vst.msk [vmem:[%s322 + $0x90] sm:$0xff] %vm5453, %v5339
      %5473 = vst.msk [vmem:[%s322 + $0x98] sm:$0xff] %vm5453, %v5341
      %5474 = vst.msk [vmem:[%s322 + $0xa0] sm:$0xff] %vm5453, %v5344
      %5475 = vst.msk [vmem:[%s322 + $0xa8] sm:$0xff] %vm5453, %v5346
      %5476 = vst.msk [vmem:[%s322 + $0xb0] sm:$0xff] %vm5453, %v5349
      %5477 = vst.msk [vmem:[%s322 + $0xb8] sm:$0xff] %vm5453, %v5351
      %5478 = vst.msk [vmem:[%s322 + $0xc0] sm:$0xff] %vm5453, %v5354
      %5479 = vst.msk [vmem:[%s322 + $0xc8] sm:$0xff] %vm5453, %v5356
      %5480 = vst.msk [vmem:[%s322 + $0xd0] sm:$0xff] %vm5453, %v5359
      %5481 = vst.msk [vmem:[%s322 + $0xd8] sm:$0xff] %vm5453, %v5361
      %5482 = vst.msk [vmem:[%s322 + $0xe0] sm:$0xff] %vm5453, %v5364
      %5483 = vst.msk [vmem:[%s322 + $0xe8] sm:$0xff] %vm5453, %v5366
      %5484 = vst.msk [vmem:[%s322 + $0xf0] sm:$0xff] %vm5453, %v5369
      %5485 = vst.msk [vmem:[%s322 + $0xf8] sm:$0xff] %vm5453, %v5371
      %5486 = vst.msk [vmem:[%s322 + $0x100] sm:$0xff] %vm5453, %v5374
      %5487 = vst.msk [vmem:[%s322 + $0x108] sm:$0xff] %vm5453, %v5376
      %5488 = vst.msk [vmem:[%s322 + $0x110] sm:$0xff] %vm5453, %v5379
      %5489 = vst.msk [vmem:[%s322 + $0x118] sm:$0xff] %vm5453, %v5381
      %5490 = vst.msk [vmem:[%s322 + $0x120] sm:$0xff] %vm5453, %v5384
      %5491 = vst.msk [vmem:[%s322 + $0x128] sm:$0xff] %vm5453, %v5386
      %5492 = vst.msk [vmem:[%s322 + $0x130] sm:$0xff] %vm5453, %v5389
      %5493 = vst.msk [vmem:[%s322 + $0x138] sm:$0xff] %vm5453, %v5391
      %5494 = vst.msk [vmem:[%s322 + $0x140] sm:$0xff] %vm5453, %v5394
      %5495 = vst.msk [vmem:[%s322 + $0x148] sm:$0xff] %vm5453, %v5396
      %5496 = vst.msk [vmem:[%s322 + $0x150] sm:$0xff] %vm5453, %v5399
      %5497 = vst.msk [vmem:[%s322 + $0x158] sm:$0xff] %vm5453, %v5401
      %5498 = vst.msk [vmem:[%s322 + $0x160] sm:$0xff] %vm5453, %v5404
      %5499 = vst.msk [vmem:[%s322 + $0x168] sm:$0xff] %vm5453, %v5406
      %5500 = vst.msk [vmem:[%s322 + $0x170] sm:$0xff] %vm5453, %v5409
      %5501 = vst.msk [vmem:[%s322 + $0x178] sm:$0xff] %vm5453, %v5411
      %5502 = vst.msk [vmem:[%s322 + $0x180] sm:$0xff] %vm5453, %v5414
      %5503 = vst.msk [vmem:[%s322 + $0x188] sm:$0xff] %vm5453, %v5416
      %5504 = vst.msk [vmem:[%s322 + $0x190] sm:$0xff] %vm5453, %v5419
      %5505 = vst.msk [vmem:[%s322 + $0x198] sm:$0xff] %vm5453, %v5421
      %5506 = vst.msk [vmem:[%s322 + $0x1a0] sm:$0xff] %vm5453, %v5424
      %5507 = vst.msk [vmem:[%s322 + $0x1a8] sm:$0xff] %vm5453, %v5426
      %5508 = vst.msk [vmem:[%s322 + $0x1b0] sm:$0xff] %vm5453, %v5429
      %5509 = vst.msk [vmem:[%s322 + $0x1b8] sm:$0xff] %vm5453, %v5431
      %5510 = vst.msk [vmem:[%s322 + $0x1c0] sm:$0xff] %vm5453, %v5434
      %5511 = vst.msk [vmem:[%s322 + $0x1c8] sm:$0xff] %vm5453, %v5436
      %5512 = vst.msk [vmem:[%s322 + $0x1d0] sm:$0xff] %vm5453, %v5439
      %5513 = vst.msk [vmem:[%s322 + $0x1d8] sm:$0xff] %vm5453, %v5441
      %5514 = vst.msk [vmem:[%s322 + $0x1e0] sm:$0xff] %vm5453, %v5444
      %5515 = vst.msk [vmem:[%s322 + $0x1e8] sm:$0xff] %vm5453, %v5446
      %5516 = vst.msk [vmem:[%s322 + $0x1f0] sm:$0xff] %vm5453, %v5449
      %5517 = vst.msk [vmem:[%s322 + $0x1f8] sm:$0xff] %vm5453, %v5451
      %s5518 = smul.u32 64, %s22
      %p5519 = scmp.lt.s32.totalorder %s23, 3
      %s5520 = scalar_select %p5519, %s23, 3
      %p5521 = scmp.lt.s32.totalorder %s5518, 63
      %s5522 = scalar_select %p5521, %s5518, 63
      %s5523 = smul.addr %s5520, 64
      %s5524 = sadd.s32 %s5522, %s5523
      %s5525 = smul.addr %s5524, 8
      %s5526 = scalar_lea.vmem %s7, %s5525
      // Predicated region
      $region49: #{conv_head_forward.3} parent=47 // pred_check
        %p5527 = pneg %p207
      $region50: #{conv_head_forward.3} parent=47 // pred_check_branch
        %5529 = sbr.rel (%p5527) target = $region52
      $region51: #{conv_head_forward.3} parent=47 // pred_region
        %s5530 = smul.u32 64, %s22
      $region52: #{conv_head_forward.3} parent=47 // pred_fallthru
        _
    $region48: #{conv_head_forward.3} parent=5 // pred_fallthru
      _
    %p5531 = scmp.le.s32.totalorder 2, %s13
    // Predicated region
    $region53: #{conv_head_forward.3} parent=5 // pred_check
      %p5532 = pneg %p5531
    $region54: #{conv_head_forward.3} parent=5 // pred_check_branch
      %5534 = sbr.rel (%p5532) target = $region56
    $region55: #{conv_head_forward.3} parent=5 // pred_region
      %s5535 = ssub.s32 %s13, 2
      // Predicated region
      $region57: #{conv_head_forward.3} parent=55 // pred_check
        %p5536 = pneg %p213
      $region58: #{conv_head_forward.3} parent=55 // pred_check_branch
        %5538 = sbr.rel (%p5536) target = $region60
      $region59: #{conv_head_forward.3} parent=55 // pred_region
        %s5539 = smul.u32 64, %s24
        %p5540 = scmp.lt.s32.totalorder %s25, 3
        %s5541 = scalar_select %p5540, %s25, 3
        %p5542 = scmp.lt.s32.totalorder %s5539, 63
        %s5543 = scalar_select %p5542, %s5539, 63
        %s5544 = smul.addr %s5541, 64
        %s5545 = sadd.s32 %s5543, %s5544
        %s5546 = smul.addr %s5545, 8
        %s5547 = scalar_lea.vmem %s7, %s5546
      $region60: #{conv_head_forward.3} parent=55 // pred_fallthru
        _
    $region56: #{conv_head_forward.3} parent=5 // pred_fallthru
      _
  $region6: #{conv_head_forward.3} parent=0 // loop_footer
    %s17 = sadd.s32 1, %s13
  $region7: #{conv_head_forward.3} parent=0 // loop_footer_branch
    %12 = sbr.rel target = $region3
  $region8: #{conv_head_forward.3} parent=0 // loop_exit
    _

</llo_original>
